<compile_context>
chip_gen: v7x
topology: tpu7x:2x2x1
jax: 0.10.0
libtpu: 0.0.40
codegen_flags: <defaults>
</compile_context>

<pallas_src>
import functools
import math

import jax
import jax.numpy as jnp
from jax.experimental import pallas as pl
from jax.experimental.pallas import tpu as pltpu

EPS = 1e-6                      # layer_norm_epsilon
MXU_DTYPE = jnp.bfloat16        # matmul operand dtype (accumulation is f32)


# --------------------------- in-kernel building blocks -----------------------

def _t5_layernorm(x, w):
    # T5LayerNorm: RMS norm (no mean subtraction, no bias), f32 math.
    var = jnp.mean(x * x, axis=-1, keepdims=True)
    return x * jax.lax.rsqrt(var + EPS) * w


def _mxu(a, w):
    # bf16 operands on the MXU, f32 accumulation.
    return jnp.dot(a.astype(MXU_DTYPE), w, preferred_element_type=jnp.float32)


def _attention(h, ln_w, wq, wk, wv, wo, bias_ref, ctx_ref, num_heads, d_kv):
    """h: (S, D) f32 residual stream. Returns h + SelfAttention(LN(h))."""
    normed = _t5_layernorm(h, ln_w)
    x16 = normed.astype(MXU_DTYPE)
    # Full-K QKV projections: one wide MXU matmul each with K = d_model.
    q = jnp.dot(x16, wq, preferred_element_type=jnp.float32)
    k = jnp.dot(x16, wk, preferred_element_type=jnp.float32)
    v = jnp.dot(x16, wv, preferred_element_type=jnp.float32)
    # Statically-unrolled head loop keeps only one (S, S) score tile live at a
    # time (a full (H, S, S) tensor would blow VMEM at real T5 sizes) and lets
    # the scheduler overlap head i's EUP exp with head i+1's MXU score push.
    for hd in range(num_heads):
        sl = slice(hd * d_kv, (hd + 1) * d_kv)
        qh = q[:, sl].astype(MXU_DTYPE)
        kh = k[:, sl].astype(MXU_DTYPE)
        vh = v[:, sl].astype(MXU_DTYPE)
        # T5 does NOT scale scores by sqrt(d_kv).
        s = jax.lax.dot_general(qh, kh, (((1,), (1,)), ((), ())),
                                preferred_element_type=jnp.float32)
        if bias_ref is not None:
            s = s + bias_ref[hd].astype(jnp.float32)       # bias stored bf16
        s = s - jnp.max(s, axis=-1, keepdims=True)
        p = jnp.exp(s)
        # EUP approximate reciprocal + multiply instead of a VPU divide.
        p = p * pl.reciprocal(jnp.sum(p, axis=-1, keepdims=True), approx=True)
        # Scatter per-head context into the bf16 VMEM scratch.
        ctx_ref[:, sl] = jnp.dot(p.astype(MXU_DTYPE), vh,
                                 preferred_element_type=jnp.float32
                                 ).astype(MXU_DTYPE)
    # Single wide O-projection: K = num_heads * d_kv, bf16 scratch feeds the
    # MXU directly (no epilogue cast).
    return h + jnp.dot(ctx_ref[...], wo, preferred_element_type=jnp.float32)


def _ff(h, ln_w, wi, wo_ff):
    normed = _t5_layernorm(h, ln_w)
    act = jnp.maximum(_mxu(normed, wi), 0.0)               # relu
    return h + _mxu(act, wo_ff)


# --------------------------- fused per-layer kernel --------------------------

def layer_kernel(*refs, num_heads, d_kv, side_d_kv, has_bias, is_first,
                 do_final_ln):
    it = iter(refs)
    h_ref = next(it)
    side_ref = None if is_first else next(it)
    # main block params
    m_sa_ln = next(it)
    m_wq, m_wk, m_wv, m_wo = next(it), next(it), next(it), next(it)
    m_bias = next(it) if has_bias else None
    m_ff_ln, m_wi, m_wo_ff = next(it), next(it), next(it)
    w_first = next(it) if is_first else None
    w_down = next(it)
    # side block params
    s_sa_ln = next(it)
    s_wq, s_wk, s_wv, s_wo = next(it), next(it), next(it), next(it)
    s_bias = next(it) if has_bias else None
    s_ff_ln, s_wi, s_wo_ff = next(it), next(it), next(it)
    fln = next(it) if do_final_ln else None
    sfln = next(it) if do_final_ln else None
    # outputs + scratch
    h_out_ref = next(it)
    side_out_ref = next(it)
    ctx_main = next(it)
    ctx_side = next(it)

    h = h_ref[0]                                           # (S, D) f32
    h1 = _attention(h, m_sa_ln[...], m_wq[...], m_wk[...], m_wv[...],
                    m_wo[...], m_bias, ctx_main, num_heads, d_kv)
    h2 = _ff(h1, m_ff_ln[...], m_wi[...], m_wo_ff[...])

    # Side path fused into the same kernel: downsample-add (first-downsample
    # on layer 0), then the side T5 block.
    side_in = _mxu(h, w_first[...]) if is_first else side_ref[0]
    s = side_in + _mxu(h2, w_down[...])
    s1 = _attention(s, s_sa_ln[...], s_wq[...], s_wk[...], s_wv[...],
                    s_wo[...], s_bias, ctx_side, num_heads, side_d_kv)
    s2 = _ff(s1, s_ff_ln[...], s_wi[...], s_wo_ff[...])

    # Final layernorms fused into the last layer's kernel.
    h_out_ref[0] = _t5_layernorm(h2, fln[...]) if do_final_ln else h2
    side_out_ref[0] = _t5_layernorm(s2, sfln[...]) if do_final_ln else s2


# --------------------------- pallas_call wrapper ------------------------------

def _vmem_limit_bytes(operands, extra_bytes):
    # Sum of all operands (invariants are single-buffered, activations small),
    # plus outputs/scratch, plus 2x headroom for compiler temporaries
    # (q/k/v, one (S,S) score tile, FF activations).  Capped at v7x's 64 MiB
    # physical VMEM per core, floored at the smallest useful scoped limit.
    total = sum(int(op.size) * op.dtype.itemsize for op in operands)
    total += extra_bytes
    return int(min(max(2 * total + (4 << 20), 16 << 20), 64 << 20))


def run_layer(h, side_h, mp, sp, *, main_bias, side_bias, w_first, w_down,
              final_ln_w, final_side_ln_w, num_heads, d_kv, side_d_kv):
    B, S, D = h.shape
    sD = w_down.shape[1]
    inner = num_heads * d_kv
    s_inner = num_heads * side_d_kv
    is_first = side_h is None
    has_bias = main_bias is not None
    do_final_ln = final_ln_w is not None

    operands = [h]
    in_specs = [pl.BlockSpec((1, S, D), lambda b: (b, 0, 0))]

    def add_invariant(x):
        # Grid-invariant operand (weights / LN vectors / layer-0 bias): the
        # block index is identical at every grid step, so double-buffering
        # buys zero overlap -- single-buffer it to halve its VMEM footprint.
        operands.append(x)
        n = x.ndim
        in_specs.append(pl.BlockSpec(x.shape, lambda b, _n=n: (0,) * _n,
                                     pipeline_mode=pl.Buffered(1)))

    if not is_first:
        operands.append(side_h)
        in_specs.append(pl.BlockSpec((1, S, sD), lambda b: (b, 0, 0)))

    add_invariant(mp["sa_ln"].reshape(1, -1))
    for name in ("wq", "wk", "wv", "wo"):
        add_invariant(mp[name])
    if has_bias:
        add_invariant(main_bias)                 # (H, S, S) bf16
    add_invariant(mp["ff_ln"].reshape(1, -1))
    add_invariant(mp["wi"])
    add_invariant(mp["wo_ff"])
    if is_first:
        add_invariant(w_first)
    add_invariant(w_down)

    add_invariant(sp["sa_ln"].reshape(1, -1))
    for name in ("wq", "wk", "wv", "wo"):
        add_invariant(sp[name])
    if has_bias:
        add_invariant(side_bias)                 # (H, S, S) bf16
    add_invariant(sp["ff_ln"].reshape(1, -1))
    add_invariant(sp["wi"])
    add_invariant(sp["wo_ff"])
    if do_final_ln:
        add_invariant(final_ln_w.reshape(1, -1))
        add_invariant(final_side_ln_w.reshape(1, -1))

    kernel = functools.partial(
        layer_kernel, num_heads=num_heads, d_kv=d_kv, side_d_kv=side_d_kv,
        has_bias=has_bias, is_first=is_first, do_final_ln=do_final_ln)

    out_bytes = 2 * 4 * S * (D + sD)             # f32 outputs, double-buffered
    scratch_bytes = 2 * S * (inner + s_inner)    # bf16 ctx scratches
    vmem_limit = _vmem_limit_bytes(operands, out_bytes + scratch_bytes)

    return pl.pallas_call(
        kernel,
        out_shape=(jax.ShapeDtypeStruct((B, S, D), jnp.float32),
                   jax.ShapeDtypeStruct((B, S, sD), jnp.float32)),
        grid=(B,),
        in_specs=in_specs,
        out_specs=(pl.BlockSpec((1, S, D), lambda b: (b, 0, 0)),
                   pl.BlockSpec((1, S, sD), lambda b: (b, 0, 0))),
        scratch_shapes=[pltpu.VMEM((S, inner), MXU_DTYPE),
                        pltpu.VMEM((S, s_inner), MXU_DTYPE)],
        compiler_params=pltpu.CompilerParams(
            dimension_semantics=("parallel",),
            vmem_limit_bytes=vmem_limit),
    )(*operands)


# --------------------------- relative position bias (glue, plain JAX) --------

def _relative_position_bucket(rel_pos, num_buckets, max_distance):
    # bidirectional=True (encoder / not is_decoder)
    num_buckets //= 2
    rb = (rel_pos > 0).astype(jnp.int32) * num_buckets
    rel_pos = jnp.abs(rel_pos)
    max_exact = num_buckets // 2
    is_small = rel_pos < max_exact
    rel_pos_f = jnp.maximum(rel_pos.astype(jnp.float32), 1.0)
    large = max_exact + (jnp.log(rel_pos_f / max_exact)
                         / math.log(max_distance / max_exact)
                         * (num_buckets - max_exact)).astype(jnp.int32)
    large = jnp.minimum(large, num_buckets - 1)
    return rb + jnp.where(is_small, rel_pos, large)


def compute_bias(seq_len, rel_emb, num_buckets, max_distance):
    ctx = jnp.arange(seq_len)[:, None]
    mem = jnp.arange(seq_len)[None, :]
    buckets = _relative_position_bucket(mem - ctx, num_buckets, max_distance)
    values = rel_emb[buckets]                        # (S, S, H)
    return jnp.transpose(values, (2, 0, 1)).astype(jnp.float32)  # (H, S, S)


# --------------------------- model: params + forward -------------------------

def init_params(key, cfg):
    D, H, dk, dff = cfg["d_model"], cfg["num_heads"], cfg["d_kv"], cfg["d_ff"]
    srf = cfg["side_reduction_factor"]
    sD, sdk, sdff = D // srf, dk // srf, dff // srf
    nb, L = cfg["num_buckets"], cfg["num_layers"]
    keys = iter(jax.random.split(key, 128))

    def w(shape):
        # weights stored bf16: native MXU operand dtype, half the DMA bytes
        return (jax.random.normal(next(keys), shape, jnp.float32)
                * 0.02).astype(MXU_DTYPE)

    def block(d_model, d_kv_, d_ff_, has_rel):
        inner = H * d_kv_
        p = dict(
            sa_ln=jnp.ones((d_model,), jnp.float32),
            wq=w((d_model, inner)), wk=w((d_model, inner)),
            wv=w((d_model, inner)), wo=w((inner, d_model)),
            ff_ln=jnp.ones((d_model,), jnp.float32),
            wi=w((d_model, d_ff_)), wo_ff=w((d_ff_, d_model)),
        )
        if has_rel:
            p["rel_emb"] = jax.random.normal(next(keys), (nb, H),
                                             jnp.float32) * 0.1
        return p

    return dict(
        block=[block(D, dk, dff, i == 0) for i in range(L)],
        side_block=[block(sD, sdk, sdff, i == 0) for i in range(L)],
        side_first_downsample=w((D, sD)),
        side_downsamples=[w((D, sD)) for _ in range(L)],
        final_layer_norm=jnp.ones((D,), jnp.float32),
        final_side_layer_norm=jnp.ones((sD,), jnp.float32),
    )


def t5_side_pp_stack_forward(params, inputs_embeds, cfg):
    B, S, D = inputs_embeds.shape
    H, dk = cfg["num_heads"], cfg["d_kv"]
    sdk = dk // cfg["side_reduction_factor"]
    nb, md = cfg["num_buckets"], cfg["max_distance"]
    L = cfg["num_layers"]

    # Only layer 0 has a relative-attention bias (position_bias is not
    # propagated in T5SidePPStack and the all-ones mask is a zero additive
    # mask), so layers > 0 compile bias-free variants.  Pass the bias in bf16
    # to halve its VMEM footprint and HBM DMA.
    main_bias0 = compute_bias(S, params["block"][0]["rel_emb"], nb, md
                              ).astype(MXU_DTYPE)
    side_bias0 = compute_bias(S, params["side_block"][0]["rel_emb"], nb, md
                              ).astype(MXU_DTYPE)

    h = inputs_embeds
    side_h = None                  # produced by the fused layer-0 kernel
    for i in range(L):
        last = i == L - 1
        h, side_h = run_layer(
            h, side_h, params["block"][i], params["side_block"][i],
            main_bias=main_bias0 if i == 0 else None,
            side_bias=side_bias0 if i == 0 else None,
            w_first=params["side_first_downsample"] if i == 0 else None,
            w_down=params["side_downsamples"][i],
            final_ln_w=params["final_layer_norm"] if last else None,
            final_side_ln_w=params["final_side_layer_norm"] if last else None,
            num_heads=H, d_kv=dk, side_d_kv=sdk)
    return h, side_h


# --------------------------- pure-JAX reference (for verification) -----------

def _ref_attn(h, p, bias, H, dk):
    normed = _t5_layernorm(h, p["sa_ln"])
    q, k, v = normed @ p["wq"], normed @ p["wk"], normed @ p["wv"]
    out = jnp.zeros_like(h)
    for hd in range(H):
        sl = slice(hd * dk, (hd + 1) * dk)
        s = q[..., sl] @ jnp.swapaxes(k[..., sl], -1, -2)
        if bias is not None:
            s = s + bias[hd]
        a = jax.nn.softmax(s, axis=-1)
        out = out + (a @ v[..., sl]) @ p["wo"][sl, :]
    return h + out


def _ref_ff(h, p):
    normed = _t5_layernorm(h, p["ff_ln"])
    return h + jnp.maximum(normed @ p["wi"], 0.0) @ p["wo_ff"]


def ref_forward(params, x, cfg):
    S = x.shape[1]
    H, dk = cfg["num_heads"], cfg["d_kv"]
    sdk = dk // cfg["side_reduction_factor"]
    nb, md = cfg["num_buckets"], cfg["max_distance"]
    h = x
    side_h = h @ params["side_first_downsample"]
    mb0 = compute_bias(S, params["block"][0]["rel_emb"], nb, md)
    sb0 = compute_bias(S, params["side_block"][0]["rel_emb"], nb, md)
    for i in range(cfg["num_layers"]):
        bp = params["block"][i]
        h = _ref_attn(h, bp, mb0 if i == 0 else None, H, dk)
        h = _ref_ff(h, bp)
        side_h = side_h + h @ params["side_downsamples"][i]
        sp = params["side_block"][i]
        side_h = _ref_attn(side_h, sp, sb0 if i == 0 else None, H, sdk)
        side_h = _ref_ff(side_h, sp)
    h = _t5_layernorm(h, params["final_layer_norm"])
    side_h = _t5_layernorm(side_h, params["final_side_layer_norm"])
    return h, side_h


# --------------------------- main ---------------------------------------------

if __name__ == "__main__":
    # Small but (8,128)-tile-aligned shapes so real TPU layouts are exercised.
    cfg = dict(
        num_layers=2, d_model=256, d_kv=64, d_ff=512, num_heads=4,
        side_reduction_factor=2, num_buckets=32, max_distance=128,
    )
    B, S = 2, 128

    root = jax.random.PRNGKey(0)
    pkey, xkey = jax.random.split(root)
    params = init_params(pkey, cfg)
    inputs_embeds = jax.random.normal(xkey, (B, S, cfg["d_model"]), jnp.float32)

    h, side_h = t5_side_pp_stack_forward(params, inputs_embeds, cfg)
    h = jax.block_until_ready(h)
    side_h = jax.block_until_ready(side_h)

    h_ref, side_ref = ref_forward(params, inputs_embeds, cfg)
    assert h.shape == (B, S, cfg["d_model"])
    assert side_h.shape == (B, S, cfg["d_model"] // cfg["side_reduction_factor"])
    # bf16 MXU operands / bf16 bias / approx-reciprocal softmax vs an f32
    # reference -> allow a small rounding budget.
    assert jnp.allclose(h, h_ref, atol=2e-2, rtol=2e-2)
    assert jnp.allclose(side_h, side_ref, atol=2e-2, rtol=2e-2)

    print("KERNEL_OK")
</pallas_src>

<mosaic_0001>
module attributes {stable_mosaic.version = 11 : i64} {
  func.func @layer_kernel(%arg0: i32, %arg1: memref<1x128x256xf32, #tpu.memory_space<vmem>>, %arg2: memref<1x256xf32, #tpu.memory_space<vmem>>, %arg3: memref<256x256xbf16, #tpu.memory_space<vmem>>, %arg4: memref<256x256xbf16, #tpu.memory_space<vmem>>, %arg5: memref<256x256xbf16, #tpu.memory_space<vmem>>, %arg6: memref<256x256xbf16, #tpu.memory_space<vmem>>, %arg7: memref<4x128x128xbf16, #tpu.memory_space<vmem>>, %arg8: memref<1x256xf32, #tpu.memory_space<vmem>>, %arg9: memref<256x512xbf16, #tpu.memory_space<vmem>>, %arg10: memref<512x256xbf16, #tpu.memory_space<vmem>>, %arg11: memref<256x128xbf16, #tpu.memory_space<vmem>>, %arg12: memref<256x128xbf16, #tpu.memory_space<vmem>>, %arg13: memref<1x128xf32, #tpu.memory_space<vmem>>, %arg14: memref<128x128xbf16, #tpu.memory_space<vmem>>, %arg15: memref<128x128xbf16, #tpu.memory_space<vmem>>, %arg16: memref<128x128xbf16, #tpu.memory_space<vmem>>, %arg17: memref<128x128xbf16, #tpu.memory_space<vmem>>, %arg18: memref<4x128x128xbf16, #tpu.memory_space<vmem>>, %arg19: memref<1x128xf32, #tpu.memory_space<vmem>>, %arg20: memref<128x256xbf16, #tpu.memory_space<vmem>>, %arg21: memref<256x128xbf16, #tpu.memory_space<vmem>>, %arg22: memref<1x128x256xf32, #tpu.memory_space<vmem>>, %arg23: memref<1x128x128xf32, #tpu.memory_space<vmem>>, %arg24: memref<128x256xbf16, #tpu.memory_space<vmem>>, %arg25: memref<128x128xbf16, #tpu.memory_space<vmem>>) attributes {dimension_semantics = [#tpu.dimension_semantics<parallel>], iteration_bounds = array<i64: 2>, scalar_prefetch = 0 : i64, scratch_operands = 2 : i64, tpu.core_type = #tpu.core_type<tc>, window_params = [{transform_indices = @transform_0, window_bounds = array<i64: 1, 128, 256>}, {pipeline_mode = #tpu.pipeline_mode<synchronous>, transform_indices = @transform_1, window_bounds = array<i64: 1, 256>}, {pipeline_mode = #tpu.pipeline_mode<synchronous>, transform_indices = @transform_2, window_bounds = array<i64: 256, 256>}, {pipeline_mode = #tpu.pipeline_mode<synchronous>, transform_indices = @transform_3, window_bounds = array<i64: 256, 256>}, {pipeline_mode = #tpu.pipeline_mode<synchronous>, transform_indices = @transform_4, window_bounds = array<i64: 256, 256>}, {pipeline_mode = #tpu.pipeline_mode<synchronous>, transform_indices = @transform_5, window_bounds = array<i64: 256, 256>}, {pipeline_mode = #tpu.pipeline_mode<synchronous>, transform_indices = @transform_6, window_bounds = array<i64: 4, 128, 128>}, {pipeline_mode = #tpu.pipeline_mode<synchronous>, transform_indices = @transform_7, window_bounds = array<i64: 1, 256>}, {pipeline_mode = #tpu.pipeline_mode<synchronous>, transform_indices = @transform_8, window_bounds = array<i64: 256, 512>}, {pipeline_mode = #tpu.pipeline_mode<synchronous>, transform_indices = @transform_9, window_bounds = array<i64: 512, 256>}, {pipeline_mode = #tpu.pipeline_mode<synchronous>, transform_indices = @transform_10, window_bounds = array<i64: 256, 128>}, {pipeline_mode = #tpu.pipeline_mode<synchronous>, transform_indices = @transform_11, window_bounds = array<i64: 256, 128>}, {pipeline_mode = #tpu.pipeline_mode<synchronous>, transform_indices = @transform_12, window_bounds = array<i64: 1, 128>}, {pipeline_mode = #tpu.pipeline_mode<synchronous>, transform_indices = @transform_13, window_bounds = array<i64: 128, 128>}, {pipeline_mode = #tpu.pipeline_mode<synchronous>, transform_indices = @transform_14, window_bounds = array<i64: 128, 128>}, {pipeline_mode = #tpu.pipeline_mode<synchronous>, transform_indices = @transform_15, window_bounds = array<i64: 128, 128>}, {pipeline_mode = #tpu.pipeline_mode<synchronous>, transform_indices = @transform_16, window_bounds = array<i64: 128, 128>}, {pipeline_mode = #tpu.pipeline_mode<synchronous>, transform_indices = @transform_17, window_bounds = array<i64: 4, 128, 128>}, {pipeline_mode = #tpu.pipeline_mode<synchronous>, transform_indices = @transform_18, window_bounds = array<i64: 1, 128>}, {pipeline_mode = #tpu.pipeline_mode<synchronous>, transform_indices = @transform_19, window_bounds = array<i64: 128, 256>}, {pipeline_mode = #tpu.pipeline_mode<synchronous>, transform_indices = @transform_20, window_bounds = array<i64: 256, 128>}, {transform_indices = @transform_21, window_bounds = array<i64: 1, 128, 256>}, {transform_indices = @transform_22, window_bounds = array<i64: 1, 128, 128>}]} {
    %c0 = arith.constant 0 : index
    %c0_0 = arith.constant 0 : index
    %c0_1 = arith.constant 0 : index
    %0 = vector.load %arg1[%c0, %c0_0, %c0_1] : memref<1x128x256xf32, #tpu.memory_space<vmem>>, vector<1x128x256xf32>
    %1 = vector.shape_cast %0 : vector<1x128x256xf32> to vector<128x256xf32>
    %c0_2 = arith.constant 0 : index
    %c0_3 = arith.constant 0 : index
    %2 = vector.load %arg2[%c0_2, %c0_3] : memref<1x256xf32, #tpu.memory_space<vmem>>, vector<1x256xf32>
    %c0_4 = arith.constant 0 : index
    %c0_5 = arith.constant 0 : index
    %3 = vector.load %arg3[%c0_4, %c0_5] : memref<256x256xbf16, #tpu.memory_space<vmem>>, vector<256x256xbf16>
    %c0_6 = arith.constant 0 : index
    %c0_7 = arith.constant 0 : index
    %4 = vector.load %arg4[%c0_6, %c0_7] : memref<256x256xbf16, #tpu.memory_space<vmem>>, vector<256x256xbf16>
    %c0_8 = arith.constant 0 : index
    %c0_9 = arith.constant 0 : index
    %5 = vector.load %arg5[%c0_8, %c0_9] : memref<256x256xbf16, #tpu.memory_space<vmem>>, vector<256x256xbf16>
    %c0_10 = arith.constant 0 : index
    %c0_11 = arith.constant 0 : index
    %6 = vector.load %arg6[%c0_10, %c0_11] : memref<256x256xbf16, #tpu.memory_space<vmem>>, vector<256x256xbf16>
    %7 = arith.mulf %1, %1 : vector<128x256xf32>
    %cst = arith.constant dense<0.000000e+00> : vector<128xf32>
    %8 = vector.multi_reduction <add>, %7, %cst [1] : vector<128x256xf32> to vector<128xf32>
    %9 = vector.shape_cast %8 : vector<128xf32> to vector<128x1xf32>
    %cst_12 = arith.constant 2.560000e+02 : f32
    %10 = vector.broadcast %cst_12 : f32 to vector<128x1xf32>
    %11 = arith.divf %9, %10 : vector<128x1xf32>
    %cst_13 = arith.constant 9.99999997E-7 : f32
    %12 = vector.broadcast %cst_13 : f32 to vector<128x1xf32>
    %13 = arith.addf %11, %12 : vector<128x1xf32>
    %14 = math.rsqrt %13 : vector<128x1xf32>
    %15 = vector.broadcast %14 : vector<128x1xf32> to vector<128x256xf32>
    %16 = arith.mulf %1, %15 : vector<128x256xf32>
    %17 = vector.broadcast %2 : vector<1x256xf32> to vector<128x256xf32>
    %18 = arith.mulf %16, %17 : vector<128x256xf32>
    %19 = arith.truncf %18 : vector<128x256xf32> to vector<128x256xbf16>
    %cst_14 = arith.constant dense<0.000000e+00> : vector<128x256xf32>
    %20 = tpu.matmul %19, %3, %cst_14 {dimension_numbers = #tpu.dot_dimension_numbers<[1], [0], [0], [1], [0, 0, 1, 1], [], []>} : vector<128x256xbf16>, vector<256x256xbf16>, vector<128x256xf32> -> vector<128x256xf32>
    %cst_15 = arith.constant dense<0.000000e+00> : vector<128x256xf32>
    %21 = tpu.matmul %19, %4, %cst_15 {dimension_numbers = #tpu.dot_dimension_numbers<[1], [0], [0], [1], [0, 0, 1, 1], [], []>} : vector<128x256xbf16>, vector<256x256xbf16>, vector<128x256xf32> -> vector<128x256xf32>
    %cst_16 = arith.constant dense<0.000000e+00> : vector<128x256xf32>
    %22 = tpu.matmul %19, %5, %cst_16 {dimension_numbers = #tpu.dot_dimension_numbers<[1], [0], [0], [1], [0, 0, 1, 1], [], []>} : vector<128x256xbf16>, vector<256x256xbf16>, vector<128x256xf32> -> vector<128x256xf32>
    %23 = vector.extract_strided_slice %20 {offsets = [0, 0], sizes = [128, 64], strides = [1, 1]} : vector<128x256xf32> to vector<128x64xf32>
    %24 = arith.truncf %23 : vector<128x64xf32> to vector<128x64xbf16>
    %25 = vector.extract_strided_slice %21 {offsets = [0, 0], sizes = [128, 64], strides = [1, 1]} : vector<128x256xf32> to vector<128x64xf32>
    %26 = arith.truncf %25 : vector<128x64xf32> to vector<128x64xbf16>
    %27 = vector.extract_strided_slice %22 {offsets = [0, 0], sizes = [128, 64], strides = [1, 1]} : vector<128x256xf32> to vector<128x64xf32>
    %28 = arith.truncf %27 : vector<128x64xf32> to vector<128x64xbf16>
    %cst_17 = arith.constant dense<0.000000e+00> : vector<128x128xf32>
    %29 = tpu.matmul %24, %26, %cst_17 {dimension_numbers = #tpu.dot_dimension_numbers<[1], [1], [0], [0], [0, 0, 1, 0], [], []>} : vector<128x64xbf16>, vector<128x64xbf16>, vector<128x128xf32> -> vector<128x128xf32>
    %c0_18 = arith.constant 0 : index
    %c0_19 = arith.constant 0 : index
    %c0_20 = arith.constant 0 : index
    %30 = vector.load %arg7[%c0_18, %c0_19, %c0_20] : memref<4x128x128xbf16, #tpu.memory_space<vmem>>, vector<1x128x128xbf16>
    %31 = vector.shape_cast %30 : vector<1x128x128xbf16> to vector<128x128xbf16>
    %32 = arith.extf %31 : vector<128x128xbf16> to vector<128x128xf32>
    %33 = arith.addf %29, %32 : vector<128x128xf32>
    %cst_21 = arith.constant dense<0xFF800000> : vector<128xf32>
    %34 = vector.multi_reduction <maximumf>, %33, %cst_21 [1] : vector<128x128xf32> to vector<128xf32>
    %35 = vector.shape_cast %34 : vector<128xf32> to vector<128x1xf32>
    %36 = vector.broadcast %35 : vector<128x1xf32> to vector<128x128xf32>
    %37 = arith.subf %33, %36 : vector<128x128xf32>
    %38 = math.exp %37 : vector<128x128xf32>
    %cst_22 = arith.constant dense<0.000000e+00> : vector<128xf32>
    %39 = vector.multi_reduction <add>, %38, %cst_22 [1] : vector<128x128xf32> to vector<128xf32>
    %40 = vector.shape_cast %39 : vector<128xf32> to vector<128x1xf32>
    %41 = tpu.reciprocal %40 {approx = true} : vector<128x1xf32> -> vector<128x1xf32>
    %42 = vector.broadcast %41 : vector<128x1xf32> to vector<128x128xf32>
    %43 = arith.mulf %38, %42 : vector<128x128xf32>
    %44 = arith.truncf %43 : vector<128x128xf32> to vector<128x128xbf16>
    %cst_23 = arith.constant dense<0.000000e+00> : vector<128x64xf32>
    %45 = tpu.matmul %44, %28, %cst_23 {dimension_numbers = #tpu.dot_dimension_numbers<[1], [0], [0], [1], [0, 0, 1, 1], [], []>} : vector<128x128xbf16>, vector<128x64xbf16>, vector<128x64xf32> -> vector<128x64xf32>
    %46 = arith.truncf %45 : vector<128x64xf32> to vector<128x64xbf16>
    %c0_24 = arith.constant 0 : index
    %c0_25 = arith.constant 0 : index
    %47 = vector.load %arg24[%c0_24, %c0_25] : memref<128x256xbf16, #tpu.memory_space<vmem>>, vector<128x64xbf16>
    tpu.vector_store %arg24[%c0_24, %c0_25], %46 {strides = array<i32>} : memref<128x256xbf16, #tpu.memory_space<vmem>>, vector<128x64xbf16>,
    %48 = vector.extract_strided_slice %20 {offsets = [0, 64], sizes = [128, 64], strides = [1, 1]} : vector<128x256xf32> to vector<128x64xf32>
    %49 = arith.truncf %48 : vector<128x64xf32> to vector<128x64xbf16>
    %50 = vector.extract_strided_slice %21 {offsets = [0, 64], sizes = [128, 64], strides = [1, 1]} : vector<128x256xf32> to vector<128x64xf32>
    %51 = arith.truncf %50 : vector<128x64xf32> to vector<128x64xbf16>
    %52 = vector.extract_strided_slice %22 {offsets = [0, 64], sizes = [128, 64], strides = [1, 1]} : vector<128x256xf32> to vector<128x64xf32>
    %53 = arith.truncf %52 : vector<128x64xf32> to vector<128x64xbf16>
    %cst_26 = arith.constant dense<0.000000e+00> : vector<128x128xf32>
    %54 = tpu.matmul %49, %51, %cst_26 {dimension_numbers = #tpu.dot_dimension_numbers<[1], [1], [0], [0], [0, 0, 1, 0], [], []>} : vector<128x64xbf16>, vector<128x64xbf16>, vector<128x128xf32> -> vector<128x128xf32>
    %c1 = arith.constant 1 : index
    %c0_27 = arith.constant 0 : index
    %c0_28 = arith.constant 0 : index
    %55 = vector.load %arg7[%c1, %c0_27, %c0_28] : memref<4x128x128xbf16, #tpu.memory_space<vmem>>, vector<1x128x128xbf16>
    %56 = vector.shape_cast %55 : vector<1x128x128xbf16> to vector<128x128xbf16>
    %57 = arith.extf %56 : vector<128x128xbf16> to vector<128x128xf32>
    %58 = arith.addf %54, %57 : vector<128x128xf32>
    %cst_29 = arith.constant dense<0xFF800000> : vector<128xf32>
    %59 = vector.multi_reduction <maximumf>, %58, %cst_29 [1] : vector<128x128xf32> to vector<128xf32>
    %60 = vector.shape_cast %59 : vector<128xf32> to vector<128x1xf32>
    %61 = vector.broadcast %60 : vector<128x1xf32> to vector<128x128xf32>
    %62 = arith.subf %58, %61 : vector<128x128xf32>
    %63 = math.exp %62 : vector<128x128xf32>
    %cst_30 = arith.constant dense<0.000000e+00> : vector<128xf32>
    %64 = vector.multi_reduction <add>, %63, %cst_30 [1] : vector<128x128xf32> to vector<128xf32>
    %65 = vector.shape_cast %64 : vector<128xf32> to vector<128x1xf32>
    %66 = tpu.reciprocal %65 {approx = true} : vector<128x1xf32> -> vector<128x1xf32>
    %67 = vector.broadcast %66 : vector<128x1xf32> to vector<128x128xf32>
    %68 = arith.mulf %63, %67 : vector<128x128xf32>
    %69 = arith.truncf %68 : vector<128x128xf32> to vector<128x128xbf16>
    %cst_31 = arith.constant dense<0.000000e+00> : vector<128x64xf32>
    %70 = tpu.matmul %69, %53, %cst_31 {dimension_numbers = #tpu.dot_dimension_numbers<[1], [0], [0], [1], [0, 0, 1, 1], [], []>} : vector<128x128xbf16>, vector<128x64xbf16>, vector<128x64xf32> -> vector<128x64xf32>
    %71 = arith.truncf %70 : vector<128x64xf32> to vector<128x64xbf16>
    %c0_32 = arith.constant 0 : index
    %c64 = arith.constant 64 : index
    %72 = vector.load %arg24[%c0_32, %c64] : memref<128x256xbf16, #tpu.memory_space<vmem>>, vector<128x64xbf16>
    tpu.vector_store %arg24[%c0_32, %c64], %71 {strides = array<i32>} : memref<128x256xbf16, #tpu.memory_space<vmem>>, vector<128x64xbf16>,
    %73 = vector.extract_strided_slice %20 {offsets = [0, 128], sizes = [128, 64], strides = [1, 1]} : vector<128x256xf32> to vector<128x64xf32>
    %74 = arith.truncf %73 : vector<128x64xf32> to vector<128x64xbf16>
    %75 = vector.extract_strided_slice %21 {offsets = [0, 128], sizes = [128, 64], strides = [1, 1]} : vector<128x256xf32> to vector<128x64xf32>
    %76 = arith.truncf %75 : vector<128x64xf32> to vector<128x64xbf16>
    %77 = vector.extract_strided_slice %22 {offsets = [0, 128], sizes = [128, 64], strides = [1, 1]} : vector<128x256xf32> to vector<128x64xf32>
    %78 = arith.truncf %77 : vector<128x64xf32> to vector<128x64xbf16>
    %cst_33 = arith.constant dense<0.000000e+00> : vector<128x128xf32>
    %79 = tpu.matmul %74, %76, %cst_33 {dimension_numbers = #tpu.dot_dimension_numbers<[1], [1], [0], [0], [0, 0, 1, 0], [], []>} : vector<128x64xbf16>, vector<128x64xbf16>, vector<128x128xf32> -> vector<128x128xf32>
    %c2 = arith.constant 2 : index
    %c0_34 = arith.constant 0 : index
    %c0_35 = arith.constant 0 : index
    %80 = vector.load %arg7[%c2, %c0_34, %c0_35] : memref<4x128x128xbf16, #tpu.memory_space<vmem>>, vector<1x128x128xbf16>
    %81 = vector.shape_cast %80 : vector<1x128x128xbf16> to vector<128x128xbf16>
    %82 = arith.extf %81 : vector<128x128xbf16> to vector<128x128xf32>
    %83 = arith.addf %79, %82 : vector<128x128xf32>
    %cst_36 = arith.constant dense<0xFF800000> : vector<128xf32>
    %84 = vector.multi_reduction <maximumf>, %83, %cst_36 [1] : vector<128x128xf32> to vector<128xf32>
    %85 = vector.shape_cast %84 : vector<128xf32> to vector<128x1xf32>
    %86 = vector.broadcast %85 : vector<128x1xf32> to vector<128x128xf32>
    %87 = arith.subf %83, %86 : vector<128x128xf32>
    %88 = math.exp %87 : vector<128x128xf32>
    %cst_37 = arith.constant dense<0.000000e+00> : vector<128xf32>
    %89 = vector.multi_reduction <add>, %88, %cst_37 [1] : vector<128x128xf32> to vector<128xf32>
    %90 = vector.shape_cast %89 : vector<128xf32> to vector<128x1xf32>
    %91 = tpu.reciprocal %90 {approx = true} : vector<128x1xf32> -> vector<128x1xf32>
    %92 = vector.broadcast %91 : vector<128x1xf32> to vector<128x128xf32>
    %93 = arith.mulf %88, %92 : vector<128x128xf32>
    %94 = arith.truncf %93 : vector<128x128xf32> to vector<128x128xbf16>
    %cst_38 = arith.constant dense<0.000000e+00> : vector<128x64xf32>
    %95 = tpu.matmul %94, %78, %cst_38 {dimension_numbers = #tpu.dot_dimension_numbers<[1], [0], [0], [1], [0, 0, 1, 1], [], []>} : vector<128x128xbf16>, vector<128x64xbf16>, vector<128x64xf32> -> vector<128x64xf32>
    %96 = arith.truncf %95 : vector<128x64xf32> to vector<128x64xbf16>
    %c0_39 = arith.constant 0 : index
    %c128 = arith.constant 128 : index
    %97 = vector.load %arg24[%c0_39, %c128] : memref<128x256xbf16, #tpu.memory_space<vmem>>, vector<128x64xbf16>
    tpu.vector_store %arg24[%c0_39, %c128], %96 {strides = array<i32>} : memref<128x256xbf16, #tpu.memory_space<vmem>>, vector<128x64xbf16>,
    %98 = vector.extract_strided_slice %20 {offsets = [0, 192], sizes = [128, 64], strides = [1, 1]} : vector<128x256xf32> to vector<128x64xf32>
    %99 = arith.truncf %98 : vector<128x64xf32> to vector<128x64xbf16>
    %100 = vector.extract_strided_slice %21 {offsets = [0, 192], sizes = [128, 64], strides = [1, 1]} : vector<128x256xf32> to vector<128x64xf32>
    %101 = arith.truncf %100 : vector<128x64xf32> to vector<128x64xbf16>
    %102 = vector.extract_strided_slice %22 {offsets = [0, 192], sizes = [128, 64], strides = [1, 1]} : vector<128x256xf32> to vector<128x64xf32>
    %103 = arith.truncf %102 : vector<128x64xf32> to vector<128x64xbf16>
    %cst_40 = arith.constant dense<0.000000e+00> : vector<128x128xf32>
    %104 = tpu.matmul %99, %101, %cst_40 {dimension_numbers = #tpu.dot_dimension_numbers<[1], [1], [0], [0], [0, 0, 1, 0], [], []>} : vector<128x64xbf16>, vector<128x64xbf16>, vector<128x128xf32> -> vector<128x128xf32>
    %c3 = arith.constant 3 : index
    %c0_41 = arith.constant 0 : index
    %c0_42 = arith.constant 0 : index
    %105 = vector.load %arg7[%c3, %c0_41, %c0_42] : memref<4x128x128xbf16, #tpu.memory_space<vmem>>, vector<1x128x128xbf16>
    %106 = vector.shape_cast %105 : vector<1x128x128xbf16> to vector<128x128xbf16>
    %107 = arith.extf %106 : vector<128x128xbf16> to vector<128x128xf32>
    %108 = arith.addf %104, %107 : vector<128x128xf32>
    %cst_43 = arith.constant dense<0xFF800000> : vector<128xf32>
    %109 = vector.multi_reduction <maximumf>, %108, %cst_43 [1] : vector<128x128xf32> to vector<128xf32>
    %110 = vector.shape_cast %109 : vector<128xf32> to vector<128x1xf32>
    %111 = vector.broadcast %110 : vector<128x1xf32> to vector<128x128xf32>
    %112 = arith.subf %108, %111 : vector<128x128xf32>
    %113 = math.exp %112 : vector<128x128xf32>
    %cst_44 = arith.constant dense<0.000000e+00> : vector<128xf32>
    %114 = vector.multi_reduction <add>, %113, %cst_44 [1] : vector<128x128xf32> to vector<128xf32>
    %115 = vector.shape_cast %114 : vector<128xf32> to vector<128x1xf32>
    %116 = tpu.reciprocal %115 {approx = true} : vector<128x1xf32> -> vector<128x1xf32>
    %117 = vector.broadcast %116 : vector<128x1xf32> to vector<128x128xf32>
    %118 = arith.mulf %113, %117 : vector<128x128xf32>
    %119 = arith.truncf %118 : vector<128x128xf32> to vector<128x128xbf16>
    %cst_45 = arith.constant dense<0.000000e+00> : vector<128x64xf32>
    %120 = tpu.matmul %119, %103, %cst_45 {dimension_numbers = #tpu.dot_dimension_numbers<[1], [0], [0], [1], [0, 0, 1, 1], [], []>} : vector<128x128xbf16>, vector<128x64xbf16>, vector<128x64xf32> -> vector<128x64xf32>
    %121 = arith.truncf %120 : vector<128x64xf32> to vector<128x64xbf16>
    %c0_46 = arith.constant 0 : index
    %c192 = arith.constant 192 : index
    %122 = vector.load %arg24[%c0_46, %c192] : memref<128x256xbf16, #tpu.memory_space<vmem>>, vector<128x64xbf16>
    tpu.vector_store %arg24[%c0_46, %c192], %121 {strides = array<i32>} : memref<128x256xbf16, #tpu.memory_space<vmem>>, vector<128x64xbf16>,
    %c0_47 = arith.constant 0 : index
    %c0_48 = arith.constant 0 : index
    %123 = vector.load %arg24[%c0_47, %c0_48] : memref<128x256xbf16, #tpu.memory_space<vmem>>, vector<128x256xbf16>
    %cst_49 = arith.constant dense<0.000000e+00> : vector<128x256xf32>
    %124 = tpu.matmul %123, %6, %cst_49 {dimension_numbers = #tpu.dot_dimension_numbers<[1], [0], [0], [1], [0, 0, 1, 1], [], []>} : vector<128x256xbf16>, vector<256x256xbf16>, vector<128x256xf32> -> vector<128x256xf32>
    %125 = arith.addf %1, %124 : vector<128x256xf32>
    %c0_50 = arith.constant 0 : index
    %c0_51 = arith.constant 0 : index
    %126 = vector.load %arg8[%c0_50, %c0_51] : memref<1x256xf32, #tpu.memory_space<vmem>>, vector<1x256xf32>
    %c0_52 = arith.constant 0 : index
    %c0_53 = arith.constant 0 : index
    %127 = vector.load %arg9[%c0_52, %c0_53] : memref<256x512xbf16, #tpu.memory_space<vmem>>, vector<256x512xbf16>
    %c0_54 = arith.constant 0 : index
    %c0_55 = arith.constant 0 : index
    %128 = vector.load %arg10[%c0_54, %c0_55] : memref<512x256xbf16, #tpu.memory_space<vmem>>, vector<512x256xbf16>
    %129 = arith.mulf %125, %125 : vector<128x256xf32>
    %cst_56 = arith.constant dense<0.000000e+00> : vector<128xf32>
    %130 = vector.multi_reduction <add>, %129, %cst_56 [1] : vector<128x256xf32> to vector<128xf32>
    %131 = vector.shape_cast %130 : vector<128xf32> to vector<128x1xf32>
    %cst_57 = arith.constant 2.560000e+02 : f32
    %132 = vector.broadcast %cst_57 : f32 to vector<128x1xf32>
    %133 = arith.divf %131, %132 : vector<128x1xf32>
    %cst_58 = arith.constant 9.99999997E-7 : f32
    %134 = vector.broadcast %cst_58 : f32 to vector<128x1xf32>
    %135 = arith.addf %133, %134 : vector<128x1xf32>
    %136 = math.rsqrt %135 : vector<128x1xf32>
    %137 = vector.broadcast %136 : vector<128x1xf32> to vector<128x256xf32>
    %138 = arith.mulf %125, %137 : vector<128x256xf32>
    %139 = vector.broadcast %126 : vector<1x256xf32> to vector<128x256xf32>
    %140 = arith.mulf %138, %139 : vector<128x256xf32>
    %141 = arith.truncf %140 : vector<128x256xf32> to vector<128x256xbf16>
    %cst_59 = arith.constant dense<0.000000e+00> : vector<128x512xf32>
    %142 = tpu.matmul %141, %127, %cst_59 {dimension_numbers = #tpu.dot_dimension_numbers<[1], [0], [0], [1], [0, 0, 1, 1], [], []>} : vector<128x256xbf16>, vector<256x512xbf16>, vector<128x512xf32> -> vector<128x512xf32>
    %cst_60 = arith.constant 0.000000e+00 : f32
    %143 = vector.broadcast %cst_60 : f32 to vector<128x512xf32>
    %144 = arith.maximumf %142, %143 : vector<128x512xf32>
    %145 = arith.truncf %144 : vector<128x512xf32> to vector<128x512xbf16>
    %cst_61 = arith.constant dense<0.000000e+00> : vector<128x256xf32>
    %146 = tpu.matmul %145, %128, %cst_61 {dimension_numbers = #tpu.dot_dimension_numbers<[1], [0], [0], [1], [0, 0, 1, 1], [], []>} : vector<128x512xbf16>, vector<512x256xbf16>, vector<128x256xf32> -> vector<128x256xf32>
    %147 = arith.addf %125, %146 : vector<128x256xf32>
    %c0_62 = arith.constant 0 : index
    %c0_63 = arith.constant 0 : index
    %148 = vector.load %arg11[%c0_62, %c0_63] : memref<256x128xbf16, #tpu.memory_space<vmem>>, vector<256x128xbf16>
    %149 = arith.truncf %1 : vector<128x256xf32> to vector<128x256xbf16>
    %cst_64 = arith.constant dense<0.000000e+00> : vector<128x128xf32>
    %150 = tpu.matmul %149, %148, %cst_64 {dimension_numbers = #tpu.dot_dimension_numbers<[1], [0], [0], [1], [0, 0, 1, 1], [], []>} : vector<128x256xbf16>, vector<256x128xbf16>, vector<128x128xf32> -> vector<128x128xf32>
    %c0_65 = arith.constant 0 : index
    %c0_66 = arith.constant 0 : index
    %151 = vector.load %arg12[%c0_65, %c0_66] : memref<256x128xbf16, #tpu.memory_space<vmem>>, vector<256x128xbf16>
    %152 = arith.truncf %147 : vector<128x256xf32> to vector<128x256xbf16>
    %cst_67 = arith.constant dense<0.000000e+00> : vector<128x128xf32>
    %153 = tpu.matmul %152, %151, %cst_67 {dimension_numbers = #tpu.dot_dimension_numbers<[1], [0], [0], [1], [0, 0, 1, 1], [], []>} : vector<128x256xbf16>, vector<256x128xbf16>, vector<128x128xf32> -> vector<128x128xf32>
    %154 = arith.addf %150, %153 : vector<128x128xf32>
    %c0_68 = arith.constant 0 : index
    %c0_69 = arith.constant 0 : index
    %155 = vector.load %arg13[%c0_68, %c0_69] : memref<1x128xf32, #tpu.memory_space<vmem>>, vector<1x128xf32>
    %c0_70 = arith.constant 0 : index
    %c0_71 = arith.constant 0 : index
    %156 = vector.load %arg14[%c0_70, %c0_71] : memref<128x128xbf16, #tpu.memory_space<vmem>>, vector<128x128xbf16>
    %c0_72 = arith.constant 0 : index
    %c0_73 = arith.constant 0 : index
    %157 = vector.load %arg15[%c0_72, %c0_73] : memref<128x128xbf16, #tpu.memory_space<vmem>>, vector<128x128xbf16>
    %c0_74 = arith.constant 0 : index
    %c0_75 = arith.constant 0 : index
    %158 = vector.load %arg16[%c0_74, %c0_75] : memref<128x128xbf16, #tpu.memory_space<vmem>>, vector<128x128xbf16>
    %c0_76 = arith.constant 0 : index
    %c0_77 = arith.constant 0 : index
    %159 = vector.load %arg17[%c0_76, %c0_77] : memref<128x128xbf16, #tpu.memory_space<vmem>>, vector<128x128xbf16>
    %160 = arith.mulf %154, %154 : vector<128x128xf32>
    %cst_78 = arith.constant dense<0.000000e+00> : vector<128xf32>
    %161 = vector.multi_reduction <add>, %160, %cst_78 [1] : vector<128x128xf32> to vector<128xf32>
    %162 = vector.shape_cast %161 : vector<128xf32> to vector<128x1xf32>
    %cst_79 = arith.constant 1.280000e+02 : f32
    %163 = vector.broadcast %cst_79 : f32 to vector<128x1xf32>
    %164 = arith.divf %162, %163 : vector<128x1xf32>
    %cst_80 = arith.constant 9.99999997E-7 : f32
    %165 = vector.broadcast %cst_80 : f32 to vector<128x1xf32>
    %166 = arith.addf %164, %165 : vector<128x1xf32>
    %167 = math.rsqrt %166 : vector<128x1xf32>
    %168 = vector.broadcast %167 : vector<128x1xf32> to vector<128x128xf32>
    %169 = arith.mulf %154, %168 : vector<128x128xf32>
    %170 = vector.broadcast %155 : vector<1x128xf32> to vector<128x128xf32>
    %171 = arith.mulf %169, %170 : vector<128x128xf32>
    %172 = arith.truncf %171 : vector<128x128xf32> to vector<128x128xbf16>
    %cst_81 = arith.constant dense<0.000000e+00> : vector<128x128xf32>
    %173 = tpu.matmul %172, %156, %cst_81 {dimension_numbers = #tpu.dot_dimension_numbers<[1], [0], [0], [1], [0, 0, 1, 1], [], []>} : vector<128x128xbf16>, vector<128x128xbf16>, vector<128x128xf32> -> vector<128x128xf32>
    %cst_82 = arith.constant dense<0.000000e+00> : vector<128x128xf32>
    %174 = tpu.matmul %172, %157, %cst_82 {dimension_numbers = #tpu.dot_dimension_numbers<[1], [0], [0], [1], [0, 0, 1, 1], [], []>} : vector<128x128xbf16>, vector<128x128xbf16>, vector<128x128xf32> -> vector<128x128xf32>
    %cst_83 = arith.constant dense<0.000000e+00> : vector<128x128xf32>
    %175 = tpu.matmul %172, %158, %cst_83 {dimension_numbers = #tpu.dot_dimension_numbers<[1], [0], [0], [1], [0, 0, 1, 1], [], []>} : vector<128x128xbf16>, vector<128x128xbf16>, vector<128x128xf32> -> vector<128x128xf32>
    %176 = vector.extract_strided_slice %173 {offsets = [0, 0], sizes = [128, 32], strides = [1, 1]} : vector<128x128xf32> to vector<128x32xf32>
    %177 = arith.truncf %176 : vector<128x32xf32> to vector<128x32xbf16>
    %178 = vector.extract_strided_slice %174 {offsets = [0, 0], sizes = [128, 32], strides = [1, 1]} : vector<128x128xf32> to vector<128x32xf32>
    %179 = arith.truncf %178 : vector<128x32xf32> to vector<128x32xbf16>
    %180 = vector.extract_strided_slice %175 {offsets = [0, 0], sizes = [128, 32], strides = [1, 1]} : vector<128x128xf32> to vector<128x32xf32>
    %181 = arith.truncf %180 : vector<128x32xf32> to vector<128x32xbf16>
    %cst_84 = arith.constant dense<0.000000e+00> : vector<128x128xf32>
    %182 = tpu.matmul %177, %179, %cst_84 {dimension_numbers = #tpu.dot_dimension_numbers<[1], [1], [0], [0], [0, 0, 1, 0], [], []>} : vector<128x32xbf16>, vector<128x32xbf16>, vector<128x128xf32> -> vector<128x128xf32>
    %c0_85 = arith.constant 0 : index
    %c0_86 = arith.constant 0 : index
    %c0_87 = arith.constant 0 : index
    %183 = vector.load %arg18[%c0_85, %c0_86, %c0_87] : memref<4x128x128xbf16, #tpu.memory_space<vmem>>, vector<1x128x128xbf16>
    %184 = vector.shape_cast %183 : vector<1x128x128xbf16> to vector<128x128xbf16>
    %185 = arith.extf %184 : vector<128x128xbf16> to vector<128x128xf32>
    %186 = arith.addf %182, %185 : vector<128x128xf32>
    %cst_88 = arith.constant dense<0xFF800000> : vector<128xf32>
    %187 = vector.multi_reduction <maximumf>, %186, %cst_88 [1] : vector<128x128xf32> to vector<128xf32>
    %188 = vector.shape_cast %187 : vector<128xf32> to vector<128x1xf32>
    %189 = vector.broadcast %188 : vector<128x1xf32> to vector<128x128xf32>
    %190 = arith.subf %186, %189 : vector<128x128xf32>
    %191 = math.exp %190 : vector<128x128xf32>
    %cst_89 = arith.constant dense<0.000000e+00> : vector<128xf32>
    %192 = vector.multi_reduction <add>, %191, %cst_89 [1] : vector<128x128xf32> to vector<128xf32>
    %193 = vector.shape_cast %192 : vector<128xf32> to vector<128x1xf32>
    %194 = tpu.reciprocal %193 {approx = true} : vector<128x1xf32> -> vector<128x1xf32>
    %195 = vector.broadcast %194 : vector<128x1xf32> to vector<128x128xf32>
    %196 = arith.mulf %191, %195 : vector<128x128xf32>
    %197 = arith.truncf %196 : vector<128x128xf32> to vector<128x128xbf16>
    %cst_90 = arith.constant dense<0.000000e+00> : vector<128x32xf32>
    %198 = tpu.matmul %197, %181, %cst_90 {dimension_numbers = #tpu.dot_dimension_numbers<[1], [0], [0], [1], [0, 0, 1, 1], [], []>} : vector<128x128xbf16>, vector<128x32xbf16>, vector<128x32xf32> -> vector<128x32xf32>
    %199 = arith.truncf %198 : vector<128x32xf32> to vector<128x32xbf16>
    %c0_91 = arith.constant 0 : index
    %c0_92 = arith.constant 0 : index
    %200 = vector.load %arg25[%c0_91, %c0_92] : memref<128x128xbf16, #tpu.memory_space<vmem>>, vector<128x32xbf16>
    tpu.vector_store %arg25[%c0_91, %c0_92], %199 {strides = array<i32>} : memref<128x128xbf16, #tpu.memory_space<vmem>>, vector<128x32xbf16>,
    %201 = vector.extract_strided_slice %173 {offsets = [0, 32], sizes = [128, 32], strides = [1, 1]} : vector<128x128xf32> to vector<128x32xf32>
    %202 = arith.truncf %201 : vector<128x32xf32> to vector<128x32xbf16>
    %203 = vector.extract_strided_slice %174 {offsets = [0, 32], sizes = [128, 32], strides = [1, 1]} : vector<128x128xf32> to vector<128x32xf32>
    %204 = arith.truncf %203 : vector<128x32xf32> to vector<128x32xbf16>
    %205 = vector.extract_strided_slice %175 {offsets = [0, 32], sizes = [128, 32], strides = [1, 1]} : vector<128x128xf32> to vector<128x32xf32>
    %206 = arith.truncf %205 : vector<128x32xf32> to vector<128x32xbf16>
    %cst_93 = arith.constant dense<0.000000e+00> : vector<128x128xf32>
    %207 = tpu.matmul %202, %204, %cst_93 {dimension_numbers = #tpu.dot_dimension_numbers<[1], [1], [0], [0], [0, 0, 1, 0], [], []>} : vector<128x32xbf16>, vector<128x32xbf16>, vector<128x128xf32> -> vector<128x128xf32>
    %c1_94 = arith.constant 1 : index
    %c0_95 = arith.constant 0 : index
    %c0_96 = arith.constant 0 : index
    %208 = vector.load %arg18[%c1_94, %c0_95, %c0_96] : memref<4x128x128xbf16, #tpu.memory_space<vmem>>, vector<1x128x128xbf16>
    %209 = vector.shape_cast %208 : vector<1x128x128xbf16> to vector<128x128xbf16>
    %210 = arith.extf %209 : vector<128x128xbf16> to vector<128x128xf32>
    %211 = arith.addf %207, %210 : vector<128x128xf32>
    %cst_97 = arith.constant dense<0xFF800000> : vector<128xf32>
    %212 = vector.multi_reduction <maximumf>, %211, %cst_97 [1] : vector<128x128xf32> to vector<128xf32>
    %213 = vector.shape_cast %212 : vector<128xf32> to vector<128x1xf32>
    %214 = vector.broadcast %213 : vector<128x1xf32> to vector<128x128xf32>
    %215 = arith.subf %211, %214 : vector<128x128xf32>
    %216 = math.exp %215 : vector<128x128xf32>
    %cst_98 = arith.constant dense<0.000000e+00> : vector<128xf32>
    %217 = vector.multi_reduction <add>, %216, %cst_98 [1] : vector<128x128xf32> to vector<128xf32>
    %218 = vector.shape_cast %217 : vector<128xf32> to vector<128x1xf32>
    %219 = tpu.reciprocal %218 {approx = true} : vector<128x1xf32> -> vector<128x1xf32>
    %220 = vector.broadcast %219 : vector<128x1xf32> to vector<128x128xf32>
    %221 = arith.mulf %216, %220 : vector<128x128xf32>
    %222 = arith.truncf %221 : vector<128x128xf32> to vector<128x128xbf16>
    %cst_99 = arith.constant dense<0.000000e+00> : vector<128x32xf32>
    %223 = tpu.matmul %222, %206, %cst_99 {dimension_numbers = #tpu.dot_dimension_numbers<[1], [0], [0], [1], [0, 0, 1, 1], [], []>} : vector<128x128xbf16>, vector<128x32xbf16>, vector<128x32xf32> -> vector<128x32xf32>
    %224 = arith.truncf %223 : vector<128x32xf32> to vector<128x32xbf16>
    %c0_100 = arith.constant 0 : index
    %c32 = arith.constant 32 : index
    %225 = vector.load %arg25[%c0_100, %c32] : memref<128x128xbf16, #tpu.memory_space<vmem>>, vector<128x32xbf16>
    tpu.vector_store %arg25[%c0_100, %c32], %224 {strides = array<i32>} : memref<128x128xbf16, #tpu.memory_space<vmem>>, vector<128x32xbf16>,
    %226 = vector.extract_strided_slice %173 {offsets = [0, 64], sizes = [128, 32], strides = [1, 1]} : vector<128x128xf32> to vector<128x32xf32>
    %227 = arith.truncf %226 : vector<128x32xf32> to vector<128x32xbf16>
    %228 = vector.extract_strided_slice %174 {offsets = [0, 64], sizes = [128, 32], strides = [1, 1]} : vector<128x128xf32> to vector<128x32xf32>
    %229 = arith.truncf %228 : vector<128x32xf32> to vector<128x32xbf16>
    %230 = vector.extract_strided_slice %175 {offsets = [0, 64], sizes = [128, 32], strides = [1, 1]} : vector<128x128xf32> to vector<128x32xf32>
    %231 = arith.truncf %230 : vector<128x32xf32> to vector<128x32xbf16>
    %cst_101 = arith.constant dense<0.000000e+00> : vector<128x128xf32>
    %232 = tpu.matmul %227, %229, %cst_101 {dimension_numbers = #tpu.dot_dimension_numbers<[1], [1], [0], [0], [0, 0, 1, 0], [], []>} : vector<128x32xbf16>, vector<128x32xbf16>, vector<128x128xf32> -> vector<128x128xf32>
    %c2_102 = arith.constant 2 : index
    %c0_103 = arith.constant 0 : index
    %c0_104 = arith.constant 0 : index
    %233 = vector.load %arg18[%c2_102, %c0_103, %c0_104] : memref<4x128x128xbf16, #tpu.memory_space<vmem>>, vector<1x128x128xbf16>
    %234 = vector.shape_cast %233 : vector<1x128x128xbf16> to vector<128x128xbf16>
    %235 = arith.extf %234 : vector<128x128xbf16> to vector<128x128xf32>
    %236 = arith.addf %232, %235 : vector<128x128xf32>
    %cst_105 = arith.constant dense<0xFF800000> : vector<128xf32>
    %237 = vector.multi_reduction <maximumf>, %236, %cst_105 [1] : vector<128x128xf32> to vector<128xf32>
    %238 = vector.shape_cast %237 : vector<128xf32> to vector<128x1xf32>
    %239 = vector.broadcast %238 : vector<128x1xf32> to vector<128x128xf32>
    %240 = arith.subf %236, %239 : vector<128x128xf32>
    %241 = math.exp %240 : vector<128x128xf32>
    %cst_106 = arith.constant dense<0.000000e+00> : vector<128xf32>
    %242 = vector.multi_reduction <add>, %241, %cst_106 [1] : vector<128x128xf32> to vector<128xf32>
    %243 = vector.shape_cast %242 : vector<128xf32> to vector<128x1xf32>
    %244 = tpu.reciprocal %243 {approx = true} : vector<128x1xf32> -> vector<128x1xf32>
    %245 = vector.broadcast %244 : vector<128x1xf32> to vector<128x128xf32>
    %246 = arith.mulf %241, %245 : vector<128x128xf32>
    %247 = arith.truncf %246 : vector<128x128xf32> to vector<128x128xbf16>
    %cst_107 = arith.constant dense<0.000000e+00> : vector<128x32xf32>
    %248 = tpu.matmul %247, %231, %cst_107 {dimension_numbers = #tpu.dot_dimension_numbers<[1], [0], [0], [1], [0, 0, 1, 1], [], []>} : vector<128x128xbf16>, vector<128x32xbf16>, vector<128x32xf32> -> vector<128x32xf32>
    %249 = arith.truncf %248 : vector<128x32xf32> to vector<128x32xbf16>
    %c0_108 = arith.constant 0 : index
    %c64_109 = arith.constant 64 : index
    %250 = vector.load %arg25[%c0_108, %c64_109] : memref<128x128xbf16, #tpu.memory_space<vmem>>, vector<128x32xbf16>
    tpu.vector_store %arg25[%c0_108, %c64_109], %249 {strides = array<i32>} : memref<128x128xbf16, #tpu.memory_space<vmem>>, vector<128x32xbf16>,
    %251 = vector.extract_strided_slice %173 {offsets = [0, 96], sizes = [128, 32], strides = [1, 1]} : vector<128x128xf32> to vector<128x32xf32>
    %252 = arith.truncf %251 : vector<128x32xf32> to vector<128x32xbf16>
    %253 = vector.extract_strided_slice %174 {offsets = [0, 96], sizes = [128, 32], strides = [1, 1]} : vector<128x128xf32> to vector<128x32xf32>
    %254 = arith.truncf %253 : vector<128x32xf32> to vector<128x32xbf16>
    %255 = vector.extract_strided_slice %175 {offsets = [0, 96], sizes = [128, 32], strides = [1, 1]} : vector<128x128xf32> to vector<128x32xf32>
    %256 = arith.truncf %255 : vector<128x32xf32> to vector<128x32xbf16>
    %cst_110 = arith.constant dense<0.000000e+00> : vector<128x128xf32>
    %257 = tpu.matmul %252, %254, %cst_110 {dimension_numbers = #tpu.dot_dimension_numbers<[1], [1], [0], [0], [0, 0, 1, 0], [], []>} : vector<128x32xbf16>, vector<128x32xbf16>, vector<128x128xf32> -> vector<128x128xf32>
    %c3_111 = arith.constant 3 : index
    %c0_112 = arith.constant 0 : index
    %c0_113 = arith.constant 0 : index
    %258 = vector.load %arg18[%c3_111, %c0_112, %c0_113] : memref<4x128x128xbf16, #tpu.memory_space<vmem>>, vector<1x128x128xbf16>
    %259 = vector.shape_cast %258 : vector<1x128x128xbf16> to vector<128x128xbf16>
    %260 = arith.extf %259 : vector<128x128xbf16> to vector<128x128xf32>
    %261 = arith.addf %257, %260 : vector<128x128xf32>
    %cst_114 = arith.constant dense<0xFF800000> : vector<128xf32>
    %262 = vector.multi_reduction <maximumf>, %261, %cst_114 [1] : vector<128x128xf32> to vector<128xf32>
    %263 = vector.shape_cast %262 : vector<128xf32> to vector<128x1xf32>
    %264 = vector.broadcast %263 : vector<128x1xf32> to vector<128x128xf32>
    %265 = arith.subf %261, %264 : vector<128x128xf32>
    %266 = math.exp %265 : vector<128x128xf32>
    %cst_115 = arith.constant dense<0.000000e+00> : vector<128xf32>
    %267 = vector.multi_reduction <add>, %266, %cst_115 [1] : vector<128x128xf32> to vector<128xf32>
    %268 = vector.shape_cast %267 : vector<128xf32> to vector<128x1xf32>
    %269 = tpu.reciprocal %268 {approx = true} : vector<128x1xf32> -> vector<128x1xf32>
    %270 = vector.broadcast %269 : vector<128x1xf32> to vector<128x128xf32>
    %271 = arith.mulf %266, %270 : vector<128x128xf32>
    %272 = arith.truncf %271 : vector<128x128xf32> to vector<128x128xbf16>
    %cst_116 = arith.constant dense<0.000000e+00> : vector<128x32xf32>
    %273 = tpu.matmul %272, %256, %cst_116 {dimension_numbers = #tpu.dot_dimension_numbers<[1], [0], [0], [1], [0, 0, 1, 1], [], []>} : vector<128x128xbf16>, vector<128x32xbf16>, vector<128x32xf32> -> vector<128x32xf32>
    %274 = arith.truncf %273 : vector<128x32xf32> to vector<128x32xbf16>
    %c0_117 = arith.constant 0 : index
    %c96 = arith.constant 96 : index
    %275 = vector.load %arg25[%c0_117, %c96] : memref<128x128xbf16, #tpu.memory_space<vmem>>, vector<128x32xbf16>
    tpu.vector_store %arg25[%c0_117, %c96], %274 {strides = array<i32>} : memref<128x128xbf16, #tpu.memory_space<vmem>>, vector<128x32xbf16>,
    %c0_118 = arith.constant 0 : index
    %c0_119 = arith.constant 0 : index
    %276 = vector.load %arg25[%c0_118, %c0_119] : memref<128x128xbf16, #tpu.memory_space<vmem>>, vector<128x128xbf16>
    %cst_120 = arith.constant dense<0.000000e+00> : vector<128x128xf32>
    %277 = tpu.matmul %276, %159, %cst_120 {dimension_numbers = #tpu.dot_dimension_numbers<[1], [0], [0], [1], [0, 0, 1, 1], [], []>} : vector<128x128xbf16>, vector<128x128xbf16>, vector<128x128xf32> -> vector<128x128xf32>
    %278 = arith.addf %154, %277 : vector<128x128xf32>
    %c0_121 = arith.constant 0 : index
    %c0_122 = arith.constant 0 : index
    %279 = vector.load %arg19[%c0_121, %c0_122] : memref<1x128xf32, #tpu.memory_space<vmem>>, vector<1x128xf32>
    %c0_123 = arith.constant 0 : index
    %c0_124 = arith.constant 0 : index
    %280 = vector.load %arg20[%c0_123, %c0_124] : memref<128x256xbf16, #tpu.memory_space<vmem>>, vector<128x256xbf16>
    %c0_125 = arith.constant 0 : index
    %c0_126 = arith.constant 0 : index
    %281 = vector.load %arg21[%c0_125, %c0_126] : memref<256x128xbf16, #tpu.memory_space<vmem>>, vector<256x128xbf16>
    %282 = arith.mulf %278, %278 : vector<128x128xf32>
    %cst_127 = arith.constant dense<0.000000e+00> : vector<128xf32>
    %283 = vector.multi_reduction <add>, %282, %cst_127 [1] : vector<128x128xf32> to vector<128xf32>
    %284 = vector.shape_cast %283 : vector<128xf32> to vector<128x1xf32>
    %cst_128 = arith.constant 1.280000e+02 : f32
    %285 = vector.broadcast %cst_128 : f32 to vector<128x1xf32>
    %286 = arith.divf %284, %285 : vector<128x1xf32>
    %cst_129 = arith.constant 9.99999997E-7 : f32
    %287 = vector.broadcast %cst_129 : f32 to vector<128x1xf32>
    %288 = arith.addf %286, %287 : vector<128x1xf32>
    %289 = math.rsqrt %288 : vector<128x1xf32>
    %290 = vector.broadcast %289 : vector<128x1xf32> to vector<128x128xf32>
    %291 = arith.mulf %278, %290 : vector<128x128xf32>
    %292 = vector.broadcast %279 : vector<1x128xf32> to vector<128x128xf32>
    %293 = arith.mulf %291, %292 : vector<128x128xf32>
    %294 = arith.truncf %293 : vector<128x128xf32> to vector<128x128xbf16>
    %cst_130 = arith.constant dense<0.000000e+00> : vector<128x256xf32>
    %295 = tpu.matmul %294, %280, %cst_130 {dimension_numbers = #tpu.dot_dimension_numbers<[1], [0], [0], [1], [0, 0, 1, 1], [], []>} : vector<128x128xbf16>, vector<128x256xbf16>, vector<128x256xf32> -> vector<128x256xf32>
    %cst_131 = arith.constant 0.000000e+00 : f32
    %296 = vector.broadcast %cst_131 : f32 to vector<128x256xf32>
    %297 = arith.maximumf %295, %296 : vector<128x256xf32>
    %298 = arith.truncf %297 : vector<128x256xf32> to vector<128x256xbf16>
    %cst_132 = arith.constant dense<0.000000e+00> : vector<128x128xf32>
    %299 = tpu.matmul %298, %281, %cst_132 {dimension_numbers = #tpu.dot_dimension_numbers<[1], [0], [0], [1], [0, 0, 1, 1], [], []>} : vector<128x256xbf16>, vector<256x128xbf16>, vector<128x128xf32> -> vector<128x128xf32>
    %300 = arith.addf %278, %299 : vector<128x128xf32>
    %c0_133 = arith.constant 0 : index
    %c0_134 = arith.constant 0 : index
    %c0_135 = arith.constant 0 : index
    %301 = vector.load %arg22[%c0_133, %c0_134, %c0_135] : memref<1x128x256xf32, #tpu.memory_space<vmem>>, vector<1x128x256xf32>
    %302 = vector.shape_cast %301 : vector<1x128x256xf32> to vector<128x256xf32>
    %303 = vector.shape_cast %147 : vector<128x256xf32> to vector<1x128x256xf32>
    tpu.vector_store %arg22[%c0_133, %c0_134, %c0_135], %303 {strides = array<i32>} : memref<1x128x256xf32, #tpu.memory_space<vmem>>, vector<1x128x256xf32>,
    %c0_136 = arith.constant 0 : index
    %c0_137 = arith.constant 0 : index
    %c0_138 = arith.constant 0 : index
    %304 = vector.load %arg23[%c0_136, %c0_137, %c0_138] : memref<1x128x128xf32, #tpu.memory_space<vmem>>, vector<1x128x128xf32>
    %305 = vector.shape_cast %304 : vector<1x128x128xf32> to vector<128x128xf32>
    %306 = vector.shape_cast %300 : vector<128x128xf32> to vector<1x128x128xf32>
    tpu.vector_store %arg23[%c0_136, %c0_137, %c0_138], %306 {strides = array<i32>} : memref<1x128x128xf32, #tpu.memory_space<vmem>>, vector<1x128x128xf32>,
    return
  }
  func.func @transform_0(%arg0: i32) -> (i32, i32, i32) {
    %c0_i32 = arith.constant 0 : i32
    %c0_i32_0 = arith.constant 0 : i32
    %c0_i32_1 = arith.constant 0 : i32
    return %arg0, %c0_i32, %c0_i32_0 : i32, i32, i32
  }
  func.func @transform_1(%arg0: i32) -> (i32, i32) {
    %c0_i32 = arith.constant 0 : i32
    %c0_i32_0 = arith.constant 0 : i32
    %c0_i32_1 = arith.constant 0 : i32
    return %c0_i32, %c0_i32_0 : i32, i32
  }
  func.func @transform_2(%arg0: i32) -> (i32, i32) {
    %c0_i32 = arith.constant 0 : i32
    %c0_i32_0 = arith.constant 0 : i32
    %c0_i32_1 = arith.constant 0 : i32
    return %c0_i32, %c0_i32_0 : i32, i32
  }
  func.func @transform_3(%arg0: i32) -> (i32, i32) {
    %c0_i32 = arith.constant 0 : i32
    %c0_i32_0 = arith.constant 0 : i32
    %c0_i32_1 = arith.constant 0 : i32
    return %c0_i32, %c0_i32_0 : i32, i32
  }
  func.func @transform_4(%arg0: i32) -> (i32, i32) {
    %c0_i32 = arith.constant 0 : i32
    %c0_i32_0 = arith.constant 0 : i32
    %c0_i32_1 = arith.constant 0 : i32
    return %c0_i32, %c0_i32_0 : i32, i32
  }
  func.func @transform_5(%arg0: i32) -> (i32, i32) {
    %c0_i32 = arith.constant 0 : i32
    %c0_i32_0 = arith.constant 0 : i32
    %c0_i32_1 = arith.constant 0 : i32
    return %c0_i32, %c0_i32_0 : i32, i32
  }
  func.func @transform_6(%arg0: i32) -> (i32, i32, i32) {
    %c0_i32 = arith.constant 0 : i32
    %c0_i32_0 = arith.constant 0 : i32
    %c0_i32_1 = arith.constant 0 : i32
    %c0_i32_2 = arith.constant 0 : i32
    return %c0_i32, %c0_i32_0, %c0_i32_1 : i32, i32, i32
  }
  func.func @transform_7(%arg0: i32) -> (i32, i32) {
    %c0_i32 = arith.constant 0 : i32
    %c0_i32_0 = arith.constant 0 : i32
    %c0_i32_1 = arith.constant 0 : i32
    return %c0_i32, %c0_i32_0 : i32, i32
  }
  func.func @transform_8(%arg0: i32) -> (i32, i32) {
    %c0_i32 = arith.constant 0 : i32
    %c0_i32_0 = arith.constant 0 : i32
    %c0_i32_1 = arith.constant 0 : i32
    return %c0_i32, %c0_i32_0 : i32, i32
  }
  func.func @transform_9(%arg0: i32) -> (i32, i32) {
    %c0_i32 = arith.constant 0 : i32
    %c0_i32_0 = arith.constant 0 : i32
    %c0_i32_1 = arith.constant 0 : i32
    return %c0_i32, %c0_i32_0 : i32, i32
  }
  func.func @transform_10(%arg0: i32) -> (i32, i32) {
    %c0_i32 = arith.constant 0 : i32
    %c0_i32_0 = arith.constant 0 : i32
    %c0_i32_1 = arith.constant 0 : i32
    return %c0_i32, %c0_i32_0 : i32, i32
  }
  func.func @transform_11(%arg0: i32) -> (i32, i32) {
    %c0_i32 = arith.constant 0 : i32
    %c0_i32_0 = arith.constant 0 : i32
    %c0_i32_1 = arith.constant 0 : i32
    return %c0_i32, %c0_i32_0 : i32, i32
  }
  func.func @transform_12(%arg0: i32) -> (i32, i32) {
    %c0_i32 = arith.constant 0 : i32
    %c0_i32_0 = arith.constant 0 : i32
    %c0_i32_1 = arith.constant 0 : i32
    return %c0_i32, %c0_i32_0 : i32, i32
  }
  func.func @transform_13(%arg0: i32) -> (i32, i32) {
    %c0_i32 = arith.constant 0 : i32
    %c0_i32_0 = arith.constant 0 : i32
    %c0_i32_1 = arith.constant 0 : i32
    return %c0_i32, %c0_i32_0 : i32, i32
  }
  func.func @transform_14(%arg0: i32) -> (i32, i32) {
    %c0_i32 = arith.constant 0 : i32
    %c0_i32_0 = arith.constant 0 : i32
    %c0_i32_1 = arith.constant 0 : i32
    return %c0_i32, %c0_i32_0 : i32, i32
  }
  func.func @transform_15(%arg0: i32) -> (i32, i32) {
    %c0_i32 = arith.constant 0 : i32
    %c0_i32_0 = arith.constant 0 : i32
    %c0_i32_1 = arith.constant 0 : i32
    return %c0_i32, %c0_i32_0 : i32, i32
  }
  func.func @transform_16(%arg0: i32) -> (i32, i32) {
    %c0_i32 = arith.constant 0 : i32
    %c0_i32_0 = arith.constant 0 : i32
    %c0_i32_1 = arith.constant 0 : i32
    return %c0_i32, %c0_i32_0 : i32, i32
  }
  func.func @transform_17(%arg0: i32) -> (i32, i32, i32) {
    %c0_i32 = arith.constant 0 : i32
    %c0_i32_0 = arith.constant 0 : i32
    %c0_i32_1 = arith.constant 0 : i32
    %c0_i32_2 = arith.constant 0 : i32
    return %c0_i32, %c0_i32_0, %c0_i32_1 : i32, i32, i32
  }
  func.func @transform_18(%arg0: i32) -> (i32, i32) {
    %c0_i32 = arith.constant 0 : i32
    %c0_i32_0 = arith.constant 0 : i32
    %c0_i32_1 = arith.constant 0 : i32
    return %c0_i32, %c0_i32_0 : i32, i32
  }
  func.func @transform_19(%arg0: i32) -> (i32, i32) {
    %c0_i32 = arith.constant 0 : i32
    %c0_i32_0 = arith.constant 0 : i32
    %c0_i32_1 = arith.constant 0 : i32
    return %c0_i32, %c0_i32_0 : i32, i32
  }
  func.func @transform_20(%arg0: i32) -> (i32, i32) {
    %c0_i32 = arith.constant 0 : i32
    %c0_i32_0 = arith.constant 0 : i32
    %c0_i32_1 = arith.constant 0 : i32
    return %c0_i32, %c0_i32_0 : i32, i32
  }
  func.func @transform_21(%arg0: i32) -> (i32, i32, i32) {
    %c0_i32 = arith.constant 0 : i32
    %c0_i32_0 = arith.constant 0 : i32
    %c0_i32_1 = arith.constant 0 : i32
    return %arg0, %c0_i32, %c0_i32_0 : i32, i32, i32
  }
  func.func @transform_22(%arg0: i32) -> (i32, i32, i32) {
    %c0_i32 = arith.constant 0 : i32
    %c0_i32_0 = arith.constant 0 : i32
    %c0_i32_1 = arith.constant 0 : i32
    return %arg0, %c0_i32, %c0_i32_0 : i32, i32, i32
  }
}

</mosaic_0001>

<llo_original>
// kernel: tpu_custom_call.1
$region0: #{tpu_custom_call.1}
  #allocation0 [shape = 'u32[]', space=smem, size = 0x4, offset = 0x4, fixed_abs, tag = 'smem constant byte address 0x4 - core index']
  #allocation1 [shape = 'u32[144,128]{1,0:T(1,128)}', space=vmem, size = 0x12000, scoped, tag = 'internal scratch']
  #allocation2 [shape = 'bf16[128,256]{1,0:T(16,128)(2,1)}', space=vmem, size = 0x10000, scoped, tag = 'scratch operand']
  #allocation3 [shape = 'bf16[128,128]{1,0:T(16,128)(2,1)}', space=vmem, size = 0x8000, scoped, tag = 'scratch operand']
  %s0 = inlined_call_operand.hbm [shape: f32[2,128,256], index: 0, kind: input, shape index: {}]
  %s1 = inlined_call_operand.vmem [shape: f32[1,256], index: 1, kind: input, shape index: {}]
  %s2 = inlined_call_operand.hbm [shape: bf16[256,256], index: 2, kind: input, shape index: {}]
  %s3 = inlined_call_operand.hbm [shape: bf16[256,256], index: 3, kind: input, shape index: {}]
  %s4 = inlined_call_operand.hbm [shape: bf16[256,256], index: 4, kind: input, shape index: {}]
  %s5 = inlined_call_operand.hbm [shape: bf16[256,256], index: 5, kind: input, shape index: {}]
  %s6 = inlined_call_operand.hbm [shape: bf16[4,128,128], index: 6, kind: input, shape index: {}]
  %s7 = inlined_call_operand.vmem [shape: f32[1,256], index: 7, kind: input, shape index: {}]
  %s8 = inlined_call_operand.hbm [shape: bf16[256,512], index: 8, kind: input, shape index: {}]
  %s9 = inlined_call_operand.hbm [shape: bf16[512,256], index: 9, kind: input, shape index: {}]
  %s10 = inlined_call_operand.hbm [shape: bf16[256,128], index: 10, kind: input, shape index: {}]
  %s11 = inlined_call_operand.hbm [shape: bf16[256,128], index: 11, kind: input, shape index: {}]
  %s12 = inlined_call_operand.vmem [shape: f32[1,128], index: 12, kind: input, shape index: {}]
  %s13 = inlined_call_operand.hbm [shape: bf16[128,128], index: 13, kind: input, shape index: {}]
  %s14 = inlined_call_operand.hbm [shape: bf16[128,128], index: 14, kind: input, shape index: {}]
  %s15 = inlined_call_operand.hbm [shape: bf16[128,128], index: 15, kind: input, shape index: {}]
  %s16 = inlined_call_operand.hbm [shape: bf16[128,128], index: 16, kind: input, shape index: {}]
  %s17 = inlined_call_operand.hbm [shape: bf16[4,128,128], index: 17, kind: input, shape index: {}]
  %s18 = inlined_call_operand.vmem [shape: f32[1,128], index: 18, kind: input, shape index: {}]
  %s19 = inlined_call_operand.hbm [shape: bf16[128,256], index: 19, kind: input, shape index: {}]
  %s20 = inlined_call_operand.hbm [shape: bf16[256,128], index: 20, kind: input, shape index: {}]
  %s21 = inlined_call_operand.hbm [shape: f32[2,128,256], index: 21, kind: output, shape index: {0}]
  %s22 = inlined_call_operand.hbm [shape: f32[2,128,128], index: 22, kind: output, shape index: {1}]
  %23 = xla_tuple %s21, %s22
  %s24 = sld [smem:[#allocation0]]
  $region193: #{tpu_custom_call.1} parent=0
    _
  %s26 = ssub.s32 1, %s24
  %s27 = scalar_select 0, %s26, %s24
  $region1: #{tpu_custom_call.1} parent=0
    #allocation4 [shape = 'u8[262144]{0}', space=vmem, size = 0x40000, scoped, tag = 'input window, operand 0']
    #allocation5 [shape = 's32[2]{0}', space=sflag, size = 0x8, scoped, tag = 'scoped memory for tpu_custom_call.1']
    #allocation6 [shape = 's32[2]{0}', space=sflag, size = 0x8, scoped, tag = 'scoped memory for tpu_custom_call.1']
    #allocation7 [shape = 'u8[131072]{0}', space=vmem, size = 0x20000, scoped, tag = 'input window, operand 2, single buffered']
    #allocation8 [shape = 's32[1]{0}', space=sflag, size = 0x4, scoped, tag = 'scoped memory for tpu_custom_call.1']
    #allocation9 [shape = 'u8[131072]{0}', space=vmem, size = 0x20000, scoped, tag = 'input window, operand 3, single buffered']
    #allocation10 [shape = 'u8[131072]{0}', space=vmem, size = 0x20000, scoped, tag = 'input window, operand 4, single buffered']
    #allocation11 [shape = 's32[1]{0}', space=sflag, size = 0x4, scoped, tag = 'scoped memory for tpu_custom_call.1']
    #allocation12 [shape = 'u8[131072]{0}', space=vmem, size = 0x20000, scoped, tag = 'input window, operand 5, single buffered']
    #allocation13 [shape = 'u8[131072]{0}', space=vmem, size = 0x20000, scoped, tag = 'input window, operand 6, single buffered']
    #allocation14 [shape = 's32[1]{0}', space=sflag, size = 0x4, scoped, tag = 'scoped memory for tpu_custom_call.1']
    #allocation15 [shape = 'u8[262144]{0}', space=vmem, size = 0x40000, scoped, tag = 'input window, operand 8, single buffered']
    #allocation16 [shape = 'u8[262144]{0}', space=vmem, size = 0x40000, scoped, tag = 'input window, operand 9, single buffered']
    #allocation17 [shape = 's32[1]{0}', space=sflag, size = 0x4, scoped, tag = 'scoped memory for tpu_custom_call.1']
    #allocation18 [shape = 'u8[65536]{0}', space=vmem, size = 0x10000, scoped, tag = 'input window, operand 10, single buffered']
    #allocation19 [shape = 'u8[65536]{0}', space=vmem, size = 0x10000, scoped, tag = 'input window, operand 11, single buffered']
    #allocation20 [shape = 's32[1]{0}', space=sflag, size = 0x4, scoped, tag = 'scoped memory for tpu_custom_call.1']
    #allocation21 [shape = 'u8[32768]{0}', space=vmem, size = 0x8000, scoped, tag = 'input window, operand 13, single buffered']
    #allocation22 [shape = 'u8[32768]{0}', space=vmem, size = 0x8000, scoped, tag = 'input window, operand 14, single buffered']
    #allocation23 [shape = 's32[1]{0}', space=sflag, size = 0x4, scoped, tag = 'scoped memory for tpu_custom_call.1']
    #allocation24 [shape = 'u8[32768]{0}', space=vmem, size = 0x8000, scoped, tag = 'input window, operand 15, single buffered']
    #allocation25 [shape = 'u8[32768]{0}', space=vmem, size = 0x8000, scoped, tag = 'input window, operand 16, single buffered']
    #allocation26 [shape = 's32[1]{0}', space=sflag, size = 0x4, scoped, tag = 'scoped memory for tpu_custom_call.1']
    #allocation27 [shape = 'u8[131072]{0}', space=vmem, size = 0x20000, scoped, tag = 'input window, operand 17, single buffered']
    #allocation28 [shape = 'u8[65536]{0}', space=vmem, size = 0x10000, scoped, tag = 'input window, operand 19, single buffered']
    #allocation29 [shape = 's32[1]{0}', space=sflag, size = 0x4, scoped, tag = 'scoped memory for tpu_custom_call.1']
    #allocation30 [shape = 'u8[65536]{0}', space=vmem, size = 0x10000, scoped, tag = 'input window, operand 20, single buffered']
    #allocation31 [shape = 'u8[262144]{0}', space=vmem, size = 0x40000, scoped, tag = 'output window, operand 0']
    #allocation32 [shape = 'u8[131072]{0}', space=vmem, size = 0x20000, scoped, tag = 'output window, operand 1']
    #allocation33 [shape = 's32[2]{0}', space=sflag, size = 0x8, scoped, tag = 'scoped memory for tpu_custom_call.1']
    %28 = vsyncpa [#allocation5], 0
    %s29 = scalar_lea.sflag [#allocation5], 1
    %30 = vsyncpa %s29, 0
    %31 = vsyncpa [#allocation8], 0
    %32 = vsyncpa [#allocation11], 0
    %33 = vsyncpa [#allocation14], 0
    %34 = vsyncpa [#allocation17], 0
    %35 = vsyncpa [#allocation20], 0
    %36 = vsyncpa [#allocation23], 0
    %37 = vsyncpa [#allocation26], 0
    %38 = vsyncpa [#allocation29], 0
    %39 = vsyncpa [#allocation6], 0
    %s40 = scalar_lea.sflag [#allocation6], 1
    %41 = vsyncpa %s40, 0
    %42 = vsyncpa [#allocation33], 0
    %s43 = scalar_lea.sflag [#allocation33], 1
    %44 = vsyncpa %s43, 0
    loop: start=0, step=1, limit=4
    $region2: #{tpu_custom_call.1} parent=1 // loop_pre_header
      _
    $region3: #{tpu_custom_call.1} parent=1 // loop_header
      %s46 = sphi 0, %s50
      %p47 = scmp.ge.s32.totalorder %s46, 4
      %s56 = sphi 0, %s58
      %s59 = sphi 0, %s56
      %s60 = sphi 0, %s59
      %s76 = sphi 0, %s60
      %s80 = sphi 0, %s80
      %s82 = sphi 0, %s80
      %s83 = sphi 0, %s82
      %s97 = sphi 0, %s83
      %s101 = sphi 0, %s101
      %s103 = sphi 0, %s101
      %s104 = sphi 0, %s103
      %s118 = sphi 0, %s104
      %s122 = sphi 0, %s122
      %s124 = sphi 0, %s122
      %s125 = sphi 0, %s124
      %s139 = sphi 0, %s125
      %s143 = sphi 0, %s143
      %s145 = sphi 0, %s143
      %s146 = sphi 0, %s145
      %s160 = sphi 0, %s146
      %s164 = sphi 0, %s164
      %s166 = sphi 0, %s164
      %s167 = sphi 0, %s166
      %s181 = sphi 0, %s167
      %s185 = sphi 0, %s185
      %s187 = sphi 0, %s185
      %s188 = sphi 0, %s187
      %s202 = sphi 0, %s188
      %s206 = sphi 0, %s206
      %s208 = sphi 0, %s206
      %s209 = sphi 0, %s208
      %s223 = sphi 0, %s209
      %s227 = sphi 0, %s227
      %s229 = sphi 0, %s227
      %s230 = sphi 0, %s229
      %s244 = sphi 0, %s230
      %s248 = sphi 0, %s248
      %s250 = sphi 0, %s248
      %s251 = sphi 0, %s250
      %s265 = sphi 0, %s251
      %s269 = sphi 0, %s269
      %s271 = sphi 0, %s269
      %s272 = sphi 0, %s271
      %s286 = sphi 0, %s272
      %s290 = sphi 0, %s290
      %s292 = sphi 0, %s290
      %s293 = sphi 0, %s292
      %s307 = sphi 0, %s293
      %s311 = sphi 0, %s311
      %s313 = sphi 0, %s311
      %s314 = sphi 0, %s313
      %s328 = sphi 0, %s314
      %s332 = sphi 0, %s332
      %s334 = sphi 0, %s332
      %s335 = sphi 0, %s334
      %s349 = sphi 0, %s335
      %s353 = sphi 0, %s353
      %s355 = sphi 0, %s353
      %s356 = sphi 0, %s355
      %s370 = sphi 0, %s356
      %s374 = sphi 0, %s374
      %s376 = sphi 0, %s374
      %s377 = sphi 0, %s376
      %s391 = sphi 0, %s377
      %s395 = sphi 0, %s395
      %s397 = sphi 0, %s395
      %s398 = sphi 0, %s397
      %s412 = sphi 0, %s398
      %s416 = sphi 0, %s416
      %s418 = sphi 0, %s416
      %s419 = sphi 0, %s418
      %s433 = sphi 0, %s419
      %s437 = sphi 0, %s437
      %s439 = sphi 0, %s437
      %s440 = sphi 0, %s439
      %s454 = sphi 0, %s440
      %s458 = sphi 0, %s458
      %s460 = sphi 0, %s458
      %s461 = sphi 0, %s460
      %s475 = sphi 0, %s461
      %s479 = sphi 0, %s479
      %s481 = sphi 0, %s479
      %s482 = sphi 0, %s481
      %s496 = sphi 0, %s482
      %s502 = sphi 0, %s504
      %s505 = sphi 0, %s502
      %s506 = sphi 0, %s505
      %s522 = sphi 0, %s506
      %s528 = sphi 0, %s530
      %s531 = sphi 0, %s528
      %s532 = sphi 0, %s531
      %s548 = sphi 0, %s532
    $region4: #{tpu_custom_call.1} parent=1 // loop_header_branch
      %49 = sbr.rel (%p47) target = $region8
    $region5: #{tpu_custom_call.1} parent=1 // loop_body
      %s51 = ssub.s32 %s46, 1
      %s52 = ssub.s32 %s46, 2
      %s53 = sadd.s32 %s46, 1
      %s54 = ssub.s32 %s46, %s53
      %p55 = scmp.eq.s32.totalorder %s54, 0
      %s57 = sadd.s32 %s56, 1
      %s58 = scalar_select %p55, %s56, %s57
      %p61 = pneg %p55
      %p62 = scmp.eq.s32.totalorder %s46, 1
      %p63 = por %p61, %p62
      %p64 = scmp.ne.s32.totalorder %s56, %s59
      %p65 = scmp.eq.s32.totalorder %s46, 0
      %p66 = por %p64, %p65
      %p67 = scmp.ne.s32.totalorder %s56, %s59
      %p68 = scmp.eq.s32.totalorder %s51, 1
      %p69 = por %p67, %p68
      %p70 = scmp.ne.s32.totalorder %s59, %s60
      %p71 = scmp.eq.s32.totalorder %s51, 0
      %p72 = por %p70, %p71
      %p73 = scmp.ne.s32.totalorder %s59, %s60
      %p74 = scmp.eq.s32.totalorder %s52, 1
      %p75 = por %p73, %p74
      %p77 = scmp.ne.s32.totalorder %s60, %s76
      %p78 = scmp.eq.s32.totalorder %s52, 0
      %p79 = por %p77, %p78
      %s81 = sadd.s32 %s80, 1
      %p84 = scmp.eq.s32.totalorder %s46, 1
      %p85 = scmp.ne.s32.totalorder %s80, %s82
      %p86 = scmp.eq.s32.totalorder %s46, 0
      %p87 = por %p85, %p86
      %p88 = scmp.ne.s32.totalorder %s80, %s82
      %p89 = scmp.eq.s32.totalorder %s51, 1
      %p90 = por %p88, %p89
      %p91 = scmp.ne.s32.totalorder %s82, %s83
      %p92 = scmp.eq.s32.totalorder %s51, 0
      %p93 = por %p91, %p92
      %p94 = scmp.ne.s32.totalorder %s82, %s83
      %p95 = scmp.eq.s32.totalorder %s52, 1
      %p96 = por %p94, %p95
      %p98 = scmp.ne.s32.totalorder %s83, %s97
      %p99 = scmp.eq.s32.totalorder %s52, 0
      %p100 = por %p98, %p99
      %s102 = sadd.s32 %s101, 1
      %p105 = scmp.eq.s32.totalorder %s46, 1
      %p106 = scmp.ne.s32.totalorder %s101, %s103
      %p107 = scmp.eq.s32.totalorder %s46, 0
      %p108 = por %p106, %p107
      %p109 = scmp.ne.s32.totalorder %s101, %s103
      %p110 = scmp.eq.s32.totalorder %s51, 1
      %p111 = por %p109, %p110
      %p112 = scmp.ne.s32.totalorder %s103, %s104
      %p113 = scmp.eq.s32.totalorder %s51, 0
      %p114 = por %p112, %p113
      %p115 = scmp.ne.s32.totalorder %s103, %s104
      %p116 = scmp.eq.s32.totalorder %s52, 1
      %p117 = por %p115, %p116
      %p119 = scmp.ne.s32.totalorder %s104, %s118
      %p120 = scmp.eq.s32.totalorder %s52, 0
      %p121 = por %p119, %p120
      %s123 = sadd.s32 %s122, 1
      %p126 = scmp.eq.s32.totalorder %s46, 1
      %p127 = scmp.ne.s32.totalorder %s122, %s124
      %p128 = scmp.eq.s32.totalorder %s46, 0
      %p129 = por %p127, %p128
      %p130 = scmp.ne.s32.totalorder %s122, %s124
      %p131 = scmp.eq.s32.totalorder %s51, 1
      %p132 = por %p130, %p131
      %p133 = scmp.ne.s32.totalorder %s124, %s125
      %p134 = scmp.eq.s32.totalorder %s51, 0
      %p135 = por %p133, %p134
      %p136 = scmp.ne.s32.totalorder %s124, %s125
      %p137 = scmp.eq.s32.totalorder %s52, 1
      %p138 = por %p136, %p137
      %p140 = scmp.ne.s32.totalorder %s125, %s139
      %p141 = scmp.eq.s32.totalorder %s52, 0
      %p142 = por %p140, %p141
      %s144 = sadd.s32 %s143, 1
      %p147 = scmp.eq.s32.totalorder %s46, 1
      %p148 = scmp.ne.s32.totalorder %s143, %s145
      %p149 = scmp.eq.s32.totalorder %s46, 0
      %p150 = por %p148, %p149
      %p151 = scmp.ne.s32.totalorder %s143, %s145
      %p152 = scmp.eq.s32.totalorder %s51, 1
      %p153 = por %p151, %p152
      %p154 = scmp.ne.s32.totalorder %s145, %s146
      %p155 = scmp.eq.s32.totalorder %s51, 0
      %p156 = por %p154, %p155
      %p157 = scmp.ne.s32.totalorder %s145, %s146
      %p158 = scmp.eq.s32.totalorder %s52, 1
      %p159 = por %p157, %p158
      %p161 = scmp.ne.s32.totalorder %s146, %s160
      %p162 = scmp.eq.s32.totalorder %s52, 0
      %p163 = por %p161, %p162
      %s165 = sadd.s32 %s164, 1
      %p168 = scmp.eq.s32.totalorder %s46, 1
      %p169 = scmp.ne.s32.totalorder %s164, %s166
      %p170 = scmp.eq.s32.totalorder %s46, 0
      %p171 = por %p169, %p170
      %p172 = scmp.ne.s32.totalorder %s164, %s166
      %p173 = scmp.eq.s32.totalorder %s51, 1
      %p174 = por %p172, %p173
      %p175 = scmp.ne.s32.totalorder %s166, %s167
      %p176 = scmp.eq.s32.totalorder %s51, 0
      %p177 = por %p175, %p176
      %p178 = scmp.ne.s32.totalorder %s166, %s167
      %p179 = scmp.eq.s32.totalorder %s52, 1
      %p180 = por %p178, %p179
      %p182 = scmp.ne.s32.totalorder %s167, %s181
      %p183 = scmp.eq.s32.totalorder %s52, 0
      %p184 = por %p182, %p183
      %s186 = sadd.s32 %s185, 1
      %p189 = scmp.eq.s32.totalorder %s46, 1
      %p190 = scmp.ne.s32.totalorder %s185, %s187
      %p191 = scmp.eq.s32.totalorder %s46, 0
      %p192 = por %p190, %p191
      %p193 = scmp.ne.s32.totalorder %s185, %s187
      %p194 = scmp.eq.s32.totalorder %s51, 1
      %p195 = por %p193, %p194
      %p196 = scmp.ne.s32.totalorder %s187, %s188
      %p197 = scmp.eq.s32.totalorder %s51, 0
      %p198 = por %p196, %p197
      %p199 = scmp.ne.s32.totalorder %s187, %s188
      %p200 = scmp.eq.s32.totalorder %s52, 1
      %p201 = por %p199, %p200
      %p203 = scmp.ne.s32.totalorder %s188, %s202
      %p204 = scmp.eq.s32.totalorder %s52, 0
      %p205 = por %p203, %p204
      %s207 = sadd.s32 %s206, 1
      %p210 = scmp.eq.s32.totalorder %s46, 1
      %p211 = scmp.ne.s32.totalorder %s206, %s208
      %p212 = scmp.eq.s32.totalorder %s46, 0
      %p213 = por %p211, %p212
      %p214 = scmp.ne.s32.totalorder %s206, %s208
      %p215 = scmp.eq.s32.totalorder %s51, 1
      %p216 = por %p214, %p215
      %p217 = scmp.ne.s32.totalorder %s208, %s209
      %p218 = scmp.eq.s32.totalorder %s51, 0
      %p219 = por %p217, %p218
      %p220 = scmp.ne.s32.totalorder %s208, %s209
      %p221 = scmp.eq.s32.totalorder %s52, 1
      %p222 = por %p220, %p221
      %p224 = scmp.ne.s32.totalorder %s209, %s223
      %p225 = scmp.eq.s32.totalorder %s52, 0
      %p226 = por %p224, %p225
      %s228 = sadd.s32 %s227, 1
      %p231 = scmp.eq.s32.totalorder %s46, 1
      %p232 = scmp.ne.s32.totalorder %s227, %s229
      %p233 = scmp.eq.s32.totalorder %s46, 0
      %p234 = por %p232, %p233
      %p235 = scmp.ne.s32.totalorder %s227, %s229
      %p236 = scmp.eq.s32.totalorder %s51, 1
      %p237 = por %p235, %p236
      %p238 = scmp.ne.s32.totalorder %s229, %s230
      %p239 = scmp.eq.s32.totalorder %s51, 0
      %p240 = por %p238, %p239
      %p241 = scmp.ne.s32.totalorder %s229, %s230
      %p242 = scmp.eq.s32.totalorder %s52, 1
      %p243 = por %p241, %p242
      %p245 = scmp.ne.s32.totalorder %s230, %s244
      %p246 = scmp.eq.s32.totalorder %s52, 0
      %p247 = por %p245, %p246
      %s249 = sadd.s32 %s248, 1
      %p252 = scmp.eq.s32.totalorder %s46, 1
      %p253 = scmp.ne.s32.totalorder %s248, %s250
      %p254 = scmp.eq.s32.totalorder %s46, 0
      %p255 = por %p253, %p254
      %p256 = scmp.ne.s32.totalorder %s248, %s250
      %p257 = scmp.eq.s32.totalorder %s51, 1
      %p258 = por %p256, %p257
      %p259 = scmp.ne.s32.totalorder %s250, %s251
      %p260 = scmp.eq.s32.totalorder %s51, 0
      %p261 = por %p259, %p260
      %p262 = scmp.ne.s32.totalorder %s250, %s251
      %p263 = scmp.eq.s32.totalorder %s52, 1
      %p264 = por %p262, %p263
      %p266 = scmp.ne.s32.totalorder %s251, %s265
      %p267 = scmp.eq.s32.totalorder %s52, 0
      %p268 = por %p266, %p267
      %s270 = sadd.s32 %s269, 1
      %p273 = scmp.eq.s32.totalorder %s46, 1
      %p274 = scmp.ne.s32.totalorder %s269, %s271
      %p275 = scmp.eq.s32.totalorder %s46, 0
      %p276 = por %p274, %p275
      %p277 = scmp.ne.s32.totalorder %s269, %s271
      %p278 = scmp.eq.s32.totalorder %s51, 1
      %p279 = por %p277, %p278
      %p280 = scmp.ne.s32.totalorder %s271, %s272
      %p281 = scmp.eq.s32.totalorder %s51, 0
      %p282 = por %p280, %p281
      %p283 = scmp.ne.s32.totalorder %s271, %s272
      %p284 = scmp.eq.s32.totalorder %s52, 1
      %p285 = por %p283, %p284
      %p287 = scmp.ne.s32.totalorder %s272, %s286
      %p288 = scmp.eq.s32.totalorder %s52, 0
      %p289 = por %p287, %p288
      %s291 = sadd.s32 %s290, 1
      %p294 = scmp.eq.s32.totalorder %s46, 1
      %p295 = scmp.ne.s32.totalorder %s290, %s292
      %p296 = scmp.eq.s32.totalorder %s46, 0
      %p297 = por %p295, %p296
      %p298 = scmp.ne.s32.totalorder %s290, %s292
      %p299 = scmp.eq.s32.totalorder %s51, 1
      %p300 = por %p298, %p299
      %p301 = scmp.ne.s32.totalorder %s292, %s293
      %p302 = scmp.eq.s32.totalorder %s51, 0
      %p303 = por %p301, %p302
      %p304 = scmp.ne.s32.totalorder %s292, %s293
      %p305 = scmp.eq.s32.totalorder %s52, 1
      %p306 = por %p304, %p305
      %p308 = scmp.ne.s32.totalorder %s293, %s307
      %p309 = scmp.eq.s32.totalorder %s52, 0
      %p310 = por %p308, %p309
      %s312 = sadd.s32 %s311, 1
      %p315 = scmp.eq.s32.totalorder %s46, 1
      %p316 = scmp.ne.s32.totalorder %s311, %s313
      %p317 = scmp.eq.s32.totalorder %s46, 0
      %p318 = por %p316, %p317
      %p319 = scmp.ne.s32.totalorder %s311, %s313
      %p320 = scmp.eq.s32.totalorder %s51, 1
      %p321 = por %p319, %p320
      %p322 = scmp.ne.s32.totalorder %s313, %s314
      %p323 = scmp.eq.s32.totalorder %s51, 0
      %p324 = por %p322, %p323
      %p325 = scmp.ne.s32.totalorder %s313, %s314
      %p326 = scmp.eq.s32.totalorder %s52, 1
      %p327 = por %p325, %p326
      %p329 = scmp.ne.s32.totalorder %s314, %s328
      %p330 = scmp.eq.s32.totalorder %s52, 0
      %p331 = por %p329, %p330
      %s333 = sadd.s32 %s332, 1
      %p336 = scmp.eq.s32.totalorder %s46, 1
      %p337 = scmp.ne.s32.totalorder %s332, %s334
      %p338 = scmp.eq.s32.totalorder %s46, 0
      %p339 = por %p337, %p338
      %p340 = scmp.ne.s32.totalorder %s332, %s334
      %p341 = scmp.eq.s32.totalorder %s51, 1
      %p342 = por %p340, %p341
      %p343 = scmp.ne.s32.totalorder %s334, %s335
      %p344 = scmp.eq.s32.totalorder %s51, 0
      %p345 = por %p343, %p344
      %p346 = scmp.ne.s32.totalorder %s334, %s335
      %p347 = scmp.eq.s32.totalorder %s52, 1
      %p348 = por %p346, %p347
      %p350 = scmp.ne.s32.totalorder %s335, %s349
      %p351 = scmp.eq.s32.totalorder %s52, 0
      %p352 = por %p350, %p351
      %s354 = sadd.s32 %s353, 1
      %p357 = scmp.eq.s32.totalorder %s46, 1
      %p358 = scmp.ne.s32.totalorder %s353, %s355
      %p359 = scmp.eq.s32.totalorder %s46, 0
      %p360 = por %p358, %p359
      %p361 = scmp.ne.s32.totalorder %s353, %s355
      %p362 = scmp.eq.s32.totalorder %s51, 1
      %p363 = por %p361, %p362
      %p364 = scmp.ne.s32.totalorder %s355, %s356
      %p365 = scmp.eq.s32.totalorder %s51, 0
      %p366 = por %p364, %p365
      %p367 = scmp.ne.s32.totalorder %s355, %s356
      %p368 = scmp.eq.s32.totalorder %s52, 1
      %p369 = por %p367, %p368
      %p371 = scmp.ne.s32.totalorder %s356, %s370
      %p372 = scmp.eq.s32.totalorder %s52, 0
      %p373 = por %p371, %p372
      %s375 = sadd.s32 %s374, 1
      %p378 = scmp.eq.s32.totalorder %s46, 1
      %p379 = scmp.ne.s32.totalorder %s374, %s376
      %p380 = scmp.eq.s32.totalorder %s46, 0
      %p381 = por %p379, %p380
      %p382 = scmp.ne.s32.totalorder %s374, %s376
      %p383 = scmp.eq.s32.totalorder %s51, 1
      %p384 = por %p382, %p383
      %p385 = scmp.ne.s32.totalorder %s376, %s377
      %p386 = scmp.eq.s32.totalorder %s51, 0
      %p387 = por %p385, %p386
      %p388 = scmp.ne.s32.totalorder %s376, %s377
      %p389 = scmp.eq.s32.totalorder %s52, 1
      %p390 = por %p388, %p389
      %p392 = scmp.ne.s32.totalorder %s377, %s391
      %p393 = scmp.eq.s32.totalorder %s52, 0
      %p394 = por %p392, %p393
      %s396 = sadd.s32 %s395, 1
      %p399 = scmp.eq.s32.totalorder %s46, 1
      %p400 = scmp.ne.s32.totalorder %s395, %s397
      %p401 = scmp.eq.s32.totalorder %s46, 0
      %p402 = por %p400, %p401
      %p403 = scmp.ne.s32.totalorder %s395, %s397
      %p404 = scmp.eq.s32.totalorder %s51, 1
      %p405 = por %p403, %p404
      %p406 = scmp.ne.s32.totalorder %s397, %s398
      %p407 = scmp.eq.s32.totalorder %s51, 0
      %p408 = por %p406, %p407
      %p409 = scmp.ne.s32.totalorder %s397, %s398
      %p410 = scmp.eq.s32.totalorder %s52, 1
      %p411 = por %p409, %p410
      %p413 = scmp.ne.s32.totalorder %s398, %s412
      %p414 = scmp.eq.s32.totalorder %s52, 0
      %p415 = por %p413, %p414
      %s417 = sadd.s32 %s416, 1
      %p420 = scmp.eq.s32.totalorder %s46, 1
      %p421 = scmp.ne.s32.totalorder %s416, %s418
      %p422 = scmp.eq.s32.totalorder %s46, 0
      %p423 = por %p421, %p422
      %p424 = scmp.ne.s32.totalorder %s416, %s418
      %p425 = scmp.eq.s32.totalorder %s51, 1
      %p426 = por %p424, %p425
      %p427 = scmp.ne.s32.totalorder %s418, %s419
      %p428 = scmp.eq.s32.totalorder %s51, 0
      %p429 = por %p427, %p428
      %p430 = scmp.ne.s32.totalorder %s418, %s419
      %p431 = scmp.eq.s32.totalorder %s52, 1
      %p432 = por %p430, %p431
      %p434 = scmp.ne.s32.totalorder %s419, %s433
      %p435 = scmp.eq.s32.totalorder %s52, 0
      %p436 = por %p434, %p435
      %s438 = sadd.s32 %s437, 1
      %p441 = scmp.eq.s32.totalorder %s46, 1
      %p442 = scmp.ne.s32.totalorder %s437, %s439
      %p443 = scmp.eq.s32.totalorder %s46, 0
      %p444 = por %p442, %p443
      %p445 = scmp.ne.s32.totalorder %s437, %s439
      %p446 = scmp.eq.s32.totalorder %s51, 1
      %p447 = por %p445, %p446
      %p448 = scmp.ne.s32.totalorder %s439, %s440
      %p449 = scmp.eq.s32.totalorder %s51, 0
      %p450 = por %p448, %p449
      %p451 = scmp.ne.s32.totalorder %s439, %s440
      %p452 = scmp.eq.s32.totalorder %s52, 1
      %p453 = por %p451, %p452
      %p455 = scmp.ne.s32.totalorder %s440, %s454
      %p456 = scmp.eq.s32.totalorder %s52, 0
      %p457 = por %p455, %p456
      %s459 = sadd.s32 %s458, 1
      %p462 = scmp.eq.s32.totalorder %s46, 1
      %p463 = scmp.ne.s32.totalorder %s458, %s460
      %p464 = scmp.eq.s32.totalorder %s46, 0
      %p465 = por %p463, %p464
      %p466 = scmp.ne.s32.totalorder %s458, %s460
      %p467 = scmp.eq.s32.totalorder %s51, 1
      %p468 = por %p466, %p467
      %p469 = scmp.ne.s32.totalorder %s460, %s461
      %p470 = scmp.eq.s32.totalorder %s51, 0
      %p471 = por %p469, %p470
      %p472 = scmp.ne.s32.totalorder %s460, %s461
      %p473 = scmp.eq.s32.totalorder %s52, 1
      %p474 = por %p472, %p473
      %p476 = scmp.ne.s32.totalorder %s461, %s475
      %p477 = scmp.eq.s32.totalorder %s52, 0
      %p478 = por %p476, %p477
      %s480 = sadd.s32 %s479, 1
      %p483 = scmp.eq.s32.totalorder %s46, 1
      %p484 = scmp.ne.s32.totalorder %s479, %s481
      %p485 = scmp.eq.s32.totalorder %s46, 0
      %p486 = por %p484, %p485
      %p487 = scmp.ne.s32.totalorder %s479, %s481
      %p488 = scmp.eq.s32.totalorder %s51, 1
      %p489 = por %p487, %p488
      %p490 = scmp.ne.s32.totalorder %s481, %s482
      %p491 = scmp.eq.s32.totalorder %s51, 0
      %p492 = por %p490, %p491
      %p493 = scmp.ne.s32.totalorder %s481, %s482
      %p494 = scmp.eq.s32.totalorder %s52, 1
      %p495 = por %p493, %p494
      %p497 = scmp.ne.s32.totalorder %s482, %s496
      %p498 = scmp.eq.s32.totalorder %s52, 0
      %p499 = por %p497, %p498
      %s500 = ssub.s32 %s46, %s53
      %p501 = scmp.eq.s32.totalorder %s500, 0
      %s503 = sadd.s32 %s502, 1
      %s504 = scalar_select %p501, %s502, %s503
      %p507 = pneg %p501
      %p508 = scmp.eq.s32.totalorder %s46, 1
      %p509 = por %p507, %p508
      %p510 = scmp.ne.s32.totalorder %s502, %s505
      %p511 = scmp.eq.s32.totalorder %s46, 0
      %p512 = por %p510, %p511
      %p513 = scmp.ne.s32.totalorder %s502, %s505
      %p514 = scmp.eq.s32.totalorder %s51, 1
      %p515 = por %p513, %p514
      %p516 = scmp.ne.s32.totalorder %s505, %s506
      %p517 = scmp.eq.s32.totalorder %s51, 0
      %p518 = por %p516, %p517
      %p519 = scmp.ne.s32.totalorder %s505, %s506
      %p520 = scmp.eq.s32.totalorder %s52, 1
      %p521 = por %p519, %p520
      %p523 = scmp.ne.s32.totalorder %s506, %s522
      %p524 = scmp.eq.s32.totalorder %s52, 0
      %p525 = por %p523, %p524
      %s526 = ssub.s32 %s46, %s53
      %p527 = scmp.eq.s32.totalorder %s526, 0
      %s529 = sadd.s32 %s528, 1
      %s530 = scalar_select %p527, %s528, %s529
      %p533 = pneg %p527
      %p534 = scmp.eq.s32.totalorder %s46, 1
      %p535 = por %p533, %p534
      %p536 = scmp.ne.s32.totalorder %s528, %s531
      %p537 = scmp.eq.s32.totalorder %s46, 0
      %p538 = por %p536, %p537
      %p539 = scmp.ne.s32.totalorder %s528, %s531
      %p540 = scmp.eq.s32.totalorder %s51, 1
      %p541 = por %p539, %p540
      %p542 = scmp.ne.s32.totalorder %s531, %s532
      %p543 = scmp.eq.s32.totalorder %s51, 0
      %p544 = por %p542, %p543
      %p545 = scmp.ne.s32.totalorder %s531, %s532
      %p546 = scmp.eq.s32.totalorder %s52, 1
      %p547 = por %p545, %p546
      %p549 = scmp.ne.s32.totalorder %s532, %s548
      %p550 = scmp.eq.s32.totalorder %s52, 0
      %p551 = por %p549, %p550
      %p552 = scmp.le.s32.totalorder 1, %s46
      %p553 = scmp.lt.s32.totalorder %s46, 3
      %p554 = pnand %p552, %p553
      %p555 = pneg %p554
      // Predicated region
      $region9: #{tpu_custom_call.1} parent=5 // pred_check
        _
      $region10: #{tpu_custom_call.1} parent=5 // pred_check_branch
        %557 = sbr.rel (%p554) target = $region12
      $region11: #{tpu_custom_call.1} parent=5 // pred_region
        %s558 = ssub.s32 %s46, 1
        // Predicated region
        $region13: #{tpu_custom_call.1} parent=11 // pred_check
          %p559 = pneg %p93
        $region14: #{tpu_custom_call.1} parent=11 // pred_check_branch
          %561 = sbr.rel (%p559) target = $region16
        $region15: #{tpu_custom_call.1} parent=11 // pred_region
          _
        $region16: #{tpu_custom_call.1} parent=11 // pred_fallthru
          _
        // Predicated region
        $region17: #{tpu_custom_call.1} parent=11 // pred_check
          %p562 = pneg %p114
        $region18: #{tpu_custom_call.1} parent=11 // pred_check_branch
          %564 = sbr.rel (%p562) target = $region20
        $region19: #{tpu_custom_call.1} parent=11 // pred_region
          %s566 = ssub.s32 4096, 4096
          %567 = vsyncadd [#allocation8], %s566
          %s568 = sshll.u32 [#allocation7], 4
          %s569 = int_to_ptr.vmem [resolvable:$true] %s568
          %574 = dma.hbm_to_vmem [thread:$0]  %s2, 4096, %s569, [#allocation8], 128, 128, 8
        $region20: #{tpu_custom_call.1} parent=11 // pred_fallthru
          _
        // Predicated region
        $region21: #{tpu_custom_call.1} parent=11 // pred_check
          %p575 = pneg %p135
        $region22: #{tpu_custom_call.1} parent=11 // pred_check_branch
          %577 = sbr.rel (%p575) target = $region24
        $region23: #{tpu_custom_call.1} parent=11 // pred_region
          %s579 = ssub.s32 4096, 4096
          %580 = vsyncadd [#allocation8], %s579
          %s581 = sshll.u32 [#allocation9], 4
          %s582 = int_to_ptr.vmem [resolvable:$true] %s581
          %587 = dma.hbm_to_vmem [thread:$0]  %s3, 4096, %s582, [#allocation8], 128, 128, 8
        $region24: #{tpu_custom_call.1} parent=11 // pred_fallthru
          _
        // Predicated region
        $region25: #{tpu_custom_call.1} parent=11 // pred_check
          %p588 = pneg %p156
        $region26: #{tpu_custom_call.1} parent=11 // pred_check_branch
          %590 = sbr.rel (%p588) target = $region28
        $region27: #{tpu_custom_call.1} parent=11 // pred_region
          %s592 = ssub.s32 4096, 4096
          %593 = vsyncadd [#allocation11], %s592
          %s594 = sshll.u32 [#allocation10], 4
          %s595 = int_to_ptr.vmem [resolvable:$true] %s594
          %600 = dma.hbm_to_vmem [thread:$0]  %s4, 4096, %s595, [#allocation11], 128, 128, 8
        $region28: #{tpu_custom_call.1} parent=11 // pred_fallthru
          _
        // Predicated region
        $region29: #{tpu_custom_call.1} parent=11 // pred_check
          %p601 = pneg %p177
        $region30: #{tpu_custom_call.1} parent=11 // pred_check_branch
          %603 = sbr.rel (%p601) target = $region32
        $region31: #{tpu_custom_call.1} parent=11 // pred_region
          %s605 = ssub.s32 4096, 4096
          %606 = vsyncadd [#allocation11], %s605
          %s607 = sshll.u32 [#allocation12], 4
          %s608 = int_to_ptr.vmem [resolvable:$true] %s607
          %613 = dma.hbm_to_vmem [thread:$0]  %s5, 4096, %s608, [#allocation11], 128, 128, 8
        $region32: #{tpu_custom_call.1} parent=11 // pred_fallthru
          _
        // Predicated region
        $region33: #{tpu_custom_call.1} parent=11 // pred_check
          %p614 = pneg %p198
        $region34: #{tpu_custom_call.1} parent=11 // pred_check_branch
          %616 = sbr.rel (%p614) target = $region36
        $region35: #{tpu_custom_call.1} parent=11 // pred_region
          %s618 = ssub.s32 4096, 4096
          %619 = vsyncadd [#allocation14], %s618
          %s620 = sshll.u32 [#allocation13], 4
          %s621 = int_to_ptr.vmem [resolvable:$true] %s620
          %626 = dma.hbm_to_vmem [thread:$0]  %s6, 4096, %s621, [#allocation14], 64, 64, 4
        $region36: #{tpu_custom_call.1} parent=11 // pred_fallthru
          _
        // Predicated region
        $region37: #{tpu_custom_call.1} parent=11 // pred_check
          %p627 = pneg %p219
        $region38: #{tpu_custom_call.1} parent=11 // pred_check_branch
          %629 = sbr.rel (%p627) target = $region40
        $region39: #{tpu_custom_call.1} parent=11 // pred_region
          _
        $region40: #{tpu_custom_call.1} parent=11 // pred_fallthru
          _
        // Predicated region
        $region41: #{tpu_custom_call.1} parent=11 // pred_check
          %p630 = pneg %p240
        $region42: #{tpu_custom_call.1} parent=11 // pred_check_branch
          %632 = sbr.rel (%p630) target = $region44
        $region43: #{tpu_custom_call.1} parent=11 // pred_region
          %s634 = ssub.s32 8192, 8192
          %635 = vsyncadd [#allocation14], %s634
          %s636 = sshll.u32 [#allocation15], 4
          %s637 = int_to_ptr.vmem [resolvable:$true] %s636
          %642 = dma.hbm_to_vmem [thread:$0]  %s8, 8192, %s637, [#allocation14], 256, 256, 16
        $region44: #{tpu_custom_call.1} parent=11 // pred_fallthru
          _
        // Predicated region
        $region45: #{tpu_custom_call.1} parent=11 // pred_check
          %p643 = pneg %p261
        $region46: #{tpu_custom_call.1} parent=11 // pred_check_branch
          %645 = sbr.rel (%p643) target = $region48
        $region47: #{tpu_custom_call.1} parent=11 // pred_region
          %s647 = ssub.s32 8192, 8192
          %648 = vsyncadd [#allocation17], %s647
          %s649 = sshll.u32 [#allocation16], 4
          %s650 = int_to_ptr.vmem [resolvable:$true] %s649
          %655 = dma.hbm_to_vmem [thread:$0]  %s9, 8192, %s650, [#allocation17], 128, 128, 8
        $region48: #{tpu_custom_call.1} parent=11 // pred_fallthru
          _
        // Predicated region
        $region49: #{tpu_custom_call.1} parent=11 // pred_check
          %p656 = pneg %p282
        $region50: #{tpu_custom_call.1} parent=11 // pred_check_branch
          %658 = sbr.rel (%p656) target = $region52
        $region51: #{tpu_custom_call.1} parent=11 // pred_region
          %s660 = ssub.s32 2048, 2048
          %661 = vsyncadd [#allocation17], %s660
          %s662 = sshll.u32 [#allocation18], 4
          %s663 = int_to_ptr.vmem [resolvable:$true] %s662
          %668 = dma.hbm_to_vmem [thread:$0]  %s10, 2048, %s663, [#allocation17], 64, 64, 4
        $region52: #{tpu_custom_call.1} parent=11 // pred_fallthru
          _
        // Predicated region
        $region53: #{tpu_custom_call.1} parent=11 // pred_check
          %p669 = pneg %p303
        $region54: #{tpu_custom_call.1} parent=11 // pred_check_branch
          %671 = sbr.rel (%p669) target = $region56
        $region55: #{tpu_custom_call.1} parent=11 // pred_region
          %s673 = ssub.s32 2048, 2048
          %674 = vsyncadd [#allocation20], %s673
          %s675 = sshll.u32 [#allocation19], 4
          %s676 = int_to_ptr.vmem [resolvable:$true] %s675
          %681 = dma.hbm_to_vmem [thread:$0]  %s11, 2048, %s676, [#allocation20], 64, 64, 4
        $region56: #{tpu_custom_call.1} parent=11 // pred_fallthru
          _
        // Predicated region
        $region57: #{tpu_custom_call.1} parent=11 // pred_check
          %p682 = pneg %p324
        $region58: #{tpu_custom_call.1} parent=11 // pred_check_branch
          %684 = sbr.rel (%p682) target = $region60
        $region59: #{tpu_custom_call.1} parent=11 // pred_region
          _
        $region60: #{tpu_custom_call.1} parent=11 // pred_fallthru
          _
        // Predicated region
        $region61: #{tpu_custom_call.1} parent=11 // pred_check
          %p685 = pneg %p345
        $region62: #{tpu_custom_call.1} parent=11 // pred_check_branch
          %687 = sbr.rel (%p685) target = $region64
        $region63: #{tpu_custom_call.1} parent=11 // pred_region
          %s689 = ssub.s32 1024, 1024
          %690 = vsyncadd [#allocation20], %s689
          %s691 = sshll.u32 [#allocation21], 4
          %s692 = int_to_ptr.vmem [resolvable:$true] %s691
          %697 = dma.hbm_to_vmem [thread:$0]  %s13, 1024, %s692, [#allocation20], 64, 64, 4
        $region64: #{tpu_custom_call.1} parent=11 // pred_fallthru
          _
        // Predicated region
        $region65: #{tpu_custom_call.1} parent=11 // pred_check
          %p698 = pneg %p366
        $region66: #{tpu_custom_call.1} parent=11 // pred_check_branch
          %700 = sbr.rel (%p698) target = $region68
        $region67: #{tpu_custom_call.1} parent=11 // pred_region
          %s702 = ssub.s32 1024, 1024
          %703 = vsyncadd [#allocation23], %s702
          %s704 = sshll.u32 [#allocation22], 4
          %s705 = int_to_ptr.vmem [resolvable:$true] %s704
          %710 = dma.hbm_to_vmem [thread:$0]  %s14, 1024, %s705, [#allocation23], 64, 64, 4
        $region68: #{tpu_custom_call.1} parent=11 // pred_fallthru
          _
        // Predicated region
        $region69: #{tpu_custom_call.1} parent=11 // pred_check
          %p711 = pneg %p387
        $region70: #{tpu_custom_call.1} parent=11 // pred_check_branch
          %713 = sbr.rel (%p711) target = $region72
        $region71: #{tpu_custom_call.1} parent=11 // pred_region
          %s715 = ssub.s32 1024, 1024
          %716 = vsyncadd [#allocation23], %s715
          %s717 = sshll.u32 [#allocation24], 4
          %s718 = int_to_ptr.vmem [resolvable:$true] %s717
          %723 = dma.hbm_to_vmem [thread:$0]  %s15, 1024, %s718, [#allocation23], 64, 64, 4
        $region72: #{tpu_custom_call.1} parent=11 // pred_fallthru
          _
        // Predicated region
        $region73: #{tpu_custom_call.1} parent=11 // pred_check
          %p724 = pneg %p408
        $region74: #{tpu_custom_call.1} parent=11 // pred_check_branch
          %726 = sbr.rel (%p724) target = $region76
        $region75: #{tpu_custom_call.1} parent=11 // pred_region
          %s728 = ssub.s32 1024, 1024
          %729 = vsyncadd [#allocation26], %s728
          %s730 = sshll.u32 [#allocation25], 4
          %s731 = int_to_ptr.vmem [resolvable:$true] %s730
          %736 = dma.hbm_to_vmem [thread:$0]  %s16, 1024, %s731, [#allocation26], 64, 64, 4
        $region76: #{tpu_custom_call.1} parent=11 // pred_fallthru
          _
        // Predicated region
        $region77: #{tpu_custom_call.1} parent=11 // pred_check
          %p737 = pneg %p429
        $region78: #{tpu_custom_call.1} parent=11 // pred_check_branch
          %739 = sbr.rel (%p737) target = $region80
        $region79: #{tpu_custom_call.1} parent=11 // pred_region
          %s741 = ssub.s32 4096, 4096
          %742 = vsyncadd [#allocation26], %s741
          %s743 = sshll.u32 [#allocation27], 4
          %s744 = int_to_ptr.vmem [resolvable:$true] %s743
          %749 = dma.hbm_to_vmem [thread:$0]  %s17, 4096, %s744, [#allocation26], 64, 64, 4
        $region80: #{tpu_custom_call.1} parent=11 // pred_fallthru
          _
        // Predicated region
        $region81: #{tpu_custom_call.1} parent=11 // pred_check
          %p750 = pneg %p450
        $region82: #{tpu_custom_call.1} parent=11 // pred_check_branch
          %752 = sbr.rel (%p750) target = $region84
        $region83: #{tpu_custom_call.1} parent=11 // pred_region
          _
        $region84: #{tpu_custom_call.1} parent=11 // pred_fallthru
          _
        // Predicated region
        $region85: #{tpu_custom_call.1} parent=11 // pred_check
          %p753 = pneg %p471
        $region86: #{tpu_custom_call.1} parent=11 // pred_check_branch
          %755 = sbr.rel (%p753) target = $region88
        $region87: #{tpu_custom_call.1} parent=11 // pred_region
          %s757 = ssub.s32 2048, 2048
          %758 = vsyncadd [#allocation29], %s757
          %s759 = sshll.u32 [#allocation28], 4
          %s760 = int_to_ptr.vmem [resolvable:$true] %s759
          %765 = dma.hbm_to_vmem [thread:$0]  %s19, 2048, %s760, [#allocation29], 128, 128, 8
        $region88: #{tpu_custom_call.1} parent=11 // pred_fallthru
          _
        // Predicated region
        $region89: #{tpu_custom_call.1} parent=11 // pred_check
          %p766 = pneg %p492
        $region90: #{tpu_custom_call.1} parent=11 // pred_check_branch
          %768 = sbr.rel (%p766) target = $region92
        $region91: #{tpu_custom_call.1} parent=11 // pred_region
          %s770 = ssub.s32 2048, 2048
          %771 = vsyncadd [#allocation29], %s770
          %s772 = sshll.u32 [#allocation30], 4
          %s773 = int_to_ptr.vmem [resolvable:$true] %s772
          %778 = dma.hbm_to_vmem [thread:$0]  %s20, 2048, %s773, [#allocation29], 64, 64, 4
        $region92: #{tpu_custom_call.1} parent=11 // pred_fallthru
          _
      $region12: #{tpu_custom_call.1} parent=5 // pred_fallthru
        _
      %p779 = scmp.lt.s32.totalorder %s46, 2
      // Predicated region
      $region93: #{tpu_custom_call.1} parent=5 // pred_check
        %p780 = pneg %p779
      $region94: #{tpu_custom_call.1} parent=5 // pred_check_branch
        %782 = sbr.rel (%p780) target = $region96
      $region95: #{tpu_custom_call.1} parent=5 // pred_region
        // Predicated region
        $region97: #{tpu_custom_call.1} parent=95 // pred_check
          %p783 = pneg %p66
        $region98: #{tpu_custom_call.1} parent=95 // pred_check_branch
          %785 = sbr.rel (%p783) target = $region100
        $region99: #{tpu_custom_call.1} parent=95 // pred_region
          %s786 = sand.u32 %s56, 1
          %s787 = scalar_lea.sflag [#allocation5], %s786
          %s788 = sand.u32 %s56, 1
          %s789 = smul.addr %s788, 256
          %s790 = scalar_lea.vmem [#allocation4], %s789
          %s792 = ssub.s32 4096, 4096
          %793 = vsyncadd %s787, %s792
          %s794 = smul.addr %s46, 32
          %s795 = smul.addr %s794, 128
          %s796 = scalar_lea.hbm %s0, %s795
          %s797 = sshll.u32 %s790, 4
          %s798 = int_to_ptr.vmem [resolvable:$true] %s797
          %803 = dma.hbm_to_vmem [thread:$0]  %s796, 4096, %s798, %s787, 256, 256, 16
        $region100: #{tpu_custom_call.1} parent=95 // pred_fallthru
          _
      $region96: #{tpu_custom_call.1} parent=5 // pred_fallthru
        _
      %p804 = scmp.le.s32.totalorder 1, %s46
      %p805 = scmp.lt.s32.totalorder %s46, 3
      %p806 = pnand %p804, %p805
      %p807 = pneg %p806
      // Predicated region
      $region101: #{tpu_custom_call.1} parent=5 // pred_check
        _
      $region102: #{tpu_custom_call.1} parent=5 // pred_check_branch
        %809 = sbr.rel (%p806) target = $region104
      $region103: #{tpu_custom_call.1} parent=5 // pred_region
        %s810 = ssub.s32 %s46, 1
        %s811 = sand.u32 %s59, 1
        %s812 = scalar_lea.sflag [#allocation5], %s811
        %s813 = sand.u32 %s59, 1
        %s814 = smul.addr %s813, 256
        %s815 = scalar_lea.vmem [#allocation4], %s814
        // Predicated region
        $region105: #{tpu_custom_call.1} parent=103 // pred_check
          %p816 = pneg %p72
        $region106: #{tpu_custom_call.1} parent=103 // pred_check_branch
          %818 = sbr.rel (%p816) target = $region108
        $region107: #{tpu_custom_call.1} parent=103 // pred_region
          %819 = dma.done %s812, 4096
        $region108: #{tpu_custom_call.1} parent=103 // pred_fallthru
          _
        // Predicated region
        $region109: #{tpu_custom_call.1} parent=103 // pred_check
          %p820 = pneg %p114
        $region110: #{tpu_custom_call.1} parent=103 // pred_check_branch
          %822 = sbr.rel (%p820) target = $region112
        $region111: #{tpu_custom_call.1} parent=103 // pred_region
          %823 = dma.done [#allocation8], 4096
        $region112: #{tpu_custom_call.1} parent=103 // pred_fallthru
          _
        // Predicated region
        $region113: #{tpu_custom_call.1} parent=103 // pred_check
          %p824 = pneg %p135
        $region114: #{tpu_custom_call.1} parent=103 // pred_check_branch
          %826 = sbr.rel (%p824) target = $region116
        $region115: #{tpu_custom_call.1} parent=103 // pred_region
          %827 = dma.done [#allocation8], 4096
        $region116: #{tpu_custom_call.1} parent=103 // pred_fallthru
          _
        // Predicated region
        $region117: #{tpu_custom_call.1} parent=103 // pred_check
          %p828 = pneg %p156
        $region118: #{tpu_custom_call.1} parent=103 // pred_check_branch
          %830 = sbr.rel (%p828) target = $region120
        $region119: #{tpu_custom_call.1} parent=103 // pred_region
          %831 = dma.done [#allocation11], 4096
        $region120: #{tpu_custom_call.1} parent=103 // pred_fallthru
          _
        // Predicated region
        $region121: #{tpu_custom_call.1} parent=103 // pred_check
          %p832 = pneg %p177
        $region122: #{tpu_custom_call.1} parent=103 // pred_check_branch
          %834 = sbr.rel (%p832) target = $region124
        $region123: #{tpu_custom_call.1} parent=103 // pred_region
          %835 = dma.done [#allocation11], 4096
        $region124: #{tpu_custom_call.1} parent=103 // pred_fallthru
          _
        // Predicated region
        $region125: #{tpu_custom_call.1} parent=103 // pred_check
          %p836 = pneg %p198
        $region126: #{tpu_custom_call.1} parent=103 // pred_check_branch
          %838 = sbr.rel (%p836) target = $region128
        $region127: #{tpu_custom_call.1} parent=103 // pred_region
          %839 = dma.done [#allocation14], 4096
        $region128: #{tpu_custom_call.1} parent=103 // pred_fallthru
          _
        // Predicated region
        $region129: #{tpu_custom_call.1} parent=103 // pred_check
          %p840 = pneg %p240
        $region130: #{tpu_custom_call.1} parent=103 // pred_check_branch
          %842 = sbr.rel (%p840) target = $region132
        $region131: #{tpu_custom_call.1} parent=103 // pred_region
          %843 = dma.done [#allocation14], 8192
        $region132: #{tpu_custom_call.1} parent=103 // pred_fallthru
          _
        // Predicated region
        $region133: #{tpu_custom_call.1} parent=103 // pred_check
          %p844 = pneg %p261
        $region134: #{tpu_custom_call.1} parent=103 // pred_check_branch
          %846 = sbr.rel (%p844) target = $region136
        $region135: #{tpu_custom_call.1} parent=103 // pred_region
          %847 = dma.done [#allocation17], 8192
        $region136: #{tpu_custom_call.1} parent=103 // pred_fallthru
          _
        // Predicated region
        $region137: #{tpu_custom_call.1} parent=103 // pred_check
          %p848 = pneg %p282
        $region138: #{tpu_custom_call.1} parent=103 // pred_check_branch
          %850 = sbr.rel (%p848) target = $region140
        $region139: #{tpu_custom_call.1} parent=103 // pred_region
          %851 = dma.done [#allocation17], 2048
        $region140: #{tpu_custom_call.1} parent=103 // pred_fallthru
          _
        // Predicated region
        $region141: #{tpu_custom_call.1} parent=103 // pred_check
          %p852 = pneg %p303
        $region142: #{tpu_custom_call.1} parent=103 // pred_check_branch
          %854 = sbr.rel (%p852) target = $region144
        $region143: #{tpu_custom_call.1} parent=103 // pred_region
          %855 = dma.done [#allocation20], 2048
        $region144: #{tpu_custom_call.1} parent=103 // pred_fallthru
          _
        // Predicated region
        $region145: #{tpu_custom_call.1} parent=103 // pred_check
          %p856 = pneg %p345
        $region146: #{tpu_custom_call.1} parent=103 // pred_check_branch
          %858 = sbr.rel (%p856) target = $region148
        $region147: #{tpu_custom_call.1} parent=103 // pred_region
          %859 = dma.done [#allocation20], 1024
        $region148: #{tpu_custom_call.1} parent=103 // pred_fallthru
          _
        // Predicated region
        $region149: #{tpu_custom_call.1} parent=103 // pred_check
          %p860 = pneg %p366
        $region150: #{tpu_custom_call.1} parent=103 // pred_check_branch
          %862 = sbr.rel (%p860) target = $region152
        $region151: #{tpu_custom_call.1} parent=103 // pred_region
          %863 = dma.done [#allocation23], 1024
        $region152: #{tpu_custom_call.1} parent=103 // pred_fallthru
          _
        // Predicated region
        $region153: #{tpu_custom_call.1} parent=103 // pred_check
          %p864 = pneg %p387
        $region154: #{tpu_custom_call.1} parent=103 // pred_check_branch
          %866 = sbr.rel (%p864) target = $region156
        $region155: #{tpu_custom_call.1} parent=103 // pred_region
          %867 = dma.done [#allocation23], 1024
        $region156: #{tpu_custom_call.1} parent=103 // pred_fallthru
          _
        // Predicated region
        $region157: #{tpu_custom_call.1} parent=103 // pred_check
          %p868 = pneg %p408
        $region158: #{tpu_custom_call.1} parent=103 // pred_check_branch
          %870 = sbr.rel (%p868) target = $region160
        $region159: #{tpu_custom_call.1} parent=103 // pred_region
          %871 = dma.done [#allocation26], 1024
        $region160: #{tpu_custom_call.1} parent=103 // pred_fallthru
          _
        // Predicated region
        $region161: #{tpu_custom_call.1} parent=103 // pred_check
          %p872 = pneg %p429
        $region162: #{tpu_custom_call.1} parent=103 // pred_check_branch
          %874 = sbr.rel (%p872) target = $region164
        $region163: #{tpu_custom_call.1} parent=103 // pred_region
          %875 = dma.done [#allocation26], 4096
        $region164: #{tpu_custom_call.1} parent=103 // pred_fallthru
          _
        // Predicated region
        $region165: #{tpu_custom_call.1} parent=103 // pred_check
          %p876 = pneg %p471
        $region166: #{tpu_custom_call.1} parent=103 // pred_check_branch
          %878 = sbr.rel (%p876) target = $region168
        $region167: #{tpu_custom_call.1} parent=103 // pred_region
          %879 = dma.done [#allocation29], 2048
        $region168: #{tpu_custom_call.1} parent=103 // pred_fallthru
          _
        // Predicated region
        $region169: #{tpu_custom_call.1} parent=103 // pred_check
          %p880 = pneg %p492
        $region170: #{tpu_custom_call.1} parent=103 // pred_check_branch
          %882 = sbr.rel (%p880) target = $region172
        $region171: #{tpu_custom_call.1} parent=103 // pred_region
          %883 = dma.done [#allocation29], 2048
        $region172: #{tpu_custom_call.1} parent=103 // pred_fallthru
          _
        %s884 = sand.u32 %s59, 1
        %s885 = scalar_lea.sflag [#allocation5], %s884
        %s886 = sand.u32 %s59, 1
        %s887 = smul.addr %s886, 256
        %s888 = scalar_lea.vmem [#allocation4], %s887
        %p889 = pneg %p72
        %p890 = pneg %p69
        %p891 = pneg %p93
        %p892 = pneg %p90
        %p893 = pneg %p114
        %p894 = pneg %p111
        %p895 = pneg %p135
        %p896 = pneg %p132
        %p897 = pneg %p156
        %p898 = pneg %p153
        %p899 = pneg %p177
        %p900 = pneg %p174
        %p901 = pneg %p198
        %p902 = pneg %p195
        %p903 = pneg %p219
        %p904 = pneg %p216
        %p905 = pneg %p240
        %p906 = pneg %p237
        %p907 = pneg %p261
        %p908 = pneg %p258
        %p909 = pneg %p282
        %p910 = pneg %p279
        %p911 = pneg %p303
        %p912 = pneg %p300
        %p913 = pneg %p324
        %p914 = pneg %p321
        %p915 = pneg %p345
        %p916 = pneg %p342
        %p917 = pneg %p366
        %p918 = pneg %p363
        %p919 = pneg %p387
        %p920 = pneg %p384
        %p921 = pneg %p408
        %p922 = pneg %p405
        %p923 = pneg %p429
        %p924 = pneg %p426
        %p925 = pneg %p450
        %p926 = pneg %p447
        %p927 = pneg %p471
        %p928 = pneg %p468
        %p929 = pneg %p492
        %p930 = pneg %p489
        %p931 = pneg %p518
        %p932 = pneg %p515
        %s933 = sand.u32 %s505, 1
        %s934 = scalar_lea.sflag [#allocation6], %s933
        %s935 = sand.u32 %s505, 1
        %s936 = smul.addr %s935, 256
        %s937 = scalar_lea.vmem [#allocation31], %s936
        %p938 = pneg %p544
        %p939 = pneg %p541
        %s940 = sand.u32 %s531, 1
        %s941 = scalar_lea.sflag [#allocation33], %s940
        %s942 = sand.u32 %s531, 1
        %s943 = smul.addr %s942, 128
        %s944 = scalar_lea.vmem [#allocation32], %s943
        %v946 = vld [vmem:[%s815] sm:$0xff]
        %v947 = vld [vmem:[%s815 + $0x8] sm:$0xff]
        %v948 = vld [vmem:[%s815 + $0x10] sm:$0xff]
        %v949 = vld [vmem:[%s815 + $0x18] sm:$0xff]
        %v950 = vld [vmem:[%s815 + $0x20] sm:$0xff]
        %v951 = vld [vmem:[%s815 + $0x28] sm:$0xff]
        %v952 = vld [vmem:[%s815 + $0x30] sm:$0xff]
        %v953 = vld [vmem:[%s815 + $0x38] sm:$0xff]
        %v954 = vld [vmem:[%s815 + $0x40] sm:$0xff]
        %v955 = vld [vmem:[%s815 + $0x48] sm:$0xff]
        %v956 = vld [vmem:[%s815 + $0x50] sm:$0xff]
        %v957 = vld [vmem:[%s815 + $0x58] sm:$0xff]
        %v958 = vld [vmem:[%s815 + $0x60] sm:$0xff]
        %v959 = vld [vmem:[%s815 + $0x68] sm:$0xff]
        %v960 = vld [vmem:[%s815 + $0x70] sm:$0xff]
        %v961 = vld [vmem:[%s815 + $0x78] sm:$0xff]
        %v962 = vld [vmem:[%s815 + $0x80] sm:$0xff]
        %v963 = vld [vmem:[%s815 + $0x88] sm:$0xff]
        %v964 = vld [vmem:[%s815 + $0x90] sm:$0xff]
        %v965 = vld [vmem:[%s815 + $0x98] sm:$0xff]
        %v966 = vld [vmem:[%s815 + $0xa0] sm:$0xff]
        %v967 = vld [vmem:[%s815 + $0xa8] sm:$0xff]
        %v968 = vld [vmem:[%s815 + $0xb0] sm:$0xff]
        %v969 = vld [vmem:[%s815 + $0xb8] sm:$0xff]
        %v970 = vld [vmem:[%s815 + $0xc0] sm:$0xff]
        %v971 = vld [vmem:[%s815 + $0xc8] sm:$0xff]
        %v972 = vld [vmem:[%s815 + $0xd0] sm:$0xff]
        %v973 = vld [vmem:[%s815 + $0xd8] sm:$0xff]
        %v974 = vld [vmem:[%s815 + $0xe0] sm:$0xff]
        %v975 = vld [vmem:[%s815 + $0xe8] sm:$0xff]
        %v976 = vld [vmem:[%s815 + $0xf0] sm:$0xff]
        %v977 = vld [vmem:[%s815 + $0xf8] sm:$0xff]
        %v978 = vld [vmem:[%s1] sm:$0x3]
        %v979 = vld [vmem:[#allocation7] sm:$0xff]
        %v980 = vld [vmem:[#allocation7 + $0x8] sm:$0xff]
        %v981 = vld [vmem:[#allocation7 + $0x10] sm:$0xff]
        %v982 = vld [vmem:[#allocation7 + $0x18] sm:$0xff]
        %v983 = vld [vmem:[#allocation7 + $0x20] sm:$0xff]
        %v984 = vld [vmem:[#allocation7 + $0x28] sm:$0xff]
        %v985 = vld [vmem:[#allocation7 + $0x30] sm:$0xff]
        %v986 = vld [vmem:[#allocation7 + $0x38] sm:$0xff]
        %v987 = vld [vmem:[#allocation7 + $0x40] sm:$0xff]
        %v988 = vld [vmem:[#allocation7 + $0x48] sm:$0xff]
        %v989 = vld [vmem:[#allocation7 + $0x50] sm:$0xff]
        %v990 = vld [vmem:[#allocation7 + $0x58] sm:$0xff]
        %v991 = vld [vmem:[#allocation7 + $0x60] sm:$0xff]
        %v992 = vld [vmem:[#allocation7 + $0x68] sm:$0xff]
        %v993 = vld [vmem:[#allocation7 + $0x70] sm:$0xff]
        %v994 = vld [vmem:[#allocation7 + $0x78] sm:$0xff]
        %v995 = vld [vmem:[#allocation7 + $0x80] sm:$0xff]
        %v996 = vld [vmem:[#allocation7 + $0x88] sm:$0xff]
        %v997 = vld [vmem:[#allocation7 + $0x90] sm:$0xff]
        %v998 = vld [vmem:[#allocation7 + $0x98] sm:$0xff]
        %v999 = vld [vmem:[#allocation7 + $0xa0] sm:$0xff]
        %v1000 = vld [vmem:[#allocation7 + $0xa8] sm:$0xff]
        %v1001 = vld [vmem:[#allocation7 + $0xb0] sm:$0xff]
        %v1002 = vld [vmem:[#allocation7 + $0xb8] sm:$0xff]
        %v1003 = vld [vmem:[#allocation7 + $0xc0] sm:$0xff]
        %v1004 = vld [vmem:[#allocation7 + $0xc8] sm:$0xff]
        %v1005 = vld [vmem:[#allocation7 + $0xd0] sm:$0xff]
        %v1006 = vld [vmem:[#allocation7 + $0xd8] sm:$0xff]
        %v1007 = vld [vmem:[#allocation7 + $0xe0] sm:$0xff]
        %v1008 = vld [vmem:[#allocation7 + $0xe8] sm:$0xff]
        %v1009 = vld [vmem:[#allocation7 + $0xf0] sm:$0xff]
        %v1010 = vld [vmem:[#allocation7 + $0xf8] sm:$0xff]
        %v1011 = vld [vmem:[#allocation9] sm:$0xff]
        %v1012 = vld [vmem:[#allocation9 + $0x8] sm:$0xff]
        %v1013 = vld [vmem:[#allocation9 + $0x10] sm:$0xff]
        %v1014 = vld [vmem:[#allocation9 + $0x18] sm:$0xff]
        %v1015 = vld [vmem:[#allocation9 + $0x20] sm:$0xff]
        %v1016 = vld [vmem:[#allocation9 + $0x28] sm:$0xff]
        %v1017 = vld [vmem:[#allocation9 + $0x30] sm:$0xff]
        %v1018 = vld [vmem:[#allocation9 + $0x38] sm:$0xff]
        %v1019 = vld [vmem:[#allocation9 + $0x40] sm:$0xff]
        %v1020 = vld [vmem:[#allocation9 + $0x48] sm:$0xff]
        %v1021 = vld [vmem:[#allocation9 + $0x50] sm:$0xff]
        %v1022 = vld [vmem:[#allocation9 + $0x58] sm:$0xff]
        %v1023 = vld [vmem:[#allocation9 + $0x60] sm:$0xff]
        %v1024 = vld [vmem:[#allocation9 + $0x68] sm:$0xff]
        %v1025 = vld [vmem:[#allocation9 + $0x70] sm:$0xff]
        %v1026 = vld [vmem:[#allocation9 + $0x78] sm:$0xff]
        %v1027 = vld [vmem:[#allocation9 + $0x80] sm:$0xff]
        %v1028 = vld [vmem:[#allocation9 + $0x88] sm:$0xff]
        %v1029 = vld [vmem:[#allocation9 + $0x90] sm:$0xff]
        %v1030 = vld [vmem:[#allocation9 + $0x98] sm:$0xff]
        %v1031 = vld [vmem:[#allocation9 + $0xa0] sm:$0xff]
        %v1032 = vld [vmem:[#allocation9 + $0xa8] sm:$0xff]
        %v1033 = vld [vmem:[#allocation9 + $0xb0] sm:$0xff]
        %v1034 = vld [vmem:[#allocation9 + $0xb8] sm:$0xff]
        %v1035 = vld [vmem:[#allocation9 + $0xc0] sm:$0xff]
        %v1036 = vld [vmem:[#allocation9 + $0xc8] sm:$0xff]
        %v1037 = vld [vmem:[#allocation9 + $0xd0] sm:$0xff]
        %v1038 = vld [vmem:[#allocation9 + $0xd8] sm:$0xff]
        %v1039 = vld [vmem:[#allocation9 + $0xe0] sm:$0xff]
        %v1040 = vld [vmem:[#allocation9 + $0xe8] sm:$0xff]
        %v1041 = vld [vmem:[#allocation9 + $0xf0] sm:$0xff]
        %v1042 = vld [vmem:[#allocation9 + $0xf8] sm:$0xff]
        %v1043 = vld [vmem:[#allocation10] sm:$0xff]
        %v1044 = vld [vmem:[#allocation10 + $0x8] sm:$0xff]
        %v1045 = vld [vmem:[#allocation10 + $0x10] sm:$0xff]
        %v1046 = vld [vmem:[#allocation10 + $0x18] sm:$0xff]
        %v1047 = vld [vmem:[#allocation10 + $0x20] sm:$0xff]
        %v1048 = vld [vmem:[#allocation10 + $0x28] sm:$0xff]
        %v1049 = vld [vmem:[#allocation10 + $0x30] sm:$0xff]
        %v1050 = vld [vmem:[#allocation10 + $0x38] sm:$0xff]
        %v1051 = vld [vmem:[#allocation10 + $0x40] sm:$0xff]
        %v1052 = vld [vmem:[#allocation10 + $0x48] sm:$0xff]
        %v1053 = vld [vmem:[#allocation10 + $0x50] sm:$0xff]
        %v1054 = vld [vmem:[#allocation10 + $0x58] sm:$0xff]
        %v1055 = vld [vmem:[#allocation10 + $0x60] sm:$0xff]
        %v1056 = vld [vmem:[#allocation10 + $0x68] sm:$0xff]
        %v1057 = vld [vmem:[#allocation10 + $0x70] sm:$0xff]
        %v1058 = vld [vmem:[#allocation10 + $0x78] sm:$0xff]
        %v1059 = vld [vmem:[#allocation10 + $0x80] sm:$0xff]
        %v1060 = vld [vmem:[#allocation10 + $0x88] sm:$0xff]
        %v1061 = vld [vmem:[#allocation10 + $0x90] sm:$0xff]
        %v1062 = vld [vmem:[#allocation10 + $0x98] sm:$0xff]
        %v1063 = vld [vmem:[#allocation10 + $0xa0] sm:$0xff]
        %v1064 = vld [vmem:[#allocation10 + $0xa8] sm:$0xff]
        %v1065 = vld [vmem:[#allocation10 + $0xb0] sm:$0xff]
        %v1066 = vld [vmem:[#allocation10 + $0xb8] sm:$0xff]
        %v1067 = vld [vmem:[#allocation10 + $0xc0] sm:$0xff]
        %v1068 = vld [vmem:[#allocation10 + $0xc8] sm:$0xff]
        %v1069 = vld [vmem:[#allocation10 + $0xd0] sm:$0xff]
        %v1070 = vld [vmem:[#allocation10 + $0xd8] sm:$0xff]
        %v1071 = vld [vmem:[#allocation10 + $0xe0] sm:$0xff]
        %v1072 = vld [vmem:[#allocation10 + $0xe8] sm:$0xff]
        %v1073 = vld [vmem:[#allocation10 + $0xf0] sm:$0xff]
        %v1074 = vld [vmem:[#allocation10 + $0xf8] sm:$0xff]
        %v1075 = vld [vmem:[#allocation12] sm:$0xff]
        %v1076 = vld [vmem:[#allocation12 + $0x8] sm:$0xff]
        %v1077 = vld [vmem:[#allocation12 + $0x10] sm:$0xff]
        %v1078 = vld [vmem:[#allocation12 + $0x18] sm:$0xff]
        %v1079 = vld [vmem:[#allocation12 + $0x20] sm:$0xff]
        %v1080 = vld [vmem:[#allocation12 + $0x28] sm:$0xff]
        %v1081 = vld [vmem:[#allocation12 + $0x30] sm:$0xff]
        %v1082 = vld [vmem:[#allocation12 + $0x38] sm:$0xff]
        %v1083 = vld [vmem:[#allocation12 + $0x40] sm:$0xff]
        %v1084 = vld [vmem:[#allocation12 + $0x48] sm:$0xff]
        %v1085 = vld [vmem:[#allocation12 + $0x50] sm:$0xff]
        %v1086 = vld [vmem:[#allocation12 + $0x58] sm:$0xff]
        %v1087 = vld [vmem:[#allocation12 + $0x60] sm:$0xff]
        %v1088 = vld [vmem:[#allocation12 + $0x68] sm:$0xff]
        %v1089 = vld [vmem:[#allocation12 + $0x70] sm:$0xff]
        %v1090 = vld [vmem:[#allocation12 + $0x78] sm:$0xff]
        %v1091 = vld [vmem:[#allocation12 + $0x80] sm:$0xff]
        %v1092 = vld [vmem:[#allocation12 + $0x88] sm:$0xff]
        %v1093 = vld [vmem:[#allocation12 + $0x90] sm:$0xff]
        %v1094 = vld [vmem:[#allocation12 + $0x98] sm:$0xff]
        %v1095 = vld [vmem:[#allocation12 + $0xa0] sm:$0xff]
        %v1096 = vld [vmem:[#allocation12 + $0xa8] sm:$0xff]
        %v1097 = vld [vmem:[#allocation12 + $0xb0] sm:$0xff]
        %v1098 = vld [vmem:[#allocation12 + $0xb8] sm:$0xff]
        %v1099 = vld [vmem:[#allocation12 + $0xc0] sm:$0xff]
        %v1100 = vld [vmem:[#allocation12 + $0xc8] sm:$0xff]
        %v1101 = vld [vmem:[#allocation12 + $0xd0] sm:$0xff]
        %v1102 = vld [vmem:[#allocation12 + $0xd8] sm:$0xff]
        %v1103 = vld [vmem:[#allocation12 + $0xe0] sm:$0xff]
        %v1104 = vld [vmem:[#allocation12 + $0xe8] sm:$0xff]
        %v1105 = vld [vmem:[#allocation12 + $0xf0] sm:$0xff]
        %v1106 = vld [vmem:[#allocation12 + $0xf8] sm:$0xff]
        %v1107 = vmul.f32 %v946, %v946
        %v1108 = vmul.f32 %v947, %v947
        %v1109 = vmul.f32 %v948, %v948
        %v1110 = vmul.f32 %v949, %v949
        %v1111 = vmul.f32 %v950, %v950
        %v1112 = vmul.f32 %v951, %v951
        %v1113 = vmul.f32 %v952, %v952
        %v1114 = vmul.f32 %v953, %v953
        %v1115 = vmul.f32 %v954, %v954
        %v1116 = vmul.f32 %v955, %v955
        %v1117 = vmul.f32 %v956, %v956
        %v1118 = vmul.f32 %v957, %v957
        %v1119 = vmul.f32 %v958, %v958
        %v1120 = vmul.f32 %v959, %v959
        %v1121 = vmul.f32 %v960, %v960
        %v1122 = vmul.f32 %v961, %v961
        %v1123 = vmul.f32 %v962, %v962
        %v1124 = vmul.f32 %v963, %v963
        %v1125 = vmul.f32 %v964, %v964
        %v1126 = vmul.f32 %v965, %v965
        %v1127 = vmul.f32 %v966, %v966
        %v1128 = vmul.f32 %v967, %v967
        %v1129 = vmul.f32 %v968, %v968
        %v1130 = vmul.f32 %v969, %v969
        %v1131 = vmul.f32 %v970, %v970
        %v1132 = vmul.f32 %v971, %v971
        %v1133 = vmul.f32 %v972, %v972
        %v1134 = vmul.f32 %v973, %v973
        %v1135 = vmul.f32 %v974, %v974
        %v1136 = vmul.f32 %v975, %v975
        %v1137 = vmul.f32 %v976, %v976
        %v1138 = vmul.f32 %v977, %v977
        %v1139 = vadd.f32 %v1107, %v1108
        %1140 = vadd.xlane.f32.xlu0 %v1139
        %v1141 = vpop.xlane.xlu0 %1140
        %v1142 = vadd.f32 %v1109, %v1110
        %1143 = vadd.xlane.f32.xlu0 %v1142
        %v1144 = vpop.xlane.xlu0 %1143
        %v1145 = vadd.f32 %v1111, %v1112
        %1146 = vadd.xlane.f32.xlu0 %v1145
        %v1147 = vpop.xlane.xlu0 %1146
        %v1148 = vadd.f32 %v1113, %v1114
        %1149 = vadd.xlane.f32.xlu0 %v1148
        %v1150 = vpop.xlane.xlu0 %1149
        %v1151 = vadd.f32 %v1115, %v1116
        %1152 = vadd.xlane.f32.xlu0 %v1151
        %v1153 = vpop.xlane.xlu0 %1152
        %v1154 = vadd.f32 %v1117, %v1118
        %1155 = vadd.xlane.f32.xlu0 %v1154
        %v1156 = vpop.xlane.xlu0 %1155
        %v1157 = vadd.f32 %v1119, %v1120
        %1158 = vadd.xlane.f32.xlu0 %v1157
        %v1159 = vpop.xlane.xlu0 %1158
        %v1160 = vadd.f32 %v1121, %v1122
        %1161 = vadd.xlane.f32.xlu0 %v1160
        %v1162 = vpop.xlane.xlu0 %1161
        %v1163 = vadd.f32 %v1123, %v1124
        %1164 = vadd.xlane.f32.xlu0 %v1163
        %v1165 = vpop.xlane.xlu0 %1164
        %v1166 = vadd.f32 %v1125, %v1126
        %1167 = vadd.xlane.f32.xlu0 %v1166
        %v1168 = vpop.xlane.xlu0 %1167
        %v1169 = vadd.f32 %v1127, %v1128
        %1170 = vadd.xlane.f32.xlu0 %v1169
        %v1171 = vpop.xlane.xlu0 %1170
        %v1172 = vadd.f32 %v1129, %v1130
        %1173 = vadd.xlane.f32.xlu0 %v1172
        %v1174 = vpop.xlane.xlu0 %1173
        %v1175 = vadd.f32 %v1131, %v1132
        %1176 = vadd.xlane.f32.xlu0 %v1175
        %v1177 = vpop.xlane.xlu0 %1176
        %v1178 = vadd.f32 %v1133, %v1134
        %1179 = vadd.xlane.f32.xlu0 %v1178
        %v1180 = vpop.xlane.xlu0 %1179
        %v1181 = vadd.f32 %v1135, %v1136
        %1182 = vadd.xlane.f32.xlu0 %v1181
        %v1183 = vpop.xlane.xlu0 %1182
        %v1184 = vadd.f32 %v1137, %v1138
        %1185 = vadd.xlane.f32.xlu0 %v1184
        %v1186 = vpop.xlane.xlu0 %1185
        %v1187 = vrcp.pop 256.0
        %v1188 = vmul.f32 %v1141, %v1187
        %v1189 = vmul.f32 %v1144, %v1187
        %v1190 = vmul.f32 %v1147, %v1187
        %v1191 = vmul.f32 %v1150, %v1187
        %v1192 = vmul.f32 %v1153, %v1187
        %v1193 = vmul.f32 %v1156, %v1187
        %v1194 = vmul.f32 %v1159, %v1187
        %v1195 = vmul.f32 %v1162, %v1187
        %v1196 = vmul.f32 %v1165, %v1187
        %v1197 = vmul.f32 %v1168, %v1187
        %v1198 = vmul.f32 %v1171, %v1187
        %v1199 = vmul.f32 %v1174, %v1187
        %v1200 = vmul.f32 %v1177, %v1187
        %v1201 = vmul.f32 %v1180, %v1187
        %v1202 = vmul.f32 %v1183, %v1187
        %v1203 = vmul.f32 %v1186, %v1187
        %v1204 = vadd.f32 %v1188, 1e-06
        %v1205 = vadd.f32 %v1189, 1e-06
        %v1206 = vadd.f32 %v1190, 1e-06
        %v1207 = vadd.f32 %v1191, 1e-06
        %v1208 = vadd.f32 %v1192, 1e-06
        %v1209 = vadd.f32 %v1193, 1e-06
        %v1210 = vadd.f32 %v1194, 1e-06
        %v1211 = vadd.f32 %v1195, 1e-06
        %v1212 = vadd.f32 %v1196, 1e-06
        %v1213 = vadd.f32 %v1197, 1e-06
        %v1214 = vadd.f32 %v1198, 1e-06
        %v1215 = vadd.f32 %v1199, 1e-06
        %v1216 = vadd.f32 %v1200, 1e-06
        %v1217 = vadd.f32 %v1201, 1e-06
        %v1218 = vadd.f32 %v1202, 1e-06
        %v1219 = vadd.f32 %v1203, 1e-06
        %v1220 = vrsqrt.pop %v1204
        %v1221 = vrsqrt.pop %v1205
        %v1222 = vrsqrt.pop %v1206
        %v1223 = vrsqrt.pop %v1207
        %v1224 = vrsqrt.pop %v1208
        %v1225 = vrsqrt.pop %v1209
        %v1226 = vrsqrt.pop %v1210
        %v1227 = vrsqrt.pop %v1211
        %v1228 = vrsqrt.pop %v1212
        %v1229 = vrsqrt.pop %v1213
        %v1230 = vrsqrt.pop %v1214
        %v1231 = vrsqrt.pop %v1215
        %v1232 = vrsqrt.pop %v1216
        %v1233 = vrsqrt.pop %v1217
        %v1234 = vrsqrt.pop %v1218
        %v1235 = vrsqrt.pop %v1219
        %v1236 = vmul.f32 %v946, %v1220
        %v1237 = vmul.f32 %v947, %v1220
        %v1238 = vmul.f32 %v948, %v1221
        %v1239 = vmul.f32 %v949, %v1221
        %v1240 = vmul.f32 %v950, %v1222
        %v1241 = vmul.f32 %v951, %v1222
        %v1242 = vmul.f32 %v952, %v1223
        %v1243 = vmul.f32 %v953, %v1223
        %v1244 = vmul.f32 %v954, %v1224
        %v1245 = vmul.f32 %v955, %v1224
        %v1246 = vmul.f32 %v956, %v1225
        %v1247 = vmul.f32 %v957, %v1225
        %v1248 = vmul.f32 %v958, %v1226
        %v1249 = vmul.f32 %v959, %v1226
        %v1250 = vmul.f32 %v960, %v1227
        %v1251 = vmul.f32 %v961, %v1227
        %v1252 = vmul.f32 %v962, %v1228
        %v1253 = vmul.f32 %v963, %v1228
        %v1254 = vmul.f32 %v964, %v1229
        %v1255 = vmul.f32 %v965, %v1229
        %v1256 = vmul.f32 %v966, %v1230
        %v1257 = vmul.f32 %v967, %v1230
        %v1258 = vmul.f32 %v968, %v1231
        %v1259 = vmul.f32 %v969, %v1231
        %v1260 = vmul.f32 %v970, %v1232
        %v1261 = vmul.f32 %v971, %v1232
        %v1262 = vmul.f32 %v972, %v1233
        %v1263 = vmul.f32 %v973, %v1233
        %v1264 = vmul.f32 %v974, %v1234
        %v1265 = vmul.f32 %v975, %v1234
        %v1266 = vmul.f32 %v976, %v1235
        %v1267 = vmul.f32 %v977, %v1235
        %v1269 = vlaneseq
        %v1270 = vshrl.u32 %v1269, 7
        %v1271 = vsub.s32 0, %v1270
        %v1272 = vrot.slane %v978, %v1271
        %v1273 = vlaneseq
        %v1274 = vshrl.u32 %v1273, 7
        %v1275 = vsub.s32 1, %v1274
        %v1276 = vrot.slane %v978, %v1275
        %v1279 = vmul.f32 %v1236, %v1272
        %v1280 = vmul.f32 %v1237, %v1276
        %v1281 = vmul.f32 %v1238, %v1272
        %v1282 = vmul.f32 %v1239, %v1276
        %v1283 = vmul.f32 %v1240, %v1272
        %v1284 = vmul.f32 %v1241, %v1276
        %v1285 = vmul.f32 %v1242, %v1272
        %v1286 = vmul.f32 %v1243, %v1276
        %v1287 = vmul.f32 %v1244, %v1272
        %v1288 = vmul.f32 %v1245, %v1276
        %v1289 = vmul.f32 %v1246, %v1272
        %v1290 = vmul.f32 %v1247, %v1276
        %v1291 = vmul.f32 %v1248, %v1272
        %v1292 = vmul.f32 %v1249, %v1276
        %v1293 = vmul.f32 %v1250, %v1272
        %v1294 = vmul.f32 %v1251, %v1276
        %v1295 = vmul.f32 %v1252, %v1272
        %v1296 = vmul.f32 %v1253, %v1276
        %v1297 = vmul.f32 %v1254, %v1272
        %v1298 = vmul.f32 %v1255, %v1276
        %v1299 = vmul.f32 %v1256, %v1272
        %v1300 = vmul.f32 %v1257, %v1276
        %v1301 = vmul.f32 %v1258, %v1272
        %v1302 = vmul.f32 %v1259, %v1276
        %v1303 = vmul.f32 %v1260, %v1272
        %v1304 = vmul.f32 %v1261, %v1276
        %v1305 = vmul.f32 %v1262, %v1272
        %v1306 = vmul.f32 %v1263, %v1276
        %v1307 = vmul.f32 %v1264, %v1272
        %v1308 = vmul.f32 %v1265, %v1276
        %v1309 = vmul.f32 %v1266, %v1272
        %v1310 = vmul.f32 %v1267, %v1276
        %v1311 = vpack.c.bf16 %v1281, %v1279
        %v1312 = vpack.c.bf16 %v1282, %v1280
        %v1313 = vpack.c.bf16 %v1285, %v1283
        %v1314 = vpack.c.bf16 %v1286, %v1284
        %v1315 = vpack.c.bf16 %v1289, %v1287
        %v1316 = vpack.c.bf16 %v1290, %v1288
        %v1317 = vpack.c.bf16 %v1293, %v1291
        %v1318 = vpack.c.bf16 %v1294, %v1292
        %v1319 = vpack.c.bf16 %v1297, %v1295
        %v1320 = vpack.c.bf16 %v1298, %v1296
        %v1321 = vpack.c.bf16 %v1301, %v1299
        %v1322 = vpack.c.bf16 %v1302, %v1300
        %v1323 = vpack.c.bf16 %v1305, %v1303
        %v1324 = vpack.c.bf16 %v1306, %v1304
        %v1325 = vpack.c.bf16 %v1309, %v1307
        %v1326 = vpack.c.bf16 %v1310, %v1308
        %v1359 = vunpack.c.l.b16 %v979
        %v1360 = vunpack.c.h.b16 %v979
        %v1361 = vunpack.c.l.b16 %v980
        %v1362 = vunpack.c.h.b16 %v980
        %v1363 = vunpack.c.l.b16 %v981
        %v1364 = vunpack.c.h.b16 %v981
        %v1365 = vunpack.c.l.b16 %v982
        %v1366 = vunpack.c.h.b16 %v982
        %v1367 = vunpack.c.l.b16 %v983
        %v1368 = vunpack.c.h.b16 %v983
        %v1369 = vunpack.c.l.b16 %v984
        %v1370 = vunpack.c.h.b16 %v984
        %v1371 = vunpack.c.l.b16 %v985
        %v1372 = vunpack.c.h.b16 %v985
        %v1373 = vunpack.c.l.b16 %v986
        %v1374 = vunpack.c.h.b16 %v986
        %v1375 = vunpack.c.l.b16 %v987
        %v1376 = vunpack.c.h.b16 %v987
        %v1377 = vunpack.c.l.b16 %v988
        %v1378 = vunpack.c.h.b16 %v988
        %v1379 = vunpack.c.l.b16 %v989
        %v1380 = vunpack.c.h.b16 %v989
        %v1381 = vunpack.c.l.b16 %v990
        %v1382 = vunpack.c.h.b16 %v990
        %v1383 = vunpack.c.l.b16 %v991
        %v1384 = vunpack.c.h.b16 %v991
        %v1385 = vunpack.c.l.b16 %v992
        %v1386 = vunpack.c.h.b16 %v992
        %v1387 = vunpack.c.l.b16 %v993
        %v1388 = vunpack.c.h.b16 %v993
        %v1389 = vunpack.c.l.b16 %v994
        %v1390 = vunpack.c.h.b16 %v994
        %v1391 = vunpack.c.l.b16 %v995
        %v1392 = vunpack.c.h.b16 %v995
        %v1393 = vunpack.c.l.b16 %v996
        %v1394 = vunpack.c.h.b16 %v996
        %v1395 = vunpack.c.l.b16 %v997
        %v1396 = vunpack.c.h.b16 %v997
        %v1397 = vunpack.c.l.b16 %v998
        %v1398 = vunpack.c.h.b16 %v998
        %v1399 = vunpack.c.l.b16 %v999
        %v1400 = vunpack.c.h.b16 %v999
        %v1401 = vunpack.c.l.b16 %v1000
        %v1402 = vunpack.c.h.b16 %v1000
        %v1403 = vunpack.c.l.b16 %v1001
        %v1404 = vunpack.c.h.b16 %v1001
        %v1405 = vunpack.c.l.b16 %v1002
        %v1406 = vunpack.c.h.b16 %v1002
        %v1407 = vunpack.c.l.b16 %v1003
        %v1408 = vunpack.c.h.b16 %v1003
        %v1409 = vunpack.c.l.b16 %v1004
        %v1410 = vunpack.c.h.b16 %v1004
        %v1411 = vunpack.c.l.b16 %v1005
        %v1412 = vunpack.c.h.b16 %v1005
        %v1413 = vunpack.c.l.b16 %v1006
        %v1414 = vunpack.c.h.b16 %v1006
        %v1415 = vunpack.c.l.b16 %v1007
        %v1416 = vunpack.c.h.b16 %v1007
        %v1417 = vunpack.c.l.b16 %v1008
        %v1418 = vunpack.c.h.b16 %v1008
        %v1419 = vunpack.c.l.b16 %v1009
        %v1420 = vunpack.c.h.b16 %v1009
        %v1421 = vunpack.c.l.b16 %v1010
        %v1422 = vunpack.c.h.b16 %v1010
        %v1423 = vpack.c.b16 %v1361, %v1359
        %v1424 = vpack.c.b16 %v1362, %v1360
        %v1425 = vpack.c.b16 %v1365, %v1363
        %v1426 = vpack.c.b16 %v1366, %v1364
        %v1427 = vpack.c.b16 %v1369, %v1367
        %v1428 = vpack.c.b16 %v1370, %v1368
        %v1429 = vpack.c.b16 %v1373, %v1371
        %v1430 = vpack.c.b16 %v1374, %v1372
        %v1431 = vpack.c.b16 %v1377, %v1375
        %v1432 = vpack.c.b16 %v1378, %v1376
        %v1433 = vpack.c.b16 %v1381, %v1379
        %v1434 = vpack.c.b16 %v1382, %v1380
        %v1435 = vpack.c.b16 %v1385, %v1383
        %v1436 = vpack.c.b16 %v1386, %v1384
        %v1437 = vpack.c.b16 %v1389, %v1387
        %v1438 = vpack.c.b16 %v1390, %v1388
        %v1439 = vpack.c.b16 %v1393, %v1391
        %v1440 = vpack.c.b16 %v1394, %v1392
        %v1441 = vpack.c.b16 %v1397, %v1395
        %v1442 = vpack.c.b16 %v1398, %v1396
        %v1443 = vpack.c.b16 %v1401, %v1399
        %v1444 = vpack.c.b16 %v1402, %v1400
        %v1445 = vpack.c.b16 %v1405, %v1403
        %v1446 = vpack.c.b16 %v1406, %v1404
        %v1447 = vpack.c.b16 %v1409, %v1407
        %v1448 = vpack.c.b16 %v1410, %v1408
        %v1449 = vpack.c.b16 %v1413, %v1411
        %v1450 = vpack.c.b16 %v1414, %v1412
        %v1451 = vpack.c.b16 %v1417, %v1415
        %v1452 = vpack.c.b16 %v1418, %v1416
        %v1453 = vpack.c.b16 %v1421, %v1419
        %v1454 = vpack.c.b16 %v1422, %v1420
        %1487 = vmatprep.subr.bf16.mxu0 %v1424
        %1488 = vmatpush1.bf16.msra.mxu0 %v1423
        %1489 = vmatprep.subr.bf16.mxu0 %v1426
        %1490 = vmatpush1.bf16.msra.mxu0 %v1425
        %1491 = vmatprep.subr.bf16.mxu0 %v1428
        %1492 = vmatpush1.bf16.msra.mxu0 %v1427
        %1493 = vmatprep.subr.bf16.mxu0 %v1430
        %1494 = vmatpush1.bf16.msra.mxu0 %v1429
        %1495 = vmatprep.subr.bf16.mxu0 %v1432
        %1496 = vmatpush1.bf16.msra.mxu0 %v1431
        %1497 = vmatprep.subr.bf16.mxu0 %v1434
        %1498 = vmatpush1.bf16.msra.mxu0 %v1433
        %1499 = vmatprep.subr.bf16.mxu0 %v1436
        %1500 = vmatpush1.bf16.msra.mxu0 %v1435
        %1501 = vmatprep.subr.bf16.mxu0 %v1438
        %1502 = vmatpush1.bf16.msra.mxu0 %v1437
        %1503 = vmatprep.subr.bf16.mxu0 %v1440
        %1504 = vmatpush1.bf16.msra.mxu0 %v1439
        %1505 = vmatprep.subr.bf16.mxu0 %v1442
        %1506 = vmatpush1.bf16.msra.mxu0 %v1441
        %1507 = vmatprep.subr.bf16.mxu0 %v1444
        %1508 = vmatpush1.bf16.msra.mxu0 %v1443
        %1509 = vmatprep.subr.bf16.mxu0 %v1446
        %1510 = vmatpush1.bf16.msra.mxu0 %v1445
        %1511 = vmatprep.subr.bf16.mxu0 %v1448
        %1512 = vmatpush1.bf16.msra.mxu0 %v1447
        %1513 = vmatprep.subr.bf16.mxu0 %v1450
        %1514 = vmatpush1.bf16.msra.mxu0 %v1449
        %1515 = vmatprep.subr.bf16.mxu0 %v1452
        %1516 = vmatpush1.bf16.msra.mxu0 %v1451
        %1517 = vmatprep.subr.bf16.mxu0 %v1454
        %1518 = vmatpush1.bf16.msra.mxu0 %v1453
        %1519 = vmatprep.mubr.bf16.mxu0 %v1312
        %1520 = vmatmul.mubr.bf16.gmra.mrb[0].mxu0 %v1311
        %v1521 = vpop.f32.mrb[0].mxu0
        %v1522 = vadd.f32 0.0, %v1521
        %v1523 = vpop.f32.mrb[0].mxu0
        %v1524 = vadd.f32 0.0, %v1523
        %v1525 = vpop.f32.mrb[0].mxu0
        %v1526 = vadd.f32 0.0, %v1525
        %v1527 = vpop.f32.mrb[0].mxu0
        %v1528 = vadd.f32 0.0, %v1527
        %1529 = vmatprep.mubr.bf16.mxu0 %v1314
        %1530 = vmatmul.mubr.bf16.gmra.mrb[0].mxu0 %v1313
        %v1531 = vpop.f32.mrb[0].mxu0
        %v1532 = vadd.f32 0.0, %v1531
        %v1533 = vpop.f32.mrb[0].mxu0
        %v1534 = vadd.f32 0.0, %v1533
        %v1535 = vpop.f32.mrb[0].mxu0
        %v1536 = vadd.f32 0.0, %v1535
        %v1537 = vpop.f32.mrb[0].mxu0
        %v1538 = vadd.f32 0.0, %v1537
        %1539 = vmatprep.mubr.bf16.mxu0 %v1316
        %1540 = vmatmul.mubr.bf16.gmra.mrb[0].mxu0 %v1315
        %v1541 = vpop.f32.mrb[0].mxu0
        %v1542 = vadd.f32 0.0, %v1541
        %v1543 = vpop.f32.mrb[0].mxu0
        %v1544 = vadd.f32 0.0, %v1543
        %v1545 = vpop.f32.mrb[0].mxu0
        %v1546 = vadd.f32 0.0, %v1545
        %v1547 = vpop.f32.mrb[0].mxu0
        %v1548 = vadd.f32 0.0, %v1547
        %1549 = vmatprep.mubr.bf16.mxu0 %v1318
        %1550 = vmatmul.mubr.bf16.gmra.mrb[0].mxu0 %v1317
        %v1551 = vpop.f32.mrb[0].mxu0
        %v1552 = vadd.f32 0.0, %v1551
        %v1553 = vpop.f32.mrb[0].mxu0
        %v1554 = vadd.f32 0.0, %v1553
        %v1555 = vpop.f32.mrb[0].mxu0
        %v1556 = vadd.f32 0.0, %v1555
        %v1557 = vpop.f32.mrb[0].mxu0
        %v1558 = vadd.f32 0.0, %v1557
        %1559 = vmatprep.mubr.bf16.mxu0 %v1320
        %1560 = vmatmul.mubr.bf16.gmra.mrb[0].mxu0 %v1319
        %v1561 = vpop.f32.mrb[0].mxu0
        %v1562 = vadd.f32 0.0, %v1561
        %v1563 = vpop.f32.mrb[0].mxu0
        %v1564 = vadd.f32 0.0, %v1563
        %v1565 = vpop.f32.mrb[0].mxu0
        %v1566 = vadd.f32 0.0, %v1565
        %v1567 = vpop.f32.mrb[0].mxu0
        %v1568 = vadd.f32 0.0, %v1567
        %1569 = vmatprep.mubr.bf16.mxu0 %v1322
        %1570 = vmatmul.mubr.bf16.gmra.mrb[0].mxu0 %v1321
        %v1571 = vpop.f32.mrb[0].mxu0
        %v1572 = vadd.f32 0.0, %v1571
        %v1573 = vpop.f32.mrb[0].mxu0
        %v1574 = vadd.f32 0.0, %v1573
        %v1575 = vpop.f32.mrb[0].mxu0
        %v1576 = vadd.f32 0.0, %v1575
        %v1577 = vpop.f32.mrb[0].mxu0
        %v1578 = vadd.f32 0.0, %v1577
        %1579 = vmatprep.mubr.bf16.mxu0 %v1324
        %1580 = vmatmul.mubr.bf16.gmra.mrb[0].mxu0 %v1323
        %v1581 = vpop.f32.mrb[0].mxu0
        %v1582 = vadd.f32 0.0, %v1581
        %v1583 = vpop.f32.mrb[0].mxu0
        %v1584 = vadd.f32 0.0, %v1583
        %v1585 = vpop.f32.mrb[0].mxu0
        %v1586 = vadd.f32 0.0, %v1585
        %v1587 = vpop.f32.mrb[0].mxu0
        %v1588 = vadd.f32 0.0, %v1587
        %1589 = vmatprep.mubr.bf16.mxu0 %v1326
        %1590 = vmatmul.mubr.bf16.gmra.mrb[0].mxu0 %v1325
        %v1591 = vpop.f32.mrb[0].mxu0
        %v1592 = vadd.f32 0.0, %v1591
        %v1593 = vpop.f32.mrb[0].mxu0
        %v1594 = vadd.f32 0.0, %v1593
        %v1595 = vpop.f32.mrb[0].mxu0
        %v1596 = vadd.f32 0.0, %v1595
        %v1597 = vpop.f32.mrb[0].mxu0
        %v1598 = vadd.f32 0.0, %v1597
        %1599 = vdwg.mxu0
        %v1632 = vunpack.c.l.b16 %v1011
        %v1633 = vunpack.c.h.b16 %v1011
        %v1634 = vunpack.c.l.b16 %v1012
        %v1635 = vunpack.c.h.b16 %v1012
        %v1636 = vunpack.c.l.b16 %v1013
        %v1637 = vunpack.c.h.b16 %v1013
        %v1638 = vunpack.c.l.b16 %v1014
        %v1639 = vunpack.c.h.b16 %v1014
        %v1640 = vunpack.c.l.b16 %v1015
        %v1641 = vunpack.c.h.b16 %v1015
        %v1642 = vunpack.c.l.b16 %v1016
        %v1643 = vunpack.c.h.b16 %v1016
        %v1644 = vunpack.c.l.b16 %v1017
        %v1645 = vunpack.c.h.b16 %v1017
        %v1646 = vunpack.c.l.b16 %v1018
        %v1647 = vunpack.c.h.b16 %v1018
        %v1648 = vunpack.c.l.b16 %v1019
        %v1649 = vunpack.c.h.b16 %v1019
        %v1650 = vunpack.c.l.b16 %v1020
        %v1651 = vunpack.c.h.b16 %v1020
        %v1652 = vunpack.c.l.b16 %v1021
        %v1653 = vunpack.c.h.b16 %v1021
        %v1654 = vunpack.c.l.b16 %v1022
        %v1655 = vunpack.c.h.b16 %v1022
        %v1656 = vunpack.c.l.b16 %v1023
        %v1657 = vunpack.c.h.b16 %v1023
        %v1658 = vunpack.c.l.b16 %v1024
        %v1659 = vunpack.c.h.b16 %v1024
        %v1660 = vunpack.c.l.b16 %v1025
        %v1661 = vunpack.c.h.b16 %v1025
        %v1662 = vunpack.c.l.b16 %v1026
        %v1663 = vunpack.c.h.b16 %v1026
        %v1664 = vunpack.c.l.b16 %v1027
        %v1665 = vunpack.c.h.b16 %v1027
        %v1666 = vunpack.c.l.b16 %v1028
        %v1667 = vunpack.c.h.b16 %v1028
        %v1668 = vunpack.c.l.b16 %v1029
        %v1669 = vunpack.c.h.b16 %v1029
        %v1670 = vunpack.c.l.b16 %v1030
        %v1671 = vunpack.c.h.b16 %v1030
        %v1672 = vunpack.c.l.b16 %v1031
        %v1673 = vunpack.c.h.b16 %v1031
        %v1674 = vunpack.c.l.b16 %v1032
        %v1675 = vunpack.c.h.b16 %v1032
        %v1676 = vunpack.c.l.b16 %v1033
        %v1677 = vunpack.c.h.b16 %v1033
        %v1678 = vunpack.c.l.b16 %v1034
        %v1679 = vunpack.c.h.b16 %v1034
        %v1680 = vunpack.c.l.b16 %v1035
        %v1681 = vunpack.c.h.b16 %v1035
        %v1682 = vunpack.c.l.b16 %v1036
        %v1683 = vunpack.c.h.b16 %v1036
        %v1684 = vunpack.c.l.b16 %v1037
        %v1685 = vunpack.c.h.b16 %v1037
        %v1686 = vunpack.c.l.b16 %v1038
        %v1687 = vunpack.c.h.b16 %v1038
        %v1688 = vunpack.c.l.b16 %v1039
        %v1689 = vunpack.c.h.b16 %v1039
        %v1690 = vunpack.c.l.b16 %v1040
        %v1691 = vunpack.c.h.b16 %v1040
        %v1692 = vunpack.c.l.b16 %v1041
        %v1693 = vunpack.c.h.b16 %v1041
        %v1694 = vunpack.c.l.b16 %v1042
        %v1695 = vunpack.c.h.b16 %v1042
        %v1696 = vpack.c.b16 %v1634, %v1632
        %v1697 = vpack.c.b16 %v1635, %v1633
        %v1698 = vpack.c.b16 %v1638, %v1636
        %v1699 = vpack.c.b16 %v1639, %v1637
        %v1700 = vpack.c.b16 %v1642, %v1640
        %v1701 = vpack.c.b16 %v1643, %v1641
        %v1702 = vpack.c.b16 %v1646, %v1644
        %v1703 = vpack.c.b16 %v1647, %v1645
        %v1704 = vpack.c.b16 %v1650, %v1648
        %v1705 = vpack.c.b16 %v1651, %v1649
        %v1706 = vpack.c.b16 %v1654, %v1652
        %v1707 = vpack.c.b16 %v1655, %v1653
        %v1708 = vpack.c.b16 %v1658, %v1656
        %v1709 = vpack.c.b16 %v1659, %v1657
        %v1710 = vpack.c.b16 %v1662, %v1660
        %v1711 = vpack.c.b16 %v1663, %v1661
        %v1712 = vpack.c.b16 %v1666, %v1664
        %v1713 = vpack.c.b16 %v1667, %v1665
        %v1714 = vpack.c.b16 %v1670, %v1668
        %v1715 = vpack.c.b16 %v1671, %v1669
        %v1716 = vpack.c.b16 %v1674, %v1672
        %v1717 = vpack.c.b16 %v1675, %v1673
        %v1718 = vpack.c.b16 %v1678, %v1676
        %v1719 = vpack.c.b16 %v1679, %v1677
        %v1720 = vpack.c.b16 %v1682, %v1680
        %v1721 = vpack.c.b16 %v1683, %v1681
        %v1722 = vpack.c.b16 %v1686, %v1684
        %v1723 = vpack.c.b16 %v1687, %v1685
        %v1724 = vpack.c.b16 %v1690, %v1688
        %v1725 = vpack.c.b16 %v1691, %v1689
        %v1726 = vpack.c.b16 %v1694, %v1692
        %v1727 = vpack.c.b16 %v1695, %v1693
        %1760 = vmatprep.subr.bf16.mxu0 %v1697
        %1761 = vmatpush1.bf16.msra.mxu0 %v1696
        %1762 = vmatprep.subr.bf16.mxu0 %v1699
        %1763 = vmatpush1.bf16.msra.mxu0 %v1698
        %1764 = vmatprep.subr.bf16.mxu0 %v1701
        %1765 = vmatpush1.bf16.msra.mxu0 %v1700
        %1766 = vmatprep.subr.bf16.mxu0 %v1703
        %1767 = vmatpush1.bf16.msra.mxu0 %v1702
        %1768 = vmatprep.subr.bf16.mxu0 %v1705
        %1769 = vmatpush1.bf16.msra.mxu0 %v1704
        %1770 = vmatprep.subr.bf16.mxu0 %v1707
        %1771 = vmatpush1.bf16.msra.mxu0 %v1706
        %1772 = vmatprep.subr.bf16.mxu0 %v1709
        %1773 = vmatpush1.bf16.msra.mxu0 %v1708
        %1774 = vmatprep.subr.bf16.mxu0 %v1711
        %1775 = vmatpush1.bf16.msra.mxu0 %v1710
        %1776 = vmatprep.subr.bf16.mxu0 %v1713
        %1777 = vmatpush1.bf16.msra.mxu0 %v1712
        %1778 = vmatprep.subr.bf16.mxu0 %v1715
        %1779 = vmatpush1.bf16.msra.mxu0 %v1714
        %1780 = vmatprep.subr.bf16.mxu0 %v1717
        %1781 = vmatpush1.bf16.msra.mxu0 %v1716
        %1782 = vmatprep.subr.bf16.mxu0 %v1719
        %1783 = vmatpush1.bf16.msra.mxu0 %v1718
        %1784 = vmatprep.subr.bf16.mxu0 %v1721
        %1785 = vmatpush1.bf16.msra.mxu0 %v1720
        %1786 = vmatprep.subr.bf16.mxu0 %v1723
        %1787 = vmatpush1.bf16.msra.mxu0 %v1722
        %1788 = vmatprep.subr.bf16.mxu0 %v1725
        %1789 = vmatpush1.bf16.msra.mxu0 %v1724
        %1790 = vmatprep.subr.bf16.mxu0 %v1727
        %1791 = vmatpush1.bf16.msra.mxu0 %v1726
        %1792 = vmatprep.mubr.bf16.mxu0 %v1312
        %1793 = vmatmul.mubr.bf16.gmra.mrb[0].mxu0 %v1311
        %v1794 = vpop.f32.mrb[0].mxu0
        %v1795 = vadd.f32 0.0, %v1794
        %v1796 = vpop.f32.mrb[0].mxu0
        %v1797 = vadd.f32 0.0, %v1796
        %v1798 = vpop.f32.mrb[0].mxu0
        %v1799 = vadd.f32 0.0, %v1798
        %v1800 = vpop.f32.mrb[0].mxu0
        %v1801 = vadd.f32 0.0, %v1800
        %1802 = vmatprep.mubr.bf16.mxu0 %v1314
        %1803 = vmatmul.mubr.bf16.gmra.mrb[0].mxu0 %v1313
        %v1804 = vpop.f32.mrb[0].mxu0
        %v1805 = vadd.f32 0.0, %v1804
        %v1806 = vpop.f32.mrb[0].mxu0
        %v1807 = vadd.f32 0.0, %v1806
        %v1808 = vpop.f32.mrb[0].mxu0
        %v1809 = vadd.f32 0.0, %v1808
        %v1810 = vpop.f32.mrb[0].mxu0
        %v1811 = vadd.f32 0.0, %v1810
        %1812 = vmatprep.mubr.bf16.mxu0 %v1316
        %1813 = vmatmul.mubr.bf16.gmra.mrb[0].mxu0 %v1315
        %v1814 = vpop.f32.mrb[0].mxu0
        %v1815 = vadd.f32 0.0, %v1814
        %v1816 = vpop.f32.mrb[0].mxu0
        %v1817 = vadd.f32 0.0, %v1816
        %v1818 = vpop.f32.mrb[0].mxu0
        %v1819 = vadd.f32 0.0, %v1818
        %v1820 = vpop.f32.mrb[0].mxu0
        %v1821 = vadd.f32 0.0, %v1820
        %1822 = vmatprep.mubr.bf16.mxu0 %v1318
        %1823 = vmatmul.mubr.bf16.gmra.mrb[0].mxu0 %v1317
        %v1824 = vpop.f32.mrb[0].mxu0
        %v1825 = vadd.f32 0.0, %v1824
        %v1826 = vpop.f32.mrb[0].mxu0
        %v1827 = vadd.f32 0.0, %v1826
        %v1828 = vpop.f32.mrb[0].mxu0
        %v1829 = vadd.f32 0.0, %v1828
        %v1830 = vpop.f32.mrb[0].mxu0
        %v1831 = vadd.f32 0.0, %v1830
        %1832 = vmatprep.mubr.bf16.mxu0 %v1320
        %1833 = vmatmul.mubr.bf16.gmra.mrb[0].mxu0 %v1319
        %v1834 = vpop.f32.mrb[0].mxu0
        %v1835 = vadd.f32 0.0, %v1834
        %v1836 = vpop.f32.mrb[0].mxu0
        %v1837 = vadd.f32 0.0, %v1836
        %v1838 = vpop.f32.mrb[0].mxu0
        %v1839 = vadd.f32 0.0, %v1838
        %v1840 = vpop.f32.mrb[0].mxu0
        %v1841 = vadd.f32 0.0, %v1840
        %1842 = vmatprep.mubr.bf16.mxu0 %v1322
        %1843 = vmatmul.mubr.bf16.gmra.mrb[0].mxu0 %v1321
        %v1844 = vpop.f32.mrb[0].mxu0
        %v1845 = vadd.f32 0.0, %v1844
        %v1846 = vpop.f32.mrb[0].mxu0
        %v1847 = vadd.f32 0.0, %v1846
        %v1848 = vpop.f32.mrb[0].mxu0
        %v1849 = vadd.f32 0.0, %v1848
        %v1850 = vpop.f32.mrb[0].mxu0
        %v1851 = vadd.f32 0.0, %v1850
        %1852 = vmatprep.mubr.bf16.mxu0 %v1324
        %1853 = vmatmul.mubr.bf16.gmra.mrb[0].mxu0 %v1323
        %v1854 = vpop.f32.mrb[0].mxu0
        %v1855 = vadd.f32 0.0, %v1854
        %v1856 = vpop.f32.mrb[0].mxu0
        %v1857 = vadd.f32 0.0, %v1856
        %v1858 = vpop.f32.mrb[0].mxu0
        %v1859 = vadd.f32 0.0, %v1858
        %v1860 = vpop.f32.mrb[0].mxu0
        %v1861 = vadd.f32 0.0, %v1860
        %1862 = vmatprep.mubr.bf16.mxu0 %v1326
        %1863 = vmatmul.mubr.bf16.gmra.mrb[0].mxu0 %v1325
        %v1864 = vpop.f32.mrb[0].mxu0
        %v1865 = vadd.f32 0.0, %v1864
        %v1866 = vpop.f32.mrb[0].mxu0
        %v1867 = vadd.f32 0.0, %v1866
        %v1868 = vpop.f32.mrb[0].mxu0
        %v1869 = vadd.f32 0.0, %v1868
        %v1870 = vpop.f32.mrb[0].mxu0
        %v1871 = vadd.f32 0.0, %v1870
        %1872 = vdwg.mxu0
        %v1905 = vunpack.c.l.b16 %v1043
        %v1906 = vunpack.c.h.b16 %v1043
        %v1907 = vunpack.c.l.b16 %v1044
        %v1908 = vunpack.c.h.b16 %v1044
        %v1909 = vunpack.c.l.b16 %v1045
        %v1910 = vunpack.c.h.b16 %v1045
        %v1911 = vunpack.c.l.b16 %v1046
        %v1912 = vunpack.c.h.b16 %v1046
        %v1913 = vunpack.c.l.b16 %v1047
        %v1914 = vunpack.c.h.b16 %v1047
        %v1915 = vunpack.c.l.b16 %v1048
        %v1916 = vunpack.c.h.b16 %v1048
        %v1917 = vunpack.c.l.b16 %v1049
        %v1918 = vunpack.c.h.b16 %v1049
        %v1919 = vunpack.c.l.b16 %v1050
        %v1920 = vunpack.c.h.b16 %v1050
        %v1921 = vunpack.c.l.b16 %v1051
        %v1922 = vunpack.c.h.b16 %v1051
        %v1923 = vunpack.c.l.b16 %v1052
        %v1924 = vunpack.c.h.b16 %v1052
        %v1925 = vunpack.c.l.b16 %v1053
        %v1926 = vunpack.c.h.b16 %v1053
        %v1927 = vunpack.c.l.b16 %v1054
        %v1928 = vunpack.c.h.b16 %v1054
        %v1929 = vunpack.c.l.b16 %v1055
        %v1930 = vunpack.c.h.b16 %v1055
        %v1931 = vunpack.c.l.b16 %v1056
        %v1932 = vunpack.c.h.b16 %v1056
        %v1933 = vunpack.c.l.b16 %v1057
        %v1934 = vunpack.c.h.b16 %v1057
        %v1935 = vunpack.c.l.b16 %v1058
        %v1936 = vunpack.c.h.b16 %v1058
        %v1937 = vunpack.c.l.b16 %v1059
        %v1938 = vunpack.c.h.b16 %v1059
        %v1939 = vunpack.c.l.b16 %v1060
        %v1940 = vunpack.c.h.b16 %v1060
        %v1941 = vunpack.c.l.b16 %v1061
        %v1942 = vunpack.c.h.b16 %v1061
        %v1943 = vunpack.c.l.b16 %v1062
        %v1944 = vunpack.c.h.b16 %v1062
        %v1945 = vunpack.c.l.b16 %v1063
        %v1946 = vunpack.c.h.b16 %v1063
        %v1947 = vunpack.c.l.b16 %v1064
        %v1948 = vunpack.c.h.b16 %v1064
        %v1949 = vunpack.c.l.b16 %v1065
        %v1950 = vunpack.c.h.b16 %v1065
        %v1951 = vunpack.c.l.b16 %v1066
        %v1952 = vunpack.c.h.b16 %v1066
        %v1953 = vunpack.c.l.b16 %v1067
        %v1954 = vunpack.c.h.b16 %v1067
        %v1955 = vunpack.c.l.b16 %v1068
        %v1956 = vunpack.c.h.b16 %v1068
        %v1957 = vunpack.c.l.b16 %v1069
        %v1958 = vunpack.c.h.b16 %v1069
        %v1959 = vunpack.c.l.b16 %v1070
        %v1960 = vunpack.c.h.b16 %v1070
        %v1961 = vunpack.c.l.b16 %v1071
        %v1962 = vunpack.c.h.b16 %v1071
        %v1963 = vunpack.c.l.b16 %v1072
        %v1964 = vunpack.c.h.b16 %v1072
        %v1965 = vunpack.c.l.b16 %v1073
        %v1966 = vunpack.c.h.b16 %v1073
        %v1967 = vunpack.c.l.b16 %v1074
        %v1968 = vunpack.c.h.b16 %v1074
        %v1969 = vpack.c.b16 %v1907, %v1905
        %v1970 = vpack.c.b16 %v1908, %v1906
        %v1971 = vpack.c.b16 %v1911, %v1909
        %v1972 = vpack.c.b16 %v1912, %v1910
        %v1973 = vpack.c.b16 %v1915, %v1913
        %v1974 = vpack.c.b16 %v1916, %v1914
        %v1975 = vpack.c.b16 %v1919, %v1917
        %v1976 = vpack.c.b16 %v1920, %v1918
        %v1977 = vpack.c.b16 %v1923, %v1921
        %v1978 = vpack.c.b16 %v1924, %v1922
        %v1979 = vpack.c.b16 %v1927, %v1925
        %v1980 = vpack.c.b16 %v1928, %v1926
        %v1981 = vpack.c.b16 %v1931, %v1929
        %v1982 = vpack.c.b16 %v1932, %v1930
        %v1983 = vpack.c.b16 %v1935, %v1933
        %v1984 = vpack.c.b16 %v1936, %v1934
        %v1985 = vpack.c.b16 %v1939, %v1937
        %v1986 = vpack.c.b16 %v1940, %v1938
        %v1987 = vpack.c.b16 %v1943, %v1941
        %v1988 = vpack.c.b16 %v1944, %v1942
        %v1989 = vpack.c.b16 %v1947, %v1945
        %v1990 = vpack.c.b16 %v1948, %v1946
        %v1991 = vpack.c.b16 %v1951, %v1949
        %v1992 = vpack.c.b16 %v1952, %v1950
        %v1993 = vpack.c.b16 %v1955, %v1953
        %v1994 = vpack.c.b16 %v1956, %v1954
        %v1995 = vpack.c.b16 %v1959, %v1957
        %v1996 = vpack.c.b16 %v1960, %v1958
        %v1997 = vpack.c.b16 %v1963, %v1961
        %v1998 = vpack.c.b16 %v1964, %v1962
        %v1999 = vpack.c.b16 %v1967, %v1965
        %v2000 = vpack.c.b16 %v1968, %v1966
        %2033 = vmatprep.subr.bf16.mxu0 %v1970
        %2034 = vmatpush1.bf16.msra.mxu0 %v1969
        %2035 = vmatprep.subr.bf16.mxu0 %v1972
        %2036 = vmatpush1.bf16.msra.mxu0 %v1971
        %2037 = vmatprep.subr.bf16.mxu0 %v1974
        %2038 = vmatpush1.bf16.msra.mxu0 %v1973
        %2039 = vmatprep.subr.bf16.mxu0 %v1976
        %2040 = vmatpush1.bf16.msra.mxu0 %v1975
        %2041 = vmatprep.subr.bf16.mxu0 %v1978
        %2042 = vmatpush1.bf16.msra.mxu0 %v1977
        %2043 = vmatprep.subr.bf16.mxu0 %v1980
        %2044 = vmatpush1.bf16.msra.mxu0 %v1979
        %2045 = vmatprep.subr.bf16.mxu0 %v1982
        %2046 = vmatpush1.bf16.msra.mxu0 %v1981
        %2047 = vmatprep.subr.bf16.mxu0 %v1984
        %2048 = vmatpush1.bf16.msra.mxu0 %v1983
        %2049 = vmatprep.subr.bf16.mxu0 %v1986
        %2050 = vmatpush1.bf16.msra.mxu0 %v1985
        %2051 = vmatprep.subr.bf16.mxu0 %v1988
        %2052 = vmatpush1.bf16.msra.mxu0 %v1987
        %2053 = vmatprep.subr.bf16.mxu0 %v1990
        %2054 = vmatpush1.bf16.msra.mxu0 %v1989
        %2055 = vmatprep.subr.bf16.mxu0 %v1992
        %2056 = vmatpush1.bf16.msra.mxu0 %v1991
        %2057 = vmatprep.subr.bf16.mxu0 %v1994
        %2058 = vmatpush1.bf16.msra.mxu0 %v1993
        %2059 = vmatprep.subr.bf16.mxu0 %v1996
        %2060 = vmatpush1.bf16.msra.mxu0 %v1995
        %2061 = vmatprep.subr.bf16.mxu0 %v1998
        %2062 = vmatpush1.bf16.msra.mxu0 %v1997
        %2063 = vmatprep.subr.bf16.mxu0 %v2000
        %2064 = vmatpush1.bf16.msra.mxu0 %v1999
        %2065 = vmatprep.mubr.bf16.mxu0 %v1312
        %2066 = vmatmul.mubr.bf16.gmra.mrb[0].mxu0 %v1311
        %v2067 = vpop.f32.mrb[0].mxu0
        %v2068 = vadd.f32 0.0, %v2067
        %v2069 = vpop.f32.mrb[0].mxu0
        %v2070 = vadd.f32 0.0, %v2069
        %v2071 = vpop.f32.mrb[0].mxu0
        %v2072 = vadd.f32 0.0, %v2071
        %v2073 = vpop.f32.mrb[0].mxu0
        %v2074 = vadd.f32 0.0, %v2073
        %2075 = vmatprep.mubr.bf16.mxu0 %v1314
        %2076 = vmatmul.mubr.bf16.gmra.mrb[0].mxu0 %v1313
        %v2077 = vpop.f32.mrb[0].mxu0
        %v2078 = vadd.f32 0.0, %v2077
        %v2079 = vpop.f32.mrb[0].mxu0
        %v2080 = vadd.f32 0.0, %v2079
        %v2081 = vpop.f32.mrb[0].mxu0
        %v2082 = vadd.f32 0.0, %v2081
        %v2083 = vpop.f32.mrb[0].mxu0
        %v2084 = vadd.f32 0.0, %v2083
        %2085 = vmatprep.mubr.bf16.mxu0 %v1316
        %2086 = vmatmul.mubr.bf16.gmra.mrb[0].mxu0 %v1315
        %v2087 = vpop.f32.mrb[0].mxu0
        %v2088 = vadd.f32 0.0, %v2087
        %v2089 = vpop.f32.mrb[0].mxu0
        %v2090 = vadd.f32 0.0, %v2089
        %v2091 = vpop.f32.mrb[0].mxu0
        %v2092 = vadd.f32 0.0, %v2091
        %v2093 = vpop.f32.mrb[0].mxu0
        %v2094 = vadd.f32 0.0, %v2093
        %2095 = vmatprep.mubr.bf16.mxu0 %v1318
        %2096 = vmatmul.mubr.bf16.gmra.mrb[0].mxu0 %v1317
        %v2097 = vpop.f32.mrb[0].mxu0
        %v2098 = vadd.f32 0.0, %v2097
        %v2099 = vpop.f32.mrb[0].mxu0
        %v2100 = vadd.f32 0.0, %v2099
        %v2101 = vpop.f32.mrb[0].mxu0
        %v2102 = vadd.f32 0.0, %v2101
        %v2103 = vpop.f32.mrb[0].mxu0
        %v2104 = vadd.f32 0.0, %v2103
        %2105 = vmatprep.mubr.bf16.mxu0 %v1320
        %2106 = vmatmul.mubr.bf16.gmra.mrb[0].mxu0 %v1319
        %v2107 = vpop.f32.mrb[0].mxu0
        %v2108 = vadd.f32 0.0, %v2107
        %v2109 = vpop.f32.mrb[0].mxu0
        %v2110 = vadd.f32 0.0, %v2109
        %v2111 = vpop.f32.mrb[0].mxu0
        %v2112 = vadd.f32 0.0, %v2111
        %v2113 = vpop.f32.mrb[0].mxu0
        %v2114 = vadd.f32 0.0, %v2113
        %2115 = vmatprep.mubr.bf16.mxu0 %v1322
        %2116 = vmatmul.mubr.bf16.gmra.mrb[0].mxu0 %v1321
        %v2117 = vpop.f32.mrb[0].mxu0
        %v2118 = vadd.f32 0.0, %v2117
        %v2119 = vpop.f32.mrb[0].mxu0
        %v2120 = vadd.f32 0.0, %v2119
        %v2121 = vpop.f32.mrb[0].mxu0
        %v2122 = vadd.f32 0.0, %v2121
        %v2123 = vpop.f32.mrb[0].mxu0
        %v2124 = vadd.f32 0.0, %v2123
        %2125 = vmatprep.mubr.bf16.mxu0 %v1324
        %2126 = vmatmul.mubr.bf16.gmra.mrb[0].mxu0 %v1323
        %v2127 = vpop.f32.mrb[0].mxu0
        %v2128 = vadd.f32 0.0, %v2127
        %v2129 = vpop.f32.mrb[0].mxu0
        %v2130 = vadd.f32 0.0, %v2129
        %v2131 = vpop.f32.mrb[0].mxu0
        %v2132 = vadd.f32 0.0, %v2131
        %v2133 = vpop.f32.mrb[0].mxu0
        %v2134 = vadd.f32 0.0, %v2133
        %2135 = vmatprep.mubr.bf16.mxu0 %v1326
        %2136 = vmatmul.mubr.bf16.gmra.mrb[0].mxu0 %v1325
        %v2137 = vpop.f32.mrb[0].mxu0
        %v2138 = vadd.f32 0.0, %v2137
        %v2139 = vpop.f32.mrb[0].mxu0
        %v2140 = vadd.f32 0.0, %v2139
        %v2141 = vpop.f32.mrb[0].mxu0
        %v2142 = vadd.f32 0.0, %v2141
        %v2143 = vpop.f32.mrb[0].mxu0
        %v2144 = vadd.f32 0.0, %v2143
        %2145 = vdwg.mxu0
        %v2146 = vpack.c.bf16 %v1526, %v1522
        %v2147 = vpack.c.bf16 %v1536, %v1532
        %v2148 = vpack.c.bf16 %v1546, %v1542
        %v2149 = vpack.c.bf16 %v1556, %v1552
        %v2150 = vpack.c.bf16 %v1566, %v1562
        %v2151 = vpack.c.bf16 %v1576, %v1572
        %v2152 = vpack.c.bf16 %v1586, %v1582
        %v2153 = vpack.c.bf16 %v1596, %v1592
        %v2154 = vpack.c.bf16 %v1799, %v1795
        %v2155 = vpack.c.bf16 %v1809, %v1805
        %v2156 = vpack.c.bf16 %v1819, %v1815
        %v2157 = vpack.c.bf16 %v1829, %v1825
        %v2158 = vpack.c.bf16 %v1839, %v1835
        %v2159 = vpack.c.bf16 %v1849, %v1845
        %v2160 = vpack.c.bf16 %v1859, %v1855
        %v2161 = vpack.c.bf16 %v1869, %v1865
        %v2162 = vpack.c.bf16 %v2072, %v2068
        %v2163 = vpack.c.bf16 %v2082, %v2078
        %v2164 = vpack.c.bf16 %v2092, %v2088
        %v2165 = vpack.c.bf16 %v2102, %v2098
        %v2166 = vpack.c.bf16 %v2112, %v2108
        %v2167 = vpack.c.bf16 %v2122, %v2118
        %v2168 = vpack.c.bf16 %v2132, %v2128
        %v2169 = vpack.c.bf16 %v2142, %v2138
        %v2170 = vld [vmem:[#allocation13] sm:$0xf]
        %v2171 = vld [vmem:[#allocation13 + $0x4] sm:$0xf]
        %v2172 = vld [vmem:[#allocation13 + $0x8] sm:$0xf]
        %v2173 = vld [vmem:[#allocation13 + $0xc] sm:$0xf]
        %v2174 = vld [vmem:[#allocation13 + $0x10] sm:$0xf]
        %v2175 = vld [vmem:[#allocation13 + $0x14] sm:$0xf]
        %v2176 = vld [vmem:[#allocation13 + $0x18] sm:$0xf]
        %v2177 = vld [vmem:[#allocation13 + $0x1c] sm:$0xf]
        %v2178 = vld [vmem:[#allocation13 + $0x20] sm:$0xf]
        %v2179 = vld [vmem:[#allocation13 + $0x24] sm:$0xf]
        %v2180 = vld [vmem:[#allocation13 + $0x28] sm:$0xf]
        %v2181 = vld [vmem:[#allocation13 + $0x2c] sm:$0xf]
        %v2182 = vld [vmem:[#allocation13 + $0x30] sm:$0xf]
        %v2183 = vld [vmem:[#allocation13 + $0x34] sm:$0xf]
        %v2184 = vld [vmem:[#allocation13 + $0x38] sm:$0xf]
        %v2185 = vld [vmem:[#allocation13 + $0x3c] sm:$0xf]
        %v2186 = vunpack.c.l.bf16 %v2170
        %v2187 = vunpack.c.l.bf16 %v2171
        %v2188 = vunpack.c.l.bf16 %v2172
        %v2189 = vunpack.c.l.bf16 %v2173
        %v2190 = vunpack.c.l.bf16 %v2174
        %v2191 = vunpack.c.l.bf16 %v2175
        %v2192 = vunpack.c.l.bf16 %v2176
        %v2193 = vunpack.c.l.bf16 %v2177
        %v2194 = vunpack.c.l.bf16 %v2178
        %v2195 = vunpack.c.l.bf16 %v2179
        %v2196 = vunpack.c.l.bf16 %v2180
        %v2197 = vunpack.c.l.bf16 %v2181
        %v2198 = vunpack.c.l.bf16 %v2182
        %v2199 = vunpack.c.l.bf16 %v2183
        %v2200 = vunpack.c.l.bf16 %v2184
        %v2201 = vunpack.c.l.bf16 %v2185
        %vm2202 = vcmask 523264
        %v2204 = vsel %vm2202, %v2146, 0
        %v2207 = vsel %vm2202, %v2147, 0
        %v2210 = vsel %vm2202, %v2148, 0
        %v2213 = vsel %vm2202, %v2149, 0
        %v2216 = vsel %vm2202, %v2150, 0
        %v2219 = vsel %vm2202, %v2151, 0
        %v2222 = vsel %vm2202, %v2152, 0
        %v2225 = vsel %vm2202, %v2153, 0
        %v2228 = vsel %vm2202, %v2154, 0
        %v2231 = vsel %vm2202, %v2155, 0
        %v2234 = vsel %vm2202, %v2156, 0
        %v2237 = vsel %vm2202, %v2157, 0
        %v2240 = vsel %vm2202, %v2158, 0
        %v2243 = vsel %vm2202, %v2159, 0
        %v2246 = vsel %vm2202, %v2160, 0
        %v2249 = vsel %vm2202, %v2161, 0
        %2251 = vmatprep.subr.bf16.mxu0 0
        %2252 = vmatpush1.bf16.xpose.msra.mxu0 %v2228
        %2253 = vmatprep.subr.bf16.mxu0 0
        %2254 = vmatpush1.bf16.xpose.msra.mxu0 %v2231
        %2255 = vmatprep.subr.bf16.mxu0 0
        %2256 = vmatpush1.bf16.xpose.msra.mxu0 %v2234
        %2257 = vmatprep.subr.bf16.mxu0 0
        %2258 = vmatpush1.bf16.xpose.msra.mxu0 %v2237
        %2259 = vmatprep.subr.bf16.mxu0 0
        %2260 = vmatpush1.bf16.xpose.msra.mxu0 %v2240
        %2261 = vmatprep.subr.bf16.mxu0 0
        %2262 = vmatpush1.bf16.xpose.msra.mxu0 %v2243
        %2263 = vmatprep.subr.bf16.mxu0 0
        %2264 = vmatpush1.bf16.xpose.msra.mxu0 %v2246
        %2265 = vmatprep.subr.bf16.mxu0 0
        %2266 = vmatpush1.bf16.xpose.msra.mxu0 %v2249
        %2267 = vmatprep.subr.bf16.mxu0 0
        %2268 = vmatpush1.bf16.xpose.msra.mxu0 0
        %2269 = vmatprep.subr.bf16.mxu0 0
        %2270 = vmatpush1.bf16.xpose.msra.mxu0 0
        %2271 = vmatprep.subr.bf16.mxu0 0
        %2272 = vmatpush1.bf16.xpose.msra.mxu0 0
        %2273 = vmatprep.subr.bf16.mxu0 0
        %2274 = vmatpush1.bf16.xpose.msra.mxu0 0
        %2275 = vmatprep.subr.bf16.mxu0 0
        %2276 = vmatpush1.bf16.xpose.msra.mxu0 0
        %2277 = vmatprep.subr.bf16.mxu0 0
        %2278 = vmatpush1.bf16.xpose.msra.mxu0 0
        %2279 = vmatprep.subr.bf16.mxu0 0
        %2280 = vmatpush1.bf16.xpose.msra.mxu0 0
        %2281 = vmatprep.subr.bf16.mxu0 0
        %2282 = vmatpush1.bf16.xpose.msra.mxu0 0
        %2283 = vmatprep.mubr.bf16.mxu0 0
        %2284 = vmatmul.mubr.bf16.gmra.mrb[0].mxu0 %v2204
        %v2285 = vpop.f32.mrb[0].mxu0
        %v2286 = vadd.f32 %v2186, %v2285
        %v2287 = vpop.f32.mrb[0].mxu0
        %v2288 = vpop.f32.mrb[0].mxu0
        %v2289 = vadd.f32 %v2187, %v2288
        %v2290 = vpop.f32.mrb[0].mxu0
        %2291 = vmatprep.mubr.bf16.mxu0 0
        %2292 = vmatmul.mubr.bf16.gmra.mrb[0].mxu0 %v2207
        %v2293 = vpop.f32.mrb[0].mxu0
        %v2294 = vadd.f32 %v2188, %v2293
        %v2295 = vpop.f32.mrb[0].mxu0
        %v2296 = vpop.f32.mrb[0].mxu0
        %v2297 = vadd.f32 %v2189, %v2296
        %v2298 = vpop.f32.mrb[0].mxu0
        %2299 = vmatprep.mubr.bf16.mxu0 0
        %2300 = vmatmul.mubr.bf16.gmra.mrb[0].mxu0 %v2210
        %v2301 = vpop.f32.mrb[0].mxu0
        %v2302 = vadd.f32 %v2190, %v2301
        %v2303 = vpop.f32.mrb[0].mxu0
        %v2304 = vpop.f32.mrb[0].mxu0
        %v2305 = vadd.f32 %v2191, %v2304
        %v2306 = vpop.f32.mrb[0].mxu0
        %2307 = vmatprep.mubr.bf16.mxu0 0
        %2308 = vmatmul.mubr.bf16.gmra.mrb[0].mxu0 %v2213
        %v2309 = vpop.f32.mrb[0].mxu0
        %v2310 = vadd.f32 %v2192, %v2309
        %v2311 = vpop.f32.mrb[0].mxu0
        %v2312 = vpop.f32.mrb[0].mxu0
        %v2313 = vadd.f32 %v2193, %v2312
        %v2314 = vpop.f32.mrb[0].mxu0
        %2315 = vmatprep.mubr.bf16.mxu0 0
        %2316 = vmatmul.mubr.bf16.gmra.mrb[0].mxu0 %v2216
        %v2317 = vpop.f32.mrb[0].mxu0
        %v2318 = vadd.f32 %v2194, %v2317
        %v2319 = vpop.f32.mrb[0].mxu0
        %v2320 = vpop.f32.mrb[0].mxu0
        %v2321 = vadd.f32 %v2195, %v2320
        %v2322 = vpop.f32.mrb[0].mxu0
        %2323 = vmatprep.mubr.bf16.mxu0 0
        %2324 = vmatmul.mubr.bf16.gmra.mrb[0].mxu0 %v2219
        %v2325 = vpop.f32.mrb[0].mxu0
        %v2326 = vadd.f32 %v2196, %v2325
        %v2327 = vpop.f32.mrb[0].mxu0
        %v2328 = vpop.f32.mrb[0].mxu0
        %v2329 = vadd.f32 %v2197, %v2328
        %v2330 = vpop.f32.mrb[0].mxu0
        %2331 = vmatprep.mubr.bf16.mxu0 0
        %2332 = vmatmul.mubr.bf16.gmra.mrb[0].mxu0 %v2222
        %v2333 = vpop.f32.mrb[0].mxu0
        %v2334 = vadd.f32 %v2198, %v2333
        %v2335 = vpop.f32.mrb[0].mxu0
        %v2336 = vpop.f32.mrb[0].mxu0
        %v2337 = vadd.f32 %v2199, %v2336
        %v2338 = vpop.f32.mrb[0].mxu0
        %2339 = vmatprep.mubr.bf16.mxu0 0
        %2340 = vmatmul.mubr.bf16.gmra.mrb[0].mxu0 %v2225
        %v2341 = vpop.f32.mrb[0].mxu0
        %v2342 = vadd.f32 %v2200, %v2341
        %v2343 = vpop.f32.mrb[0].mxu0
        %v2344 = vpop.f32.mrb[0].mxu0
        %v2345 = vadd.f32 %v2201, %v2344
        %v2346 = vpop.f32.mrb[0].mxu0
        %2347 = vdwg.mxu0
        %2348 = vmax.xlane.f32.xlu0 %v2286
        %v2349 = vpop.xlane.xlu0 %2348
        %2350 = vmax.xlane.f32.xlu0 %v2289
        %v2351 = vpop.xlane.xlu0 %2350
        %2352 = vmax.xlane.f32.xlu0 %v2294
        %v2353 = vpop.xlane.xlu0 %2352
        %2354 = vmax.xlane.f32.xlu0 %v2297
        %v2355 = vpop.xlane.xlu0 %2354
        %2356 = vmax.xlane.f32.xlu0 %v2302
        %v2357 = vpop.xlane.xlu0 %2356
        %2358 = vmax.xlane.f32.xlu0 %v2305
        %v2359 = vpop.xlane.xlu0 %2358
        %2360 = vmax.xlane.f32.xlu0 %v2310
        %v2361 = vpop.xlane.xlu0 %2360
        %2362 = vmax.xlane.f32.xlu0 %v2313
        %v2363 = vpop.xlane.xlu0 %2362
        %2364 = vmax.xlane.f32.xlu0 %v2318
        %v2365 = vpop.xlane.xlu0 %2364
        %2366 = vmax.xlane.f32.xlu0 %v2321
        %v2367 = vpop.xlane.xlu0 %2366
        %2368 = vmax.xlane.f32.xlu0 %v2326
        %v2369 = vpop.xlane.xlu0 %2368
        %2370 = vmax.xlane.f32.xlu0 %v2329
        %v2371 = vpop.xlane.xlu0 %2370
        %2372 = vmax.xlane.f32.xlu0 %v2334
        %v2373 = vpop.xlane.xlu0 %2372
        %2374 = vmax.xlane.f32.xlu0 %v2337
        %v2375 = vpop.xlane.xlu0 %2374
        %2376 = vmax.xlane.f32.xlu0 %v2342
        %v2377 = vpop.xlane.xlu0 %2376
        %2378 = vmax.xlane.f32.xlu0 %v2345
        %v2379 = vpop.xlane.xlu0 %2378
        %v2380 = vsub.f32 %v2286, %v2349
        %v2381 = vsub.f32 %v2289, %v2351
        %v2382 = vsub.f32 %v2294, %v2353
        %v2383 = vsub.f32 %v2297, %v2355
        %v2384 = vsub.f32 %v2302, %v2357
        %v2385 = vsub.f32 %v2305, %v2359
        %v2386 = vsub.f32 %v2310, %v2361
        %v2387 = vsub.f32 %v2313, %v2363
        %v2388 = vsub.f32 %v2318, %v2365
        %v2389 = vsub.f32 %v2321, %v2367
        %v2390 = vsub.f32 %v2326, %v2369
        %v2391 = vsub.f32 %v2329, %v2371
        %v2392 = vsub.f32 %v2334, %v2373
        %v2393 = vsub.f32 %v2337, %v2375
        %v2394 = vsub.f32 %v2342, %v2377
        %v2395 = vsub.f32 %v2345, %v2379
        %v2396 = vmul.f32 %v2380, 1.442695
        %v2397 = vpow.pop %v2396
        %v2398 = vmul.f32 %v2381, 1.442695
        %v2399 = vpow.pop %v2398
        %v2400 = vmul.f32 %v2382, 1.442695
        %v2401 = vpow.pop %v2400
        %v2402 = vmul.f32 %v2383, 1.442695
        %v2403 = vpow.pop %v2402
        %v2404 = vmul.f32 %v2384, 1.442695
        %v2405 = vpow.pop %v2404
        %v2406 = vmul.f32 %v2385, 1.442695
        %v2407 = vpow.pop %v2406
        %v2408 = vmul.f32 %v2386, 1.442695
        %v2409 = vpow.pop %v2408
        %v2410 = vmul.f32 %v2387, 1.442695
        %v2411 = vpow.pop %v2410
        %v2412 = vmul.f32 %v2388, 1.442695
        %v2413 = vpow.pop %v2412
        %v2414 = vmul.f32 %v2389, 1.442695
        %v2415 = vpow.pop %v2414
        %v2416 = vmul.f32 %v2390, 1.442695
        %v2417 = vpow.pop %v2416
        %v2418 = vmul.f32 %v2391, 1.442695
        %v2419 = vpow.pop %v2418
        %v2420 = vmul.f32 %v2392, 1.442695
        %v2421 = vpow.pop %v2420
        %v2422 = vmul.f32 %v2393, 1.442695
        %v2423 = vpow.pop %v2422
        %v2424 = vmul.f32 %v2394, 1.442695
        %v2425 = vpow.pop %v2424
        %v2426 = vmul.f32 %v2395, 1.442695
        %v2427 = vpow.pop %v2426
        %2428 = vadd.xlane.f32.xlu0 %v2397
        %v2429 = vpop.xlane.xlu0 %2428
        %2430 = vadd.xlane.f32.xlu0 %v2399
        %v2431 = vpop.xlane.xlu0 %2430
        %2432 = vadd.xlane.f32.xlu0 %v2401
        %v2433 = vpop.xlane.xlu0 %2432
        %2434 = vadd.xlane.f32.xlu0 %v2403
        %v2435 = vpop.xlane.xlu0 %2434
        %2436 = vadd.xlane.f32.xlu0 %v2405
        %v2437 = vpop.xlane.xlu0 %2436
        %2438 = vadd.xlane.f32.xlu0 %v2407
        %v2439 = vpop.xlane.xlu0 %2438
        %2440 = vadd.xlane.f32.xlu0 %v2409
        %v2441 = vpop.xlane.xlu0 %2440
        %2442 = vadd.xlane.f32.xlu0 %v2411
        %v2443 = vpop.xlane.xlu0 %2442
        %2444 = vadd.xlane.f32.xlu0 %v2413
        %v2445 = vpop.xlane.xlu0 %2444
        %2446 = vadd.xlane.f32.xlu0 %v2415
        %v2447 = vpop.xlane.xlu0 %2446
        %2448 = vadd.xlane.f32.xlu0 %v2417
        %v2449 = vpop.xlane.xlu0 %2448
        %2450 = vadd.xlane.f32.xlu0 %v2419
        %v2451 = vpop.xlane.xlu0 %2450
        %2452 = vadd.xlane.f32.xlu0 %v2421
        %v2453 = vpop.xlane.xlu0 %2452
        %2454 = vadd.xlane.f32.xlu0 %v2423
        %v2455 = vpop.xlane.xlu0 %2454
        %2456 = vadd.xlane.f32.xlu0 %v2425
        %v2457 = vpop.xlane.xlu0 %2456
        %2458 = vadd.xlane.f32.xlu0 %v2427
        %v2459 = vpop.xlane.xlu0 %2458
        %v2460 = vrcp.pop %v2429
        %v2461 = vrcp.pop %v2431
        %v2462 = vrcp.pop %v2433
        %v2463 = vrcp.pop %v2435
        %v2464 = vrcp.pop %v2437
        %v2465 = vrcp.pop %v2439
        %v2466 = vrcp.pop %v2441
        %v2467 = vrcp.pop %v2443
        %v2468 = vrcp.pop %v2445
        %v2469 = vrcp.pop %v2447
        %v2470 = vrcp.pop %v2449
        %v2471 = vrcp.pop %v2451
        %v2472 = vrcp.pop %v2453
        %v2473 = vrcp.pop %v2455
        %v2474 = vrcp.pop %v2457
        %v2475 = vrcp.pop %v2459
        %v2476 = vmul.f32 %v2397, %v2460
        %v2477 = vmul.f32 %v2399, %v2461
        %v2478 = vmul.f32 %v2401, %v2462
        %v2479 = vmul.f32 %v2403, %v2463
        %v2480 = vmul.f32 %v2405, %v2464
        %v2481 = vmul.f32 %v2407, %v2465
        %v2482 = vmul.f32 %v2409, %v2466
        %v2483 = vmul.f32 %v2411, %v2467
        %v2484 = vmul.f32 %v2413, %v2468
        %v2485 = vmul.f32 %v2415, %v2469
        %v2486 = vmul.f32 %v2417, %v2470
        %v2487 = vmul.f32 %v2419, %v2471
        %v2488 = vmul.f32 %v2421, %v2472
        %v2489 = vmul.f32 %v2423, %v2473
        %v2490 = vmul.f32 %v2425, %v2474
        %v2491 = vmul.f32 %v2427, %v2475
        %v2492 = vpack.c.bf16 %v2477, %v2476
        %v2493 = vpack.c.bf16 %v2479, %v2478
        %v2494 = vpack.c.bf16 %v2481, %v2480
        %v2495 = vpack.c.bf16 %v2483, %v2482
        %v2496 = vpack.c.bf16 %v2485, %v2484
        %v2497 = vpack.c.bf16 %v2487, %v2486
        %v2498 = vpack.c.bf16 %v2489, %v2488
        %v2499 = vpack.c.bf16 %v2491, %v2490
        %2500 = vmatprep.subr.bf16.mxu0 0
        %2501 = vmatpush1.bf16.msra.mxu0 %v2162
        %2502 = vmatprep.subr.bf16.mxu0 0
        %2503 = vmatpush1.bf16.msra.mxu0 %v2163
        %2504 = vmatprep.subr.bf16.mxu0 0
        %2505 = vmatpush1.bf16.msra.mxu0 %v2164
        %2506 = vmatprep.subr.bf16.mxu0 0
        %2507 = vmatpush1.bf16.msra.mxu0 %v2165
        %2508 = vmatprep.subr.bf16.mxu0 0
        %2509 = vmatpush1.bf16.msra.mxu0 %v2166
        %2510 = vmatprep.subr.bf16.mxu0 0
        %2511 = vmatpush1.bf16.msra.mxu0 %v2167
        %2512 = vmatprep.subr.bf16.mxu0 0
        %2513 = vmatpush1.bf16.msra.mxu0 %v2168
        %2514 = vmatprep.subr.bf16.mxu0 0
        %2515 = vmatpush1.bf16.msra.mxu0 %v2169
        %2516 = vmatprep.subr.bf16.mxu0 0
        %2517 = vmatpush1.bf16.msra.mxu0 0
        %2518 = vmatprep.subr.bf16.mxu0 0
        %2519 = vmatpush1.bf16.msra.mxu0 0
        %2520 = vmatprep.subr.bf16.mxu0 0
        %2521 = vmatpush1.bf16.msra.mxu0 0
        %2522 = vmatprep.subr.bf16.mxu0 0
        %2523 = vmatpush1.bf16.msra.mxu0 0
        %2524 = vmatprep.subr.bf16.mxu0 0
        %2525 = vmatpush1.bf16.msra.mxu0 0
        %2526 = vmatprep.subr.bf16.mxu0 0
        %2527 = vmatpush1.bf16.msra.mxu0 0
        %2528 = vmatprep.subr.bf16.mxu0 0
        %2529 = vmatpush1.bf16.msra.mxu0 0
        %2530 = vmatprep.subr.bf16.mxu0 0
        %2531 = vmatpush1.bf16.msra.mxu0 0
        %2532 = vmatprep.mubr.bf16.mxu0 0
        %2533 = vmatmul.mubr.bf16.gmra.mrb[0].mxu0 %v2492
        %v2534 = vpop.f32.mrb[0].mxu0
        %v2535 = vadd.f32 0.0, %v2534
        %v2536 = vpop.f32.mrb[0].mxu0
        %v2537 = vpop.f32.mrb[0].mxu0
        %v2538 = vadd.f32 0.0, %v2537
        %v2539 = vpop.f32.mrb[0].mxu0
        %2540 = vmatprep.mubr.bf16.mxu0 0
        %2541 = vmatmul.mubr.bf16.gmra.mrb[0].mxu0 %v2493
        %v2542 = vpop.f32.mrb[0].mxu0
        %v2543 = vadd.f32 0.0, %v2542
        %v2544 = vpop.f32.mrb[0].mxu0
        %v2545 = vpop.f32.mrb[0].mxu0
        %v2546 = vadd.f32 0.0, %v2545
        %v2547 = vpop.f32.mrb[0].mxu0
        %2548 = vmatprep.mubr.bf16.mxu0 0
        %2549 = vmatmul.mubr.bf16.gmra.mrb[0].mxu0 %v2494
        %v2550 = vpop.f32.mrb[0].mxu0
        %v2551 = vadd.f32 0.0, %v2550
        %v2552 = vpop.f32.mrb[0].mxu0
        %v2553 = vpop.f32.mrb[0].mxu0
        %v2554 = vadd.f32 0.0, %v2553
        %v2555 = vpop.f32.mrb[0].mxu0
        %2556 = vmatprep.mubr.bf16.mxu0 0
        %2557 = vmatmul.mubr.bf16.gmra.mrb[0].mxu0 %v2495
        %v2558 = vpop.f32.mrb[0].mxu0
        %v2559 = vadd.f32 0.0, %v2558
        %v2560 = vpop.f32.mrb[0].mxu0
        %v2561 = vpop.f32.mrb[0].mxu0
        %v2562 = vadd.f32 0.0, %v2561
        %v2563 = vpop.f32.mrb[0].mxu0
        %2564 = vmatprep.mubr.bf16.mxu0 0
        %2565 = vmatmul.mubr.bf16.gmra.mrb[0].mxu0 %v2496
        %v2566 = vpop.f32.mrb[0].mxu0
        %v2567 = vadd.f32 0.0, %v2566
        %v2568 = vpop.f32.mrb[0].mxu0
        %v2569 = vpop.f32.mrb[0].mxu0
        %v2570 = vadd.f32 0.0, %v2569
        %v2571 = vpop.f32.mrb[0].mxu0
        %2572 = vmatprep.mubr.bf16.mxu0 0
        %2573 = vmatmul.mubr.bf16.gmra.mrb[0].mxu0 %v2497
        %v2574 = vpop.f32.mrb[0].mxu0
        %v2575 = vadd.f32 0.0, %v2574
        %v2576 = vpop.f32.mrb[0].mxu0
        %v2577 = vpop.f32.mrb[0].mxu0
        %v2578 = vadd.f32 0.0, %v2577
        %v2579 = vpop.f32.mrb[0].mxu0
        %2580 = vmatprep.mubr.bf16.mxu0 0
        %2581 = vmatmul.mubr.bf16.gmra.mrb[0].mxu0 %v2498
        %v2582 = vpop.f32.mrb[0].mxu0
        %v2583 = vadd.f32 0.0, %v2582
        %v2584 = vpop.f32.mrb[0].mxu0
        %v2585 = vpop.f32.mrb[0].mxu0
        %v2586 = vadd.f32 0.0, %v2585
        %v2587 = vpop.f32.mrb[0].mxu0
        %2588 = vmatprep.mubr.bf16.mxu0 0
        %2589 = vmatmul.mubr.bf16.gmra.mrb[0].mxu0 %v2499
        %v2590 = vpop.f32.mrb[0].mxu0
        %v2591 = vadd.f32 0.0, %v2590
        %v2592 = vpop.f32.mrb[0].mxu0
        %v2593 = vpop.f32.mrb[0].mxu0
        %v2594 = vadd.f32 0.0, %v2593
        %v2595 = vpop.f32.mrb[0].mxu0
        %2596 = vdwg.mxu0
        %v2597 = vpack.c.bf16 %v2538, %v2535
        %v2598 = vpack.c.bf16 %v2546, %v2543
        %v2599 = vpack.c.bf16 %v2554, %v2551
        %v2600 = vpack.c.bf16 %v2562, %v2559
        %v2601 = vpack.c.bf16 %v2570, %v2567
        %v2602 = vpack.c.bf16 %v2578, %v2575
        %v2603 = vpack.c.bf16 %v2586, %v2583
        %v2604 = vpack.c.bf16 %v2594, %v2591
        %2605 = vst.msk [vmem:[#allocation2] sm:$0xff] %vm2202, %v2597
        %2606 = vst.msk [vmem:[#allocation2 + $0x10] sm:$0xff] %vm2202, %v2598
        %2607 = vst.msk [vmem:[#allocation2 + $0x20] sm:$0xff] %vm2202, %v2599
        %2608 = vst.msk [vmem:[#allocation2 + $0x30] sm:$0xff] %vm2202, %v2600
        %2609 = vst.msk [vmem:[#allocation2 + $0x40] sm:$0xff] %vm2202, %v2601
        %2610 = vst.msk [vmem:[#allocation2 + $0x50] sm:$0xff] %vm2202, %v2602
        %2611 = vst.msk [vmem:[#allocation2 + $0x60] sm:$0xff] %vm2202, %v2603
        %2612 = vst.msk [vmem:[#allocation2 + $0x70] sm:$0xff] %vm2202, %v2604
        %s2613 = scalar_lea.vmem [#allocation13], 64
        %v2614 = vld [vmem:[%s2613] sm:$0xf]
        %v2615 = vld [vmem:[%s2613 + $0x4] sm:$0xf]
        %v2616 = vld [vmem:[%s2613 + $0x8] sm:$0xf]
        %v2617 = vld [vmem:[%s2613 + $0xc] sm:$0xf]
        %v2618 = vld [vmem:[%s2613 + $0x10] sm:$0xf]
        %v2619 = vld [vmem:[%s2613 + $0x14] sm:$0xf]
        %v2620 = vld [vmem:[%s2613 + $0x18] sm:$0xf]
        %v2621 = vld [vmem:[%s2613 + $0x1c] sm:$0xf]
        %v2622 = vld [vmem:[%s2613 + $0x20] sm:$0xf]
        %v2623 = vld [vmem:[%s2613 + $0x24] sm:$0xf]
        %v2624 = vld [vmem:[%s2613 + $0x28] sm:$0xf]
        %v2625 = vld [vmem:[%s2613 + $0x2c] sm:$0xf]
        %v2626 = vld [vmem:[%s2613 + $0x30] sm:$0xf]
        %v2627 = vld [vmem:[%s2613 + $0x34] sm:$0xf]
        %v2628 = vld [vmem:[%s2613 + $0x38] sm:$0xf]
        %v2629 = vld [vmem:[%s2613 + $0x3c] sm:$0xf]
        %v2630 = vunpack.c.l.bf16 %v2614
        %v2631 = vunpack.c.l.bf16 %v2615
        %v2632 = vunpack.c.l.bf16 %v2616
        %v2633 = vunpack.c.l.bf16 %v2617
        %v2634 = vunpack.c.l.bf16 %v2618
        %v2635 = vunpack.c.l.bf16 %v2619
        %v2636 = vunpack.c.l.bf16 %v2620
        %v2637 = vunpack.c.l.bf16 %v2621
        %v2638 = vunpack.c.l.bf16 %v2622
        %v2639 = vunpack.c.l.bf16 %v2623
        %v2640 = vunpack.c.l.bf16 %v2624
        %v2641 = vunpack.c.l.bf16 %v2625
        %v2642 = vunpack.c.l.bf16 %v2626
        %v2643 = vunpack.c.l.bf16 %v2627
        %v2644 = vunpack.c.l.bf16 %v2628
        %v2645 = vunpack.c.l.bf16 %v2629
        %2654 = vrot.lane.b32.xlu0 %v2146, 64
        %v2655 = vpop.permute.xlu0 %2654
        %2656 = vrot.lane.b32.xlu0 %v2147, 64
        %v2657 = vpop.permute.xlu0 %2656
        %2658 = vrot.lane.b32.xlu0 %v2148, 64
        %v2659 = vpop.permute.xlu0 %2658
        %2660 = vrot.lane.b32.xlu0 %v2149, 64
        %v2661 = vpop.permute.xlu0 %2660
        %2662 = vrot.lane.b32.xlu0 %v2150, 64
        %v2663 = vpop.permute.xlu0 %2662
        %2664 = vrot.lane.b32.xlu0 %v2151, 64
        %v2665 = vpop.permute.xlu0 %2664
        %2666 = vrot.lane.b32.xlu0 %v2152, 64
        %v2667 = vpop.permute.xlu0 %2666
        %2668 = vrot.lane.b32.xlu0 %v2153, 64
        %v2669 = vpop.permute.xlu0 %2668
        %2678 = vrot.lane.b32.xlu0 %v2154, 64
        %v2679 = vpop.permute.xlu0 %2678
        %2680 = vrot.lane.b32.xlu0 %v2155, 64
        %v2681 = vpop.permute.xlu0 %2680
        %2682 = vrot.lane.b32.xlu0 %v2156, 64
        %v2683 = vpop.permute.xlu0 %2682
        %2684 = vrot.lane.b32.xlu0 %v2157, 64
        %v2685 = vpop.permute.xlu0 %2684
        %2686 = vrot.lane.b32.xlu0 %v2158, 64
        %v2687 = vpop.permute.xlu0 %2686
        %2688 = vrot.lane.b32.xlu0 %v2159, 64
        %v2689 = vpop.permute.xlu0 %2688
        %2690 = vrot.lane.b32.xlu0 %v2160, 64
        %v2691 = vpop.permute.xlu0 %2690
        %2692 = vrot.lane.b32.xlu0 %v2161, 64
        %v2693 = vpop.permute.xlu0 %2692
        %v2695 = vsel %vm2202, %v2655, 0
        %v2698 = vsel %vm2202, %v2657, 0
        %v2701 = vsel %vm2202, %v2659, 0
        %v2704 = vsel %vm2202, %v2661, 0
        %v2707 = vsel %vm2202, %v2663, 0
        %v2710 = vsel %vm2202, %v2665, 0
        %v2713 = vsel %vm2202, %v2667, 0
        %v2716 = vsel %vm2202, %v2669, 0
        %v2719 = vsel %vm2202, %v2679, 0
        %v2722 = vsel %vm2202, %v2681, 0
        %v2725 = vsel %vm2202, %v2683, 0
        %v2728 = vsel %vm2202, %v2685, 0
        %v2731 = vsel %vm2202, %v2687, 0
        %v2734 = vsel %vm2202, %v2689, 0
        %v2737 = vsel %vm2202, %v2691, 0
        %v2740 = vsel %vm2202, %v2693, 0
        %2742 = vmatprep.subr.bf16.mxu0 0
        %2743 = vmatpush1.bf16.xpose.msra.mxu0 %v2719
        %2744 = vmatprep.subr.bf16.mxu0 0
        %2745 = vmatpush1.bf16.xpose.msra.mxu0 %v2722
        %2746 = vmatprep.subr.bf16.mxu0 0
        %2747 = vmatpush1.bf16.xpose.msra.mxu0 %v2725
        %2748 = vmatprep.subr.bf16.mxu0 0
        %2749 = vmatpush1.bf16.xpose.msra.mxu0 %v2728
        %2750 = vmatprep.subr.bf16.mxu0 0
        %2751 = vmatpush1.bf16.xpose.msra.mxu0 %v2731
        %2752 = vmatprep.subr.bf16.mxu0 0
        %2753 = vmatpush1.bf16.xpose.msra.mxu0 %v2734
        %2754 = vmatprep.subr.bf16.mxu0 0
        %2755 = vmatpush1.bf16.xpose.msra.mxu0 %v2737
        %2756 = vmatprep.subr.bf16.mxu0 0
        %2757 = vmatpush1.bf16.xpose.msra.mxu0 %v2740
        %2758 = vmatprep.subr.bf16.mxu0 0
        %2759 = vmatpush1.bf16.xpose.msra.mxu0 0
        %2760 = vmatprep.subr.bf16.mxu0 0
        %2761 = vmatpush1.bf16.xpose.msra.mxu0 0
        %2762 = vmatprep.subr.bf16.mxu0 0
        %2763 = vmatpush1.bf16.xpose.msra.mxu0 0
        %2764 = vmatprep.subr.bf16.mxu0 0
        %2765 = vmatpush1.bf16.xpose.msra.mxu0 0
        %2766 = vmatprep.subr.bf16.mxu0 0
        %2767 = vmatpush1.bf16.xpose.msra.mxu0 0
        %2768 = vmatprep.subr.bf16.mxu0 0
        %2769 = vmatpush1.bf16.xpose.msra.mxu0 0
        %2770 = vmatprep.subr.bf16.mxu0 0
        %2771 = vmatpush1.bf16.xpose.msra.mxu0 0
        %2772 = vmatprep.subr.bf16.mxu0 0
        %2773 = vmatpush1.bf16.xpose.msra.mxu0 0
        %2774 = vmatprep.mubr.bf16.mxu0 0
        %2775 = vmatmul.mubr.bf16.gmra.mrb[0].mxu0 %v2695
        %v2776 = vpop.f32.mrb[0].mxu0
        %v2777 = vadd.f32 %v2630, %v2776
        %v2778 = vpop.f32.mrb[0].mxu0
        %v2779 = vpop.f32.mrb[0].mxu0
        %v2780 = vadd.f32 %v2631, %v2779
        %v2781 = vpop.f32.mrb[0].mxu0
        %2782 = vmatprep.mubr.bf16.mxu0 0
        %2783 = vmatmul.mubr.bf16.gmra.mrb[0].mxu0 %v2698
        %v2784 = vpop.f32.mrb[0].mxu0
        %v2785 = vadd.f32 %v2632, %v2784
        %v2786 = vpop.f32.mrb[0].mxu0
        %v2787 = vpop.f32.mrb[0].mxu0
        %v2788 = vadd.f32 %v2633, %v2787
        %v2789 = vpop.f32.mrb[0].mxu0
        %2790 = vmatprep.mubr.bf16.mxu0 0
        %2791 = vmatmul.mubr.bf16.gmra.mrb[0].mxu0 %v2701
        %v2792 = vpop.f32.mrb[0].mxu0
        %v2793 = vadd.f32 %v2634, %v2792
        %v2794 = vpop.f32.mrb[0].mxu0
        %v2795 = vpop.f32.mrb[0].mxu0
        %v2796 = vadd.f32 %v2635, %v2795
        %v2797 = vpop.f32.mrb[0].mxu0
        %2798 = vmatprep.mubr.bf16.mxu0 0
        %2799 = vmatmul.mubr.bf16.gmra.mrb[0].mxu0 %v2704
        %v2800 = vpop.f32.mrb[0].mxu0
        %v2801 = vadd.f32 %v2636, %v2800
        %v2802 = vpop.f32.mrb[0].mxu0
        %v2803 = vpop.f32.mrb[0].mxu0
        %v2804 = vadd.f32 %v2637, %v2803
        %v2805 = vpop.f32.mrb[0].mxu0
        %2806 = vmatprep.mubr.bf16.mxu0 0
        %2807 = vmatmul.mubr.bf16.gmra.mrb[0].mxu0 %v2707
        %v2808 = vpop.f32.mrb[0].mxu0
        %v2809 = vadd.f32 %v2638, %v2808
        %v2810 = vpop.f32.mrb[0].mxu0
        %v2811 = vpop.f32.mrb[0].mxu0
        %v2812 = vadd.f32 %v2639, %v2811
        %v2813 = vpop.f32.mrb[0].mxu0
        %2814 = vmatprep.mubr.bf16.mxu0 0
        %2815 = vmatmul.mubr.bf16.gmra.mrb[0].mxu0 %v2710
        %v2816 = vpop.f32.mrb[0].mxu0
        %v2817 = vadd.f32 %v2640, %v2816
        %v2818 = vpop.f32.mrb[0].mxu0
        %v2819 = vpop.f32.mrb[0].mxu0
        %v2820 = vadd.f32 %v2641, %v2819
        %v2821 = vpop.f32.mrb[0].mxu0
        %2822 = vmatprep.mubr.bf16.mxu0 0
        %2823 = vmatmul.mubr.bf16.gmra.mrb[0].mxu0 %v2713
        %v2824 = vpop.f32.mrb[0].mxu0
        %v2825 = vadd.f32 %v2642, %v2824
        %v2826 = vpop.f32.mrb[0].mxu0
        %v2827 = vpop.f32.mrb[0].mxu0
        %v2828 = vadd.f32 %v2643, %v2827
        %v2829 = vpop.f32.mrb[0].mxu0
        %2830 = vmatprep.mubr.bf16.mxu0 0
        %2831 = vmatmul.mubr.bf16.gmra.mrb[0].mxu0 %v2716
        %v2832 = vpop.f32.mrb[0].mxu0
        %v2833 = vadd.f32 %v2644, %v2832
        %v2834 = vpop.f32.mrb[0].mxu0
        %v2835 = vpop.f32.mrb[0].mxu0
        %v2836 = vadd.f32 %v2645, %v2835
        %v2837 = vpop.f32.mrb[0].mxu0
        %2838 = vdwg.mxu0
        %2839 = vmax.xlane.f32.xlu0 %v2777
        %v2840 = vpop.xlane.xlu0 %2839
        %2841 = vmax.xlane.f32.xlu0 %v2780
        %v2842 = vpop.xlane.xlu0 %2841
        %2843 = vmax.xlane.f32.xlu0 %v2785
        %v2844 = vpop.xlane.xlu0 %2843
        %2845 = vmax.xlane.f32.xlu0 %v2788
        %v2846 = vpop.xlane.xlu0 %2845
        %2847 = vmax.xlane.f32.xlu0 %v2793
        %v2848 = vpop.xlane.xlu0 %2847
        %2849 = vmax.xlane.f32.xlu0 %v2796
        %v2850 = vpop.xlane.xlu0 %2849
        %2851 = vmax.xlane.f32.xlu0 %v2801
        %v2852 = vpop.xlane.xlu0 %2851
        %2853 = vmax.xlane.f32.xlu0 %v2804
        %v2854 = vpop.xlane.xlu0 %2853
        %2855 = vmax.xlane.f32.xlu0 %v2809
        %v2856 = vpop.xlane.xlu0 %2855
        %2857 = vmax.xlane.f32.xlu0 %v2812
        %v2858 = vpop.xlane.xlu0 %2857
        %2859 = vmax.xlane.f32.xlu0 %v2817
        %v2860 = vpop.xlane.xlu0 %2859
        %2861 = vmax.xlane.f32.xlu0 %v2820
        %v2862 = vpop.xlane.xlu0 %2861
        %2863 = vmax.xlane.f32.xlu0 %v2825
        %v2864 = vpop.xlane.xlu0 %2863
        %2865 = vmax.xlane.f32.xlu0 %v2828
        %v2866 = vpop.xlane.xlu0 %2865
        %2867 = vmax.xlane.f32.xlu0 %v2833
        %v2868 = vpop.xlane.xlu0 %2867
        %2869 = vmax.xlane.f32.xlu0 %v2836
        %v2870 = vpop.xlane.xlu0 %2869
        %v2871 = vsub.f32 %v2777, %v2840
        %v2872 = vsub.f32 %v2780, %v2842
        %v2873 = vsub.f32 %v2785, %v2844
        %v2874 = vsub.f32 %v2788, %v2846
        %v2875 = vsub.f32 %v2793, %v2848
        %v2876 = vsub.f32 %v2796, %v2850
        %v2877 = vsub.f32 %v2801, %v2852
        %v2878 = vsub.f32 %v2804, %v2854
        %v2879 = vsub.f32 %v2809, %v2856
        %v2880 = vsub.f32 %v2812, %v2858
        %v2881 = vsub.f32 %v2817, %v2860
        %v2882 = vsub.f32 %v2820, %v2862
        %v2883 = vsub.f32 %v2825, %v2864
        %v2884 = vsub.f32 %v2828, %v2866
        %v2885 = vsub.f32 %v2833, %v2868
        %v2886 = vsub.f32 %v2836, %v2870
        %v2887 = vmul.f32 %v2871, 1.442695
        %v2888 = vpow.pop %v2887
        %v2889 = vmul.f32 %v2872, 1.442695
        %v2890 = vpow.pop %v2889
        %v2891 = vmul.f32 %v2873, 1.442695
        %v2892 = vpow.pop %v2891
        %v2893 = vmul.f32 %v2874, 1.442695
        %v2894 = vpow.pop %v2893
        %v2895 = vmul.f32 %v2875, 1.442695
        %v2896 = vpow.pop %v2895
        %v2897 = vmul.f32 %v2876, 1.442695
        %v2898 = vpow.pop %v2897
        %v2899 = vmul.f32 %v2877, 1.442695
        %v2900 = vpow.pop %v2899
        %v2901 = vmul.f32 %v2878, 1.442695
        %v2902 = vpow.pop %v2901
        %v2903 = vmul.f32 %v2879, 1.442695
        %v2904 = vpow.pop %v2903
        %v2905 = vmul.f32 %v2880, 1.442695
        %v2906 = vpow.pop %v2905
        %v2907 = vmul.f32 %v2881, 1.442695
        %v2908 = vpow.pop %v2907
        %v2909 = vmul.f32 %v2882, 1.442695
        %v2910 = vpow.pop %v2909
        %v2911 = vmul.f32 %v2883, 1.442695
        %v2912 = vpow.pop %v2911
        %v2913 = vmul.f32 %v2884, 1.442695
        %v2914 = vpow.pop %v2913
        %v2915 = vmul.f32 %v2885, 1.442695
        %v2916 = vpow.pop %v2915
        %v2917 = vmul.f32 %v2886, 1.442695
        %v2918 = vpow.pop %v2917
        %2919 = vadd.xlane.f32.xlu0 %v2888
        %v2920 = vpop.xlane.xlu0 %2919
        %2921 = vadd.xlane.f32.xlu0 %v2890
        %v2922 = vpop.xlane.xlu0 %2921
        %2923 = vadd.xlane.f32.xlu0 %v2892
        %v2924 = vpop.xlane.xlu0 %2923
        %2925 = vadd.xlane.f32.xlu0 %v2894
        %v2926 = vpop.xlane.xlu0 %2925
        %2927 = vadd.xlane.f32.xlu0 %v2896
        %v2928 = vpop.xlane.xlu0 %2927
        %2929 = vadd.xlane.f32.xlu0 %v2898
        %v2930 = vpop.xlane.xlu0 %2929
        %2931 = vadd.xlane.f32.xlu0 %v2900
        %v2932 = vpop.xlane.xlu0 %2931
        %2933 = vadd.xlane.f32.xlu0 %v2902
        %v2934 = vpop.xlane.xlu0 %2933
        %2935 = vadd.xlane.f32.xlu0 %v2904
        %v2936 = vpop.xlane.xlu0 %2935
        %2937 = vadd.xlane.f32.xlu0 %v2906
        %v2938 = vpop.xlane.xlu0 %2937
        %2939 = vadd.xlane.f32.xlu0 %v2908
        %v2940 = vpop.xlane.xlu0 %2939
        %2941 = vadd.xlane.f32.xlu0 %v2910
        %v2942 = vpop.xlane.xlu0 %2941
        %2943 = vadd.xlane.f32.xlu0 %v2912
        %v2944 = vpop.xlane.xlu0 %2943
        %2945 = vadd.xlane.f32.xlu0 %v2914
        %v2946 = vpop.xlane.xlu0 %2945
        %2947 = vadd.xlane.f32.xlu0 %v2916
        %v2948 = vpop.xlane.xlu0 %2947
        %2949 = vadd.xlane.f32.xlu0 %v2918
        %v2950 = vpop.xlane.xlu0 %2949
        %v2951 = vrcp.pop %v2920
        %v2952 = vrcp.pop %v2922
        %v2953 = vrcp.pop %v2924
        %v2954 = vrcp.pop %v2926
        %v2955 = vrcp.pop %v2928
        %v2956 = vrcp.pop %v2930
        %v2957 = vrcp.pop %v2932
        %v2958 = vrcp.pop %v2934
        %v2959 = vrcp.pop %v2936
        %v2960 = vrcp.pop %v2938
        %v2961 = vrcp.pop %v2940
        %v2962 = vrcp.pop %v2942
        %v2963 = vrcp.pop %v2944
        %v2964 = vrcp.pop %v2946
        %v2965 = vrcp.pop %v2948
        %v2966 = vrcp.pop %v2950
        %v2967 = vmul.f32 %v2888, %v2951
        %v2968 = vmul.f32 %v2890, %v2952
        %v2969 = vmul.f32 %v2892, %v2953
        %v2970 = vmul.f32 %v2894, %v2954
        %v2971 = vmul.f32 %v2896, %v2955
        %v2972 = vmul.f32 %v2898, %v2956
        %v2973 = vmul.f32 %v2900, %v2957
        %v2974 = vmul.f32 %v2902, %v2958
        %v2975 = vmul.f32 %v2904, %v2959
        %v2976 = vmul.f32 %v2906, %v2960
        %v2977 = vmul.f32 %v2908, %v2961
        %v2978 = vmul.f32 %v2910, %v2962
        %v2979 = vmul.f32 %v2912, %v2963
        %v2980 = vmul.f32 %v2914, %v2964
        %v2981 = vmul.f32 %v2916, %v2965
        %v2982 = vmul.f32 %v2918, %v2966
        %v2983 = vpack.c.bf16 %v2968, %v2967
        %v2984 = vpack.c.bf16 %v2970, %v2969
        %v2985 = vpack.c.bf16 %v2972, %v2971
        %v2986 = vpack.c.bf16 %v2974, %v2973
        %v2987 = vpack.c.bf16 %v2976, %v2975
        %v2988 = vpack.c.bf16 %v2978, %v2977
        %v2989 = vpack.c.bf16 %v2980, %v2979
        %v2990 = vpack.c.bf16 %v2982, %v2981
        %2999 = vrot.lane.b32.xlu0 %v2162, 64
        %v3000 = vpop.permute.xlu0 %2999
        %3001 = vrot.lane.b32.xlu0 %v2163, 64
        %v3002 = vpop.permute.xlu0 %3001
        %3003 = vrot.lane.b32.xlu0 %v2164, 64
        %v3004 = vpop.permute.xlu0 %3003
        %3005 = vrot.lane.b32.xlu0 %v2165, 64
        %v3006 = vpop.permute.xlu0 %3005
        %3007 = vrot.lane.b32.xlu0 %v2166, 64
        %v3008 = vpop.permute.xlu0 %3007
        %3009 = vrot.lane.b32.xlu0 %v2167, 64
        %v3010 = vpop.permute.xlu0 %3009
        %3011 = vrot.lane.b32.xlu0 %v2168, 64
        %v3012 = vpop.permute.xlu0 %3011
        %3013 = vrot.lane.b32.xlu0 %v2169, 64
        %v3014 = vpop.permute.xlu0 %3013
        %3023 = vmatprep.subr.bf16.mxu0 0
        %3024 = vmatpush1.bf16.msra.mxu0 %v3000
        %3025 = vmatprep.subr.bf16.mxu0 0
        %3026 = vmatpush1.bf16.msra.mxu0 %v3002
        %3027 = vmatprep.subr.bf16.mxu0 0
        %3028 = vmatpush1.bf16.msra.mxu0 %v3004
        %3029 = vmatprep.subr.bf16.mxu0 0
        %3030 = vmatpush1.bf16.msra.mxu0 %v3006
        %3031 = vmatprep.subr.bf16.mxu0 0
        %3032 = vmatpush1.bf16.msra.mxu0 %v3008
        %3033 = vmatprep.subr.bf16.mxu0 0
        %3034 = vmatpush1.bf16.msra.mxu0 %v3010
        %3035 = vmatprep.subr.bf16.mxu0 0
        %3036 = vmatpush1.bf16.msra.mxu0 %v3012
        %3037 = vmatprep.subr.bf16.mxu0 0
        %3038 = vmatpush1.bf16.msra.mxu0 %v3014
        %3039 = vmatprep.subr.bf16.mxu0 0
        %3040 = vmatpush1.bf16.msra.mxu0 0
        %3041 = vmatprep.subr.bf16.mxu0 0
        %3042 = vmatpush1.bf16.msra.mxu0 0
        %3043 = vmatprep.subr.bf16.mxu0 0
        %3044 = vmatpush1.bf16.msra.mxu0 0
        %3045 = vmatprep.subr.bf16.mxu0 0
        %3046 = vmatpush1.bf16.msra.mxu0 0
        %3047 = vmatprep.subr.bf16.mxu0 0
        %3048 = vmatpush1.bf16.msra.mxu0 0
        %3049 = vmatprep.subr.bf16.mxu0 0
        %3050 = vmatpush1.bf16.msra.mxu0 0
        %3051 = vmatprep.subr.bf16.mxu0 0
        %3052 = vmatpush1.bf16.msra.mxu0 0
        %3053 = vmatprep.subr.bf16.mxu0 0
        %3054 = vmatpush1.bf16.msra.mxu0 0
        %3055 = vmatprep.mubr.bf16.mxu0 0
        %3056 = vmatmul.mubr.bf16.gmra.mrb[0].mxu0 %v2983
        %v3057 = vpop.f32.mrb[0].mxu0
        %v3058 = vadd.f32 0.0, %v3057
        %v3059 = vpop.f32.mrb[0].mxu0
        %v3060 = vpop.f32.mrb[0].mxu0
        %v3061 = vadd.f32 0.0, %v3060
        %v3062 = vpop.f32.mrb[0].mxu0
        %3063 = vmatprep.mubr.bf16.mxu0 0
        %3064 = vmatmul.mubr.bf16.gmra.mrb[0].mxu0 %v2984
        %v3065 = vpop.f32.mrb[0].mxu0
        %v3066 = vadd.f32 0.0, %v3065
        %v3067 = vpop.f32.mrb[0].mxu0
        %v3068 = vpop.f32.mrb[0].mxu0
        %v3069 = vadd.f32 0.0, %v3068
        %v3070 = vpop.f32.mrb[0].mxu0
        %3071 = vmatprep.mubr.bf16.mxu0 0
        %3072 = vmatmul.mubr.bf16.gmra.mrb[0].mxu0 %v2985
        %v3073 = vpop.f32.mrb[0].mxu0
        %v3074 = vadd.f32 0.0, %v3073
        %v3075 = vpop.f32.mrb[0].mxu0
        %v3076 = vpop.f32.mrb[0].mxu0
        %v3077 = vadd.f32 0.0, %v3076
        %v3078 = vpop.f32.mrb[0].mxu0
        %3079 = vmatprep.mubr.bf16.mxu0 0
        %3080 = vmatmul.mubr.bf16.gmra.mrb[0].mxu0 %v2986
        %v3081 = vpop.f32.mrb[0].mxu0
        %v3082 = vadd.f32 0.0, %v3081
        %v3083 = vpop.f32.mrb[0].mxu0
        %v3084 = vpop.f32.mrb[0].mxu0
        %v3085 = vadd.f32 0.0, %v3084
        %v3086 = vpop.f32.mrb[0].mxu0
        %3087 = vmatprep.mubr.bf16.mxu0 0
        %3088 = vmatmul.mubr.bf16.gmra.mrb[0].mxu0 %v2987
        %v3089 = vpop.f32.mrb[0].mxu0
        %v3090 = vadd.f32 0.0, %v3089
        %v3091 = vpop.f32.mrb[0].mxu0
        %v3092 = vpop.f32.mrb[0].mxu0
        %v3093 = vadd.f32 0.0, %v3092
        %v3094 = vpop.f32.mrb[0].mxu0
        %3095 = vmatprep.mubr.bf16.mxu0 0
        %3096 = vmatmul.mubr.bf16.gmra.mrb[0].mxu0 %v2988
        %v3097 = vpop.f32.mrb[0].mxu0
        %v3098 = vadd.f32 0.0, %v3097
        %v3099 = vpop.f32.mrb[0].mxu0
        %v3100 = vpop.f32.mrb[0].mxu0
        %v3101 = vadd.f32 0.0, %v3100
        %v3102 = vpop.f32.mrb[0].mxu0
        %3103 = vmatprep.mubr.bf16.mxu0 0
        %3104 = vmatmul.mubr.bf16.gmra.mrb[0].mxu0 %v2989
        %v3105 = vpop.f32.mrb[0].mxu0
        %v3106 = vadd.f32 0.0, %v3105
        %v3107 = vpop.f32.mrb[0].mxu0
        %v3108 = vpop.f32.mrb[0].mxu0
        %v3109 = vadd.f32 0.0, %v3108
        %v3110 = vpop.f32.mrb[0].mxu0
        %3111 = vmatprep.mubr.bf16.mxu0 0
        %3112 = vmatmul.mubr.bf16.gmra.mrb[0].mxu0 %v2990
        %v3113 = vpop.f32.mrb[0].mxu0
        %v3114 = vadd.f32 0.0, %v3113
        %v3115 = vpop.f32.mrb[0].mxu0
        %v3116 = vpop.f32.mrb[0].mxu0
        %v3117 = vadd.f32 0.0, %v3116
        %v3118 = vpop.f32.mrb[0].mxu0
        %3119 = vdwg.mxu0
        %v3120 = vpack.c.bf16 %v3061, %v3058
        %v3121 = vpack.c.bf16 %v3069, %v3066
        %v3122 = vpack.c.bf16 %v3077, %v3074
        %v3123 = vpack.c.bf16 %v3085, %v3082
        %v3124 = vpack.c.bf16 %v3093, %v3090
        %v3125 = vpack.c.bf16 %v3101, %v3098
        %v3126 = vpack.c.bf16 %v3109, %v3106
        %v3127 = vpack.c.bf16 %v3117, %v3114
        %3136 = vrot.lane.b32.xlu0 %v3120, 64
        %v3137 = vpop.permute.xlu0 %3136
        %3138 = vrot.lane.b32.xlu0 %v3121, 64
        %v3139 = vpop.permute.xlu0 %3138
        %3140 = vrot.lane.b32.xlu0 %v3122, 64
        %v3141 = vpop.permute.xlu0 %3140
        %3142 = vrot.lane.b32.xlu0 %v3123, 64
        %v3143 = vpop.permute.xlu0 %3142
        %3144 = vrot.lane.b32.xlu0 %v3124, 64
        %v3145 = vpop.permute.xlu0 %3144
        %3146 = vrot.lane.b32.xlu0 %v3125, 64
        %v3147 = vpop.permute.xlu0 %3146
        %3148 = vrot.lane.b32.xlu0 %v3126, 64
        %v3149 = vpop.permute.xlu0 %3148
        %3150 = vrot.lane.b32.xlu0 %v3127, 64
        %v3151 = vpop.permute.xlu0 %3150
        %vm3160 = vcmask 1048064
        %3161 = vst.msk [vmem:[#allocation2] sm:$0xff] %vm3160, %v3137
        %3162 = vst.msk [vmem:[#allocation2 + $0x10] sm:$0xff] %vm3160, %v3139
        %3163 = vst.msk [vmem:[#allocation2 + $0x20] sm:$0xff] %vm3160, %v3141
        %3164 = vst.msk [vmem:[#allocation2 + $0x30] sm:$0xff] %vm3160, %v3143
        %3165 = vst.msk [vmem:[#allocation2 + $0x40] sm:$0xff] %vm3160, %v3145
        %3166 = vst.msk [vmem:[#allocation2 + $0x50] sm:$0xff] %vm3160, %v3147
        %3167 = vst.msk [vmem:[#allocation2 + $0x60] sm:$0xff] %vm3160, %v3149
        %3168 = vst.msk [vmem:[#allocation2 + $0x70] sm:$0xff] %vm3160, %v3151
        %v3169 = vpack.c.bf16 %v1528, %v1524
        %v3170 = vpack.c.bf16 %v1538, %v1534
        %v3171 = vpack.c.bf16 %v1548, %v1544
        %v3172 = vpack.c.bf16 %v1558, %v1554
        %v3173 = vpack.c.bf16 %v1568, %v1564
        %v3174 = vpack.c.bf16 %v1578, %v1574
        %v3175 = vpack.c.bf16 %v1588, %v1584
        %v3176 = vpack.c.bf16 %v1598, %v1594
        %v3177 = vpack.c.bf16 %v1801, %v1797
        %v3178 = vpack.c.bf16 %v1811, %v1807
        %v3179 = vpack.c.bf16 %v1821, %v1817
        %v3180 = vpack.c.bf16 %v1831, %v1827
        %v3181 = vpack.c.bf16 %v1841, %v1837
        %v3182 = vpack.c.bf16 %v1851, %v1847
        %v3183 = vpack.c.bf16 %v1861, %v1857
        %v3184 = vpack.c.bf16 %v1871, %v1867
        %v3185 = vpack.c.bf16 %v2074, %v2070
        %v3186 = vpack.c.bf16 %v2084, %v2080
        %v3187 = vpack.c.bf16 %v2094, %v2090
        %v3188 = vpack.c.bf16 %v2104, %v2100
        %v3189 = vpack.c.bf16 %v2114, %v2110
        %v3190 = vpack.c.bf16 %v2124, %v2120
        %v3191 = vpack.c.bf16 %v2134, %v2130
        %v3192 = vpack.c.bf16 %v2144, %v2140
        %s3193 = scalar_lea.vmem [#allocation13], 128
        %v3194 = vld [vmem:[%s3193] sm:$0xf]
        %v3195 = vld [vmem:[%s3193 + $0x4] sm:$0xf]
        %v3196 = vld [vmem:[%s3193 + $0x8] sm:$0xf]
        %v3197 = vld [vmem:[%s3193 + $0xc] sm:$0xf]
        %v3198 = vld [vmem:[%s3193 + $0x10] sm:$0xf]
        %v3199 = vld [vmem:[%s3193 + $0x14] sm:$0xf]
        %v3200 = vld [vmem:[%s3193 + $0x18] sm:$0xf]
        %v3201 = vld [vmem:[%s3193 + $0x1c] sm:$0xf]
        %v3202 = vld [vmem:[%s3193 + $0x20] sm:$0xf]
        %v3203 = vld [vmem:[%s3193 + $0x24] sm:$0xf]
        %v3204 = vld [vmem:[%s3193 + $0x28] sm:$0xf]
        %v3205 = vld [vmem:[%s3193 + $0x2c] sm:$0xf]
        %v3206 = vld [vmem:[%s3193 + $0x30] sm:$0xf]
        %v3207 = vld [vmem:[%s3193 + $0x34] sm:$0xf]
        %v3208 = vld [vmem:[%s3193 + $0x38] sm:$0xf]
        %v3209 = vld [vmem:[%s3193 + $0x3c] sm:$0xf]
        %v3210 = vunpack.c.l.bf16 %v3194
        %v3211 = vunpack.c.l.bf16 %v3195
        %v3212 = vunpack.c.l.bf16 %v3196
        %v3213 = vunpack.c.l.bf16 %v3197
        %v3214 = vunpack.c.l.bf16 %v3198
        %v3215 = vunpack.c.l.bf16 %v3199
        %v3216 = vunpack.c.l.bf16 %v3200
        %v3217 = vunpack.c.l.bf16 %v3201
        %v3218 = vunpack.c.l.bf16 %v3202
        %v3219 = vunpack.c.l.bf16 %v3203
        %v3220 = vunpack.c.l.bf16 %v3204
        %v3221 = vunpack.c.l.bf16 %v3205
        %v3222 = vunpack.c.l.bf16 %v3206
        %v3223 = vunpack.c.l.bf16 %v3207
        %v3224 = vunpack.c.l.bf16 %v3208
        %v3225 = vunpack.c.l.bf16 %v3209
        %v3227 = vsel %vm2202, %v3169, 0
        %v3230 = vsel %vm2202, %v3170, 0
        %v3233 = vsel %vm2202, %v3171, 0
        %v3236 = vsel %vm2202, %v3172, 0
        %v3239 = vsel %vm2202, %v3173, 0
        %v3242 = vsel %vm2202, %v3174, 0
        %v3245 = vsel %vm2202, %v3175, 0
        %v3248 = vsel %vm2202, %v3176, 0
        %v3251 = vsel %vm2202, %v3177, 0
        %v3254 = vsel %vm2202, %v3178, 0
        %v3257 = vsel %vm2202, %v3179, 0
        %v3260 = vsel %vm2202, %v3180, 0
        %v3263 = vsel %vm2202, %v3181, 0
        %v3266 = vsel %vm2202, %v3182, 0
        %v3269 = vsel %vm2202, %v3183, 0
        %v3272 = vsel %vm2202, %v3184, 0
        %3274 = vmatprep.subr.bf16.mxu0 0
        %3275 = vmatpush1.bf16.xpose.msra.mxu0 %v3251
        %3276 = vmatprep.subr.bf16.mxu0 0
        %3277 = vmatpush1.bf16.xpose.msra.mxu0 %v3254
        %3278 = vmatprep.subr.bf16.mxu0 0
        %3279 = vmatpush1.bf16.xpose.msra.mxu0 %v3257
        %3280 = vmatprep.subr.bf16.mxu0 0
        %3281 = vmatpush1.bf16.xpose.msra.mxu0 %v3260
        %3282 = vmatprep.subr.bf16.mxu0 0
        %3283 = vmatpush1.bf16.xpose.msra.mxu0 %v3263
        %3284 = vmatprep.subr.bf16.mxu0 0
        %3285 = vmatpush1.bf16.xpose.msra.mxu0 %v3266
        %3286 = vmatprep.subr.bf16.mxu0 0
        %3287 = vmatpush1.bf16.xpose.msra.mxu0 %v3269
        %3288 = vmatprep.subr.bf16.mxu0 0
        %3289 = vmatpush1.bf16.xpose.msra.mxu0 %v3272
        %3290 = vmatprep.subr.bf16.mxu0 0
        %3291 = vmatpush1.bf16.xpose.msra.mxu0 0
        %3292 = vmatprep.subr.bf16.mxu0 0
        %3293 = vmatpush1.bf16.xpose.msra.mxu0 0
        %3294 = vmatprep.subr.bf16.mxu0 0
        %3295 = vmatpush1.bf16.xpose.msra.mxu0 0
        %3296 = vmatprep.subr.bf16.mxu0 0
        %3297 = vmatpush1.bf16.xpose.msra.mxu0 0
        %3298 = vmatprep.subr.bf16.mxu0 0
        %3299 = vmatpush1.bf16.xpose.msra.mxu0 0
        %3300 = vmatprep.subr.bf16.mxu0 0
        %3301 = vmatpush1.bf16.xpose.msra.mxu0 0
        %3302 = vmatprep.subr.bf16.mxu0 0
        %3303 = vmatpush1.bf16.xpose.msra.mxu0 0
        %3304 = vmatprep.subr.bf16.mxu0 0
        %3305 = vmatpush1.bf16.xpose.msra.mxu0 0
        %3306 = vmatprep.mubr.bf16.mxu0 0
        %3307 = vmatmul.mubr.bf16.gmra.mrb[0].mxu0 %v3227
        %v3308 = vpop.f32.mrb[0].mxu0
        %v3309 = vadd.f32 %v3210, %v3308
        %v3310 = vpop.f32.mrb[0].mxu0
        %v3311 = vpop.f32.mrb[0].mxu0
        %v3312 = vadd.f32 %v3211, %v3311
        %v3313 = vpop.f32.mrb[0].mxu0
        %3314 = vmatprep.mubr.bf16.mxu0 0
        %3315 = vmatmul.mubr.bf16.gmra.mrb[0].mxu0 %v3230
        %v3316 = vpop.f32.mrb[0].mxu0
        %v3317 = vadd.f32 %v3212, %v3316
        %v3318 = vpop.f32.mrb[0].mxu0
        %v3319 = vpop.f32.mrb[0].mxu0
        %v3320 = vadd.f32 %v3213, %v3319
        %v3321 = vpop.f32.mrb[0].mxu0
        %3322 = vmatprep.mubr.bf16.mxu0 0
        %3323 = vmatmul.mubr.bf16.gmra.mrb[0].mxu0 %v3233
        %v3324 = vpop.f32.mrb[0].mxu0
        %v3325 = vadd.f32 %v3214, %v3324
        %v3326 = vpop.f32.mrb[0].mxu0
        %v3327 = vpop.f32.mrb[0].mxu0
        %v3328 = vadd.f32 %v3215, %v3327
        %v3329 = vpop.f32.mrb[0].mxu0
        %3330 = vmatprep.mubr.bf16.mxu0 0
        %3331 = vmatmul.mubr.bf16.gmra.mrb[0].mxu0 %v3236
        %v3332 = vpop.f32.mrb[0].mxu0
        %v3333 = vadd.f32 %v3216, %v3332
        %v3334 = vpop.f32.mrb[0].mxu0
        %v3335 = vpop.f32.mrb[0].mxu0
        %v3336 = vadd.f32 %v3217, %v3335
        %v3337 = vpop.f32.mrb[0].mxu0
        %3338 = vmatprep.mubr.bf16.mxu0 0
        %3339 = vmatmul.mubr.bf16.gmra.mrb[0].mxu0 %v3239
        %v3340 = vpop.f32.mrb[0].mxu0
        %v3341 = vadd.f32 %v3218, %v3340
        %v3342 = vpop.f32.mrb[0].mxu0
        %v3343 = vpop.f32.mrb[0].mxu0
        %v3344 = vadd.f32 %v3219, %v3343
        %v3345 = vpop.f32.mrb[0].mxu0
        %3346 = vmatprep.mubr.bf16.mxu0 0
        %3347 = vmatmul.mubr.bf16.gmra.mrb[0].mxu0 %v3242
        %v3348 = vpop.f32.mrb[0].mxu0
        %v3349 = vadd.f32 %v3220, %v3348
        %v3350 = vpop.f32.mrb[0].mxu0
        %v3351 = vpop.f32.mrb[0].mxu0
        %v3352 = vadd.f32 %v3221, %v3351
        %v3353 = vpop.f32.mrb[0].mxu0
        %3354 = vmatprep.mubr.bf16.mxu0 0
        %3355 = vmatmul.mubr.bf16.gmra.mrb[0].mxu0 %v3245
        %v3356 = vpop.f32.mrb[0].mxu0
        %v3357 = vadd.f32 %v3222, %v3356
        %v3358 = vpop.f32.mrb[0].mxu0
        %v3359 = vpop.f32.mrb[0].mxu0
        %v3360 = vadd.f32 %v3223, %v3359
        %v3361 = vpop.f32.mrb[0].mxu0
        %3362 = vmatprep.mubr.bf16.mxu0 0
        %3363 = vmatmul.mubr.bf16.gmra.mrb[0].mxu0 %v3248
        %v3364 = vpop.f32.mrb[0].mxu0
        %v3365 = vadd.f32 %v3224, %v3364
        %v3366 = vpop.f32.mrb[0].mxu0
        %v3367 = vpop.f32.mrb[0].mxu0
        %v3368 = vadd.f32 %v3225, %v3367
        %v3369 = vpop.f32.mrb[0].mxu0
        %3370 = vdwg.mxu0
        %3371 = vmax.xlane.f32.xlu0 %v3309
        %v3372 = vpop.xlane.xlu0 %3371
        %3373 = vmax.xlane.f32.xlu0 %v3312
        %v3374 = vpop.xlane.xlu0 %3373
        %3375 = vmax.xlane.f32.xlu0 %v3317
        %v3376 = vpop.xlane.xlu0 %3375
        %3377 = vmax.xlane.f32.xlu0 %v3320
        %v3378 = vpop.xlane.xlu0 %3377
        %3379 = vmax.xlane.f32.xlu0 %v3325
        %v3380 = vpop.xlane.xlu0 %3379
        %3381 = vmax.xlane.f32.xlu0 %v3328
        %v3382 = vpop.xlane.xlu0 %3381
        %3383 = vmax.xlane.f32.xlu0 %v3333
        %v3384 = vpop.xlane.xlu0 %3383
        %3385 = vmax.xlane.f32.xlu0 %v3336
        %v3386 = vpop.xlane.xlu0 %3385
        %3387 = vmax.xlane.f32.xlu0 %v3341
        %v3388 = vpop.xlane.xlu0 %3387
        %3389 = vmax.xlane.f32.xlu0 %v3344
        %v3390 = vpop.xlane.xlu0 %3389
        %3391 = vmax.xlane.f32.xlu0 %v3349
        %v3392 = vpop.xlane.xlu0 %3391
        %3393 = vmax.xlane.f32.xlu0 %v3352
        %v3394 = vpop.xlane.xlu0 %3393
        %3395 = vmax.xlane.f32.xlu0 %v3357
        %v3396 = vpop.xlane.xlu0 %3395
        %3397 = vmax.xlane.f32.xlu0 %v3360
        %v3398 = vpop.xlane.xlu0 %3397
        %3399 = vmax.xlane.f32.xlu0 %v3365
        %v3400 = vpop.xlane.xlu0 %3399
        %3401 = vmax.xlane.f32.xlu0 %v3368
        %v3402 = vpop.xlane.xlu0 %3401
        %v3403 = vsub.f32 %v3309, %v3372
        %v3404 = vsub.f32 %v3312, %v3374
        %v3405 = vsub.f32 %v3317, %v3376
        %v3406 = vsub.f32 %v3320, %v3378
        %v3407 = vsub.f32 %v3325, %v3380
        %v3408 = vsub.f32 %v3328, %v3382
        %v3409 = vsub.f32 %v3333, %v3384
        %v3410 = vsub.f32 %v3336, %v3386
        %v3411 = vsub.f32 %v3341, %v3388
        %v3412 = vsub.f32 %v3344, %v3390
        %v3413 = vsub.f32 %v3349, %v3392
        %v3414 = vsub.f32 %v3352, %v3394
        %v3415 = vsub.f32 %v3357, %v3396
        %v3416 = vsub.f32 %v3360, %v3398
        %v3417 = vsub.f32 %v3365, %v3400
        %v3418 = vsub.f32 %v3368, %v3402
        %v3419 = vmul.f32 %v3403, 1.442695
        %v3420 = vpow.pop %v3419
        %v3421 = vmul.f32 %v3404, 1.442695
        %v3422 = vpow.pop %v3421
        %v3423 = vmul.f32 %v3405, 1.442695
        %v3424 = vpow.pop %v3423
        %v3425 = vmul.f32 %v3406, 1.442695
        %v3426 = vpow.pop %v3425
        %v3427 = vmul.f32 %v3407, 1.442695
        %v3428 = vpow.pop %v3427
        %v3429 = vmul.f32 %v3408, 1.442695
        %v3430 = vpow.pop %v3429
        %v3431 = vmul.f32 %v3409, 1.442695
        %v3432 = vpow.pop %v3431
        %v3433 = vmul.f32 %v3410, 1.442695
        %v3434 = vpow.pop %v3433
        %v3435 = vmul.f32 %v3411, 1.442695
        %v3436 = vpow.pop %v3435
        %v3437 = vmul.f32 %v3412, 1.442695
        %v3438 = vpow.pop %v3437
        %v3439 = vmul.f32 %v3413, 1.442695
        %v3440 = vpow.pop %v3439
        %v3441 = vmul.f32 %v3414, 1.442695
        %v3442 = vpow.pop %v3441
        %v3443 = vmul.f32 %v3415, 1.442695
        %v3444 = vpow.pop %v3443
        %v3445 = vmul.f32 %v3416, 1.442695
        %v3446 = vpow.pop %v3445
        %v3447 = vmul.f32 %v3417, 1.442695
        %v3448 = vpow.pop %v3447
        %v3449 = vmul.f32 %v3418, 1.442695
        %v3450 = vpow.pop %v3449
        %3451 = vadd.xlane.f32.xlu0 %v3420
        %v3452 = vpop.xlane.xlu0 %3451
        %3453 = vadd.xlane.f32.xlu0 %v3422
        %v3454 = vpop.xlane.xlu0 %3453
        %3455 = vadd.xlane.f32.xlu0 %v3424
        %v3456 = vpop.xlane.xlu0 %3455
        %3457 = vadd.xlane.f32.xlu0 %v3426
        %v3458 = vpop.xlane.xlu0 %3457
        %3459 = vadd.xlane.f32.xlu0 %v3428
        %v3460 = vpop.xlane.xlu0 %3459
        %3461 = vadd.xlane.f32.xlu0 %v3430
        %v3462 = vpop.xlane.xlu0 %3461
        %3463 = vadd.xlane.f32.xlu0 %v3432
        %v3464 = vpop.xlane.xlu0 %3463
        %3465 = vadd.xlane.f32.xlu0 %v3434
        %v3466 = vpop.xlane.xlu0 %3465
        %3467 = vadd.xlane.f32.xlu0 %v3436
        %v3468 = vpop.xlane.xlu0 %3467
        %3469 = vadd.xlane.f32.xlu0 %v3438
        %v3470 = vpop.xlane.xlu0 %3469
        %3471 = vadd.xlane.f32.xlu0 %v3440
        %v3472 = vpop.xlane.xlu0 %3471
        %3473 = vadd.xlane.f32.xlu0 %v3442
        %v3474 = vpop.xlane.xlu0 %3473
        %3475 = vadd.xlane.f32.xlu0 %v3444
        %v3476 = vpop.xlane.xlu0 %3475
        %3477 = vadd.xlane.f32.xlu0 %v3446
        %v3478 = vpop.xlane.xlu0 %3477
        %3479 = vadd.xlane.f32.xlu0 %v3448
        %v3480 = vpop.xlane.xlu0 %3479
        %3481 = vadd.xlane.f32.xlu0 %v3450
        %v3482 = vpop.xlane.xlu0 %3481
        %v3483 = vrcp.pop %v3452
        %v3484 = vrcp.pop %v3454
        %v3485 = vrcp.pop %v3456
        %v3486 = vrcp.pop %v3458
        %v3487 = vrcp.pop %v3460
        %v3488 = vrcp.pop %v3462
        %v3489 = vrcp.pop %v3464
        %v3490 = vrcp.pop %v3466
        %v3491 = vrcp.pop %v3468
        %v3492 = vrcp.pop %v3470
        %v3493 = vrcp.pop %v3472
        %v3494 = vrcp.pop %v3474
        %v3495 = vrcp.pop %v3476
        %v3496 = vrcp.pop %v3478
        %v3497 = vrcp.pop %v3480
        %v3498 = vrcp.pop %v3482
        %v3499 = vmul.f32 %v3420, %v3483
        %v3500 = vmul.f32 %v3422, %v3484
        %v3501 = vmul.f32 %v3424, %v3485
        %v3502 = vmul.f32 %v3426, %v3486
        %v3503 = vmul.f32 %v3428, %v3487
        %v3504 = vmul.f32 %v3430, %v3488
        %v3505 = vmul.f32 %v3432, %v3489
        %v3506 = vmul.f32 %v3434, %v3490
        %v3507 = vmul.f32 %v3436, %v3491
        %v3508 = vmul.f32 %v3438, %v3492
        %v3509 = vmul.f32 %v3440, %v3493
        %v3510 = vmul.f32 %v3442, %v3494
        %v3511 = vmul.f32 %v3444, %v3495
        %v3512 = vmul.f32 %v3446, %v3496
        %v3513 = vmul.f32 %v3448, %v3497
        %v3514 = vmul.f32 %v3450, %v3498
        %v3515 = vpack.c.bf16 %v3500, %v3499
        %v3516 = vpack.c.bf16 %v3502, %v3501
        %v3517 = vpack.c.bf16 %v3504, %v3503
        %v3518 = vpack.c.bf16 %v3506, %v3505
        %v3519 = vpack.c.bf16 %v3508, %v3507
        %v3520 = vpack.c.bf16 %v3510, %v3509
        %v3521 = vpack.c.bf16 %v3512, %v3511
        %v3522 = vpack.c.bf16 %v3514, %v3513
        %3523 = vmatprep.subr.bf16.mxu0 0
        %3524 = vmatpush1.bf16.msra.mxu0 %v3185
        %3525 = vmatprep.subr.bf16.mxu0 0
        %3526 = vmatpush1.bf16.msra.mxu0 %v3186
        %3527 = vmatprep.subr.bf16.mxu0 0
        %3528 = vmatpush1.bf16.msra.mxu0 %v3187
        %3529 = vmatprep.subr.bf16.mxu0 0
        %3530 = vmatpush1.bf16.msra.mxu0 %v3188
        %3531 = vmatprep.subr.bf16.mxu0 0
        %3532 = vmatpush1.bf16.msra.mxu0 %v3189
        %3533 = vmatprep.subr.bf16.mxu0 0
        %3534 = vmatpush1.bf16.msra.mxu0 %v3190
        %3535 = vmatprep.subr.bf16.mxu0 0
        %3536 = vmatpush1.bf16.msra.mxu0 %v3191
        %3537 = vmatprep.subr.bf16.mxu0 0
        %3538 = vmatpush1.bf16.msra.mxu0 %v3192
        %3539 = vmatprep.subr.bf16.mxu0 0
        %3540 = vmatpush1.bf16.msra.mxu0 0
        %3541 = vmatprep.subr.bf16.mxu0 0
        %3542 = vmatpush1.bf16.msra.mxu0 0
        %3543 = vmatprep.subr.bf16.mxu0 0
        %3544 = vmatpush1.bf16.msra.mxu0 0
        %3545 = vmatprep.subr.bf16.mxu0 0
        %3546 = vmatpush1.bf16.msra.mxu0 0
        %3547 = vmatprep.subr.bf16.mxu0 0
        %3548 = vmatpush1.bf16.msra.mxu0 0
        %3549 = vmatprep.subr.bf16.mxu0 0
        %3550 = vmatpush1.bf16.msra.mxu0 0
        %3551 = vmatprep.subr.bf16.mxu0 0
        %3552 = vmatpush1.bf16.msra.mxu0 0
        %3553 = vmatprep.subr.bf16.mxu0 0
        %3554 = vmatpush1.bf16.msra.mxu0 0
        %3555 = vmatprep.mubr.bf16.mxu0 0
        %3556 = vmatmul.mubr.bf16.gmra.mrb[0].mxu0 %v3515
        %v3557 = vpop.f32.mrb[0].mxu0
        %v3558 = vadd.f32 0.0, %v3557
        %v3559 = vpop.f32.mrb[0].mxu0
        %v3560 = vpop.f32.mrb[0].mxu0
        %v3561 = vadd.f32 0.0, %v3560
        %v3562 = vpop.f32.mrb[0].mxu0
        %3563 = vmatprep.mubr.bf16.mxu0 0
        %3564 = vmatmul.mubr.bf16.gmra.mrb[0].mxu0 %v3516
        %v3565 = vpop.f32.mrb[0].mxu0
        %v3566 = vadd.f32 0.0, %v3565
        %v3567 = vpop.f32.mrb[0].mxu0
        %v3568 = vpop.f32.mrb[0].mxu0
        %v3569 = vadd.f32 0.0, %v3568
        %v3570 = vpop.f32.mrb[0].mxu0
        %3571 = vmatprep.mubr.bf16.mxu0 0
        %3572 = vmatmul.mubr.bf16.gmra.mrb[0].mxu0 %v3517
        %v3573 = vpop.f32.mrb[0].mxu0
        %v3574 = vadd.f32 0.0, %v3573
        %v3575 = vpop.f32.mrb[0].mxu0
        %v3576 = vpop.f32.mrb[0].mxu0
        %v3577 = vadd.f32 0.0, %v3576
        %v3578 = vpop.f32.mrb[0].mxu0
        %3579 = vmatprep.mubr.bf16.mxu0 0
        %3580 = vmatmul.mubr.bf16.gmra.mrb[0].mxu0 %v3518
        %v3581 = vpop.f32.mrb[0].mxu0
        %v3582 = vadd.f32 0.0, %v3581
        %v3583 = vpop.f32.mrb[0].mxu0
        %v3584 = vpop.f32.mrb[0].mxu0
        %v3585 = vadd.f32 0.0, %v3584
        %v3586 = vpop.f32.mrb[0].mxu0
        %3587 = vmatprep.mubr.bf16.mxu0 0
        %3588 = vmatmul.mubr.bf16.gmra.mrb[0].mxu0 %v3519
        %v3589 = vpop.f32.mrb[0].mxu0
        %v3590 = vadd.f32 0.0, %v3589
        %v3591 = vpop.f32.mrb[0].mxu0
        %v3592 = vpop.f32.mrb[0].mxu0
        %v3593 = vadd.f32 0.0, %v3592
        %v3594 = vpop.f32.mrb[0].mxu0
        %3595 = vmatprep.mubr.bf16.mxu0 0
        %3596 = vmatmul.mubr.bf16.gmra.mrb[0].mxu0 %v3520
        %v3597 = vpop.f32.mrb[0].mxu0
        %v3598 = vadd.f32 0.0, %v3597
        %v3599 = vpop.f32.mrb[0].mxu0
        %v3600 = vpop.f32.mrb[0].mxu0
        %v3601 = vadd.f32 0.0, %v3600
        %v3602 = vpop.f32.mrb[0].mxu0
        %3603 = vmatprep.mubr.bf16.mxu0 0
        %3604 = vmatmul.mubr.bf16.gmra.mrb[0].mxu0 %v3521
        %v3605 = vpop.f32.mrb[0].mxu0
        %v3606 = vadd.f32 0.0, %v3605
        %v3607 = vpop.f32.mrb[0].mxu0
        %v3608 = vpop.f32.mrb[0].mxu0
        %v3609 = vadd.f32 0.0, %v3608
        %v3610 = vpop.f32.mrb[0].mxu0
        %3611 = vmatprep.mubr.bf16.mxu0 0
        %3612 = vmatmul.mubr.bf16.gmra.mrb[0].mxu0 %v3522
        %v3613 = vpop.f32.mrb[0].mxu0
        %v3614 = vadd.f32 0.0, %v3613
        %v3615 = vpop.f32.mrb[0].mxu0
        %v3616 = vpop.f32.mrb[0].mxu0
        %v3617 = vadd.f32 0.0, %v3616
        %v3618 = vpop.f32.mrb[0].mxu0
        %3619 = vdwg.mxu0
        %v3620 = vpack.c.bf16 %v3561, %v3558
        %v3621 = vpack.c.bf16 %v3569, %v3566
        %v3622 = vpack.c.bf16 %v3577, %v3574
        %v3623 = vpack.c.bf16 %v3585, %v3582
        %v3624 = vpack.c.bf16 %v3593, %v3590
        %v3625 = vpack.c.bf16 %v3601, %v3598
        %v3626 = vpack.c.bf16 %v3609, %v3606
        %v3627 = vpack.c.bf16 %v3617, %v3614
        %3628 = vst.msk [vmem:[#allocation2 + $0x8] sm:$0xff] %vm2202, %v3620
        %3629 = vst.msk [vmem:[#allocation2 + $0x18] sm:$0xff] %vm2202, %v3621
        %3630 = vst.msk [vmem:[#allocation2 + $0x28] sm:$0xff] %vm2202, %v3622
        %3631 = vst.msk [vmem:[#allocation2 + $0x38] sm:$0xff] %vm2202, %v3623
        %3632 = vst.msk [vmem:[#allocation2 + $0x48] sm:$0xff] %vm2202, %v3624
        %3633 = vst.msk [vmem:[#allocation2 + $0x58] sm:$0xff] %vm2202, %v3625
        %3634 = vst.msk [vmem:[#allocation2 + $0x68] sm:$0xff] %vm2202, %v3626
        %3635 = vst.msk [vmem:[#allocation2 + $0x78] sm:$0xff] %vm2202, %v3627
        %s3636 = scalar_lea.vmem [#allocation13], 192
        %v3637 = vld [vmem:[%s3636] sm:$0xf]
        %v3638 = vld [vmem:[%s3636 + $0x4] sm:$0xf]
        %v3639 = vld [vmem:[%s3636 + $0x8] sm:$0xf]
        %v3640 = vld [vmem:[%s3636 + $0xc] sm:$0xf]
        %v3641 = vld [vmem:[%s3636 + $0x10] sm:$0xf]
        %v3642 = vld [vmem:[%s3636 + $0x14] sm:$0xf]
        %v3643 = vld [vmem:[%s3636 + $0x18] sm:$0xf]
        %v3644 = vld [vmem:[%s3636 + $0x1c] sm:$0xf]
        %v3645 = vld [vmem:[%s3636 + $0x20] sm:$0xf]
        %v3646 = vld [vmem:[%s3636 + $0x24] sm:$0xf]
        %v3647 = vld [vmem:[%s3636 + $0x28] sm:$0xf]
        %v3648 = vld [vmem:[%s3636 + $0x2c] sm:$0xf]
        %v3649 = vld [vmem:[%s3636 + $0x30] sm:$0xf]
        %v3650 = vld [vmem:[%s3636 + $0x34] sm:$0xf]
        %v3651 = vld [vmem:[%s3636 + $0x38] sm:$0xf]
        %v3652 = vld [vmem:[%s3636 + $0x3c] sm:$0xf]
        %v3653 = vunpack.c.l.bf16 %v3637
        %v3654 = vunpack.c.l.bf16 %v3638
        %v3655 = vunpack.c.l.bf16 %v3639
        %v3656 = vunpack.c.l.bf16 %v3640
        %v3657 = vunpack.c.l.bf16 %v3641
        %v3658 = vunpack.c.l.bf16 %v3642
        %v3659 = vunpack.c.l.bf16 %v3643
        %v3660 = vunpack.c.l.bf16 %v3644
        %v3661 = vunpack.c.l.bf16 %v3645
        %v3662 = vunpack.c.l.bf16 %v3646
        %v3663 = vunpack.c.l.bf16 %v3647
        %v3664 = vunpack.c.l.bf16 %v3648
        %v3665 = vunpack.c.l.bf16 %v3649
        %v3666 = vunpack.c.l.bf16 %v3650
        %v3667 = vunpack.c.l.bf16 %v3651
        %v3668 = vunpack.c.l.bf16 %v3652
        %3677 = vrot.lane.b32.xlu0 %v3169, 64
        %v3678 = vpop.permute.xlu0 %3677
        %3679 = vrot.lane.b32.xlu0 %v3170, 64
        %v3680 = vpop.permute.xlu0 %3679
        %3681 = vrot.lane.b32.xlu0 %v3171, 64
        %v3682 = vpop.permute.xlu0 %3681
        %3683 = vrot.lane.b32.xlu0 %v3172, 64
        %v3684 = vpop.permute.xlu0 %3683
        %3685 = vrot.lane.b32.xlu0 %v3173, 64
        %v3686 = vpop.permute.xlu0 %3685
        %3687 = vrot.lane.b32.xlu0 %v3174, 64
        %v3688 = vpop.permute.xlu0 %3687
        %3689 = vrot.lane.b32.xlu0 %v3175, 64
        %v3690 = vpop.permute.xlu0 %3689
        %3691 = vrot.lane.b32.xlu0 %v3176, 64
        %v3692 = vpop.permute.xlu0 %3691
        %3701 = vrot.lane.b32.xlu0 %v3177, 64
        %v3702 = vpop.permute.xlu0 %3701
        %3703 = vrot.lane.b32.xlu0 %v3178, 64
        %v3704 = vpop.permute.xlu0 %3703
        %3705 = vrot.lane.b32.xlu0 %v3179, 64
        %v3706 = vpop.permute.xlu0 %3705
        %3707 = vrot.lane.b32.xlu0 %v3180, 64
        %v3708 = vpop.permute.xlu0 %3707
        %3709 = vrot.lane.b32.xlu0 %v3181, 64
        %v3710 = vpop.permute.xlu0 %3709
        %3711 = vrot.lane.b32.xlu0 %v3182, 64
        %v3712 = vpop.permute.xlu0 %3711
        %3713 = vrot.lane.b32.xlu0 %v3183, 64
        %v3714 = vpop.permute.xlu0 %3713
        %3715 = vrot.lane.b32.xlu0 %v3184, 64
        %v3716 = vpop.permute.xlu0 %3715
        %v3718 = vsel %vm2202, %v3678, 0
        %v3721 = vsel %vm2202, %v3680, 0
        %v3724 = vsel %vm2202, %v3682, 0
        %v3727 = vsel %vm2202, %v3684, 0
        %v3730 = vsel %vm2202, %v3686, 0
        %v3733 = vsel %vm2202, %v3688, 0
        %v3736 = vsel %vm2202, %v3690, 0
        %v3739 = vsel %vm2202, %v3692, 0
        %v3742 = vsel %vm2202, %v3702, 0
        %v3745 = vsel %vm2202, %v3704, 0
        %v3748 = vsel %vm2202, %v3706, 0
        %v3751 = vsel %vm2202, %v3708, 0
        %v3754 = vsel %vm2202, %v3710, 0
        %v3757 = vsel %vm2202, %v3712, 0
        %v3760 = vsel %vm2202, %v3714, 0
        %v3763 = vsel %vm2202, %v3716, 0
        %3765 = vmatprep.subr.bf16.mxu0 0
        %3766 = vmatpush1.bf16.xpose.msra.mxu0 %v3742
        %3767 = vmatprep.subr.bf16.mxu0 0
        %3768 = vmatpush1.bf16.xpose.msra.mxu0 %v3745
        %3769 = vmatprep.subr.bf16.mxu0 0
        %3770 = vmatpush1.bf16.xpose.msra.mxu0 %v3748
        %3771 = vmatprep.subr.bf16.mxu0 0
        %3772 = vmatpush1.bf16.xpose.msra.mxu0 %v3751
        %3773 = vmatprep.subr.bf16.mxu0 0
        %3774 = vmatpush1.bf16.xpose.msra.mxu0 %v3754
        %3775 = vmatprep.subr.bf16.mxu0 0
        %3776 = vmatpush1.bf16.xpose.msra.mxu0 %v3757
        %3777 = vmatprep.subr.bf16.mxu0 0
        %3778 = vmatpush1.bf16.xpose.msra.mxu0 %v3760
        %3779 = vmatprep.subr.bf16.mxu0 0
        %3780 = vmatpush1.bf16.xpose.msra.mxu0 %v3763
        %3781 = vmatprep.subr.bf16.mxu0 0
        %3782 = vmatpush1.bf16.xpose.msra.mxu0 0
        %3783 = vmatprep.subr.bf16.mxu0 0
        %3784 = vmatpush1.bf16.xpose.msra.mxu0 0
        %3785 = vmatprep.subr.bf16.mxu0 0
        %3786 = vmatpush1.bf16.xpose.msra.mxu0 0
        %3787 = vmatprep.subr.bf16.mxu0 0
        %3788 = vmatpush1.bf16.xpose.msra.mxu0 0
        %3789 = vmatprep.subr.bf16.mxu0 0
        %3790 = vmatpush1.bf16.xpose.msra.mxu0 0
        %3791 = vmatprep.subr.bf16.mxu0 0
        %3792 = vmatpush1.bf16.xpose.msra.mxu0 0
        %3793 = vmatprep.subr.bf16.mxu0 0
        %3794 = vmatpush1.bf16.xpose.msra.mxu0 0
        %3795 = vmatprep.subr.bf16.mxu0 0
        %3796 = vmatpush1.bf16.xpose.msra.mxu0 0
        %3797 = vmatprep.mubr.bf16.mxu0 0
        %3798 = vmatmul.mubr.bf16.gmra.mrb[0].mxu0 %v3718
        %v3799 = vpop.f32.mrb[0].mxu0
        %v3800 = vadd.f32 %v3653, %v3799
        %v3801 = vpop.f32.mrb[0].mxu0
        %v3802 = vpop.f32.mrb[0].mxu0
        %v3803 = vadd.f32 %v3654, %v3802
        %v3804 = vpop.f32.mrb[0].mxu0
        %3805 = vmatprep.mubr.bf16.mxu0 0
        %3806 = vmatmul.mubr.bf16.gmra.mrb[0].mxu0 %v3721
        %v3807 = vpop.f32.mrb[0].mxu0
        %v3808 = vadd.f32 %v3655, %v3807
        %v3809 = vpop.f32.mrb[0].mxu0
        %v3810 = vpop.f32.mrb[0].mxu0
        %v3811 = vadd.f32 %v3656, %v3810
        %v3812 = vpop.f32.mrb[0].mxu0
        %3813 = vmatprep.mubr.bf16.mxu0 0
        %3814 = vmatmul.mubr.bf16.gmra.mrb[0].mxu0 %v3724
        %v3815 = vpop.f32.mrb[0].mxu0
        %v3816 = vadd.f32 %v3657, %v3815
        %v3817 = vpop.f32.mrb[0].mxu0
        %v3818 = vpop.f32.mrb[0].mxu0
        %v3819 = vadd.f32 %v3658, %v3818
        %v3820 = vpop.f32.mrb[0].mxu0
        %3821 = vmatprep.mubr.bf16.mxu0 0
        %3822 = vmatmul.mubr.bf16.gmra.mrb[0].mxu0 %v3727
        %v3823 = vpop.f32.mrb[0].mxu0
        %v3824 = vadd.f32 %v3659, %v3823
        %v3825 = vpop.f32.mrb[0].mxu0
        %v3826 = vpop.f32.mrb[0].mxu0
        %v3827 = vadd.f32 %v3660, %v3826
        %v3828 = vpop.f32.mrb[0].mxu0
        %3829 = vmatprep.mubr.bf16.mxu0 0
        %3830 = vmatmul.mubr.bf16.gmra.mrb[0].mxu0 %v3730
        %v3831 = vpop.f32.mrb[0].mxu0
        %v3832 = vadd.f32 %v3661, %v3831
        %v3833 = vpop.f32.mrb[0].mxu0
        %v3834 = vpop.f32.mrb[0].mxu0
        %v3835 = vadd.f32 %v3662, %v3834
        %v3836 = vpop.f32.mrb[0].mxu0
        %3837 = vmatprep.mubr.bf16.mxu0 0
        %3838 = vmatmul.mubr.bf16.gmra.mrb[0].mxu0 %v3733
        %v3839 = vpop.f32.mrb[0].mxu0
        %v3840 = vadd.f32 %v3663, %v3839
        %v3841 = vpop.f32.mrb[0].mxu0
        %v3842 = vpop.f32.mrb[0].mxu0
        %v3843 = vadd.f32 %v3664, %v3842
        %v3844 = vpop.f32.mrb[0].mxu0
        %3845 = vmatprep.mubr.bf16.mxu0 0
        %3846 = vmatmul.mubr.bf16.gmra.mrb[0].mxu0 %v3736
        %v3847 = vpop.f32.mrb[0].mxu0
        %v3848 = vadd.f32 %v3665, %v3847
        %v3849 = vpop.f32.mrb[0].mxu0
        %v3850 = vpop.f32.mrb[0].mxu0
        %v3851 = vadd.f32 %v3666, %v3850
        %v3852 = vpop.f32.mrb[0].mxu0
        %3853 = vmatprep.mubr.bf16.mxu0 0
        %3854 = vmatmul.mubr.bf16.gmra.mrb[0].mxu0 %v3739
        %v3855 = vpop.f32.mrb[0].mxu0
        %v3856 = vadd.f32 %v3667, %v3855
        %v3857 = vpop.f32.mrb[0].mxu0
        %v3858 = vpop.f32.mrb[0].mxu0
        %v3859 = vadd.f32 %v3668, %v3858
        %v3860 = vpop.f32.mrb[0].mxu0
        %3861 = vdwg.mxu0
        %3862 = vmax.xlane.f32.xlu0 %v3800
        %v3863 = vpop.xlane.xlu0 %3862
        %3864 = vmax.xlane.f32.xlu0 %v3803
        %v3865 = vpop.xlane.xlu0 %3864
        %3866 = vmax.xlane.f32.xlu0 %v3808
        %v3867 = vpop.xlane.xlu0 %3866
        %3868 = vmax.xlane.f32.xlu0 %v3811
        %v3869 = vpop.xlane.xlu0 %3868
        %3870 = vmax.xlane.f32.xlu0 %v3816
        %v3871 = vpop.xlane.xlu0 %3870
        %3872 = vmax.xlane.f32.xlu0 %v3819
        %v3873 = vpop.xlane.xlu0 %3872
        %3874 = vmax.xlane.f32.xlu0 %v3824
        %v3875 = vpop.xlane.xlu0 %3874
        %3876 = vmax.xlane.f32.xlu0 %v3827
        %v3877 = vpop.xlane.xlu0 %3876
        %3878 = vmax.xlane.f32.xlu0 %v3832
        %v3879 = vpop.xlane.xlu0 %3878
        %3880 = vmax.xlane.f32.xlu0 %v3835
        %v3881 = vpop.xlane.xlu0 %3880
        %3882 = vmax.xlane.f32.xlu0 %v3840
        %v3883 = vpop.xlane.xlu0 %3882
        %3884 = vmax.xlane.f32.xlu0 %v3843
        %v3885 = vpop.xlane.xlu0 %3884
        %3886 = vmax.xlane.f32.xlu0 %v3848
        %v3887 = vpop.xlane.xlu0 %3886
        %3888 = vmax.xlane.f32.xlu0 %v3851
        %v3889 = vpop.xlane.xlu0 %3888
        %3890 = vmax.xlane.f32.xlu0 %v3856
        %v3891 = vpop.xlane.xlu0 %3890
        %3892 = vmax.xlane.f32.xlu0 %v3859
        %v3893 = vpop.xlane.xlu0 %3892
        %v3894 = vsub.f32 %v3800, %v3863
        %v3895 = vsub.f32 %v3803, %v3865
        %v3896 = vsub.f32 %v3808, %v3867
        %v3897 = vsub.f32 %v3811, %v3869
        %v3898 = vsub.f32 %v3816, %v3871
        %v3899 = vsub.f32 %v3819, %v3873
        %v3900 = vsub.f32 %v3824, %v3875
        %v3901 = vsub.f32 %v3827, %v3877
        %v3902 = vsub.f32 %v3832, %v3879
        %v3903 = vsub.f32 %v3835, %v3881
        %v3904 = vsub.f32 %v3840, %v3883
        %v3905 = vsub.f32 %v3843, %v3885
        %v3906 = vsub.f32 %v3848, %v3887
        %v3907 = vsub.f32 %v3851, %v3889
        %v3908 = vsub.f32 %v3856, %v3891
        %v3909 = vsub.f32 %v3859, %v3893
        %v3910 = vmul.f32 %v3894, 1.442695
        %v3911 = vpow.pop %v3910
        %v3912 = vmul.f32 %v3895, 1.442695
        %v3913 = vpow.pop %v3912
        %v3914 = vmul.f32 %v3896, 1.442695
        %v3915 = vpow.pop %v3914
        %v3916 = vmul.f32 %v3897, 1.442695
        %v3917 = vpow.pop %v3916
        %v3918 = vmul.f32 %v3898, 1.442695
        %v3919 = vpow.pop %v3918
        %v3920 = vmul.f32 %v3899, 1.442695
        %v3921 = vpow.pop %v3920
        %v3922 = vmul.f32 %v3900, 1.442695
        %v3923 = vpow.pop %v3922
        %v3924 = vmul.f32 %v3901, 1.442695
        %v3925 = vpow.pop %v3924
        %v3926 = vmul.f32 %v3902, 1.442695
        %v3927 = vpow.pop %v3926
        %v3928 = vmul.f32 %v3903, 1.442695
        %v3929 = vpow.pop %v3928
        %v3930 = vmul.f32 %v3904, 1.442695
        %v3931 = vpow.pop %v3930
        %v3932 = vmul.f32 %v3905, 1.442695
        %v3933 = vpow.pop %v3932
        %v3934 = vmul.f32 %v3906, 1.442695
        %v3935 = vpow.pop %v3934
        %v3936 = vmul.f32 %v3907, 1.442695
        %v3937 = vpow.pop %v3936
        %v3938 = vmul.f32 %v3908, 1.442695
        %v3939 = vpow.pop %v3938
        %v3940 = vmul.f32 %v3909, 1.442695
        %v3941 = vpow.pop %v3940
        %3942 = vadd.xlane.f32.xlu0 %v3911
        %v3943 = vpop.xlane.xlu0 %3942
        %3944 = vadd.xlane.f32.xlu0 %v3913
        %v3945 = vpop.xlane.xlu0 %3944
        %3946 = vadd.xlane.f32.xlu0 %v3915
        %v3947 = vpop.xlane.xlu0 %3946
        %3948 = vadd.xlane.f32.xlu0 %v3917
        %v3949 = vpop.xlane.xlu0 %3948
        %3950 = vadd.xlane.f32.xlu0 %v3919
        %v3951 = vpop.xlane.xlu0 %3950
        %3952 = vadd.xlane.f32.xlu0 %v3921
        %v3953 = vpop.xlane.xlu0 %3952
        %3954 = vadd.xlane.f32.xlu0 %v3923
        %v3955 = vpop.xlane.xlu0 %3954
        %3956 = vadd.xlane.f32.xlu0 %v3925
        %v3957 = vpop.xlane.xlu0 %3956
        %3958 = vadd.xlane.f32.xlu0 %v3927
        %v3959 = vpop.xlane.xlu0 %3958
        %3960 = vadd.xlane.f32.xlu0 %v3929
        %v3961 = vpop.xlane.xlu0 %3960
        %3962 = vadd.xlane.f32.xlu0 %v3931
        %v3963 = vpop.xlane.xlu0 %3962
        %3964 = vadd.xlane.f32.xlu0 %v3933
        %v3965 = vpop.xlane.xlu0 %3964
        %3966 = vadd.xlane.f32.xlu0 %v3935
        %v3967 = vpop.xlane.xlu0 %3966
        %3968 = vadd.xlane.f32.xlu0 %v3937
        %v3969 = vpop.xlane.xlu0 %3968
        %3970 = vadd.xlane.f32.xlu0 %v3939
        %v3971 = vpop.xlane.xlu0 %3970
        %3972 = vadd.xlane.f32.xlu0 %v3941
        %v3973 = vpop.xlane.xlu0 %3972
        %v3974 = vrcp.pop %v3943
        %v3975 = vrcp.pop %v3945
        %v3976 = vrcp.pop %v3947
        %v3977 = vrcp.pop %v3949
        %v3978 = vrcp.pop %v3951
        %v3979 = vrcp.pop %v3953
        %v3980 = vrcp.pop %v3955
        %v3981 = vrcp.pop %v3957
        %v3982 = vrcp.pop %v3959
        %v3983 = vrcp.pop %v3961
        %v3984 = vrcp.pop %v3963
        %v3985 = vrcp.pop %v3965
        %v3986 = vrcp.pop %v3967
        %v3987 = vrcp.pop %v3969
        %v3988 = vrcp.pop %v3971
        %v3989 = vrcp.pop %v3973
        %v3990 = vmul.f32 %v3911, %v3974
        %v3991 = vmul.f32 %v3913, %v3975
        %v3992 = vmul.f32 %v3915, %v3976
        %v3993 = vmul.f32 %v3917, %v3977
        %v3994 = vmul.f32 %v3919, %v3978
        %v3995 = vmul.f32 %v3921, %v3979
        %v3996 = vmul.f32 %v3923, %v3980
        %v3997 = vmul.f32 %v3925, %v3981
        %v3998 = vmul.f32 %v3927, %v3982
        %v3999 = vmul.f32 %v3929, %v3983
        %v4000 = vmul.f32 %v3931, %v3984
        %v4001 = vmul.f32 %v3933, %v3985
        %v4002 = vmul.f32 %v3935, %v3986
        %v4003 = vmul.f32 %v3937, %v3987
        %v4004 = vmul.f32 %v3939, %v3988
        %v4005 = vmul.f32 %v3941, %v3989
        %v4006 = vpack.c.bf16 %v3991, %v3990
        %v4007 = vpack.c.bf16 %v3993, %v3992
        %v4008 = vpack.c.bf16 %v3995, %v3994
        %v4009 = vpack.c.bf16 %v3997, %v3996
        %v4010 = vpack.c.bf16 %v3999, %v3998
        %v4011 = vpack.c.bf16 %v4001, %v4000
        %v4012 = vpack.c.bf16 %v4003, %v4002
        %v4013 = vpack.c.bf16 %v4005, %v4004
        %4022 = vrot.lane.b32.xlu0 %v3185, 64
        %v4023 = vpop.permute.xlu0 %4022
        %4024 = vrot.lane.b32.xlu0 %v3186, 64
        %v4025 = vpop.permute.xlu0 %4024
        %4026 = vrot.lane.b32.xlu0 %v3187, 64
        %v4027 = vpop.permute.xlu0 %4026
        %4028 = vrot.lane.b32.xlu0 %v3188, 64
        %v4029 = vpop.permute.xlu0 %4028
        %4030 = vrot.lane.b32.xlu0 %v3189, 64
        %v4031 = vpop.permute.xlu0 %4030
        %4032 = vrot.lane.b32.xlu0 %v3190, 64
        %v4033 = vpop.permute.xlu0 %4032
        %4034 = vrot.lane.b32.xlu0 %v3191, 64
        %v4035 = vpop.permute.xlu0 %4034
        %4036 = vrot.lane.b32.xlu0 %v3192, 64
        %v4037 = vpop.permute.xlu0 %4036
        %4046 = vmatprep.subr.bf16.mxu0 0
        %4047 = vmatpush1.bf16.msra.mxu0 %v4023
        %4048 = vmatprep.subr.bf16.mxu0 0
        %4049 = vmatpush1.bf16.msra.mxu0 %v4025
        %4050 = vmatprep.subr.bf16.mxu0 0
        %4051 = vmatpush1.bf16.msra.mxu0 %v4027
        %4052 = vmatprep.subr.bf16.mxu0 0
        %4053 = vmatpush1.bf16.msra.mxu0 %v4029
        %4054 = vmatprep.subr.bf16.mxu0 0
        %4055 = vmatpush1.bf16.msra.mxu0 %v4031
        %4056 = vmatprep.subr.bf16.mxu0 0
        %4057 = vmatpush1.bf16.msra.mxu0 %v4033
        %4058 = vmatprep.subr.bf16.mxu0 0
        %4059 = vmatpush1.bf16.msra.mxu0 %v4035
        %4060 = vmatprep.subr.bf16.mxu0 0
        %4061 = vmatpush1.bf16.msra.mxu0 %v4037
        %4062 = vmatprep.subr.bf16.mxu0 0
        %4063 = vmatpush1.bf16.msra.mxu0 0
        %4064 = vmatprep.subr.bf16.mxu0 0
        %4065 = vmatpush1.bf16.msra.mxu0 0
        %4066 = vmatprep.subr.bf16.mxu0 0
        %4067 = vmatpush1.bf16.msra.mxu0 0
        %4068 = vmatprep.subr.bf16.mxu0 0
        %4069 = vmatpush1.bf16.msra.mxu0 0
        %4070 = vmatprep.subr.bf16.mxu0 0
        %4071 = vmatpush1.bf16.msra.mxu0 0
        %4072 = vmatprep.subr.bf16.mxu0 0
        %4073 = vmatpush1.bf16.msra.mxu0 0
        %4074 = vmatprep.subr.bf16.mxu0 0
        %4075 = vmatpush1.bf16.msra.mxu0 0
        %4076 = vmatprep.subr.bf16.mxu0 0
        %4077 = vmatpush1.bf16.msra.mxu0 0
        %4078 = vmatprep.mubr.bf16.mxu0 0
        %4079 = vmatmul.mubr.bf16.gmra.mrb[0].mxu0 %v4006
        %v4080 = vpop.f32.mrb[0].mxu0
        %v4081 = vadd.f32 0.0, %v4080
        %v4082 = vpop.f32.mrb[0].mxu0
        %v4083 = vpop.f32.mrb[0].mxu0
        %v4084 = vadd.f32 0.0, %v4083
        %v4085 = vpop.f32.mrb[0].mxu0
        %4086 = vmatprep.mubr.bf16.mxu0 0
        %4087 = vmatmul.mubr.bf16.gmra.mrb[0].mxu0 %v4007
        %v4088 = vpop.f32.mrb[0].mxu0
        %v4089 = vadd.f32 0.0, %v4088
        %v4090 = vpop.f32.mrb[0].mxu0
        %v4091 = vpop.f32.mrb[0].mxu0
        %v4092 = vadd.f32 0.0, %v4091
        %v4093 = vpop.f32.mrb[0].mxu0
        %4094 = vmatprep.mubr.bf16.mxu0 0
        %4095 = vmatmul.mubr.bf16.gmra.mrb[0].mxu0 %v4008
        %v4096 = vpop.f32.mrb[0].mxu0
        %v4097 = vadd.f32 0.0, %v4096
        %v4098 = vpop.f32.mrb[0].mxu0
        %v4099 = vpop.f32.mrb[0].mxu0
        %v4100 = vadd.f32 0.0, %v4099
        %v4101 = vpop.f32.mrb[0].mxu0
        %4102 = vmatprep.mubr.bf16.mxu0 0
        %4103 = vmatmul.mubr.bf16.gmra.mrb[0].mxu0 %v4009
        %v4104 = vpop.f32.mrb[0].mxu0
        %v4105 = vadd.f32 0.0, %v4104
        %v4106 = vpop.f32.mrb[0].mxu0
        %v4107 = vpop.f32.mrb[0].mxu0
        %v4108 = vadd.f32 0.0, %v4107
        %v4109 = vpop.f32.mrb[0].mxu0
        %4110 = vmatprep.mubr.bf16.mxu0 0
        %4111 = vmatmul.mubr.bf16.gmra.mrb[0].mxu0 %v4010
        %v4112 = vpop.f32.mrb[0].mxu0
        %v4113 = vadd.f32 0.0, %v4112
        %v4114 = vpop.f32.mrb[0].mxu0
        %v4115 = vpop.f32.mrb[0].mxu0
        %v4116 = vadd.f32 0.0, %v4115
        %v4117 = vpop.f32.mrb[0].mxu0
        %4118 = vmatprep.mubr.bf16.mxu0 0
        %4119 = vmatmul.mubr.bf16.gmra.mrb[0].mxu0 %v4011
        %v4120 = vpop.f32.mrb[0].mxu0
        %v4121 = vadd.f32 0.0, %v4120
        %v4122 = vpop.f32.mrb[0].mxu0
        %v4123 = vpop.f32.mrb[0].mxu0
        %v4124 = vadd.f32 0.0, %v4123
        %v4125 = vpop.f32.mrb[0].mxu0
        %4126 = vmatprep.mubr.bf16.mxu0 0
        %4127 = vmatmul.mubr.bf16.gmra.mrb[0].mxu0 %v4012
        %v4128 = vpop.f32.mrb[0].mxu0
        %v4129 = vadd.f32 0.0, %v4128
        %v4130 = vpop.f32.mrb[0].mxu0
        %v4131 = vpop.f32.mrb[0].mxu0
        %v4132 = vadd.f32 0.0, %v4131
        %v4133 = vpop.f32.mrb[0].mxu0
        %4134 = vmatprep.mubr.bf16.mxu0 0
        %4135 = vmatmul.mubr.bf16.gmra.mrb[0].mxu0 %v4013
        %v4136 = vpop.f32.mrb[0].mxu0
        %v4137 = vadd.f32 0.0, %v4136
        %v4138 = vpop.f32.mrb[0].mxu0
        %v4139 = vpop.f32.mrb[0].mxu0
        %v4140 = vadd.f32 0.0, %v4139
        %v4141 = vpop.f32.mrb[0].mxu0
        %4142 = vdwg.mxu0
        %v4143 = vpack.c.bf16 %v4084, %v4081
        %v4144 = vpack.c.bf16 %v4092, %v4089
        %v4145 = vpack.c.bf16 %v4100, %v4097
        %v4146 = vpack.c.bf16 %v4108, %v4105
        %v4147 = vpack.c.bf16 %v4116, %v4113
        %v4148 = vpack.c.bf16 %v4124, %v4121
        %v4149 = vpack.c.bf16 %v4132, %v4129
        %v4150 = vpack.c.bf16 %v4140, %v4137
        %4159 = vrot.lane.b32.xlu0 %v4143, 64
        %v4160 = vpop.permute.xlu0 %4159
        %4161 = vrot.lane.b32.xlu0 %v4144, 64
        %v4162 = vpop.permute.xlu0 %4161
        %4163 = vrot.lane.b32.xlu0 %v4145, 64
        %v4164 = vpop.permute.xlu0 %4163
        %4165 = vrot.lane.b32.xlu0 %v4146, 64
        %v4166 = vpop.permute.xlu0 %4165
        %4167 = vrot.lane.b32.xlu0 %v4147, 64
        %v4168 = vpop.permute.xlu0 %4167
        %4169 = vrot.lane.b32.xlu0 %v4148, 64
        %v4170 = vpop.permute.xlu0 %4169
        %4171 = vrot.lane.b32.xlu0 %v4149, 64
        %v4172 = vpop.permute.xlu0 %4171
        %4173 = vrot.lane.b32.xlu0 %v4150, 64
        %v4174 = vpop.permute.xlu0 %4173
        %4183 = vst.msk [vmem:[#allocation2 + $0x8] sm:$0xff] %vm3160, %v4160
        %4184 = vst.msk [vmem:[#allocation2 + $0x18] sm:$0xff] %vm3160, %v4162
        %4185 = vst.msk [vmem:[#allocation2 + $0x28] sm:$0xff] %vm3160, %v4164
        %4186 = vst.msk [vmem:[#allocation2 + $0x38] sm:$0xff] %vm3160, %v4166
        %4187 = vst.msk [vmem:[#allocation2 + $0x48] sm:$0xff] %vm3160, %v4168
        %4188 = vst.msk [vmem:[#allocation2 + $0x58] sm:$0xff] %vm3160, %v4170
        %4189 = vst.msk [vmem:[#allocation2 + $0x68] sm:$0xff] %vm3160, %v4172
        %4190 = vst.msk [vmem:[#allocation2 + $0x78] sm:$0xff] %vm3160, %v4174
        %v4191 = vld [vmem:[#allocation2] sm:$0xff]
        %v4192 = vld [vmem:[#allocation2 + $0x8] sm:$0xff]
        %v4193 = vld [vmem:[#allocation2 + $0x10] sm:$0xff]
        %v4194 = vld [vmem:[#allocation2 + $0x18] sm:$0xff]
        %v4195 = vld [vmem:[#allocation2 + $0x20] sm:$0xff]
        %v4196 = vld [vmem:[#allocation2 + $0x28] sm:$0xff]
        %v4197 = vld [vmem:[#allocation2 + $0x30] sm:$0xff]
        %v4198 = vld [vmem:[#allocation2 + $0x38] sm:$0xff]
        %v4199 = vld [vmem:[#allocation2 + $0x40] sm:$0xff]
        %v4200 = vld [vmem:[#allocation2 + $0x48] sm:$0xff]
        %v4201 = vld [vmem:[#allocation2 + $0x50] sm:$0xff]
        %v4202 = vld [vmem:[#allocation2 + $0x58] sm:$0xff]
        %v4203 = vld [vmem:[#allocation2 + $0x60] sm:$0xff]
        %v4204 = vld [vmem:[#allocation2 + $0x68] sm:$0xff]
        %v4205 = vld [vmem:[#allocation2 + $0x70] sm:$0xff]
        %v4206 = vld [vmem:[#allocation2 + $0x78] sm:$0xff]
        %v4239 = vunpack.c.l.b16 %v1075
        %v4240 = vunpack.c.h.b16 %v1075
        %v4241 = vunpack.c.l.b16 %v1076
        %v4242 = vunpack.c.h.b16 %v1076
        %v4243 = vunpack.c.l.b16 %v1077
        %v4244 = vunpack.c.h.b16 %v1077
        %v4245 = vunpack.c.l.b16 %v1078
        %v4246 = vunpack.c.h.b16 %v1078
        %v4247 = vunpack.c.l.b16 %v1079
        %v4248 = vunpack.c.h.b16 %v1079
        %v4249 = vunpack.c.l.b16 %v1080
        %v4250 = vunpack.c.h.b16 %v1080
        %v4251 = vunpack.c.l.b16 %v1081
        %v4252 = vunpack.c.h.b16 %v1081
        %v4253 = vunpack.c.l.b16 %v1082
        %v4254 = vunpack.c.h.b16 %v1082
        %v4255 = vunpack.c.l.b16 %v1083
        %v4256 = vunpack.c.h.b16 %v1083
        %v4257 = vunpack.c.l.b16 %v1084
        %v4258 = vunpack.c.h.b16 %v1084
        %v4259 = vunpack.c.l.b16 %v1085
        %v4260 = vunpack.c.h.b16 %v1085
        %v4261 = vunpack.c.l.b16 %v1086
        %v4262 = vunpack.c.h.b16 %v1086
        %v4263 = vunpack.c.l.b16 %v1087
        %v4264 = vunpack.c.h.b16 %v1087
        %v4265 = vunpack.c.l.b16 %v1088
        %v4266 = vunpack.c.h.b16 %v1088
        %v4267 = vunpack.c.l.b16 %v1089
        %v4268 = vunpack.c.h.b16 %v1089
        %v4269 = vunpack.c.l.b16 %v1090
        %v4270 = vunpack.c.h.b16 %v1090
        %v4271 = vunpack.c.l.b16 %v1091
        %v4272 = vunpack.c.h.b16 %v1091
        %v4273 = vunpack.c.l.b16 %v1092
        %v4274 = vunpack.c.h.b16 %v1092
        %v4275 = vunpack.c.l.b16 %v1093
        %v4276 = vunpack.c.h.b16 %v1093
        %v4277 = vunpack.c.l.b16 %v1094
        %v4278 = vunpack.c.h.b16 %v1094
        %v4279 = vunpack.c.l.b16 %v1095
        %v4280 = vunpack.c.h.b16 %v1095
        %v4281 = vunpack.c.l.b16 %v1096
        %v4282 = vunpack.c.h.b16 %v1096
        %v4283 = vunpack.c.l.b16 %v1097
        %v4284 = vunpack.c.h.b16 %v1097
        %v4285 = vunpack.c.l.b16 %v1098
        %v4286 = vunpack.c.h.b16 %v1098
        %v4287 = vunpack.c.l.b16 %v1099
        %v4288 = vunpack.c.h.b16 %v1099
        %v4289 = vunpack.c.l.b16 %v1100
        %v4290 = vunpack.c.h.b16 %v1100
        %v4291 = vunpack.c.l.b16 %v1101
        %v4292 = vunpack.c.h.b16 %v1101
        %v4293 = vunpack.c.l.b16 %v1102
        %v4294 = vunpack.c.h.b16 %v1102
        %v4295 = vunpack.c.l.b16 %v1103
        %v4296 = vunpack.c.h.b16 %v1103
        %v4297 = vunpack.c.l.b16 %v1104
        %v4298 = vunpack.c.h.b16 %v1104
        %v4299 = vunpack.c.l.b16 %v1105
        %v4300 = vunpack.c.h.b16 %v1105
        %v4301 = vunpack.c.l.b16 %v1106
        %v4302 = vunpack.c.h.b16 %v1106
        %v4303 = vpack.c.b16 %v4241, %v4239
        %v4304 = vpack.c.b16 %v4242, %v4240
        %v4305 = vpack.c.b16 %v4245, %v4243
        %v4306 = vpack.c.b16 %v4246, %v4244
        %v4307 = vpack.c.b16 %v4249, %v4247
        %v4308 = vpack.c.b16 %v4250, %v4248
        %v4309 = vpack.c.b16 %v4253, %v4251
        %v4310 = vpack.c.b16 %v4254, %v4252
        %v4311 = vpack.c.b16 %v4257, %v4255
        %v4312 = vpack.c.b16 %v4258, %v4256
        %v4313 = vpack.c.b16 %v4261, %v4259
        %v4314 = vpack.c.b16 %v4262, %v4260
        %v4315 = vpack.c.b16 %v4265, %v4263
        %v4316 = vpack.c.b16 %v4266, %v4264
        %v4317 = vpack.c.b16 %v4269, %v4267
        %v4318 = vpack.c.b16 %v4270, %v4268
        %v4319 = vpack.c.b16 %v4273, %v4271
        %v4320 = vpack.c.b16 %v4274, %v4272
        %v4321 = vpack.c.b16 %v4277, %v4275
        %v4322 = vpack.c.b16 %v4278, %v4276
        %v4323 = vpack.c.b16 %v4281, %v4279
        %v4324 = vpack.c.b16 %v4282, %v4280
        %v4325 = vpack.c.b16 %v4285, %v4283
        %v4326 = vpack.c.b16 %v4286, %v4284
        %v4327 = vpack.c.b16 %v4289, %v4287
        %v4328 = vpack.c.b16 %v4290, %v4288
        %v4329 = vpack.c.b16 %v4293, %v4291
        %v4330 = vpack.c.b16 %v4294, %v4292
        %v4331 = vpack.c.b16 %v4297, %v4295
        %v4332 = vpack.c.b16 %v4298, %v4296
        %v4333 = vpack.c.b16 %v4301, %v4299
        %v4334 = vpack.c.b16 %v4302, %v4300
        %4367 = vmatprep.subr.bf16.mxu0 %v4304
        %4368 = vmatpush1.bf16.msra.mxu0 %v4303
        %4369 = vmatprep.subr.bf16.mxu0 %v4306
        %4370 = vmatpush1.bf16.msra.mxu0 %v4305
        %4371 = vmatprep.subr.bf16.mxu0 %v4308
        %4372 = vmatpush1.bf16.msra.mxu0 %v4307
        %4373 = vmatprep.subr.bf16.mxu0 %v4310
        %4374 = vmatpush1.bf16.msra.mxu0 %v4309
        %4375 = vmatprep.subr.bf16.mxu0 %v4312
        %4376 = vmatpush1.bf16.msra.mxu0 %v4311
        %4377 = vmatprep.subr.bf16.mxu0 %v4314
        %4378 = vmatpush1.bf16.msra.mxu0 %v4313
        %4379 = vmatprep.subr.bf16.mxu0 %v4316
        %4380 = vmatpush1.bf16.msra.mxu0 %v4315
        %4381 = vmatprep.subr.bf16.mxu0 %v4318
        %4382 = vmatpush1.bf16.msra.mxu0 %v4317
        %4383 = vmatprep.subr.bf16.mxu0 %v4320
        %4384 = vmatpush1.bf16.msra.mxu0 %v4319
        %4385 = vmatprep.subr.bf16.mxu0 %v4322
        %4386 = vmatpush1.bf16.msra.mxu0 %v4321
        %4387 = vmatprep.subr.bf16.mxu0 %v4324
        %4388 = vmatpush1.bf16.msra.mxu0 %v4323
        %4389 = vmatprep.subr.bf16.mxu0 %v4326
        %4390 = vmatpush1.bf16.msra.mxu0 %v4325
        %4391 = vmatprep.subr.bf16.mxu0 %v4328
        %4392 = vmatpush1.bf16.msra.mxu0 %v4327
        %4393 = vmatprep.subr.bf16.mxu0 %v4330
        %4394 = vmatpush1.bf16.msra.mxu0 %v4329
        %4395 = vmatprep.subr.bf16.mxu0 %v4332
        %4396 = vmatpush1.bf16.msra.mxu0 %v4331
        %4397 = vmatprep.subr.bf16.mxu0 %v4334
        %4398 = vmatpush1.bf16.msra.mxu0 %v4333
        %4399 = vmatprep.mubr.bf16.mxu0 %v4192
        %4400 = vmatmul.mubr.bf16.gmra.mrb[0].mxu0 %v4191
        %v4401 = vpop.f32.mrb[0].mxu0
        %v4402 = vadd.f32 0.0, %v4401
        %v4403 = vpop.f32.mrb[0].mxu0
        %v4404 = vadd.f32 0.0, %v4403
        %v4405 = vpop.f32.mrb[0].mxu0
        %v4406 = vadd.f32 0.0, %v4405
        %v4407 = vpop.f32.mrb[0].mxu0
        %v4408 = vadd.f32 0.0, %v4407
        %4409 = vmatprep.mubr.bf16.mxu0 %v4194
        %4410 = vmatmul.mubr.bf16.gmra.mrb[0].mxu0 %v4193
        %v4411 = vpop.f32.mrb[0].mxu0
        %v4412 = vadd.f32 0.0, %v4411
        %v4413 = vpop.f32.mrb[0].mxu0
        %v4414 = vadd.f32 0.0, %v4413
        %v4415 = vpop.f32.mrb[0].mxu0
        %v4416 = vadd.f32 0.0, %v4415
        %v4417 = vpop.f32.mrb[0].mxu0
        %v4418 = vadd.f32 0.0, %v4417
        %4419 = vmatprep.mubr.bf16.mxu0 %v4196
        %4420 = vmatmul.mubr.bf16.gmra.mrb[0].mxu0 %v4195
        %v4421 = vpop.f32.mrb[0].mxu0
        %v4422 = vadd.f32 0.0, %v4421
        %v4423 = vpop.f32.mrb[0].mxu0
        %v4424 = vadd.f32 0.0, %v4423
        %v4425 = vpop.f32.mrb[0].mxu0
        %v4426 = vadd.f32 0.0, %v4425
        %v4427 = vpop.f32.mrb[0].mxu0
        %v4428 = vadd.f32 0.0, %v4427
        %4429 = vmatprep.mubr.bf16.mxu0 %v4198
        %4430 = vmatmul.mubr.bf16.gmra.mrb[0].mxu0 %v4197
        %v4431 = vpop.f32.mrb[0].mxu0
        %v4432 = vadd.f32 0.0, %v4431
        %v4433 = vpop.f32.mrb[0].mxu0
        %v4434 = vadd.f32 0.0, %v4433
        %v4435 = vpop.f32.mrb[0].mxu0
        %v4436 = vadd.f32 0.0, %v4435
        %v4437 = vpop.f32.mrb[0].mxu0
        %v4438 = vadd.f32 0.0, %v4437
        %4439 = vmatprep.mubr.bf16.mxu0 %v4200
        %4440 = vmatmul.mubr.bf16.gmra.mrb[0].mxu0 %v4199
        %v4441 = vpop.f32.mrb[0].mxu0
        %v4442 = vadd.f32 0.0, %v4441
        %v4443 = vpop.f32.mrb[0].mxu0
        %v4444 = vadd.f32 0.0, %v4443
        %v4445 = vpop.f32.mrb[0].mxu0
        %v4446 = vadd.f32 0.0, %v4445
        %v4447 = vpop.f32.mrb[0].mxu0
        %v4448 = vadd.f32 0.0, %v4447
        %4449 = vmatprep.mubr.bf16.mxu0 %v4202
        %4450 = vmatmul.mubr.bf16.gmra.mrb[0].mxu0 %v4201
        %v4451 = vpop.f32.mrb[0].mxu0
        %v4452 = vadd.f32 0.0, %v4451
        %v4453 = vpop.f32.mrb[0].mxu0
        %v4454 = vadd.f32 0.0, %v4453
        %v4455 = vpop.f32.mrb[0].mxu0
        %v4456 = vadd.f32 0.0, %v4455
        %v4457 = vpop.f32.mrb[0].mxu0
        %v4458 = vadd.f32 0.0, %v4457
        %4459 = vmatprep.mubr.bf16.mxu0 %v4204
        %4460 = vmatmul.mubr.bf16.gmra.mrb[0].mxu0 %v4203
        %v4461 = vpop.f32.mrb[0].mxu0
        %v4462 = vadd.f32 0.0, %v4461
        %v4463 = vpop.f32.mrb[0].mxu0
        %v4464 = vadd.f32 0.0, %v4463
        %v4465 = vpop.f32.mrb[0].mxu0
        %v4466 = vadd.f32 0.0, %v4465
        %v4467 = vpop.f32.mrb[0].mxu0
        %v4468 = vadd.f32 0.0, %v4467
        %4469 = vmatprep.mubr.bf16.mxu0 %v4206
        %4470 = vmatmul.mubr.bf16.gmra.mrb[0].mxu0 %v4205
        %v4471 = vpop.f32.mrb[0].mxu0
        %v4472 = vadd.f32 0.0, %v4471
        %v4473 = vpop.f32.mrb[0].mxu0
        %v4474 = vadd.f32 0.0, %v4473
        %v4475 = vpop.f32.mrb[0].mxu0
        %v4476 = vadd.f32 0.0, %v4475
        %v4477 = vpop.f32.mrb[0].mxu0
        %v4478 = vadd.f32 0.0, %v4477
        %4479 = vdwg.mxu0
        %v4480 = vadd.f32 %v946, %v4402
        %v4481 = vadd.f32 %v947, %v4404
        %v4482 = vadd.f32 %v948, %v4406
        %v4483 = vadd.f32 %v949, %v4408
        %v4484 = vadd.f32 %v950, %v4412
        %v4485 = vadd.f32 %v951, %v4414
        %v4486 = vadd.f32 %v952, %v4416
        %v4487 = vadd.f32 %v953, %v4418
        %v4488 = vadd.f32 %v954, %v4422
        %v4489 = vadd.f32 %v955, %v4424
        %v4490 = vadd.f32 %v956, %v4426
        %v4491 = vadd.f32 %v957, %v4428
        %v4492 = vadd.f32 %v958, %v4432
        %v4493 = vadd.f32 %v959, %v4434
        %v4494 = vadd.f32 %v960, %v4436
        %v4495 = vadd.f32 %v961, %v4438
        %v4496 = vadd.f32 %v962, %v4442
        %v4497 = vadd.f32 %v963, %v4444
        %v4498 = vadd.f32 %v964, %v4446
        %v4499 = vadd.f32 %v965, %v4448
        %v4500 = vadd.f32 %v966, %v4452
        %v4501 = vadd.f32 %v967, %v4454
        %v4502 = vadd.f32 %v968, %v4456
        %v4503 = vadd.f32 %v969, %v4458
        %v4504 = vadd.f32 %v970, %v4462
        %v4505 = vadd.f32 %v971, %v4464
        %v4506 = vadd.f32 %v972, %v4466
        %v4507 = vadd.f32 %v973, %v4468
        %v4508 = vadd.f32 %v974, %v4472
        %v4509 = vadd.f32 %v975, %v4474
        %v4510 = vadd.f32 %v976, %v4476
        %v4511 = vadd.f32 %v977, %v4478
        %v4512 = vld [vmem:[%s7] sm:$0x3]
        %v4513 = vld [vmem:[#allocation15] sm:$0xff]
        %v4514 = vld [vmem:[#allocation15 + $0x8] sm:$0xff]
        %v4515 = vld [vmem:[#allocation15 + $0x10] sm:$0xff]
        %v4516 = vld [vmem:[#allocation15 + $0x18] sm:$0xff]
        %v4517 = vld [vmem:[#allocation15 + $0x20] sm:$0xff]
        %v4518 = vld [vmem:[#allocation15 + $0x28] sm:$0xff]
        %v4519 = vld [vmem:[#allocation15 + $0x30] sm:$0xff]
        %v4520 = vld [vmem:[#allocation15 + $0x38] sm:$0xff]
        %v4521 = vld [vmem:[#allocation15 + $0x40] sm:$0xff]
        %v4522 = vld [vmem:[#allocation15 + $0x48] sm:$0xff]
        %v4523 = vld [vmem:[#allocation15 + $0x50] sm:$0xff]
        %v4524 = vld [vmem:[#allocation15 + $0x58] sm:$0xff]
        %v4525 = vld [vmem:[#allocation15 + $0x60] sm:$0xff]
        %v4526 = vld [vmem:[#allocation15 + $0x68] sm:$0xff]
        %v4527 = vld [vmem:[#allocation15 + $0x70] sm:$0xff]
        %v4528 = vld [vmem:[#allocation15 + $0x78] sm:$0xff]
        %v4529 = vld [vmem:[#allocation15 + $0x80] sm:$0xff]
        %v4530 = vld [vmem:[#allocation15 + $0x88] sm:$0xff]
        %v4531 = vld [vmem:[#allocation15 + $0x90] sm:$0xff]
        %v4532 = vld [vmem:[#allocation15 + $0x98] sm:$0xff]
        %v4533 = vld [vmem:[#allocation15 + $0xa0] sm:$0xff]
        %v4534 = vld [vmem:[#allocation15 + $0xa8] sm:$0xff]
        %v4535 = vld [vmem:[#allocation15 + $0xb0] sm:$0xff]
        %v4536 = vld [vmem:[#allocation15 + $0xb8] sm:$0xff]
        %v4537 = vld [vmem:[#allocation15 + $0xc0] sm:$0xff]
        %v4538 = vld [vmem:[#allocation15 + $0xc8] sm:$0xff]
        %v4539 = vld [vmem:[#allocation15 + $0xd0] sm:$0xff]
        %v4540 = vld [vmem:[#allocation15 + $0xd8] sm:$0xff]
        %v4541 = vld [vmem:[#allocation15 + $0xe0] sm:$0xff]
        %v4542 = vld [vmem:[#allocation15 + $0xe8] sm:$0xff]
        %v4543 = vld [vmem:[#allocation15 + $0xf0] sm:$0xff]
        %v4544 = vld [vmem:[#allocation15 + $0xf8] sm:$0xff]
        %v4545 = vld [vmem:[#allocation15 + $0x100] sm:$0xff]
        %v4546 = vld [vmem:[#allocation15 + $0x108] sm:$0xff]
        %v4547 = vld [vmem:[#allocation15 + $0x110] sm:$0xff]
        %v4548 = vld [vmem:[#allocation15 + $0x118] sm:$0xff]
        %v4549 = vld [vmem:[#allocation15 + $0x120] sm:$0xff]
        %v4550 = vld [vmem:[#allocation15 + $0x128] sm:$0xff]
        %v4551 = vld [vmem:[#allocation15 + $0x130] sm:$0xff]
        %v4552 = vld [vmem:[#allocation15 + $0x138] sm:$0xff]
        %v4553 = vld [vmem:[#allocation15 + $0x140] sm:$0xff]
        %v4554 = vld [vmem:[#allocation15 + $0x148] sm:$0xff]
        %v4555 = vld [vmem:[#allocation15 + $0x150] sm:$0xff]
        %v4556 = vld [vmem:[#allocation15 + $0x158] sm:$0xff]
        %v4557 = vld [vmem:[#allocation15 + $0x160] sm:$0xff]
        %v4558 = vld [vmem:[#allocation15 + $0x168] sm:$0xff]
        %v4559 = vld [vmem:[#allocation15 + $0x170] sm:$0xff]
        %v4560 = vld [vmem:[#allocation15 + $0x178] sm:$0xff]
        %v4561 = vld [vmem:[#allocation15 + $0x180] sm:$0xff]
        %v4562 = vld [vmem:[#allocation15 + $0x188] sm:$0xff]
        %v4563 = vld [vmem:[#allocation15 + $0x190] sm:$0xff]
        %v4564 = vld [vmem:[#allocation15 + $0x198] sm:$0xff]
        %v4565 = vld [vmem:[#allocation15 + $0x1a0] sm:$0xff]
        %v4566 = vld [vmem:[#allocation15 + $0x1a8] sm:$0xff]
        %v4567 = vld [vmem:[#allocation15 + $0x1b0] sm:$0xff]
        %v4568 = vld [vmem:[#allocation15 + $0x1b8] sm:$0xff]
        %v4569 = vld [vmem:[#allocation15 + $0x1c0] sm:$0xff]
        %v4570 = vld [vmem:[#allocation15 + $0x1c8] sm:$0xff]
        %v4571 = vld [vmem:[#allocation15 + $0x1d0] sm:$0xff]
        %v4572 = vld [vmem:[#allocation15 + $0x1d8] sm:$0xff]
        %v4573 = vld [vmem:[#allocation15 + $0x1e0] sm:$0xff]
        %v4574 = vld [vmem:[#allocation15 + $0x1e8] sm:$0xff]
        %v4575 = vld [vmem:[#allocation15 + $0x1f0] sm:$0xff]
        %v4576 = vld [vmem:[#allocation15 + $0x1f8] sm:$0xff]
        %v4577 = vld [vmem:[#allocation16] sm:$0xff]
        %v4578 = vld [vmem:[#allocation16 + $0x8] sm:$0xff]
        %v4579 = vld [vmem:[#allocation16 + $0x10] sm:$0xff]
        %v4580 = vld [vmem:[#allocation16 + $0x18] sm:$0xff]
        %v4581 = vld [vmem:[#allocation16 + $0x20] sm:$0xff]
        %v4582 = vld [vmem:[#allocation16 + $0x28] sm:$0xff]
        %v4583 = vld [vmem:[#allocation16 + $0x30] sm:$0xff]
        %v4584 = vld [vmem:[#allocation16 + $0x38] sm:$0xff]
        %v4585 = vld [vmem:[#allocation16 + $0x40] sm:$0xff]
        %v4586 = vld [vmem:[#allocation16 + $0x48] sm:$0xff]
        %v4587 = vld [vmem:[#allocation16 + $0x50] sm:$0xff]
        %v4588 = vld [vmem:[#allocation16 + $0x58] sm:$0xff]
        %v4589 = vld [vmem:[#allocation16 + $0x60] sm:$0xff]
        %v4590 = vld [vmem:[#allocation16 + $0x68] sm:$0xff]
        %v4591 = vld [vmem:[#allocation16 + $0x70] sm:$0xff]
        %v4592 = vld [vmem:[#allocation16 + $0x78] sm:$0xff]
        %v4593 = vld [vmem:[#allocation16 + $0x80] sm:$0xff]
        %v4594 = vld [vmem:[#allocation16 + $0x88] sm:$0xff]
        %v4595 = vld [vmem:[#allocation16 + $0x90] sm:$0xff]
        %v4596 = vld [vmem:[#allocation16 + $0x98] sm:$0xff]
        %v4597 = vld [vmem:[#allocation16 + $0xa0] sm:$0xff]
        %v4598 = vld [vmem:[#allocation16 + $0xa8] sm:$0xff]
        %v4599 = vld [vmem:[#allocation16 + $0xb0] sm:$0xff]
        %v4600 = vld [vmem:[#allocation16 + $0xb8] sm:$0xff]
        %v4601 = vld [vmem:[#allocation16 + $0xc0] sm:$0xff]
        %v4602 = vld [vmem:[#allocation16 + $0xc8] sm:$0xff]
        %v4603 = vld [vmem:[#allocation16 + $0xd0] sm:$0xff]
        %v4604 = vld [vmem:[#allocation16 + $0xd8] sm:$0xff]
        %v4605 = vld [vmem:[#allocation16 + $0xe0] sm:$0xff]
        %v4606 = vld [vmem:[#allocation16 + $0xe8] sm:$0xff]
        %v4607 = vld [vmem:[#allocation16 + $0xf0] sm:$0xff]
        %v4608 = vld [vmem:[#allocation16 + $0xf8] sm:$0xff]
        %v4609 = vld [vmem:[#allocation16 + $0x100] sm:$0xff]
        %v4610 = vld [vmem:[#allocation16 + $0x108] sm:$0xff]
        %v4611 = vld [vmem:[#allocation16 + $0x110] sm:$0xff]
        %v4612 = vld [vmem:[#allocation16 + $0x118] sm:$0xff]
        %v4613 = vld [vmem:[#allocation16 + $0x120] sm:$0xff]
        %v4614 = vld [vmem:[#allocation16 + $0x128] sm:$0xff]
        %v4615 = vld [vmem:[#allocation16 + $0x130] sm:$0xff]
        %v4616 = vld [vmem:[#allocation16 + $0x138] sm:$0xff]
        %v4617 = vld [vmem:[#allocation16 + $0x140] sm:$0xff]
        %v4618 = vld [vmem:[#allocation16 + $0x148] sm:$0xff]
        %v4619 = vld [vmem:[#allocation16 + $0x150] sm:$0xff]
        %v4620 = vld [vmem:[#allocation16 + $0x158] sm:$0xff]
        %v4621 = vld [vmem:[#allocation16 + $0x160] sm:$0xff]
        %v4622 = vld [vmem:[#allocation16 + $0x168] sm:$0xff]
        %v4623 = vld [vmem:[#allocation16 + $0x170] sm:$0xff]
        %v4624 = vld [vmem:[#allocation16 + $0x178] sm:$0xff]
        %v4625 = vld [vmem:[#allocation16 + $0x180] sm:$0xff]
        %v4626 = vld [vmem:[#allocation16 + $0x188] sm:$0xff]
        %v4627 = vld [vmem:[#allocation16 + $0x190] sm:$0xff]
        %v4628 = vld [vmem:[#allocation16 + $0x198] sm:$0xff]
        %v4629 = vld [vmem:[#allocation16 + $0x1a0] sm:$0xff]
        %v4630 = vld [vmem:[#allocation16 + $0x1a8] sm:$0xff]
        %v4631 = vld [vmem:[#allocation16 + $0x1b0] sm:$0xff]
        %v4632 = vld [vmem:[#allocation16 + $0x1b8] sm:$0xff]
        %v4633 = vld [vmem:[#allocation16 + $0x1c0] sm:$0xff]
        %v4634 = vld [vmem:[#allocation16 + $0x1c8] sm:$0xff]
        %v4635 = vld [vmem:[#allocation16 + $0x1d0] sm:$0xff]
        %v4636 = vld [vmem:[#allocation16 + $0x1d8] sm:$0xff]
        %v4637 = vld [vmem:[#allocation16 + $0x1e0] sm:$0xff]
        %v4638 = vld [vmem:[#allocation16 + $0x1e8] sm:$0xff]
        %v4639 = vld [vmem:[#allocation16 + $0x1f0] sm:$0xff]
        %v4640 = vld [vmem:[#allocation16 + $0x1f8] sm:$0xff]
        %v4641 = vmul.f32 %v4480, %v4480
        %v4642 = vmul.f32 %v4481, %v4481
        %v4643 = vmul.f32 %v4482, %v4482
        %v4644 = vmul.f32 %v4483, %v4483
        %v4645 = vmul.f32 %v4484, %v4484
        %v4646 = vmul.f32 %v4485, %v4485
        %v4647 = vmul.f32 %v4486, %v4486
        %v4648 = vmul.f32 %v4487, %v4487
        %v4649 = vmul.f32 %v4488, %v4488
        %v4650 = vmul.f32 %v4489, %v4489
        %v4651 = vmul.f32 %v4490, %v4490
        %v4652 = vmul.f32 %v4491, %v4491
        %v4653 = vmul.f32 %v4492, %v4492
        %v4654 = vmul.f32 %v4493, %v4493
        %v4655 = vmul.f32 %v4494, %v4494
        %v4656 = vmul.f32 %v4495, %v4495
        %v4657 = vmul.f32 %v4496, %v4496
        %v4658 = vmul.f32 %v4497, %v4497
        %v4659 = vmul.f32 %v4498, %v4498
        %v4660 = vmul.f32 %v4499, %v4499
        %v4661 = vmul.f32 %v4500, %v4500
        %v4662 = vmul.f32 %v4501, %v4501
        %v4663 = vmul.f32 %v4502, %v4502
        %v4664 = vmul.f32 %v4503, %v4503
        %v4665 = vmul.f32 %v4504, %v4504
        %v4666 = vmul.f32 %v4505, %v4505
        %v4667 = vmul.f32 %v4506, %v4506
        %v4668 = vmul.f32 %v4507, %v4507
        %v4669 = vmul.f32 %v4508, %v4508
        %v4670 = vmul.f32 %v4509, %v4509
        %v4671 = vmul.f32 %v4510, %v4510
        %v4672 = vmul.f32 %v4511, %v4511
        %v4673 = vadd.f32 %v4641, %v4642
        %4674 = vadd.xlane.f32.xlu0 %v4673
        %v4675 = vpop.xlane.xlu0 %4674
        %v4676 = vadd.f32 %v4643, %v4644
        %4677 = vadd.xlane.f32.xlu0 %v4676
        %v4678 = vpop.xlane.xlu0 %4677
        %v4679 = vadd.f32 %v4645, %v4646
        %4680 = vadd.xlane.f32.xlu0 %v4679
        %v4681 = vpop.xlane.xlu0 %4680
        %v4682 = vadd.f32 %v4647, %v4648
        %4683 = vadd.xlane.f32.xlu0 %v4682
        %v4684 = vpop.xlane.xlu0 %4683
        %v4685 = vadd.f32 %v4649, %v4650
        %4686 = vadd.xlane.f32.xlu0 %v4685
        %v4687 = vpop.xlane.xlu0 %4686
        %v4688 = vadd.f32 %v4651, %v4652
        %4689 = vadd.xlane.f32.xlu0 %v4688
        %v4690 = vpop.xlane.xlu0 %4689
        %v4691 = vadd.f32 %v4653, %v4654
        %4692 = vadd.xlane.f32.xlu0 %v4691
        %v4693 = vpop.xlane.xlu0 %4692
        %v4694 = vadd.f32 %v4655, %v4656
        %4695 = vadd.xlane.f32.xlu0 %v4694
        %v4696 = vpop.xlane.xlu0 %4695
        %v4697 = vadd.f32 %v4657, %v4658
        %4698 = vadd.xlane.f32.xlu0 %v4697
        %v4699 = vpop.xlane.xlu0 %4698
        %v4700 = vadd.f32 %v4659, %v4660
        %4701 = vadd.xlane.f32.xlu0 %v4700
        %v4702 = vpop.xlane.xlu0 %4701
        %v4703 = vadd.f32 %v4661, %v4662
        %4704 = vadd.xlane.f32.xlu0 %v4703
        %v4705 = vpop.xlane.xlu0 %4704
        %v4706 = vadd.f32 %v4663, %v4664
        %4707 = vadd.xlane.f32.xlu0 %v4706
        %v4708 = vpop.xlane.xlu0 %4707
        %v4709 = vadd.f32 %v4665, %v4666
        %4710 = vadd.xlane.f32.xlu0 %v4709
        %v4711 = vpop.xlane.xlu0 %4710
        %v4712 = vadd.f32 %v4667, %v4668
        %4713 = vadd.xlane.f32.xlu0 %v4712
        %v4714 = vpop.xlane.xlu0 %4713
        %v4715 = vadd.f32 %v4669, %v4670
        %4716 = vadd.xlane.f32.xlu0 %v4715
        %v4717 = vpop.xlane.xlu0 %4716
        %v4718 = vadd.f32 %v4671, %v4672
        %4719 = vadd.xlane.f32.xlu0 %v4718
        %v4720 = vpop.xlane.xlu0 %4719
        %v4721 = vmul.f32 %v4675, %v1187
        %v4722 = vmul.f32 %v4678, %v1187
        %v4723 = vmul.f32 %v4681, %v1187
        %v4724 = vmul.f32 %v4684, %v1187
        %v4725 = vmul.f32 %v4687, %v1187
        %v4726 = vmul.f32 %v4690, %v1187
        %v4727 = vmul.f32 %v4693, %v1187
        %v4728 = vmul.f32 %v4696, %v1187
        %v4729 = vmul.f32 %v4699, %v1187
        %v4730 = vmul.f32 %v4702, %v1187
        %v4731 = vmul.f32 %v4705, %v1187
        %v4732 = vmul.f32 %v4708, %v1187
        %v4733 = vmul.f32 %v4711, %v1187
        %v4734 = vmul.f32 %v4714, %v1187
        %v4735 = vmul.f32 %v4717, %v1187
        %v4736 = vmul.f32 %v4720, %v1187
        %v4737 = vadd.f32 %v4721, 1e-06
        %v4738 = vadd.f32 %v4722, 1e-06
        %v4739 = vadd.f32 %v4723, 1e-06
        %v4740 = vadd.f32 %v4724, 1e-06
        %v4741 = vadd.f32 %v4725, 1e-06
        %v4742 = vadd.f32 %v4726, 1e-06
        %v4743 = vadd.f32 %v4727, 1e-06
        %v4744 = vadd.f32 %v4728, 1e-06
        %v4745 = vadd.f32 %v4729, 1e-06
        %v4746 = vadd.f32 %v4730, 1e-06
        %v4747 = vadd.f32 %v4731, 1e-06
        %v4748 = vadd.f32 %v4732, 1e-06
        %v4749 = vadd.f32 %v4733, 1e-06
        %v4750 = vadd.f32 %v4734, 1e-06
        %v4751 = vadd.f32 %v4735, 1e-06
        %v4752 = vadd.f32 %v4736, 1e-06
        %v4753 = vrsqrt.pop %v4737
        %v4754 = vrsqrt.pop %v4738
        %v4755 = vrsqrt.pop %v4739
        %v4756 = vrsqrt.pop %v4740
        %v4757 = vrsqrt.pop %v4741
        %v4758 = vrsqrt.pop %v4742
        %v4759 = vrsqrt.pop %v4743
        %v4760 = vrsqrt.pop %v4744
        %v4761 = vrsqrt.pop %v4745
        %v4762 = vrsqrt.pop %v4746
        %v4763 = vrsqrt.pop %v4747
        %v4764 = vrsqrt.pop %v4748
        %v4765 = vrsqrt.pop %v4749
        %v4766 = vrsqrt.pop %v4750
        %v4767 = vrsqrt.pop %v4751
        %v4768 = vrsqrt.pop %v4752
        %v4769 = vmul.f32 %v4480, %v4753
        %v4770 = vmul.f32 %v4481, %v4753
        %v4771 = vmul.f32 %v4482, %v4754
        %v4772 = vmul.f32 %v4483, %v4754
        %v4773 = vmul.f32 %v4484, %v4755
        %v4774 = vmul.f32 %v4485, %v4755
        %v4775 = vmul.f32 %v4486, %v4756
        %v4776 = vmul.f32 %v4487, %v4756
        %v4777 = vmul.f32 %v4488, %v4757
        %v4778 = vmul.f32 %v4489, %v4757
        %v4779 = vmul.f32 %v4490, %v4758
        %v4780 = vmul.f32 %v4491, %v4758
        %v4781 = vmul.f32 %v4492, %v4759
        %v4782 = vmul.f32 %v4493, %v4759
        %v4783 = vmul.f32 %v4494, %v4760
        %v4784 = vmul.f32 %v4495, %v4760
        %v4785 = vmul.f32 %v4496, %v4761
        %v4786 = vmul.f32 %v4497, %v4761
        %v4787 = vmul.f32 %v4498, %v4762
        %v4788 = vmul.f32 %v4499, %v4762
        %v4789 = vmul.f32 %v4500, %v4763
        %v4790 = vmul.f32 %v4501, %v4763
        %v4791 = vmul.f32 %v4502, %v4764
        %v4792 = vmul.f32 %v4503, %v4764
        %v4793 = vmul.f32 %v4504, %v4765
        %v4794 = vmul.f32 %v4505, %v4765
        %v4795 = vmul.f32 %v4506, %v4766
        %v4796 = vmul.f32 %v4507, %v4766
        %v4797 = vmul.f32 %v4508, %v4767
        %v4798 = vmul.f32 %v4509, %v4767
        %v4799 = vmul.f32 %v4510, %v4768
        %v4800 = vmul.f32 %v4511, %v4768
        %v4802 = vlaneseq
        %v4803 = vshrl.u32 %v4802, 7
        %v4804 = vsub.s32 0, %v4803
        %v4805 = vrot.slane %v4512, %v4804
        %v4806 = vlaneseq
        %v4807 = vshrl.u32 %v4806, 7
        %v4808 = vsub.s32 1, %v4807
        %v4809 = vrot.slane %v4512, %v4808
        %v4812 = vmul.f32 %v4769, %v4805
        %v4813 = vmul.f32 %v4770, %v4809
        %v4814 = vmul.f32 %v4771, %v4805
        %v4815 = vmul.f32 %v4772, %v4809
        %v4816 = vmul.f32 %v4773, %v4805
        %v4817 = vmul.f32 %v4774, %v4809
        %v4818 = vmul.f32 %v4775, %v4805
        %v4819 = vmul.f32 %v4776, %v4809
        %v4820 = vmul.f32 %v4777, %v4805
        %v4821 = vmul.f32 %v4778, %v4809
        %v4822 = vmul.f32 %v4779, %v4805
        %v4823 = vmul.f32 %v4780, %v4809
        %v4824 = vmul.f32 %v4781, %v4805
        %v4825 = vmul.f32 %v4782, %v4809
        %v4826 = vmul.f32 %v4783, %v4805
        %v4827 = vmul.f32 %v4784, %v4809
        %v4828 = vmul.f32 %v4785, %v4805
        %v4829 = vmul.f32 %v4786, %v4809
        %v4830 = vmul.f32 %v4787, %v4805
        %v4831 = vmul.f32 %v4788, %v4809
        %v4832 = vmul.f32 %v4789, %v4805
        %v4833 = vmul.f32 %v4790, %v4809
        %v4834 = vmul.f32 %v4791, %v4805
        %v4835 = vmul.f32 %v4792, %v4809
        %v4836 = vmul.f32 %v4793, %v4805
        %v4837 = vmul.f32 %v4794, %v4809
        %v4838 = vmul.f32 %v4795, %v4805
        %v4839 = vmul.f32 %v4796, %v4809
        %v4840 = vmul.f32 %v4797, %v4805
        %v4841 = vmul.f32 %v4798, %v4809
        %v4842 = vmul.f32 %v4799, %v4805
        %v4843 = vmul.f32 %v4800, %v4809
        %v4844 = vpack.c.bf16 %v4814, %v4812
        %v4845 = vpack.c.bf16 %v4815, %v4813
        %v4846 = vpack.c.bf16 %v4818, %v4816
        %v4847 = vpack.c.bf16 %v4819, %v4817
        %v4848 = vpack.c.bf16 %v4822, %v4820
        %v4849 = vpack.c.bf16 %v4823, %v4821
        %v4850 = vpack.c.bf16 %v4826, %v4824
        %v4851 = vpack.c.bf16 %v4827, %v4825
        %v4852 = vpack.c.bf16 %v4830, %v4828
        %v4853 = vpack.c.bf16 %v4831, %v4829
        %v4854 = vpack.c.bf16 %v4834, %v4832
        %v4855 = vpack.c.bf16 %v4835, %v4833
        %v4856 = vpack.c.bf16 %v4838, %v4836
        %v4857 = vpack.c.bf16 %v4839, %v4837
        %v4858 = vpack.c.bf16 %v4842, %v4840
        %v4859 = vpack.c.bf16 %v4843, %v4841
        %v4924 = vunpack.c.l.b16 %v4513
        %v4925 = vunpack.c.h.b16 %v4513
        %v4926 = vunpack.c.l.b16 %v4514
        %v4927 = vunpack.c.h.b16 %v4514
        %v4928 = vunpack.c.l.b16 %v4515
        %v4929 = vunpack.c.h.b16 %v4515
        %v4930 = vunpack.c.l.b16 %v4516
        %v4931 = vunpack.c.h.b16 %v4516
        %v4932 = vunpack.c.l.b16 %v4517
        %v4933 = vunpack.c.h.b16 %v4517
        %v4934 = vunpack.c.l.b16 %v4518
        %v4935 = vunpack.c.h.b16 %v4518
        %v4936 = vunpack.c.l.b16 %v4519
        %v4937 = vunpack.c.h.b16 %v4519
        %v4938 = vunpack.c.l.b16 %v4520
        %v4939 = vunpack.c.h.b16 %v4520
        %v4940 = vunpack.c.l.b16 %v4521
        %v4941 = vunpack.c.h.b16 %v4521
        %v4942 = vunpack.c.l.b16 %v4522
        %v4943 = vunpack.c.h.b16 %v4522
        %v4944 = vunpack.c.l.b16 %v4523
        %v4945 = vunpack.c.h.b16 %v4523
        %v4946 = vunpack.c.l.b16 %v4524
        %v4947 = vunpack.c.h.b16 %v4524
        %v4948 = vunpack.c.l.b16 %v4525
        %v4949 = vunpack.c.h.b16 %v4525
        %v4950 = vunpack.c.l.b16 %v4526
        %v4951 = vunpack.c.h.b16 %v4526
        %v4952 = vunpack.c.l.b16 %v4527
        %v4953 = vunpack.c.h.b16 %v4527
        %v4954 = vunpack.c.l.b16 %v4528
        %v4955 = vunpack.c.h.b16 %v4528
        %v4956 = vunpack.c.l.b16 %v4529
        %v4957 = vunpack.c.h.b16 %v4529
        %v4958 = vunpack.c.l.b16 %v4530
        %v4959 = vunpack.c.h.b16 %v4530
        %v4960 = vunpack.c.l.b16 %v4531
        %v4961 = vunpack.c.h.b16 %v4531
        %v4962 = vunpack.c.l.b16 %v4532
        %v4963 = vunpack.c.h.b16 %v4532
        %v4964 = vunpack.c.l.b16 %v4533
        %v4965 = vunpack.c.h.b16 %v4533
        %v4966 = vunpack.c.l.b16 %v4534
        %v4967 = vunpack.c.h.b16 %v4534
        %v4968 = vunpack.c.l.b16 %v4535
        %v4969 = vunpack.c.h.b16 %v4535
        %v4970 = vunpack.c.l.b16 %v4536
        %v4971 = vunpack.c.h.b16 %v4536
        %v4972 = vunpack.c.l.b16 %v4537
        %v4973 = vunpack.c.h.b16 %v4537
        %v4974 = vunpack.c.l.b16 %v4538
        %v4975 = vunpack.c.h.b16 %v4538
        %v4976 = vunpack.c.l.b16 %v4539
        %v4977 = vunpack.c.h.b16 %v4539
        %v4978 = vunpack.c.l.b16 %v4540
        %v4979 = vunpack.c.h.b16 %v4540
        %v4980 = vunpack.c.l.b16 %v4541
        %v4981 = vunpack.c.h.b16 %v4541
        %v4982 = vunpack.c.l.b16 %v4542
        %v4983 = vunpack.c.h.b16 %v4542
        %v4984 = vunpack.c.l.b16 %v4543
        %v4985 = vunpack.c.h.b16 %v4543
        %v4986 = vunpack.c.l.b16 %v4544
        %v4987 = vunpack.c.h.b16 %v4544
        %v4988 = vunpack.c.l.b16 %v4545
        %v4989 = vunpack.c.h.b16 %v4545
        %v4990 = vunpack.c.l.b16 %v4546
        %v4991 = vunpack.c.h.b16 %v4546
        %v4992 = vunpack.c.l.b16 %v4547
        %v4993 = vunpack.c.h.b16 %v4547
        %v4994 = vunpack.c.l.b16 %v4548
        %v4995 = vunpack.c.h.b16 %v4548
        %v4996 = vunpack.c.l.b16 %v4549
        %v4997 = vunpack.c.h.b16 %v4549
        %v4998 = vunpack.c.l.b16 %v4550
        %v4999 = vunpack.c.h.b16 %v4550
        %v5000 = vunpack.c.l.b16 %v4551
        %v5001 = vunpack.c.h.b16 %v4551
        %v5002 = vunpack.c.l.b16 %v4552
        %v5003 = vunpack.c.h.b16 %v4552
        %v5004 = vunpack.c.l.b16 %v4553
        %v5005 = vunpack.c.h.b16 %v4553
        %v5006 = vunpack.c.l.b16 %v4554
        %v5007 = vunpack.c.h.b16 %v4554
        %v5008 = vunpack.c.l.b16 %v4555
        %v5009 = vunpack.c.h.b16 %v4555
        %v5010 = vunpack.c.l.b16 %v4556
        %v5011 = vunpack.c.h.b16 %v4556
        %v5012 = vunpack.c.l.b16 %v4557
        %v5013 = vunpack.c.h.b16 %v4557
        %v5014 = vunpack.c.l.b16 %v4558
        %v5015 = vunpack.c.h.b16 %v4558
        %v5016 = vunpack.c.l.b16 %v4559
        %v5017 = vunpack.c.h.b16 %v4559
        %v5018 = vunpack.c.l.b16 %v4560
        %v5019 = vunpack.c.h.b16 %v4560
        %v5020 = vunpack.c.l.b16 %v4561
        %v5021 = vunpack.c.h.b16 %v4561
        %v5022 = vunpack.c.l.b16 %v4562
        %v5023 = vunpack.c.h.b16 %v4562
        %v5024 = vunpack.c.l.b16 %v4563
        %v5025 = vunpack.c.h.b16 %v4563
        %v5026 = vunpack.c.l.b16 %v4564
        %v5027 = vunpack.c.h.b16 %v4564
        %v5028 = vunpack.c.l.b16 %v4565
        %v5029 = vunpack.c.h.b16 %v4565
        %v5030 = vunpack.c.l.b16 %v4566
        %v5031 = vunpack.c.h.b16 %v4566
        %v5032 = vunpack.c.l.b16 %v4567
        %v5033 = vunpack.c.h.b16 %v4567
        %v5034 = vunpack.c.l.b16 %v4568
        %v5035 = vunpack.c.h.b16 %v4568
        %v5036 = vunpack.c.l.b16 %v4569
        %v5037 = vunpack.c.h.b16 %v4569
        %v5038 = vunpack.c.l.b16 %v4570
        %v5039 = vunpack.c.h.b16 %v4570
        %v5040 = vunpack.c.l.b16 %v4571
        %v5041 = vunpack.c.h.b16 %v4571
        %v5042 = vunpack.c.l.b16 %v4572
        %v5043 = vunpack.c.h.b16 %v4572
        %v5044 = vunpack.c.l.b16 %v4573
        %v5045 = vunpack.c.h.b16 %v4573
        %v5046 = vunpack.c.l.b16 %v4574
        %v5047 = vunpack.c.h.b16 %v4574
        %v5048 = vunpack.c.l.b16 %v4575
        %v5049 = vunpack.c.h.b16 %v4575
        %v5050 = vunpack.c.l.b16 %v4576
        %v5051 = vunpack.c.h.b16 %v4576
        %v5052 = vpack.c.b16 %v4928, %v4924
        %v5053 = vpack.c.b16 %v4929, %v4925
        %v5054 = vpack.c.b16 %v4930, %v4926
        %v5055 = vpack.c.b16 %v4931, %v4927
        %v5056 = vpack.c.b16 %v4936, %v4932
        %v5057 = vpack.c.b16 %v4937, %v4933
        %v5058 = vpack.c.b16 %v4938, %v4934
        %v5059 = vpack.c.b16 %v4939, %v4935
        %v5060 = vpack.c.b16 %v4944, %v4940
        %v5061 = vpack.c.b16 %v4945, %v4941
        %v5062 = vpack.c.b16 %v4946, %v4942
        %v5063 = vpack.c.b16 %v4947, %v4943
        %v5064 = vpack.c.b16 %v4952, %v4948
        %v5065 = vpack.c.b16 %v4953, %v4949
        %v5066 = vpack.c.b16 %v4954, %v4950
        %v5067 = vpack.c.b16 %v4955, %v4951
        %v5068 = vpack.c.b16 %v4960, %v4956
        %v5069 = vpack.c.b16 %v4961, %v4957
        %v5070 = vpack.c.b16 %v4962, %v4958
        %v5071 = vpack.c.b16 %v4963, %v4959
        %v5072 = vpack.c.b16 %v4968, %v4964
        %v5073 = vpack.c.b16 %v4969, %v4965
        %v5074 = vpack.c.b16 %v4970, %v4966
        %v5075 = vpack.c.b16 %v4971, %v4967
        %v5076 = vpack.c.b16 %v4976, %v4972
        %v5077 = vpack.c.b16 %v4977, %v4973
        %v5078 = vpack.c.b16 %v4978, %v4974
        %v5079 = vpack.c.b16 %v4979, %v4975
        %v5080 = vpack.c.b16 %v4984, %v4980
        %v5081 = vpack.c.b16 %v4985, %v4981
        %v5082 = vpack.c.b16 %v4986, %v4982
        %v5083 = vpack.c.b16 %v4987, %v4983
        %v5084 = vpack.c.b16 %v4992, %v4988
        %v5085 = vpack.c.b16 %v4993, %v4989
        %v5086 = vpack.c.b16 %v4994, %v4990
        %v5087 = vpack.c.b16 %v4995, %v4991
        %v5088 = vpack.c.b16 %v5000, %v4996
        %v5089 = vpack.c.b16 %v5001, %v4997
        %v5090 = vpack.c.b16 %v5002, %v4998
        %v5091 = vpack.c.b16 %v5003, %v4999
        %v5092 = vpack.c.b16 %v5008, %v5004
        %v5093 = vpack.c.b16 %v5009, %v5005
        %v5094 = vpack.c.b16 %v5010, %v5006
        %v5095 = vpack.c.b16 %v5011, %v5007
        %v5096 = vpack.c.b16 %v5016, %v5012
        %v5097 = vpack.c.b16 %v5017, %v5013
        %v5098 = vpack.c.b16 %v5018, %v5014
        %v5099 = vpack.c.b16 %v5019, %v5015
        %v5100 = vpack.c.b16 %v5024, %v5020
        %v5101 = vpack.c.b16 %v5025, %v5021
        %v5102 = vpack.c.b16 %v5026, %v5022
        %v5103 = vpack.c.b16 %v5027, %v5023
        %v5104 = vpack.c.b16 %v5032, %v5028
        %v5105 = vpack.c.b16 %v5033, %v5029
        %v5106 = vpack.c.b16 %v5034, %v5030
        %v5107 = vpack.c.b16 %v5035, %v5031
        %v5108 = vpack.c.b16 %v5040, %v5036
        %v5109 = vpack.c.b16 %v5041, %v5037
        %v5110 = vpack.c.b16 %v5042, %v5038
        %v5111 = vpack.c.b16 %v5043, %v5039
        %v5112 = vpack.c.b16 %v5048, %v5044
        %v5113 = vpack.c.b16 %v5049, %v5045
        %v5114 = vpack.c.b16 %v5050, %v5046
        %v5115 = vpack.c.b16 %v5051, %v5047
        %5180 = vmatprep.subr.bf16.mxu0 %v5053
        %5181 = vmatpush1.bf16.msra.mxu0 %v5052
        %5182 = vmatprep.subr.bf16.mxu0 %v5057
        %5183 = vmatpush1.bf16.msra.mxu0 %v5056
        %5184 = vmatprep.subr.bf16.mxu0 %v5061
        %5185 = vmatpush1.bf16.msra.mxu0 %v5060
        %5186 = vmatprep.subr.bf16.mxu0 %v5065
        %5187 = vmatpush1.bf16.msra.mxu0 %v5064
        %5188 = vmatprep.subr.bf16.mxu0 %v5069
        %5189 = vmatpush1.bf16.msra.mxu0 %v5068
        %5190 = vmatprep.subr.bf16.mxu0 %v5073
        %5191 = vmatpush1.bf16.msra.mxu0 %v5072
        %5192 = vmatprep.subr.bf16.mxu0 %v5077
        %5193 = vmatpush1.bf16.msra.mxu0 %v5076
        %5194 = vmatprep.subr.bf16.mxu0 %v5081
        %5195 = vmatpush1.bf16.msra.mxu0 %v5080
        %5196 = vmatprep.subr.bf16.mxu0 %v5085
        %5197 = vmatpush1.bf16.msra.mxu0 %v5084
        %5198 = vmatprep.subr.bf16.mxu0 %v5089
        %5199 = vmatpush1.bf16.msra.mxu0 %v5088
        %5200 = vmatprep.subr.bf16.mxu0 %v5093
        %5201 = vmatpush1.bf16.msra.mxu0 %v5092
        %5202 = vmatprep.subr.bf16.mxu0 %v5097
        %5203 = vmatpush1.bf16.msra.mxu0 %v5096
        %5204 = vmatprep.subr.bf16.mxu0 %v5101
        %5205 = vmatpush1.bf16.msra.mxu0 %v5100
        %5206 = vmatprep.subr.bf16.mxu0 %v5105
        %5207 = vmatpush1.bf16.msra.mxu0 %v5104
        %5208 = vmatprep.subr.bf16.mxu0 %v5109
        %5209 = vmatpush1.bf16.msra.mxu0 %v5108
        %5210 = vmatprep.subr.bf16.mxu0 %v5113
        %5211 = vmatpush1.bf16.msra.mxu0 %v5112
        %5212 = vmatprep.mubr.bf16.mxu0 %v4845
        %5213 = vmatmul.mubr.bf16.gmra.mrb[0].mxu0 %v4844
        %v5214 = vpop.f32.mrb[0].mxu0
        %v5215 = vadd.f32 0.0, %v5214
        %v5216 = vpop.f32.mrb[0].mxu0
        %v5217 = vadd.f32 0.0, %v5216
        %v5218 = vpop.f32.mrb[0].mxu0
        %v5219 = vadd.f32 0.0, %v5218
        %v5220 = vpop.f32.mrb[0].mxu0
        %v5221 = vadd.f32 0.0, %v5220
        %5222 = vmatprep.mubr.bf16.mxu0 %v4847
        %5223 = vmatmul.mubr.bf16.gmra.mrb[0].mxu0 %v4846
        %v5224 = vpop.f32.mrb[0].mxu0
        %v5225 = vadd.f32 0.0, %v5224
        %v5226 = vpop.f32.mrb[0].mxu0
        %v5227 = vadd.f32 0.0, %v5226
        %v5228 = vpop.f32.mrb[0].mxu0
        %v5229 = vadd.f32 0.0, %v5228
        %v5230 = vpop.f32.mrb[0].mxu0
        %v5231 = vadd.f32 0.0, %v5230
        %5232 = vmatprep.mubr.bf16.mxu0 %v4849
        %5233 = vmatmul.mubr.bf16.gmra.mrb[0].mxu0 %v4848
        %v5234 = vpop.f32.mrb[0].mxu0
        %v5235 = vadd.f32 0.0, %v5234
        %v5236 = vpop.f32.mrb[0].mxu0
        %v5237 = vadd.f32 0.0, %v5236
        %v5238 = vpop.f32.mrb[0].mxu0
        %v5239 = vadd.f32 0.0, %v5238
        %v5240 = vpop.f32.mrb[0].mxu0
        %v5241 = vadd.f32 0.0, %v5240
        %5242 = vmatprep.mubr.bf16.mxu0 %v4851
        %5243 = vmatmul.mubr.bf16.gmra.mrb[0].mxu0 %v4850
        %v5244 = vpop.f32.mrb[0].mxu0
        %v5245 = vadd.f32 0.0, %v5244
        %v5246 = vpop.f32.mrb[0].mxu0
        %v5247 = vadd.f32 0.0, %v5246
        %v5248 = vpop.f32.mrb[0].mxu0
        %v5249 = vadd.f32 0.0, %v5248
        %v5250 = vpop.f32.mrb[0].mxu0
        %v5251 = vadd.f32 0.0, %v5250
        %5252 = vmatprep.mubr.bf16.mxu0 %v4853
        %5253 = vmatmul.mubr.bf16.gmra.mrb[0].mxu0 %v4852
        %v5254 = vpop.f32.mrb[0].mxu0
        %v5255 = vadd.f32 0.0, %v5254
        %v5256 = vpop.f32.mrb[0].mxu0
        %v5257 = vadd.f32 0.0, %v5256
        %v5258 = vpop.f32.mrb[0].mxu0
        %v5259 = vadd.f32 0.0, %v5258
        %v5260 = vpop.f32.mrb[0].mxu0
        %v5261 = vadd.f32 0.0, %v5260
        %5262 = vmatprep.mubr.bf16.mxu0 %v4855
        %5263 = vmatmul.mubr.bf16.gmra.mrb[0].mxu0 %v4854
        %v5264 = vpop.f32.mrb[0].mxu0
        %v5265 = vadd.f32 0.0, %v5264
        %v5266 = vpop.f32.mrb[0].mxu0
        %v5267 = vadd.f32 0.0, %v5266
        %v5268 = vpop.f32.mrb[0].mxu0
        %v5269 = vadd.f32 0.0, %v5268
        %v5270 = vpop.f32.mrb[0].mxu0
        %v5271 = vadd.f32 0.0, %v5270
        %5272 = vmatprep.mubr.bf16.mxu0 %v4857
        %5273 = vmatmul.mubr.bf16.gmra.mrb[0].mxu0 %v4856
        %v5274 = vpop.f32.mrb[0].mxu0
        %v5275 = vadd.f32 0.0, %v5274
        %v5276 = vpop.f32.mrb[0].mxu0
        %v5277 = vadd.f32 0.0, %v5276
        %v5278 = vpop.f32.mrb[0].mxu0
        %v5279 = vadd.f32 0.0, %v5278
        %v5280 = vpop.f32.mrb[0].mxu0
        %v5281 = vadd.f32 0.0, %v5280
        %5282 = vmatprep.mubr.bf16.mxu0 %v4859
        %5283 = vmatmul.mubr.bf16.gmra.mrb[0].mxu0 %v4858
        %v5284 = vpop.f32.mrb[0].mxu0
        %v5285 = vadd.f32 0.0, %v5284
        %v5286 = vpop.f32.mrb[0].mxu0
        %v5287 = vadd.f32 0.0, %v5286
        %v5288 = vpop.f32.mrb[0].mxu0
        %v5289 = vadd.f32 0.0, %v5288
        %v5290 = vpop.f32.mrb[0].mxu0
        %v5291 = vadd.f32 0.0, %v5290
        %5292 = vdwg.mxu0
        %5293 = vmatprep.subr.bf16.mxu0 %v5055
        %5294 = vmatpush1.bf16.msra.mxu0 %v5054
        %5295 = vmatprep.subr.bf16.mxu0 %v5059
        %5296 = vmatpush1.bf16.msra.mxu0 %v5058
        %5297 = vmatprep.subr.bf16.mxu0 %v5063
        %5298 = vmatpush1.bf16.msra.mxu0 %v5062
        %5299 = vmatprep.subr.bf16.mxu0 %v5067
        %5300 = vmatpush1.bf16.msra.mxu0 %v5066
        %5301 = vmatprep.subr.bf16.mxu0 %v5071
        %5302 = vmatpush1.bf16.msra.mxu0 %v5070
        %5303 = vmatprep.subr.bf16.mxu0 %v5075
        %5304 = vmatpush1.bf16.msra.mxu0 %v5074
        %5305 = vmatprep.subr.bf16.mxu0 %v5079
        %5306 = vmatpush1.bf16.msra.mxu0 %v5078
        %5307 = vmatprep.subr.bf16.mxu0 %v5083
        %5308 = vmatpush1.bf16.msra.mxu0 %v5082
        %5309 = vmatprep.subr.bf16.mxu0 %v5087
        %5310 = vmatpush1.bf16.msra.mxu0 %v5086
        %5311 = vmatprep.subr.bf16.mxu0 %v5091
        %5312 = vmatpush1.bf16.msra.mxu0 %v5090
        %5313 = vmatprep.subr.bf16.mxu0 %v5095
        %5314 = vmatpush1.bf16.msra.mxu0 %v5094
        %5315 = vmatprep.subr.bf16.mxu0 %v5099
        %5316 = vmatpush1.bf16.msra.mxu0 %v5098
        %5317 = vmatprep.subr.bf16.mxu0 %v5103
        %5318 = vmatpush1.bf16.msra.mxu0 %v5102
        %5319 = vmatprep.subr.bf16.mxu0 %v5107
        %5320 = vmatpush1.bf16.msra.mxu0 %v5106
        %5321 = vmatprep.subr.bf16.mxu0 %v5111
        %5322 = vmatpush1.bf16.msra.mxu0 %v5110
        %5323 = vmatprep.subr.bf16.mxu0 %v5115
        %5324 = vmatpush1.bf16.msra.mxu0 %v5114
        %5325 = vmatprep.mubr.bf16.mxu0 %v4845
        %5326 = vmatmul.mubr.bf16.gmra.mrb[0].mxu0 %v4844
        %v5327 = vpop.f32.mrb[0].mxu0
        %v5328 = vadd.f32 0.0, %v5327
        %v5329 = vpop.f32.mrb[0].mxu0
        %v5330 = vadd.f32 0.0, %v5329
        %v5331 = vpop.f32.mrb[0].mxu0
        %v5332 = vadd.f32 0.0, %v5331
        %v5333 = vpop.f32.mrb[0].mxu0
        %v5334 = vadd.f32 0.0, %v5333
        %5335 = vmatprep.mubr.bf16.mxu0 %v4847
        %5336 = vmatmul.mubr.bf16.gmra.mrb[0].mxu0 %v4846
        %v5337 = vpop.f32.mrb[0].mxu0
        %v5338 = vadd.f32 0.0, %v5337
        %v5339 = vpop.f32.mrb[0].mxu0
        %v5340 = vadd.f32 0.0, %v5339
        %v5341 = vpop.f32.mrb[0].mxu0
        %v5342 = vadd.f32 0.0, %v5341
        %v5343 = vpop.f32.mrb[0].mxu0
        %v5344 = vadd.f32 0.0, %v5343
        %5345 = vmatprep.mubr.bf16.mxu0 %v4849
        %5346 = vmatmul.mubr.bf16.gmra.mrb[0].mxu0 %v4848
        %v5347 = vpop.f32.mrb[0].mxu0
        %v5348 = vadd.f32 0.0, %v5347
        %v5349 = vpop.f32.mrb[0].mxu0
        %v5350 = vadd.f32 0.0, %v5349
        %v5351 = vpop.f32.mrb[0].mxu0
        %v5352 = vadd.f32 0.0, %v5351
        %v5353 = vpop.f32.mrb[0].mxu0
        %v5354 = vadd.f32 0.0, %v5353
        %5355 = vmatprep.mubr.bf16.mxu0 %v4851
        %5356 = vmatmul.mubr.bf16.gmra.mrb[0].mxu0 %v4850
        %v5357 = vpop.f32.mrb[0].mxu0
        %v5358 = vadd.f32 0.0, %v5357
        %v5359 = vpop.f32.mrb[0].mxu0
        %v5360 = vadd.f32 0.0, %v5359
        %v5361 = vpop.f32.mrb[0].mxu0
        %v5362 = vadd.f32 0.0, %v5361
        %v5363 = vpop.f32.mrb[0].mxu0
        %v5364 = vadd.f32 0.0, %v5363
        %5365 = vmatprep.mubr.bf16.mxu0 %v4853
        %5366 = vmatmul.mubr.bf16.gmra.mrb[0].mxu0 %v4852
        %v5367 = vpop.f32.mrb[0].mxu0
        %v5368 = vadd.f32 0.0, %v5367
        %v5369 = vpop.f32.mrb[0].mxu0
        %v5370 = vadd.f32 0.0, %v5369
        %v5371 = vpop.f32.mrb[0].mxu0
        %v5372 = vadd.f32 0.0, %v5371
        %v5373 = vpop.f32.mrb[0].mxu0
        %v5374 = vadd.f32 0.0, %v5373
        %5375 = vmatprep.mubr.bf16.mxu0 %v4855
        %5376 = vmatmul.mubr.bf16.gmra.mrb[0].mxu0 %v4854
        %v5377 = vpop.f32.mrb[0].mxu0
        %v5378 = vadd.f32 0.0, %v5377
        %v5379 = vpop.f32.mrb[0].mxu0
        %v5380 = vadd.f32 0.0, %v5379
        %v5381 = vpop.f32.mrb[0].mxu0
        %v5382 = vadd.f32 0.0, %v5381
        %v5383 = vpop.f32.mrb[0].mxu0
        %v5384 = vadd.f32 0.0, %v5383
        %5385 = vmatprep.mubr.bf16.mxu0 %v4857
        %5386 = vmatmul.mubr.bf16.gmra.mrb[0].mxu0 %v4856
        %v5387 = vpop.f32.mrb[0].mxu0
        %v5388 = vadd.f32 0.0, %v5387
        %v5389 = vpop.f32.mrb[0].mxu0
        %v5390 = vadd.f32 0.0, %v5389
        %v5391 = vpop.f32.mrb[0].mxu0
        %v5392 = vadd.f32 0.0, %v5391
        %v5393 = vpop.f32.mrb[0].mxu0
        %v5394 = vadd.f32 0.0, %v5393
        %5395 = vmatprep.mubr.bf16.mxu0 %v4859
        %5396 = vmatmul.mubr.bf16.gmra.mrb[0].mxu0 %v4858
        %v5397 = vpop.f32.mrb[0].mxu0
        %v5398 = vadd.f32 0.0, %v5397
        %v5399 = vpop.f32.mrb[0].mxu0
        %v5400 = vadd.f32 0.0, %v5399
        %v5401 = vpop.f32.mrb[0].mxu0
        %v5402 = vadd.f32 0.0, %v5401
        %v5403 = vpop.f32.mrb[0].mxu0
        %v5404 = vadd.f32 0.0, %v5403
        %5405 = vdwg.mxu0
        %v5406 = vmax.f32 %v5215, 0.0
        %v5407 = vmax.f32 %v5217, 0.0
        %v5408 = vmax.f32 %v5328, 0.0
        %v5409 = vmax.f32 %v5330, 0.0
        %v5410 = vmax.f32 %v5219, 0.0
        %v5411 = vmax.f32 %v5221, 0.0
        %v5412 = vmax.f32 %v5332, 0.0
        %v5413 = vmax.f32 %v5334, 0.0
        %v5414 = vmax.f32 %v5225, 0.0
        %v5415 = vmax.f32 %v5227, 0.0
        %v5416 = vmax.f32 %v5338, 0.0
        %v5417 = vmax.f32 %v5340, 0.0
        %v5418 = vmax.f32 %v5229, 0.0
        %v5419 = vmax.f32 %v5231, 0.0
        %v5420 = vmax.f32 %v5342, 0.0
        %v5421 = vmax.f32 %v5344, 0.0
        %v5422 = vmax.f32 %v5235, 0.0
        %v5423 = vmax.f32 %v5237, 0.0
        %v5424 = vmax.f32 %v5348, 0.0
        %v5425 = vmax.f32 %v5350, 0.0
        %v5426 = vmax.f32 %v5239, 0.0
        %v5427 = vmax.f32 %v5241, 0.0
        %v5428 = vmax.f32 %v5352, 0.0
        %v5429 = vmax.f32 %v5354, 0.0
        %v5430 = vmax.f32 %v5245, 0.0
        %v5431 = vmax.f32 %v5247, 0.0
        %v5432 = vmax.f32 %v5358, 0.0
        %v5433 = vmax.f32 %v5360, 0.0
        %v5434 = vmax.f32 %v5249, 0.0
        %v5435 = vmax.f32 %v5251, 0.0
        %v5436 = vmax.f32 %v5362, 0.0
        %v5437 = vmax.f32 %v5364, 0.0
        %v5438 = vmax.f32 %v5255, 0.0
        %v5439 = vmax.f32 %v5257, 0.0
        %v5440 = vmax.f32 %v5368, 0.0
        %v5441 = vmax.f32 %v5370, 0.0
        %v5442 = vmax.f32 %v5259, 0.0
        %v5443 = vmax.f32 %v5261, 0.0
        %v5444 = vmax.f32 %v5372, 0.0
        %v5445 = vmax.f32 %v5374, 0.0
        %v5446 = vmax.f32 %v5265, 0.0
        %v5447 = vmax.f32 %v5267, 0.0
        %v5448 = vmax.f32 %v5378, 0.0
        %v5449 = vmax.f32 %v5380, 0.0
        %v5450 = vmax.f32 %v5269, 0.0
        %v5451 = vmax.f32 %v5271, 0.0
        %v5452 = vmax.f32 %v5382, 0.0
        %v5453 = vmax.f32 %v5384, 0.0
        %v5454 = vmax.f32 %v5275, 0.0
        %v5455 = vmax.f32 %v5277, 0.0
        %v5456 = vmax.f32 %v5388, 0.0
        %v5457 = vmax.f32 %v5390, 0.0
        %v5458 = vmax.f32 %v5279, 0.0
        %v5459 = vmax.f32 %v5281, 0.0
        %v5460 = vmax.f32 %v5392, 0.0
        %v5461 = vmax.f32 %v5394, 0.0
        %v5462 = vmax.f32 %v5285, 0.0
        %v5463 = vmax.f32 %v5287, 0.0
        %v5464 = vmax.f32 %v5398, 0.0
        %v5465 = vmax.f32 %v5400, 0.0
        %v5466 = vmax.f32 %v5289, 0.0
        %v5467 = vmax.f32 %v5291, 0.0
        %v5468 = vmax.f32 %v5402, 0.0
        %v5469 = vmax.f32 %v5404, 0.0
        %v5470 = vpack.c.bf16 %v5410, %v5406
        %v5471 = vpack.c.bf16 %v5411, %v5407
        %v5472 = vpack.c.bf16 %v5412, %v5408
        %v5473 = vpack.c.bf16 %v5413, %v5409
        %v5474 = vpack.c.bf16 %v5418, %v5414
        %v5475 = vpack.c.bf16 %v5419, %v5415
        %v5476 = vpack.c.bf16 %v5420, %v5416
        %v5477 = vpack.c.bf16 %v5421, %v5417
        %v5478 = vpack.c.bf16 %v5426, %v5422
        %v5479 = vpack.c.bf16 %v5427, %v5423
        %v5480 = vpack.c.bf16 %v5428, %v5424
        %v5481 = vpack.c.bf16 %v5429, %v5425
        %v5482 = vpack.c.bf16 %v5434, %v5430
        %v5483 = vpack.c.bf16 %v5435, %v5431
        %v5484 = vpack.c.bf16 %v5436, %v5432
        %v5485 = vpack.c.bf16 %v5437, %v5433
        %v5486 = vpack.c.bf16 %v5442, %v5438
        %v5487 = vpack.c.bf16 %v5443, %v5439
        %v5488 = vpack.c.bf16 %v5444, %v5440
        %v5489 = vpack.c.bf16 %v5445, %v5441
        %v5490 = vpack.c.bf16 %v5450, %v5446
        %v5491 = vpack.c.bf16 %v5451, %v5447
        %v5492 = vpack.c.bf16 %v5452, %v5448
        %v5493 = vpack.c.bf16 %v5453, %v5449
        %v5494 = vpack.c.bf16 %v5458, %v5454
        %v5495 = vpack.c.bf16 %v5459, %v5455
        %v5496 = vpack.c.bf16 %v5460, %v5456
        %v5497 = vpack.c.bf16 %v5461, %v5457
        %v5498 = vpack.c.bf16 %v5466, %v5462
        %v5499 = vpack.c.bf16 %v5467, %v5463
        %v5500 = vpack.c.bf16 %v5468, %v5464
        %v5501 = vpack.c.bf16 %v5469, %v5465
        %v5566 = vunpack.c.l.b16 %v4577
        %v5567 = vunpack.c.h.b16 %v4577
        %v5568 = vunpack.c.l.b16 %v4578
        %v5569 = vunpack.c.h.b16 %v4578
        %v5570 = vunpack.c.l.b16 %v4579
        %v5571 = vunpack.c.h.b16 %v4579
        %v5572 = vunpack.c.l.b16 %v4580
        %v5573 = vunpack.c.h.b16 %v4580
        %v5574 = vunpack.c.l.b16 %v4581
        %v5575 = vunpack.c.h.b16 %v4581
        %v5576 = vunpack.c.l.b16 %v4582
        %v5577 = vunpack.c.h.b16 %v4582
        %v5578 = vunpack.c.l.b16 %v4583
        %v5579 = vunpack.c.h.b16 %v4583
        %v5580 = vunpack.c.l.b16 %v4584
        %v5581 = vunpack.c.h.b16 %v4584
        %v5582 = vunpack.c.l.b16 %v4585
        %v5583 = vunpack.c.h.b16 %v4585
        %v5584 = vunpack.c.l.b16 %v4586
        %v5585 = vunpack.c.h.b16 %v4586
        %v5586 = vunpack.c.l.b16 %v4587
        %v5587 = vunpack.c.h.b16 %v4587
        %v5588 = vunpack.c.l.b16 %v4588
        %v5589 = vunpack.c.h.b16 %v4588
        %v5590 = vunpack.c.l.b16 %v4589
        %v5591 = vunpack.c.h.b16 %v4589
        %v5592 = vunpack.c.l.b16 %v4590
        %v5593 = vunpack.c.h.b16 %v4590
        %v5594 = vunpack.c.l.b16 %v4591
        %v5595 = vunpack.c.h.b16 %v4591
        %v5596 = vunpack.c.l.b16 %v4592
        %v5597 = vunpack.c.h.b16 %v4592
        %v5598 = vunpack.c.l.b16 %v4593
        %v5599 = vunpack.c.h.b16 %v4593
        %v5600 = vunpack.c.l.b16 %v4594
        %v5601 = vunpack.c.h.b16 %v4594
        %v5602 = vunpack.c.l.b16 %v4595
        %v5603 = vunpack.c.h.b16 %v4595
        %v5604 = vunpack.c.l.b16 %v4596
        %v5605 = vunpack.c.h.b16 %v4596
        %v5606 = vunpack.c.l.b16 %v4597
        %v5607 = vunpack.c.h.b16 %v4597
        %v5608 = vunpack.c.l.b16 %v4598
        %v5609 = vunpack.c.h.b16 %v4598
        %v5610 = vunpack.c.l.b16 %v4599
        %v5611 = vunpack.c.h.b16 %v4599
        %v5612 = vunpack.c.l.b16 %v4600
        %v5613 = vunpack.c.h.b16 %v4600
        %v5614 = vunpack.c.l.b16 %v4601
        %v5615 = vunpack.c.h.b16 %v4601
        %v5616 = vunpack.c.l.b16 %v4602
        %v5617 = vunpack.c.h.b16 %v4602
        %v5618 = vunpack.c.l.b16 %v4603
        %v5619 = vunpack.c.h.b16 %v4603
        %v5620 = vunpack.c.l.b16 %v4604
        %v5621 = vunpack.c.h.b16 %v4604
        %v5622 = vunpack.c.l.b16 %v4605
        %v5623 = vunpack.c.h.b16 %v4605
        %v5624 = vunpack.c.l.b16 %v4606
        %v5625 = vunpack.c.h.b16 %v4606
        %v5626 = vunpack.c.l.b16 %v4607
        %v5627 = vunpack.c.h.b16 %v4607
        %v5628 = vunpack.c.l.b16 %v4608
        %v5629 = vunpack.c.h.b16 %v4608
        %v5630 = vunpack.c.l.b16 %v4609
        %v5631 = vunpack.c.h.b16 %v4609
        %v5632 = vunpack.c.l.b16 %v4610
        %v5633 = vunpack.c.h.b16 %v4610
        %v5634 = vunpack.c.l.b16 %v4611
        %v5635 = vunpack.c.h.b16 %v4611
        %v5636 = vunpack.c.l.b16 %v4612
        %v5637 = vunpack.c.h.b16 %v4612
        %v5638 = vunpack.c.l.b16 %v4613
        %v5639 = vunpack.c.h.b16 %v4613
        %v5640 = vunpack.c.l.b16 %v4614
        %v5641 = vunpack.c.h.b16 %v4614
        %v5642 = vunpack.c.l.b16 %v4615
        %v5643 = vunpack.c.h.b16 %v4615
        %v5644 = vunpack.c.l.b16 %v4616
        %v5645 = vunpack.c.h.b16 %v4616
        %v5646 = vunpack.c.l.b16 %v4617
        %v5647 = vunpack.c.h.b16 %v4617
        %v5648 = vunpack.c.l.b16 %v4618
        %v5649 = vunpack.c.h.b16 %v4618
        %v5650 = vunpack.c.l.b16 %v4619
        %v5651 = vunpack.c.h.b16 %v4619
        %v5652 = vunpack.c.l.b16 %v4620
        %v5653 = vunpack.c.h.b16 %v4620
        %v5654 = vunpack.c.l.b16 %v4621
        %v5655 = vunpack.c.h.b16 %v4621
        %v5656 = vunpack.c.l.b16 %v4622
        %v5657 = vunpack.c.h.b16 %v4622
        %v5658 = vunpack.c.l.b16 %v4623
        %v5659 = vunpack.c.h.b16 %v4623
        %v5660 = vunpack.c.l.b16 %v4624
        %v5661 = vunpack.c.h.b16 %v4624
        %v5662 = vunpack.c.l.b16 %v4625
        %v5663 = vunpack.c.h.b16 %v4625
        %v5664 = vunpack.c.l.b16 %v4626
        %v5665 = vunpack.c.h.b16 %v4626
        %v5666 = vunpack.c.l.b16 %v4627
        %v5667 = vunpack.c.h.b16 %v4627
        %v5668 = vunpack.c.l.b16 %v4628
        %v5669 = vunpack.c.h.b16 %v4628
        %v5670 = vunpack.c.l.b16 %v4629
        %v5671 = vunpack.c.h.b16 %v4629
        %v5672 = vunpack.c.l.b16 %v4630
        %v5673 = vunpack.c.h.b16 %v4630
        %v5674 = vunpack.c.l.b16 %v4631
        %v5675 = vunpack.c.h.b16 %v4631
        %v5676 = vunpack.c.l.b16 %v4632
        %v5677 = vunpack.c.h.b16 %v4632
        %v5678 = vunpack.c.l.b16 %v4633
        %v5679 = vunpack.c.h.b16 %v4633
        %v5680 = vunpack.c.l.b16 %v4634
        %v5681 = vunpack.c.h.b16 %v4634
        %v5682 = vunpack.c.l.b16 %v4635
        %v5683 = vunpack.c.h.b16 %v4635
        %v5684 = vunpack.c.l.b16 %v4636
        %v5685 = vunpack.c.h.b16 %v4636
        %v5686 = vunpack.c.l.b16 %v4637
        %v5687 = vunpack.c.h.b16 %v4637
        %v5688 = vunpack.c.l.b16 %v4638
        %v5689 = vunpack.c.h.b16 %v4638
        %v5690 = vunpack.c.l.b16 %v4639
        %v5691 = vunpack.c.h.b16 %v4639
        %v5692 = vunpack.c.l.b16 %v4640
        %v5693 = vunpack.c.h.b16 %v4640
        %v5694 = vpack.c.b16 %v5568, %v5566
        %v5695 = vpack.c.b16 %v5569, %v5567
        %v5696 = vpack.c.b16 %v5572, %v5570
        %v5697 = vpack.c.b16 %v5573, %v5571
        %v5698 = vpack.c.b16 %v5576, %v5574
        %v5699 = vpack.c.b16 %v5577, %v5575
        %v5700 = vpack.c.b16 %v5580, %v5578
        %v5701 = vpack.c.b16 %v5581, %v5579
        %v5702 = vpack.c.b16 %v5584, %v5582
        %v5703 = vpack.c.b16 %v5585, %v5583
        %v5704 = vpack.c.b16 %v5588, %v5586
        %v5705 = vpack.c.b16 %v5589, %v5587
        %v5706 = vpack.c.b16 %v5592, %v5590
        %v5707 = vpack.c.b16 %v5593, %v5591
        %v5708 = vpack.c.b16 %v5596, %v5594
        %v5709 = vpack.c.b16 %v5597, %v5595
        %v5710 = vpack.c.b16 %v5600, %v5598
        %v5711 = vpack.c.b16 %v5601, %v5599
        %v5712 = vpack.c.b16 %v5604, %v5602
        %v5713 = vpack.c.b16 %v5605, %v5603
        %v5714 = vpack.c.b16 %v5608, %v5606
        %v5715 = vpack.c.b16 %v5609, %v5607
        %v5716 = vpack.c.b16 %v5612, %v5610
        %v5717 = vpack.c.b16 %v5613, %v5611
        %v5718 = vpack.c.b16 %v5616, %v5614
        %v5719 = vpack.c.b16 %v5617, %v5615
        %v5720 = vpack.c.b16 %v5620, %v5618
        %v5721 = vpack.c.b16 %v5621, %v5619
        %v5722 = vpack.c.b16 %v5624, %v5622
        %v5723 = vpack.c.b16 %v5625, %v5623
        %v5724 = vpack.c.b16 %v5628, %v5626
        %v5725 = vpack.c.b16 %v5629, %v5627
        %v5726 = vpack.c.b16 %v5632, %v5630
        %v5727 = vpack.c.b16 %v5633, %v5631
        %v5728 = vpack.c.b16 %v5636, %v5634
        %v5729 = vpack.c.b16 %v5637, %v5635
        %v5730 = vpack.c.b16 %v5640, %v5638
        %v5731 = vpack.c.b16 %v5641, %v5639
        %v5732 = vpack.c.b16 %v5644, %v5642
        %v5733 = vpack.c.b16 %v5645, %v5643
        %v5734 = vpack.c.b16 %v5648, %v5646
        %v5735 = vpack.c.b16 %v5649, %v5647
        %v5736 = vpack.c.b16 %v5652, %v5650
        %v5737 = vpack.c.b16 %v5653, %v5651
        %v5738 = vpack.c.b16 %v5656, %v5654
        %v5739 = vpack.c.b16 %v5657, %v5655
        %v5740 = vpack.c.b16 %v5660, %v5658
        %v5741 = vpack.c.b16 %v5661, %v5659
        %v5742 = vpack.c.b16 %v5664, %v5662
        %v5743 = vpack.c.b16 %v5665, %v5663
        %v5744 = vpack.c.b16 %v5668, %v5666
        %v5745 = vpack.c.b16 %v5669, %v5667
        %v5746 = vpack.c.b16 %v5672, %v5670
        %v5747 = vpack.c.b16 %v5673, %v5671
        %v5748 = vpack.c.b16 %v5676, %v5674
        %v5749 = vpack.c.b16 %v5677, %v5675
        %v5750 = vpack.c.b16 %v5680, %v5678
        %v5751 = vpack.c.b16 %v5681, %v5679
        %v5752 = vpack.c.b16 %v5684, %v5682
        %v5753 = vpack.c.b16 %v5685, %v5683
        %v5754 = vpack.c.b16 %v5688, %v5686
        %v5755 = vpack.c.b16 %v5689, %v5687
        %v5756 = vpack.c.b16 %v5692, %v5690
        %v5757 = vpack.c.b16 %v5693, %v5691
        %5822 = vmatprep.subr.bf16.mxu0 %v5695
        %5823 = vmatpush1.bf16.msra.mxu0 %v5694
        %5824 = vmatprep.subr.bf16.mxu0 %v5697
        %5825 = vmatpush1.bf16.msra.mxu0 %v5696
        %5826 = vmatprep.subr.bf16.mxu0 %v5699
        %5827 = vmatpush1.bf16.msra.mxu0 %v5698
        %5828 = vmatprep.subr.bf16.mxu0 %v5701
        %5829 = vmatpush1.bf16.msra.mxu0 %v5700
        %5830 = vmatprep.subr.bf16.mxu0 %v5703
        %5831 = vmatpush1.bf16.msra.mxu0 %v5702
        %5832 = vmatprep.subr.bf16.mxu0 %v5705
        %5833 = vmatpush1.bf16.msra.mxu0 %v5704
        %5834 = vmatprep.subr.bf16.mxu0 %v5707
        %5835 = vmatpush1.bf16.msra.mxu0 %v5706
        %5836 = vmatprep.subr.bf16.mxu0 %v5709
        %5837 = vmatpush1.bf16.msra.mxu0 %v5708
        %5838 = vmatprep.subr.bf16.mxu0 %v5711
        %5839 = vmatpush1.bf16.msra.mxu0 %v5710
        %5840 = vmatprep.subr.bf16.mxu0 %v5713
        %5841 = vmatpush1.bf16.msra.mxu0 %v5712
        %5842 = vmatprep.subr.bf16.mxu0 %v5715
        %5843 = vmatpush1.bf16.msra.mxu0 %v5714
        %5844 = vmatprep.subr.bf16.mxu0 %v5717
        %5845 = vmatpush1.bf16.msra.mxu0 %v5716
        %5846 = vmatprep.subr.bf16.mxu0 %v5719
        %5847 = vmatpush1.bf16.msra.mxu0 %v5718
        %5848 = vmatprep.subr.bf16.mxu0 %v5721
        %5849 = vmatpush1.bf16.msra.mxu0 %v5720
        %5850 = vmatprep.subr.bf16.mxu0 %v5723
        %5851 = vmatpush1.bf16.msra.mxu0 %v5722
        %5852 = vmatprep.subr.bf16.mxu0 %v5725
        %5853 = vmatpush1.bf16.msra.mxu0 %v5724
        %5854 = vmatprep.mubr.bf16.mxu0 %v5471
        %5855 = vmatmul.mubr.bf16.gmra.mrb[0].mxu0 %v5470
        %v5856 = vpop.f32.mrb[0].mxu0
        %v5857 = vadd.f32 0.0, %v5856
        %v5858 = vpop.f32.mrb[0].mxu0
        %v5859 = vadd.f32 0.0, %v5858
        %v5860 = vpop.f32.mrb[0].mxu0
        %v5861 = vadd.f32 0.0, %v5860
        %v5862 = vpop.f32.mrb[0].mxu0
        %v5863 = vadd.f32 0.0, %v5862
        %5864 = vmatprep.mubr.bf16.mxu0 %v5475
        %5865 = vmatmul.mubr.bf16.gmra.mrb[0].mxu0 %v5474
        %v5866 = vpop.f32.mrb[0].mxu0
        %v5867 = vadd.f32 0.0, %v5866
        %v5868 = vpop.f32.mrb[0].mxu0
        %v5869 = vadd.f32 0.0, %v5868
        %v5870 = vpop.f32.mrb[0].mxu0
        %v5871 = vadd.f32 0.0, %v5870
        %v5872 = vpop.f32.mrb[0].mxu0
        %v5873 = vadd.f32 0.0, %v5872
        %5874 = vmatprep.mubr.bf16.mxu0 %v5479
        %5875 = vmatmul.mubr.bf16.gmra.mrb[0].mxu0 %v5478
        %v5876 = vpop.f32.mrb[0].mxu0
        %v5877 = vadd.f32 0.0, %v5876
        %v5878 = vpop.f32.mrb[0].mxu0
        %v5879 = vadd.f32 0.0, %v5878
        %v5880 = vpop.f32.mrb[0].mxu0
        %v5881 = vadd.f32 0.0, %v5880
        %v5882 = vpop.f32.mrb[0].mxu0
        %v5883 = vadd.f32 0.0, %v5882
        %5884 = vmatprep.mubr.bf16.mxu0 %v5483
        %5885 = vmatmul.mubr.bf16.gmra.mrb[0].mxu0 %v5482
        %v5886 = vpop.f32.mrb[0].mxu0
        %v5887 = vadd.f32 0.0, %v5886
        %v5888 = vpop.f32.mrb[0].mxu0
        %v5889 = vadd.f32 0.0, %v5888
        %v5890 = vpop.f32.mrb[0].mxu0
        %v5891 = vadd.f32 0.0, %v5890
        %v5892 = vpop.f32.mrb[0].mxu0
        %v5893 = vadd.f32 0.0, %v5892
        %5894 = vmatprep.mubr.bf16.mxu0 %v5487
        %5895 = vmatmul.mubr.bf16.gmra.mrb[0].mxu0 %v5486
        %v5896 = vpop.f32.mrb[0].mxu0
        %v5897 = vadd.f32 0.0, %v5896
        %v5898 = vpop.f32.mrb[0].mxu0
        %v5899 = vadd.f32 0.0, %v5898
        %v5900 = vpop.f32.mrb[0].mxu0
        %v5901 = vadd.f32 0.0, %v5900
        %v5902 = vpop.f32.mrb[0].mxu0
        %v5903 = vadd.f32 0.0, %v5902
        %5904 = vmatprep.mubr.bf16.mxu0 %v5491
        %5905 = vmatmul.mubr.bf16.gmra.mrb[0].mxu0 %v5490
        %v5906 = vpop.f32.mrb[0].mxu0
        %v5907 = vadd.f32 0.0, %v5906
        %v5908 = vpop.f32.mrb[0].mxu0
        %v5909 = vadd.f32 0.0, %v5908
        %v5910 = vpop.f32.mrb[0].mxu0
        %v5911 = vadd.f32 0.0, %v5910
        %v5912 = vpop.f32.mrb[0].mxu0
        %v5913 = vadd.f32 0.0, %v5912
        %5914 = vmatprep.mubr.bf16.mxu0 %v5495
        %5915 = vmatmul.mubr.bf16.gmra.mrb[0].mxu0 %v5494
        %v5916 = vpop.f32.mrb[0].mxu0
        %v5917 = vadd.f32 0.0, %v5916
        %v5918 = vpop.f32.mrb[0].mxu0
        %v5919 = vadd.f32 0.0, %v5918
        %v5920 = vpop.f32.mrb[0].mxu0
        %v5921 = vadd.f32 0.0, %v5920
        %v5922 = vpop.f32.mrb[0].mxu0
        %v5923 = vadd.f32 0.0, %v5922
        %5924 = vmatprep.mubr.bf16.mxu0 %v5499
        %5925 = vmatmul.mubr.bf16.gmra.mrb[0].mxu0 %v5498
        %v5926 = vpop.f32.mrb[0].mxu0
        %v5927 = vadd.f32 0.0, %v5926
        %v5928 = vpop.f32.mrb[0].mxu0
        %v5929 = vadd.f32 0.0, %v5928
        %v5930 = vpop.f32.mrb[0].mxu0
        %v5931 = vadd.f32 0.0, %v5930
        %v5932 = vpop.f32.mrb[0].mxu0
        %v5933 = vadd.f32 0.0, %v5932
        %5934 = vdwg.mxu0
        %5935 = vmatprep.subr.bf16.mxu0 %v5727
        %5936 = vmatpush1.bf16.msra.mxu0 %v5726
        %5937 = vmatprep.subr.bf16.mxu0 %v5729
        %5938 = vmatpush1.bf16.msra.mxu0 %v5728
        %5939 = vmatprep.subr.bf16.mxu0 %v5731
        %5940 = vmatpush1.bf16.msra.mxu0 %v5730
        %5941 = vmatprep.subr.bf16.mxu0 %v5733
        %5942 = vmatpush1.bf16.msra.mxu0 %v5732
        %5943 = vmatprep.subr.bf16.mxu0 %v5735
        %5944 = vmatpush1.bf16.msra.mxu0 %v5734
        %5945 = vmatprep.subr.bf16.mxu0 %v5737
        %5946 = vmatpush1.bf16.msra.mxu0 %v5736
        %5947 = vmatprep.subr.bf16.mxu0 %v5739
        %5948 = vmatpush1.bf16.msra.mxu0 %v5738
        %5949 = vmatprep.subr.bf16.mxu0 %v5741
        %5950 = vmatpush1.bf16.msra.mxu0 %v5740
        %5951 = vmatprep.subr.bf16.mxu0 %v5743
        %5952 = vmatpush1.bf16.msra.mxu0 %v5742
        %5953 = vmatprep.subr.bf16.mxu0 %v5745
        %5954 = vmatpush1.bf16.msra.mxu0 %v5744
        %5955 = vmatprep.subr.bf16.mxu0 %v5747
        %5956 = vmatpush1.bf16.msra.mxu0 %v5746
        %5957 = vmatprep.subr.bf16.mxu0 %v5749
        %5958 = vmatpush1.bf16.msra.mxu0 %v5748
        %5959 = vmatprep.subr.bf16.mxu0 %v5751
        %5960 = vmatpush1.bf16.msra.mxu0 %v5750
        %5961 = vmatprep.subr.bf16.mxu0 %v5753
        %5962 = vmatpush1.bf16.msra.mxu0 %v5752
        %5963 = vmatprep.subr.bf16.mxu0 %v5755
        %5964 = vmatpush1.bf16.msra.mxu0 %v5754
        %5965 = vmatprep.subr.bf16.mxu0 %v5757
        %5966 = vmatpush1.bf16.msra.mxu0 %v5756
        %5967 = vmatprep.mubr.bf16.mxu0 %v5473
        %5968 = vmatmul.mubr.bf16.gmra.mrb[0].mxu0 %v5472
        %v5969 = vpop.f32.mrb[0].mxu0
        %v5970 = vadd.f32 %v5857, %v5969
        %v5971 = vpop.f32.mrb[0].mxu0
        %v5972 = vadd.f32 %v5859, %v5971
        %v5973 = vpop.f32.mrb[0].mxu0
        %v5974 = vadd.f32 %v5861, %v5973
        %v5975 = vpop.f32.mrb[0].mxu0
        %v5976 = vadd.f32 %v5863, %v5975
        %5977 = vmatprep.mubr.bf16.mxu0 %v5477
        %5978 = vmatmul.mubr.bf16.gmra.mrb[0].mxu0 %v5476
        %v5979 = vpop.f32.mrb[0].mxu0
        %v5980 = vadd.f32 %v5867, %v5979
        %v5981 = vpop.f32.mrb[0].mxu0
        %v5982 = vadd.f32 %v5869, %v5981
        %v5983 = vpop.f32.mrb[0].mxu0
        %v5984 = vadd.f32 %v5871, %v5983
        %v5985 = vpop.f32.mrb[0].mxu0
        %v5986 = vadd.f32 %v5873, %v5985
        %5987 = vmatprep.mubr.bf16.mxu0 %v5481
        %5988 = vmatmul.mubr.bf16.gmra.mrb[0].mxu0 %v5480
        %v5989 = vpop.f32.mrb[0].mxu0
        %v5990 = vadd.f32 %v5877, %v5989
        %v5991 = vpop.f32.mrb[0].mxu0
        %v5992 = vadd.f32 %v5879, %v5991
        %v5993 = vpop.f32.mrb[0].mxu0
        %v5994 = vadd.f32 %v5881, %v5993
        %v5995 = vpop.f32.mrb[0].mxu0
        %v5996 = vadd.f32 %v5883, %v5995
        %5997 = vmatprep.mubr.bf16.mxu0 %v5485
        %5998 = vmatmul.mubr.bf16.gmra.mrb[0].mxu0 %v5484
        %v5999 = vpop.f32.mrb[0].mxu0
        %v6000 = vadd.f32 %v5887, %v5999
        %v6001 = vpop.f32.mrb[0].mxu0
        %v6002 = vadd.f32 %v5889, %v6001
        %v6003 = vpop.f32.mrb[0].mxu0
        %v6004 = vadd.f32 %v5891, %v6003
        %v6005 = vpop.f32.mrb[0].mxu0
        %v6006 = vadd.f32 %v5893, %v6005
        %6007 = vmatprep.mubr.bf16.mxu0 %v5489
        %6008 = vmatmul.mubr.bf16.gmra.mrb[0].mxu0 %v5488
        %v6009 = vpop.f32.mrb[0].mxu0
        %v6010 = vadd.f32 %v5897, %v6009
        %v6011 = vpop.f32.mrb[0].mxu0
        %v6012 = vadd.f32 %v5899, %v6011
        %v6013 = vpop.f32.mrb[0].mxu0
        %v6014 = vadd.f32 %v5901, %v6013
        %v6015 = vpop.f32.mrb[0].mxu0
        %v6016 = vadd.f32 %v5903, %v6015
        %6017 = vmatprep.mubr.bf16.mxu0 %v5493
        %6018 = vmatmul.mubr.bf16.gmra.mrb[0].mxu0 %v5492
        %v6019 = vpop.f32.mrb[0].mxu0
        %v6020 = vadd.f32 %v5907, %v6019
        %v6021 = vpop.f32.mrb[0].mxu0
        %v6022 = vadd.f32 %v5909, %v6021
        %v6023 = vpop.f32.mrb[0].mxu0
        %v6024 = vadd.f32 %v5911, %v6023
        %v6025 = vpop.f32.mrb[0].mxu0
        %v6026 = vadd.f32 %v5913, %v6025
        %6027 = vmatprep.mubr.bf16.mxu0 %v5497
        %6028 = vmatmul.mubr.bf16.gmra.mrb[0].mxu0 %v5496
        %v6029 = vpop.f32.mrb[0].mxu0
        %v6030 = vadd.f32 %v5917, %v6029
        %v6031 = vpop.f32.mrb[0].mxu0
        %v6032 = vadd.f32 %v5919, %v6031
        %v6033 = vpop.f32.mrb[0].mxu0
        %v6034 = vadd.f32 %v5921, %v6033
        %v6035 = vpop.f32.mrb[0].mxu0
        %v6036 = vadd.f32 %v5923, %v6035
        %6037 = vmatprep.mubr.bf16.mxu0 %v5501
        %6038 = vmatmul.mubr.bf16.gmra.mrb[0].mxu0 %v5500
        %v6039 = vpop.f32.mrb[0].mxu0
        %v6040 = vadd.f32 %v5927, %v6039
        %v6041 = vpop.f32.mrb[0].mxu0
        %v6042 = vadd.f32 %v5929, %v6041
        %v6043 = vpop.f32.mrb[0].mxu0
        %v6044 = vadd.f32 %v5931, %v6043
        %v6045 = vpop.f32.mrb[0].mxu0
        %v6046 = vadd.f32 %v5933, %v6045
        %6047 = vdwg.mxu0
        %v6048 = vadd.f32 %v4480, %v5970
        %v6049 = vadd.f32 %v4481, %v5972
        %v6050 = vadd.f32 %v4482, %v5974
        %v6051 = vadd.f32 %v4483, %v5976
        %v6052 = vadd.f32 %v4484, %v5980
        %v6053 = vadd.f32 %v4485, %v5982
        %v6054 = vadd.f32 %v4486, %v5984
        %v6055 = vadd.f32 %v4487, %v5986
        %v6056 = vadd.f32 %v4488, %v5990
        %v6057 = vadd.f32 %v4489, %v5992
        %v6058 = vadd.f32 %v4490, %v5994
        %v6059 = vadd.f32 %v4491, %v5996
        %v6060 = vadd.f32 %v4492, %v6000
        %v6061 = vadd.f32 %v4493, %v6002
        %v6062 = vadd.f32 %v4494, %v6004
        %v6063 = vadd.f32 %v4495, %v6006
        %v6064 = vadd.f32 %v4496, %v6010
        %v6065 = vadd.f32 %v4497, %v6012
        %v6066 = vadd.f32 %v4498, %v6014
        %v6067 = vadd.f32 %v4499, %v6016
        %v6068 = vadd.f32 %v4500, %v6020
        %v6069 = vadd.f32 %v4501, %v6022
        %v6070 = vadd.f32 %v4502, %v6024
        %v6071 = vadd.f32 %v4503, %v6026
        %v6072 = vadd.f32 %v4504, %v6030
        %v6073 = vadd.f32 %v4505, %v6032
        %v6074 = vadd.f32 %v4506, %v6034
        %v6075 = vadd.f32 %v4507, %v6036
        %v6076 = vadd.f32 %v4508, %v6040
        %v6077 = vadd.f32 %v4509, %v6042
        %v6078 = vadd.f32 %v4510, %v6044
        %v6079 = vadd.f32 %v4511, %v6046
        %v6080 = vld [vmem:[#allocation18] sm:$0xf]
        %v6081 = vld [vmem:[#allocation18 + $0x4] sm:$0xf]
        %v6082 = vld [vmem:[#allocation18 + $0x8] sm:$0xf]
        %v6083 = vld [vmem:[#allocation18 + $0xc] sm:$0xf]
        %v6084 = vld [vmem:[#allocation18 + $0x10] sm:$0xf]
        %v6085 = vld [vmem:[#allocation18 + $0x14] sm:$0xf]
        %v6086 = vld [vmem:[#allocation18 + $0x18] sm:$0xf]
        %v6087 = vld [vmem:[#allocation18 + $0x1c] sm:$0xf]
        %v6088 = vld [vmem:[#allocation18 + $0x20] sm:$0xf]
        %v6089 = vld [vmem:[#allocation18 + $0x24] sm:$0xf]
        %v6090 = vld [vmem:[#allocation18 + $0x28] sm:$0xf]
        %v6091 = vld [vmem:[#allocation18 + $0x2c] sm:$0xf]
        %v6092 = vld [vmem:[#allocation18 + $0x30] sm:$0xf]
        %v6093 = vld [vmem:[#allocation18 + $0x34] sm:$0xf]
        %v6094 = vld [vmem:[#allocation18 + $0x38] sm:$0xf]
        %v6095 = vld [vmem:[#allocation18 + $0x3c] sm:$0xf]
        %v6096 = vld [vmem:[#allocation18 + $0x40] sm:$0xf]
        %v6097 = vld [vmem:[#allocation18 + $0x44] sm:$0xf]
        %v6098 = vld [vmem:[#allocation18 + $0x48] sm:$0xf]
        %v6099 = vld [vmem:[#allocation18 + $0x4c] sm:$0xf]
        %v6100 = vld [vmem:[#allocation18 + $0x50] sm:$0xf]
        %v6101 = vld [vmem:[#allocation18 + $0x54] sm:$0xf]
        %v6102 = vld [vmem:[#allocation18 + $0x58] sm:$0xf]
        %v6103 = vld [vmem:[#allocation18 + $0x5c] sm:$0xf]
        %v6104 = vld [vmem:[#allocation18 + $0x60] sm:$0xf]
        %v6105 = vld [vmem:[#allocation18 + $0x64] sm:$0xf]
        %v6106 = vld [vmem:[#allocation18 + $0x68] sm:$0xf]
        %v6107 = vld [vmem:[#allocation18 + $0x6c] sm:$0xf]
        %v6108 = vld [vmem:[#allocation18 + $0x70] sm:$0xf]
        %v6109 = vld [vmem:[#allocation18 + $0x74] sm:$0xf]
        %v6110 = vld [vmem:[#allocation18 + $0x78] sm:$0xf]
        %v6111 = vld [vmem:[#allocation18 + $0x7c] sm:$0xf]
        %v6112 = vpack.c.bf16 %v948, %v946
        %v6113 = vpack.c.bf16 %v949, %v947
        %v6114 = vpack.c.bf16 %v952, %v950
        %v6115 = vpack.c.bf16 %v953, %v951
        %v6116 = vpack.c.bf16 %v956, %v954
        %v6117 = vpack.c.bf16 %v957, %v955
        %v6118 = vpack.c.bf16 %v960, %v958
        %v6119 = vpack.c.bf16 %v961, %v959
        %v6120 = vpack.c.bf16 %v964, %v962
        %v6121 = vpack.c.bf16 %v965, %v963
        %v6122 = vpack.c.bf16 %v968, %v966
        %v6123 = vpack.c.bf16 %v969, %v967
        %v6124 = vpack.c.bf16 %v972, %v970
        %v6125 = vpack.c.bf16 %v973, %v971
        %v6126 = vpack.c.bf16 %v976, %v974
        %v6127 = vpack.c.bf16 %v977, %v975
        %v6128 = vld [vmem:[#allocation19] sm:$0xf]
        %v6129 = vld [vmem:[#allocation19 + $0x4] sm:$0xf]
        %v6130 = vld [vmem:[#allocation19 + $0x8] sm:$0xf]
        %v6131 = vld [vmem:[#allocation19 + $0xc] sm:$0xf]
        %v6132 = vld [vmem:[#allocation19 + $0x10] sm:$0xf]
        %v6133 = vld [vmem:[#allocation19 + $0x14] sm:$0xf]
        %v6134 = vld [vmem:[#allocation19 + $0x18] sm:$0xf]
        %v6135 = vld [vmem:[#allocation19 + $0x1c] sm:$0xf]
        %v6136 = vld [vmem:[#allocation19 + $0x20] sm:$0xf]
        %v6137 = vld [vmem:[#allocation19 + $0x24] sm:$0xf]
        %v6138 = vld [vmem:[#allocation19 + $0x28] sm:$0xf]
        %v6139 = vld [vmem:[#allocation19 + $0x2c] sm:$0xf]
        %v6140 = vld [vmem:[#allocation19 + $0x30] sm:$0xf]
        %v6141 = vld [vmem:[#allocation19 + $0x34] sm:$0xf]
        %v6142 = vld [vmem:[#allocation19 + $0x38] sm:$0xf]
        %v6143 = vld [vmem:[#allocation19 + $0x3c] sm:$0xf]
        %v6144 = vld [vmem:[#allocation19 + $0x40] sm:$0xf]
        %v6145 = vld [vmem:[#allocation19 + $0x44] sm:$0xf]
        %v6146 = vld [vmem:[#allocation19 + $0x48] sm:$0xf]
        %v6147 = vld [vmem:[#allocation19 + $0x4c] sm:$0xf]
        %v6148 = vld [vmem:[#allocation19 + $0x50] sm:$0xf]
        %v6149 = vld [vmem:[#allocation19 + $0x54] sm:$0xf]
        %v6150 = vld [vmem:[#allocation19 + $0x58] sm:$0xf]
        %v6151 = vld [vmem:[#allocation19 + $0x5c] sm:$0xf]
        %v6152 = vld [vmem:[#allocation19 + $0x60] sm:$0xf]
        %v6153 = vld [vmem:[#allocation19 + $0x64] sm:$0xf]
        %v6154 = vld [vmem:[#allocation19 + $0x68] sm:$0xf]
        %v6155 = vld [vmem:[#allocation19 + $0x6c] sm:$0xf]
        %v6156 = vld [vmem:[#allocation19 + $0x70] sm:$0xf]
        %v6157 = vld [vmem:[#allocation19 + $0x74] sm:$0xf]
        %v6158 = vld [vmem:[#allocation19 + $0x78] sm:$0xf]
        %v6159 = vld [vmem:[#allocation19 + $0x7c] sm:$0xf]
        %v6160 = vpack.c.bf16 %v6050, %v6048
        %v6161 = vpack.c.bf16 %v6051, %v6049
        %v6162 = vpack.c.bf16 %v6054, %v6052
        %v6163 = vpack.c.bf16 %v6055, %v6053
        %v6164 = vpack.c.bf16 %v6058, %v6056
        %v6165 = vpack.c.bf16 %v6059, %v6057
        %v6166 = vpack.c.bf16 %v6062, %v6060
        %v6167 = vpack.c.bf16 %v6063, %v6061
        %v6168 = vpack.c.bf16 %v6066, %v6064
        %v6169 = vpack.c.bf16 %v6067, %v6065
        %v6170 = vpack.c.bf16 %v6070, %v6068
        %v6171 = vpack.c.bf16 %v6071, %v6069
        %v6172 = vpack.c.bf16 %v6074, %v6072
        %v6173 = vpack.c.bf16 %v6075, %v6073
        %v6174 = vpack.c.bf16 %v6078, %v6076
        %v6175 = vpack.c.bf16 %v6079, %v6077
        %v6208 = vunpack.c.l.b16 %v6128
        %v6209 = vunpack.c.l.b16 %v6129
        %v6210 = vunpack.c.l.b16 %v6130
        %v6211 = vunpack.c.l.b16 %v6131
        %v6212 = vunpack.c.l.b16 %v6132
        %v6213 = vunpack.c.l.b16 %v6133
        %v6214 = vunpack.c.l.b16 %v6134
        %v6215 = vunpack.c.l.b16 %v6135
        %v6216 = vunpack.c.l.b16 %v6136
        %v6217 = vunpack.c.l.b16 %v6137
        %v6218 = vunpack.c.l.b16 %v6138
        %v6219 = vunpack.c.l.b16 %v6139
        %v6220 = vunpack.c.l.b16 %v6140
        %v6221 = vunpack.c.l.b16 %v6141
        %v6222 = vunpack.c.l.b16 %v6142
        %v6223 = vunpack.c.l.b16 %v6143
        %v6224 = vunpack.c.l.b16 %v6144
        %v6225 = vunpack.c.l.b16 %v6145
        %v6226 = vunpack.c.l.b16 %v6146
        %v6227 = vunpack.c.l.b16 %v6147
        %v6228 = vunpack.c.l.b16 %v6148
        %v6229 = vunpack.c.l.b16 %v6149
        %v6230 = vunpack.c.l.b16 %v6150
        %v6231 = vunpack.c.l.b16 %v6151
        %v6232 = vunpack.c.l.b16 %v6152
        %v6233 = vunpack.c.l.b16 %v6153
        %v6234 = vunpack.c.l.b16 %v6154
        %v6235 = vunpack.c.l.b16 %v6155
        %v6236 = vunpack.c.l.b16 %v6156
        %v6237 = vunpack.c.l.b16 %v6157
        %v6238 = vunpack.c.l.b16 %v6158
        %v6239 = vunpack.c.l.b16 %v6159
        %v6240 = vpack.c.b16 %v6209, %v6208
        %v6241 = vpack.c.b16 %v6211, %v6210
        %v6242 = vpack.c.b16 %v6213, %v6212
        %v6243 = vpack.c.b16 %v6215, %v6214
        %v6244 = vpack.c.b16 %v6217, %v6216
        %v6245 = vpack.c.b16 %v6219, %v6218
        %v6246 = vpack.c.b16 %v6221, %v6220
        %v6247 = vpack.c.b16 %v6223, %v6222
        %v6248 = vpack.c.b16 %v6225, %v6224
        %v6249 = vpack.c.b16 %v6227, %v6226
        %v6250 = vpack.c.b16 %v6229, %v6228
        %v6251 = vpack.c.b16 %v6231, %v6230
        %v6252 = vpack.c.b16 %v6233, %v6232
        %v6253 = vpack.c.b16 %v6235, %v6234
        %v6254 = vpack.c.b16 %v6237, %v6236
        %v6255 = vpack.c.b16 %v6239, %v6238
        %6272 = vmatprep.subr.bf16.mxu0 0
        %6273 = vmatpush1.bf16.msra.mxu0 %v6240
        %6274 = vmatprep.subr.bf16.mxu0 0
        %6275 = vmatpush1.bf16.msra.mxu0 %v6241
        %6276 = vmatprep.subr.bf16.mxu0 0
        %6277 = vmatpush1.bf16.msra.mxu0 %v6242
        %6278 = vmatprep.subr.bf16.mxu0 0
        %6279 = vmatpush1.bf16.msra.mxu0 %v6243
        %6280 = vmatprep.subr.bf16.mxu0 0
        %6281 = vmatpush1.bf16.msra.mxu0 %v6244
        %6282 = vmatprep.subr.bf16.mxu0 0
        %6283 = vmatpush1.bf16.msra.mxu0 %v6245
        %6284 = vmatprep.subr.bf16.mxu0 0
        %6285 = vmatpush1.bf16.msra.mxu0 %v6246
        %6286 = vmatprep.subr.bf16.mxu0 0
        %6287 = vmatpush1.bf16.msra.mxu0 %v6247
        %6288 = vmatprep.subr.bf16.mxu0 0
        %6289 = vmatpush1.bf16.msra.mxu0 %v6248
        %6290 = vmatprep.subr.bf16.mxu0 0
        %6291 = vmatpush1.bf16.msra.mxu0 %v6249
        %6292 = vmatprep.subr.bf16.mxu0 0
        %6293 = vmatpush1.bf16.msra.mxu0 %v6250
        %6294 = vmatprep.subr.bf16.mxu0 0
        %6295 = vmatpush1.bf16.msra.mxu0 %v6251
        %6296 = vmatprep.subr.bf16.mxu0 0
        %6297 = vmatpush1.bf16.msra.mxu0 %v6252
        %6298 = vmatprep.subr.bf16.mxu0 0
        %6299 = vmatpush1.bf16.msra.mxu0 %v6253
        %6300 = vmatprep.subr.bf16.mxu0 0
        %6301 = vmatpush1.bf16.msra.mxu0 %v6254
        %6302 = vmatprep.subr.bf16.mxu0 0
        %6303 = vmatpush1.bf16.msra.mxu0 %v6255
        %6304 = vmatprep.mubr.bf16.mxu0 %v6161
        %6305 = vmatmul.mubr.bf16.gmra.mrb[0].mxu0 %v6160
        %v6306 = vpop.f32.mrb[0].mxu0
        %v6307 = vadd.f32 0.0, %v6306
        %v6308 = vpop.f32.mrb[0].mxu0
        %v6309 = vpop.f32.mrb[0].mxu0
        %v6310 = vadd.f32 0.0, %v6309
        %v6311 = vpop.f32.mrb[0].mxu0
        %6312 = vmatprep.mubr.bf16.mxu0 %v6163
        %6313 = vmatmul.mubr.bf16.gmra.mrb[0].mxu0 %v6162
        %v6314 = vpop.f32.mrb[0].mxu0
        %v6315 = vadd.f32 0.0, %v6314
        %v6316 = vpop.f32.mrb[0].mxu0
        %v6317 = vpop.f32.mrb[0].mxu0
        %v6318 = vadd.f32 0.0, %v6317
        %v6319 = vpop.f32.mrb[0].mxu0
        %6320 = vmatprep.mubr.bf16.mxu0 %v6165
        %6321 = vmatmul.mubr.bf16.gmra.mrb[0].mxu0 %v6164
        %v6322 = vpop.f32.mrb[0].mxu0
        %v6323 = vadd.f32 0.0, %v6322
        %v6324 = vpop.f32.mrb[0].mxu0
        %v6325 = vpop.f32.mrb[0].mxu0
        %v6326 = vadd.f32 0.0, %v6325
        %v6327 = vpop.f32.mrb[0].mxu0
        %6328 = vmatprep.mubr.bf16.mxu0 %v6167
        %6329 = vmatmul.mubr.bf16.gmra.mrb[0].mxu0 %v6166
        %v6330 = vpop.f32.mrb[0].mxu0
        %v6331 = vadd.f32 0.0, %v6330
        %v6332 = vpop.f32.mrb[0].mxu0
        %v6333 = vpop.f32.mrb[0].mxu0
        %v6334 = vadd.f32 0.0, %v6333
        %v6335 = vpop.f32.mrb[0].mxu0
        %6336 = vmatprep.mubr.bf16.mxu0 %v6169
        %6337 = vmatmul.mubr.bf16.gmra.mrb[0].mxu0 %v6168
        %v6338 = vpop.f32.mrb[0].mxu0
        %v6339 = vadd.f32 0.0, %v6338
        %v6340 = vpop.f32.mrb[0].mxu0
        %v6341 = vpop.f32.mrb[0].mxu0
        %v6342 = vadd.f32 0.0, %v6341
        %v6343 = vpop.f32.mrb[0].mxu0
        %6344 = vmatprep.mubr.bf16.mxu0 %v6171
        %6345 = vmatmul.mubr.bf16.gmra.mrb[0].mxu0 %v6170
        %v6346 = vpop.f32.mrb[0].mxu0
        %v6347 = vadd.f32 0.0, %v6346
        %v6348 = vpop.f32.mrb[0].mxu0
        %v6349 = vpop.f32.mrb[0].mxu0
        %v6350 = vadd.f32 0.0, %v6349
        %v6351 = vpop.f32.mrb[0].mxu0
        %6352 = vmatprep.mubr.bf16.mxu0 %v6173
        %6353 = vmatmul.mubr.bf16.gmra.mrb[0].mxu0 %v6172
        %v6354 = vpop.f32.mrb[0].mxu0
        %v6355 = vadd.f32 0.0, %v6354
        %v6356 = vpop.f32.mrb[0].mxu0
        %v6357 = vpop.f32.mrb[0].mxu0
        %v6358 = vadd.f32 0.0, %v6357
        %v6359 = vpop.f32.mrb[0].mxu0
        %6360 = vmatprep.mubr.bf16.mxu0 %v6175
        %6361 = vmatmul.mubr.bf16.gmra.mrb[0].mxu0 %v6174
        %v6362 = vpop.f32.mrb[0].mxu0
        %v6363 = vadd.f32 0.0, %v6362
        %v6364 = vpop.f32.mrb[0].mxu0
        %v6365 = vpop.f32.mrb[0].mxu0
        %v6366 = vadd.f32 0.0, %v6365
        %v6367 = vpop.f32.mrb[0].mxu0
        %6368 = vdwg.mxu0
        %v6401 = vunpack.c.l.b16 %v6080
        %v6402 = vunpack.c.l.b16 %v6081
        %v6403 = vunpack.c.l.b16 %v6082
        %v6404 = vunpack.c.l.b16 %v6083
        %v6405 = vunpack.c.l.b16 %v6084
        %v6406 = vunpack.c.l.b16 %v6085
        %v6407 = vunpack.c.l.b16 %v6086
        %v6408 = vunpack.c.l.b16 %v6087
        %v6409 = vunpack.c.l.b16 %v6088
        %v6410 = vunpack.c.l.b16 %v6089
        %v6411 = vunpack.c.l.b16 %v6090
        %v6412 = vunpack.c.l.b16 %v6091
        %v6413 = vunpack.c.l.b16 %v6092
        %v6414 = vunpack.c.l.b16 %v6093
        %v6415 = vunpack.c.l.b16 %v6094
        %v6416 = vunpack.c.l.b16 %v6095
        %v6417 = vunpack.c.l.b16 %v6096
        %v6418 = vunpack.c.l.b16 %v6097
        %v6419 = vunpack.c.l.b16 %v6098
        %v6420 = vunpack.c.l.b16 %v6099
        %v6421 = vunpack.c.l.b16 %v6100
        %v6422 = vunpack.c.l.b16 %v6101
        %v6423 = vunpack.c.l.b16 %v6102
        %v6424 = vunpack.c.l.b16 %v6103
        %v6425 = vunpack.c.l.b16 %v6104
        %v6426 = vunpack.c.l.b16 %v6105
        %v6427 = vunpack.c.l.b16 %v6106
        %v6428 = vunpack.c.l.b16 %v6107
        %v6429 = vunpack.c.l.b16 %v6108
        %v6430 = vunpack.c.l.b16 %v6109
        %v6431 = vunpack.c.l.b16 %v6110
        %v6432 = vunpack.c.l.b16 %v6111
        %v6433 = vpack.c.b16 %v6402, %v6401
        %v6434 = vpack.c.b16 %v6404, %v6403
        %v6435 = vpack.c.b16 %v6406, %v6405
        %v6436 = vpack.c.b16 %v6408, %v6407
        %v6437 = vpack.c.b16 %v6410, %v6409
        %v6438 = vpack.c.b16 %v6412, %v6411
        %v6439 = vpack.c.b16 %v6414, %v6413
        %v6440 = vpack.c.b16 %v6416, %v6415
        %v6441 = vpack.c.b16 %v6418, %v6417
        %v6442 = vpack.c.b16 %v6420, %v6419
        %v6443 = vpack.c.b16 %v6422, %v6421
        %v6444 = vpack.c.b16 %v6424, %v6423
        %v6445 = vpack.c.b16 %v6426, %v6425
        %v6446 = vpack.c.b16 %v6428, %v6427
        %v6447 = vpack.c.b16 %v6430, %v6429
        %v6448 = vpack.c.b16 %v6432, %v6431
        %6465 = vmatprep.subr.bf16.mxu0 0
        %6466 = vmatpush1.bf16.msra.mxu0 %v6433
        %6467 = vmatprep.subr.bf16.mxu0 0
        %6468 = vmatpush1.bf16.msra.mxu0 %v6434
        %6469 = vmatprep.subr.bf16.mxu0 0
        %6470 = vmatpush1.bf16.msra.mxu0 %v6435
        %6471 = vmatprep.subr.bf16.mxu0 0
        %6472 = vmatpush1.bf16.msra.mxu0 %v6436
        %6473 = vmatprep.subr.bf16.mxu0 0
        %6474 = vmatpush1.bf16.msra.mxu0 %v6437
        %6475 = vmatprep.subr.bf16.mxu0 0
        %6476 = vmatpush1.bf16.msra.mxu0 %v6438
        %6477 = vmatprep.subr.bf16.mxu0 0
        %6478 = vmatpush1.bf16.msra.mxu0 %v6439
        %6479 = vmatprep.subr.bf16.mxu0 0
        %6480 = vmatpush1.bf16.msra.mxu0 %v6440
        %6481 = vmatprep.subr.bf16.mxu0 0
        %6482 = vmatpush1.bf16.msra.mxu0 %v6441
        %6483 = vmatprep.subr.bf16.mxu0 0
        %6484 = vmatpush1.bf16.msra.mxu0 %v6442
        %6485 = vmatprep.subr.bf16.mxu0 0
        %6486 = vmatpush1.bf16.msra.mxu0 %v6443
        %6487 = vmatprep.subr.bf16.mxu0 0
        %6488 = vmatpush1.bf16.msra.mxu0 %v6444
        %6489 = vmatprep.subr.bf16.mxu0 0
        %6490 = vmatpush1.bf16.msra.mxu0 %v6445
        %6491 = vmatprep.subr.bf16.mxu0 0
        %6492 = vmatpush1.bf16.msra.mxu0 %v6446
        %6493 = vmatprep.subr.bf16.mxu0 0
        %6494 = vmatpush1.bf16.msra.mxu0 %v6447
        %6495 = vmatprep.subr.bf16.mxu0 0
        %6496 = vmatpush1.bf16.msra.mxu0 %v6448
        %6497 = vmatprep.mubr.bf16.mxu0 %v6113
        %6498 = vmatmul.mubr.bf16.gmra.mrb[0].mxu0 %v6112
        %v6499 = vpop.f32.mrb[0].mxu0
        %v6500 = vadd.f32 %v6307, %v6499
        %v6501 = vpop.f32.mrb[0].mxu0
        %v6502 = vpop.f32.mrb[0].mxu0
        %v6503 = vadd.f32 %v6310, %v6502
        %v6504 = vpop.f32.mrb[0].mxu0
        %6505 = vmatprep.mubr.bf16.mxu0 %v6115
        %6506 = vmatmul.mubr.bf16.gmra.mrb[0].mxu0 %v6114
        %v6507 = vpop.f32.mrb[0].mxu0
        %v6508 = vadd.f32 %v6315, %v6507
        %v6509 = vpop.f32.mrb[0].mxu0
        %v6510 = vpop.f32.mrb[0].mxu0
        %v6511 = vadd.f32 %v6318, %v6510
        %v6512 = vpop.f32.mrb[0].mxu0
        %6513 = vmatprep.mubr.bf16.mxu0 %v6117
        %6514 = vmatmul.mubr.bf16.gmra.mrb[0].mxu0 %v6116
        %v6515 = vpop.f32.mrb[0].mxu0
        %v6516 = vadd.f32 %v6323, %v6515
        %v6517 = vpop.f32.mrb[0].mxu0
        %v6518 = vpop.f32.mrb[0].mxu0
        %v6519 = vadd.f32 %v6326, %v6518
        %v6520 = vpop.f32.mrb[0].mxu0
        %6521 = vmatprep.mubr.bf16.mxu0 %v6119
        %6522 = vmatmul.mubr.bf16.gmra.mrb[0].mxu0 %v6118
        %v6523 = vpop.f32.mrb[0].mxu0
        %v6524 = vadd.f32 %v6331, %v6523
        %v6525 = vpop.f32.mrb[0].mxu0
        %v6526 = vpop.f32.mrb[0].mxu0
        %v6527 = vadd.f32 %v6334, %v6526
        %v6528 = vpop.f32.mrb[0].mxu0
        %6529 = vmatprep.mubr.bf16.mxu0 %v6121
        %6530 = vmatmul.mubr.bf16.gmra.mrb[0].mxu0 %v6120
        %v6531 = vpop.f32.mrb[0].mxu0
        %v6532 = vadd.f32 %v6339, %v6531
        %v6533 = vpop.f32.mrb[0].mxu0
        %v6534 = vpop.f32.mrb[0].mxu0
        %v6535 = vadd.f32 %v6342, %v6534
        %v6536 = vpop.f32.mrb[0].mxu0
        %6537 = vmatprep.mubr.bf16.mxu0 %v6123
        %6538 = vmatmul.mubr.bf16.gmra.mrb[0].mxu0 %v6122
        %v6539 = vpop.f32.mrb[0].mxu0
        %v6540 = vadd.f32 %v6347, %v6539
        %v6541 = vpop.f32.mrb[0].mxu0
        %v6542 = vpop.f32.mrb[0].mxu0
        %v6543 = vadd.f32 %v6350, %v6542
        %v6544 = vpop.f32.mrb[0].mxu0
        %6545 = vmatprep.mubr.bf16.mxu0 %v6125
        %6546 = vmatmul.mubr.bf16.gmra.mrb[0].mxu0 %v6124
        %v6547 = vpop.f32.mrb[0].mxu0
        %v6548 = vadd.f32 %v6355, %v6547
        %v6549 = vpop.f32.mrb[0].mxu0
        %v6550 = vpop.f32.mrb[0].mxu0
        %v6551 = vadd.f32 %v6358, %v6550
        %v6552 = vpop.f32.mrb[0].mxu0
        %6553 = vmatprep.mubr.bf16.mxu0 %v6127
        %6554 = vmatmul.mubr.bf16.gmra.mrb[0].mxu0 %v6126
        %v6555 = vpop.f32.mrb[0].mxu0
        %v6556 = vadd.f32 %v6363, %v6555
        %v6557 = vpop.f32.mrb[0].mxu0
        %v6558 = vpop.f32.mrb[0].mxu0
        %v6559 = vadd.f32 %v6366, %v6558
        %v6560 = vpop.f32.mrb[0].mxu0
        %6561 = vdwg.mxu0
        %v6562 = vld [vmem:[%s12] sm:$0x1]
        %v6563 = vld [vmem:[#allocation21] sm:$0xf]
        %v6564 = vld [vmem:[#allocation21 + $0x4] sm:$0xf]
        %v6565 = vld [vmem:[#allocation21 + $0x8] sm:$0xf]
        %v6566 = vld [vmem:[#allocation21 + $0xc] sm:$0xf]
        %v6567 = vld [vmem:[#allocation21 + $0x10] sm:$0xf]
        %v6568 = vld [vmem:[#allocation21 + $0x14] sm:$0xf]
        %v6569 = vld [vmem:[#allocation21 + $0x18] sm:$0xf]
        %v6570 = vld [vmem:[#allocation21 + $0x1c] sm:$0xf]
        %v6571 = vld [vmem:[#allocation21 + $0x20] sm:$0xf]
        %v6572 = vld [vmem:[#allocation21 + $0x24] sm:$0xf]
        %v6573 = vld [vmem:[#allocation21 + $0x28] sm:$0xf]
        %v6574 = vld [vmem:[#allocation21 + $0x2c] sm:$0xf]
        %v6575 = vld [vmem:[#allocation21 + $0x30] sm:$0xf]
        %v6576 = vld [vmem:[#allocation21 + $0x34] sm:$0xf]
        %v6577 = vld [vmem:[#allocation21 + $0x38] sm:$0xf]
        %v6578 = vld [vmem:[#allocation21 + $0x3c] sm:$0xf]
        %v6579 = vld [vmem:[#allocation22] sm:$0xf]
        %v6580 = vld [vmem:[#allocation22 + $0x4] sm:$0xf]
        %v6581 = vld [vmem:[#allocation22 + $0x8] sm:$0xf]
        %v6582 = vld [vmem:[#allocation22 + $0xc] sm:$0xf]
        %v6583 = vld [vmem:[#allocation22 + $0x10] sm:$0xf]
        %v6584 = vld [vmem:[#allocation22 + $0x14] sm:$0xf]
        %v6585 = vld [vmem:[#allocation22 + $0x18] sm:$0xf]
        %v6586 = vld [vmem:[#allocation22 + $0x1c] sm:$0xf]
        %v6587 = vld [vmem:[#allocation22 + $0x20] sm:$0xf]
        %v6588 = vld [vmem:[#allocation22 + $0x24] sm:$0xf]
        %v6589 = vld [vmem:[#allocation22 + $0x28] sm:$0xf]
        %v6590 = vld [vmem:[#allocation22 + $0x2c] sm:$0xf]
        %v6591 = vld [vmem:[#allocation22 + $0x30] sm:$0xf]
        %v6592 = vld [vmem:[#allocation22 + $0x34] sm:$0xf]
        %v6593 = vld [vmem:[#allocation22 + $0x38] sm:$0xf]
        %v6594 = vld [vmem:[#allocation22 + $0x3c] sm:$0xf]
        %v6595 = vld [vmem:[#allocation24] sm:$0xf]
        %v6596 = vld [vmem:[#allocation24 + $0x4] sm:$0xf]
        %v6597 = vld [vmem:[#allocation24 + $0x8] sm:$0xf]
        %v6598 = vld [vmem:[#allocation24 + $0xc] sm:$0xf]
        %v6599 = vld [vmem:[#allocation24 + $0x10] sm:$0xf]
        %v6600 = vld [vmem:[#allocation24 + $0x14] sm:$0xf]
        %v6601 = vld [vmem:[#allocation24 + $0x18] sm:$0xf]
        %v6602 = vld [vmem:[#allocation24 + $0x1c] sm:$0xf]
        %v6603 = vld [vmem:[#allocation24 + $0x20] sm:$0xf]
        %v6604 = vld [vmem:[#allocation24 + $0x24] sm:$0xf]
        %v6605 = vld [vmem:[#allocation24 + $0x28] sm:$0xf]
        %v6606 = vld [vmem:[#allocation24 + $0x2c] sm:$0xf]
        %v6607 = vld [vmem:[#allocation24 + $0x30] sm:$0xf]
        %v6608 = vld [vmem:[#allocation24 + $0x34] sm:$0xf]
        %v6609 = vld [vmem:[#allocation24 + $0x38] sm:$0xf]
        %v6610 = vld [vmem:[#allocation24 + $0x3c] sm:$0xf]
        %v6611 = vld [vmem:[#allocation25] sm:$0xf]
        %v6612 = vld [vmem:[#allocation25 + $0x4] sm:$0xf]
        %v6613 = vld [vmem:[#allocation25 + $0x8] sm:$0xf]
        %v6614 = vld [vmem:[#allocation25 + $0xc] sm:$0xf]
        %v6615 = vld [vmem:[#allocation25 + $0x10] sm:$0xf]
        %v6616 = vld [vmem:[#allocation25 + $0x14] sm:$0xf]
        %v6617 = vld [vmem:[#allocation25 + $0x18] sm:$0xf]
        %v6618 = vld [vmem:[#allocation25 + $0x1c] sm:$0xf]
        %v6619 = vld [vmem:[#allocation25 + $0x20] sm:$0xf]
        %v6620 = vld [vmem:[#allocation25 + $0x24] sm:$0xf]
        %v6621 = vld [vmem:[#allocation25 + $0x28] sm:$0xf]
        %v6622 = vld [vmem:[#allocation25 + $0x2c] sm:$0xf]
        %v6623 = vld [vmem:[#allocation25 + $0x30] sm:$0xf]
        %v6624 = vld [vmem:[#allocation25 + $0x34] sm:$0xf]
        %v6625 = vld [vmem:[#allocation25 + $0x38] sm:$0xf]
        %v6626 = vld [vmem:[#allocation25 + $0x3c] sm:$0xf]
        %v6627 = vmul.f32 %v6500, %v6500
        %v6628 = vmul.f32 %v6503, %v6503
        %v6629 = vmul.f32 %v6508, %v6508
        %v6630 = vmul.f32 %v6511, %v6511
        %v6631 = vmul.f32 %v6516, %v6516
        %v6632 = vmul.f32 %v6519, %v6519
        %v6633 = vmul.f32 %v6524, %v6524
        %v6634 = vmul.f32 %v6527, %v6527
        %v6635 = vmul.f32 %v6532, %v6532
        %v6636 = vmul.f32 %v6535, %v6535
        %v6637 = vmul.f32 %v6540, %v6540
        %v6638 = vmul.f32 %v6543, %v6543
        %v6639 = vmul.f32 %v6548, %v6548
        %v6640 = vmul.f32 %v6551, %v6551
        %v6641 = vmul.f32 %v6556, %v6556
        %v6642 = vmul.f32 %v6559, %v6559
        %6643 = vadd.xlane.f32.xlu0 %v6627
        %v6644 = vpop.xlane.xlu0 %6643
        %6645 = vadd.xlane.f32.xlu0 %v6628
        %v6646 = vpop.xlane.xlu0 %6645
        %6647 = vadd.xlane.f32.xlu0 %v6629
        %v6648 = vpop.xlane.xlu0 %6647
        %6649 = vadd.xlane.f32.xlu0 %v6630
        %v6650 = vpop.xlane.xlu0 %6649
        %6651 = vadd.xlane.f32.xlu0 %v6631
        %v6652 = vpop.xlane.xlu0 %6651
        %6653 = vadd.xlane.f32.xlu0 %v6632
        %v6654 = vpop.xlane.xlu0 %6653
        %6655 = vadd.xlane.f32.xlu0 %v6633
        %v6656 = vpop.xlane.xlu0 %6655
        %6657 = vadd.xlane.f32.xlu0 %v6634
        %v6658 = vpop.xlane.xlu0 %6657
        %6659 = vadd.xlane.f32.xlu0 %v6635
        %v6660 = vpop.xlane.xlu0 %6659
        %6661 = vadd.xlane.f32.xlu0 %v6636
        %v6662 = vpop.xlane.xlu0 %6661
        %6663 = vadd.xlane.f32.xlu0 %v6637
        %v6664 = vpop.xlane.xlu0 %6663
        %6665 = vadd.xlane.f32.xlu0 %v6638
        %v6666 = vpop.xlane.xlu0 %6665
        %6667 = vadd.xlane.f32.xlu0 %v6639
        %v6668 = vpop.xlane.xlu0 %6667
        %6669 = vadd.xlane.f32.xlu0 %v6640
        %v6670 = vpop.xlane.xlu0 %6669
        %6671 = vadd.xlane.f32.xlu0 %v6641
        %v6672 = vpop.xlane.xlu0 %6671
        %6673 = vadd.xlane.f32.xlu0 %v6642
        %v6674 = vpop.xlane.xlu0 %6673
        %v6675 = vrcp.pop 128.0
        %v6676 = vmul.f32 %v6644, %v6675
        %v6677 = vmul.f32 %v6646, %v6675
        %v6678 = vmul.f32 %v6648, %v6675
        %v6679 = vmul.f32 %v6650, %v6675
        %v6680 = vmul.f32 %v6652, %v6675
        %v6681 = vmul.f32 %v6654, %v6675
        %v6682 = vmul.f32 %v6656, %v6675
        %v6683 = vmul.f32 %v6658, %v6675
        %v6684 = vmul.f32 %v6660, %v6675
        %v6685 = vmul.f32 %v6662, %v6675
        %v6686 = vmul.f32 %v6664, %v6675
        %v6687 = vmul.f32 %v6666, %v6675
        %v6688 = vmul.f32 %v6668, %v6675
        %v6689 = vmul.f32 %v6670, %v6675
        %v6690 = vmul.f32 %v6672, %v6675
        %v6691 = vmul.f32 %v6674, %v6675
        %v6692 = vadd.f32 %v6676, 1e-06
        %v6693 = vadd.f32 %v6677, 1e-06
        %v6694 = vadd.f32 %v6678, 1e-06
        %v6695 = vadd.f32 %v6679, 1e-06
        %v6696 = vadd.f32 %v6680, 1e-06
        %v6697 = vadd.f32 %v6681, 1e-06
        %v6698 = vadd.f32 %v6682, 1e-06
        %v6699 = vadd.f32 %v6683, 1e-06
        %v6700 = vadd.f32 %v6684, 1e-06
        %v6701 = vadd.f32 %v6685, 1e-06
        %v6702 = vadd.f32 %v6686, 1e-06
        %v6703 = vadd.f32 %v6687, 1e-06
        %v6704 = vadd.f32 %v6688, 1e-06
        %v6705 = vadd.f32 %v6689, 1e-06
        %v6706 = vadd.f32 %v6690, 1e-06
        %v6707 = vadd.f32 %v6691, 1e-06
        %v6708 = vrsqrt.pop %v6692
        %v6709 = vrsqrt.pop %v6693
        %v6710 = vrsqrt.pop %v6694
        %v6711 = vrsqrt.pop %v6695
        %v6712 = vrsqrt.pop %v6696
        %v6713 = vrsqrt.pop %v6697
        %v6714 = vrsqrt.pop %v6698
        %v6715 = vrsqrt.pop %v6699
        %v6716 = vrsqrt.pop %v6700
        %v6717 = vrsqrt.pop %v6701
        %v6718 = vrsqrt.pop %v6702
        %v6719 = vrsqrt.pop %v6703
        %v6720 = vrsqrt.pop %v6704
        %v6721 = vrsqrt.pop %v6705
        %v6722 = vrsqrt.pop %v6706
        %v6723 = vrsqrt.pop %v6707
        %v6724 = vmul.f32 %v6500, %v6708
        %v6725 = vmul.f32 %v6503, %v6709
        %v6726 = vmul.f32 %v6508, %v6710
        %v6727 = vmul.f32 %v6511, %v6711
        %v6728 = vmul.f32 %v6516, %v6712
        %v6729 = vmul.f32 %v6519, %v6713
        %v6730 = vmul.f32 %v6524, %v6714
        %v6731 = vmul.f32 %v6527, %v6715
        %v6732 = vmul.f32 %v6532, %v6716
        %v6733 = vmul.f32 %v6535, %v6717
        %v6734 = vmul.f32 %v6540, %v6718
        %v6735 = vmul.f32 %v6543, %v6719
        %v6736 = vmul.f32 %v6548, %v6720
        %v6737 = vmul.f32 %v6551, %v6721
        %v6738 = vmul.f32 %v6556, %v6722
        %v6739 = vmul.f32 %v6559, %v6723
        %v6741 = vlaneseq
        %v6742 = vshrl.u32 %v6741, 7
        %v6743 = vsub.s32 0, %v6742
        %v6744 = vrot.slane %v6562, %v6743
        %v6746 = vmul.f32 %v6724, %v6744
        %v6747 = vmul.f32 %v6725, %v6744
        %v6748 = vmul.f32 %v6726, %v6744
        %v6749 = vmul.f32 %v6727, %v6744
        %v6750 = vmul.f32 %v6728, %v6744
        %v6751 = vmul.f32 %v6729, %v6744
        %v6752 = vmul.f32 %v6730, %v6744
        %v6753 = vmul.f32 %v6731, %v6744
        %v6754 = vmul.f32 %v6732, %v6744
        %v6755 = vmul.f32 %v6733, %v6744
        %v6756 = vmul.f32 %v6734, %v6744
        %v6757 = vmul.f32 %v6735, %v6744
        %v6758 = vmul.f32 %v6736, %v6744
        %v6759 = vmul.f32 %v6737, %v6744
        %v6760 = vmul.f32 %v6738, %v6744
        %v6761 = vmul.f32 %v6739, %v6744
        %v6762 = vpack.c.bf16 %v6747, %v6746
        %v6763 = vpack.c.bf16 %v6749, %v6748
        %v6764 = vpack.c.bf16 %v6751, %v6750
        %v6765 = vpack.c.bf16 %v6753, %v6752
        %v6766 = vpack.c.bf16 %v6755, %v6754
        %v6767 = vpack.c.bf16 %v6757, %v6756
        %v6768 = vpack.c.bf16 %v6759, %v6758
        %v6769 = vpack.c.bf16 %v6761, %v6760
        %v6786 = vunpack.c.l.b16 %v6563
        %v6787 = vunpack.c.l.b16 %v6564
        %v6788 = vunpack.c.l.b16 %v6565
        %v6789 = vunpack.c.l.b16 %v6566
        %v6790 = vunpack.c.l.b16 %v6567
        %v6791 = vunpack.c.l.b16 %v6568
        %v6792 = vunpack.c.l.b16 %v6569
        %v6793 = vunpack.c.l.b16 %v6570
        %v6794 = vunpack.c.l.b16 %v6571
        %v6795 = vunpack.c.l.b16 %v6572
        %v6796 = vunpack.c.l.b16 %v6573
        %v6797 = vunpack.c.l.b16 %v6574
        %v6798 = vunpack.c.l.b16 %v6575
        %v6799 = vunpack.c.l.b16 %v6576
        %v6800 = vunpack.c.l.b16 %v6577
        %v6801 = vunpack.c.l.b16 %v6578
        %v6802 = vpack.c.b16 %v6787, %v6786
        %v6803 = vpack.c.b16 %v6789, %v6788
        %v6804 = vpack.c.b16 %v6791, %v6790
        %v6805 = vpack.c.b16 %v6793, %v6792
        %v6806 = vpack.c.b16 %v6795, %v6794
        %v6807 = vpack.c.b16 %v6797, %v6796
        %v6808 = vpack.c.b16 %v6799, %v6798
        %v6809 = vpack.c.b16 %v6801, %v6800
        %6818 = vmatprep.subr.bf16.mxu0 0
        %6819 = vmatpush1.bf16.msra.mxu0 %v6802
        %6820 = vmatprep.subr.bf16.mxu0 0
        %6821 = vmatpush1.bf16.msra.mxu0 %v6803
        %6822 = vmatprep.subr.bf16.mxu0 0
        %6823 = vmatpush1.bf16.msra.mxu0 %v6804
        %6824 = vmatprep.subr.bf16.mxu0 0
        %6825 = vmatpush1.bf16.msra.mxu0 %v6805
        %6826 = vmatprep.subr.bf16.mxu0 0
        %6827 = vmatpush1.bf16.msra.mxu0 %v6806
        %6828 = vmatprep.subr.bf16.mxu0 0
        %6829 = vmatpush1.bf16.msra.mxu0 %v6807
        %6830 = vmatprep.subr.bf16.mxu0 0
        %6831 = vmatpush1.bf16.msra.mxu0 %v6808
        %6832 = vmatprep.subr.bf16.mxu0 0
        %6833 = vmatpush1.bf16.msra.mxu0 %v6809
        %6834 = vmatprep.subr.bf16.mxu0 0
        %6835 = vmatpush1.bf16.msra.mxu0 0
        %6836 = vmatprep.subr.bf16.mxu0 0
        %6837 = vmatpush1.bf16.msra.mxu0 0
        %6838 = vmatprep.subr.bf16.mxu0 0
        %6839 = vmatpush1.bf16.msra.mxu0 0
        %6840 = vmatprep.subr.bf16.mxu0 0
        %6841 = vmatpush1.bf16.msra.mxu0 0
        %6842 = vmatprep.subr.bf16.mxu0 0
        %6843 = vmatpush1.bf16.msra.mxu0 0
        %6844 = vmatprep.subr.bf16.mxu0 0
        %6845 = vmatpush1.bf16.msra.mxu0 0
        %6846 = vmatprep.subr.bf16.mxu0 0
        %6847 = vmatpush1.bf16.msra.mxu0 0
        %6848 = vmatprep.subr.bf16.mxu0 0
        %6849 = vmatpush1.bf16.msra.mxu0 0
        %6850 = vmatprep.mubr.bf16.mxu0 0
        %6851 = vmatmul.mubr.bf16.gmra.mrb[0].mxu0 %v6762
        %v6852 = vpop.f32.mrb[0].mxu0
        %v6853 = vadd.f32 0.0, %v6852
        %v6854 = vpop.f32.mrb[0].mxu0
        %v6855 = vpop.f32.mrb[0].mxu0
        %v6856 = vadd.f32 0.0, %v6855
        %v6857 = vpop.f32.mrb[0].mxu0
        %6858 = vmatprep.mubr.bf16.mxu0 0
        %6859 = vmatmul.mubr.bf16.gmra.mrb[0].mxu0 %v6763
        %v6860 = vpop.f32.mrb[0].mxu0
        %v6861 = vadd.f32 0.0, %v6860
        %v6862 = vpop.f32.mrb[0].mxu0
        %v6863 = vpop.f32.mrb[0].mxu0
        %v6864 = vadd.f32 0.0, %v6863
        %v6865 = vpop.f32.mrb[0].mxu0
        %6866 = vmatprep.mubr.bf16.mxu0 0
        %6867 = vmatmul.mubr.bf16.gmra.mrb[0].mxu0 %v6764
        %v6868 = vpop.f32.mrb[0].mxu0
        %v6869 = vadd.f32 0.0, %v6868
        %v6870 = vpop.f32.mrb[0].mxu0
        %v6871 = vpop.f32.mrb[0].mxu0
        %v6872 = vadd.f32 0.0, %v6871
        %v6873 = vpop.f32.mrb[0].mxu0
        %6874 = vmatprep.mubr.bf16.mxu0 0
        %6875 = vmatmul.mubr.bf16.gmra.mrb[0].mxu0 %v6765
        %v6876 = vpop.f32.mrb[0].mxu0
        %v6877 = vadd.f32 0.0, %v6876
        %v6878 = vpop.f32.mrb[0].mxu0
        %v6879 = vpop.f32.mrb[0].mxu0
        %v6880 = vadd.f32 0.0, %v6879
        %v6881 = vpop.f32.mrb[0].mxu0
        %6882 = vmatprep.mubr.bf16.mxu0 0
        %6883 = vmatmul.mubr.bf16.gmra.mrb[0].mxu0 %v6766
        %v6884 = vpop.f32.mrb[0].mxu0
        %v6885 = vadd.f32 0.0, %v6884
        %v6886 = vpop.f32.mrb[0].mxu0
        %v6887 = vpop.f32.mrb[0].mxu0
        %v6888 = vadd.f32 0.0, %v6887
        %v6889 = vpop.f32.mrb[0].mxu0
        %6890 = vmatprep.mubr.bf16.mxu0 0
        %6891 = vmatmul.mubr.bf16.gmra.mrb[0].mxu0 %v6767
        %v6892 = vpop.f32.mrb[0].mxu0
        %v6893 = vadd.f32 0.0, %v6892
        %v6894 = vpop.f32.mrb[0].mxu0
        %v6895 = vpop.f32.mrb[0].mxu0
        %v6896 = vadd.f32 0.0, %v6895
        %v6897 = vpop.f32.mrb[0].mxu0
        %6898 = vmatprep.mubr.bf16.mxu0 0
        %6899 = vmatmul.mubr.bf16.gmra.mrb[0].mxu0 %v6768
        %v6900 = vpop.f32.mrb[0].mxu0
        %v6901 = vadd.f32 0.0, %v6900
        %v6902 = vpop.f32.mrb[0].mxu0
        %v6903 = vpop.f32.mrb[0].mxu0
        %v6904 = vadd.f32 0.0, %v6903
        %v6905 = vpop.f32.mrb[0].mxu0
        %6906 = vmatprep.mubr.bf16.mxu0 0
        %6907 = vmatmul.mubr.bf16.gmra.mrb[0].mxu0 %v6769
        %v6908 = vpop.f32.mrb[0].mxu0
        %v6909 = vadd.f32 0.0, %v6908
        %v6910 = vpop.f32.mrb[0].mxu0
        %v6911 = vpop.f32.mrb[0].mxu0
        %v6912 = vadd.f32 0.0, %v6911
        %v6913 = vpop.f32.mrb[0].mxu0
        %6914 = vdwg.mxu0
        %v6931 = vunpack.c.l.b16 %v6579
        %v6932 = vunpack.c.l.b16 %v6580
        %v6933 = vunpack.c.l.b16 %v6581
        %v6934 = vunpack.c.l.b16 %v6582
        %v6935 = vunpack.c.l.b16 %v6583
        %v6936 = vunpack.c.l.b16 %v6584
        %v6937 = vunpack.c.l.b16 %v6585
        %v6938 = vunpack.c.l.b16 %v6586
        %v6939 = vunpack.c.l.b16 %v6587
        %v6940 = vunpack.c.l.b16 %v6588
        %v6941 = vunpack.c.l.b16 %v6589
        %v6942 = vunpack.c.l.b16 %v6590
        %v6943 = vunpack.c.l.b16 %v6591
        %v6944 = vunpack.c.l.b16 %v6592
        %v6945 = vunpack.c.l.b16 %v6593
        %v6946 = vunpack.c.l.b16 %v6594
        %v6947 = vpack.c.b16 %v6932, %v6931
        %v6948 = vpack.c.b16 %v6934, %v6933
        %v6949 = vpack.c.b16 %v6936, %v6935
        %v6950 = vpack.c.b16 %v6938, %v6937
        %v6951 = vpack.c.b16 %v6940, %v6939
        %v6952 = vpack.c.b16 %v6942, %v6941
        %v6953 = vpack.c.b16 %v6944, %v6943
        %v6954 = vpack.c.b16 %v6946, %v6945
        %6963 = vmatprep.subr.bf16.mxu0 0
        %6964 = vmatpush1.bf16.msra.mxu0 %v6947
        %6965 = vmatprep.subr.bf16.mxu0 0
        %6966 = vmatpush1.bf16.msra.mxu0 %v6948
        %6967 = vmatprep.subr.bf16.mxu0 0
        %6968 = vmatpush1.bf16.msra.mxu0 %v6949
        %6969 = vmatprep.subr.bf16.mxu0 0
        %6970 = vmatpush1.bf16.msra.mxu0 %v6950
        %6971 = vmatprep.subr.bf16.mxu0 0
        %6972 = vmatpush1.bf16.msra.mxu0 %v6951
        %6973 = vmatprep.subr.bf16.mxu0 0
        %6974 = vmatpush1.bf16.msra.mxu0 %v6952
        %6975 = vmatprep.subr.bf16.mxu0 0
        %6976 = vmatpush1.bf16.msra.mxu0 %v6953
        %6977 = vmatprep.subr.bf16.mxu0 0
        %6978 = vmatpush1.bf16.msra.mxu0 %v6954
        %6979 = vmatprep.subr.bf16.mxu0 0
        %6980 = vmatpush1.bf16.msra.mxu0 0
        %6981 = vmatprep.subr.bf16.mxu0 0
        %6982 = vmatpush1.bf16.msra.mxu0 0
        %6983 = vmatprep.subr.bf16.mxu0 0
        %6984 = vmatpush1.bf16.msra.mxu0 0
        %6985 = vmatprep.subr.bf16.mxu0 0
        %6986 = vmatpush1.bf16.msra.mxu0 0
        %6987 = vmatprep.subr.bf16.mxu0 0
        %6988 = vmatpush1.bf16.msra.mxu0 0
        %6989 = vmatprep.subr.bf16.mxu0 0
        %6990 = vmatpush1.bf16.msra.mxu0 0
        %6991 = vmatprep.subr.bf16.mxu0 0
        %6992 = vmatpush1.bf16.msra.mxu0 0
        %6993 = vmatprep.subr.bf16.mxu0 0
        %6994 = vmatpush1.bf16.msra.mxu0 0
        %6995 = vmatprep.mubr.bf16.mxu0 0
        %6996 = vmatmul.mubr.bf16.gmra.mrb[0].mxu0 %v6762
        %v6997 = vpop.f32.mrb[0].mxu0
        %v6998 = vadd.f32 0.0, %v6997
        %v6999 = vpop.f32.mrb[0].mxu0
        %v7000 = vpop.f32.mrb[0].mxu0
        %v7001 = vadd.f32 0.0, %v7000
        %v7002 = vpop.f32.mrb[0].mxu0
        %7003 = vmatprep.mubr.bf16.mxu0 0
        %7004 = vmatmul.mubr.bf16.gmra.mrb[0].mxu0 %v6763
        %v7005 = vpop.f32.mrb[0].mxu0
        %v7006 = vadd.f32 0.0, %v7005
        %v7007 = vpop.f32.mrb[0].mxu0
        %v7008 = vpop.f32.mrb[0].mxu0
        %v7009 = vadd.f32 0.0, %v7008
        %v7010 = vpop.f32.mrb[0].mxu0
        %7011 = vmatprep.mubr.bf16.mxu0 0
        %7012 = vmatmul.mubr.bf16.gmra.mrb[0].mxu0 %v6764
        %v7013 = vpop.f32.mrb[0].mxu0
        %v7014 = vadd.f32 0.0, %v7013
        %v7015 = vpop.f32.mrb[0].mxu0
        %v7016 = vpop.f32.mrb[0].mxu0
        %v7017 = vadd.f32 0.0, %v7016
        %v7018 = vpop.f32.mrb[0].mxu0
        %7019 = vmatprep.mubr.bf16.mxu0 0
        %7020 = vmatmul.mubr.bf16.gmra.mrb[0].mxu0 %v6765
        %v7021 = vpop.f32.mrb[0].mxu0
        %v7022 = vadd.f32 0.0, %v7021
        %v7023 = vpop.f32.mrb[0].mxu0
        %v7024 = vpop.f32.mrb[0].mxu0
        %v7025 = vadd.f32 0.0, %v7024
        %v7026 = vpop.f32.mrb[0].mxu0
        %7027 = vmatprep.mubr.bf16.mxu0 0
        %7028 = vmatmul.mubr.bf16.gmra.mrb[0].mxu0 %v6766
        %v7029 = vpop.f32.mrb[0].mxu0
        %v7030 = vadd.f32 0.0, %v7029
        %v7031 = vpop.f32.mrb[0].mxu0
        %v7032 = vpop.f32.mrb[0].mxu0
        %v7033 = vadd.f32 0.0, %v7032
        %v7034 = vpop.f32.mrb[0].mxu0
        %7035 = vmatprep.mubr.bf16.mxu0 0
        %7036 = vmatmul.mubr.bf16.gmra.mrb[0].mxu0 %v6767
        %v7037 = vpop.f32.mrb[0].mxu0
        %v7038 = vadd.f32 0.0, %v7037
        %v7039 = vpop.f32.mrb[0].mxu0
        %v7040 = vpop.f32.mrb[0].mxu0
        %v7041 = vadd.f32 0.0, %v7040
        %v7042 = vpop.f32.mrb[0].mxu0
        %7043 = vmatprep.mubr.bf16.mxu0 0
        %7044 = vmatmul.mubr.bf16.gmra.mrb[0].mxu0 %v6768
        %v7045 = vpop.f32.mrb[0].mxu0
        %v7046 = vadd.f32 0.0, %v7045
        %v7047 = vpop.f32.mrb[0].mxu0
        %v7048 = vpop.f32.mrb[0].mxu0
        %v7049 = vadd.f32 0.0, %v7048
        %v7050 = vpop.f32.mrb[0].mxu0
        %7051 = vmatprep.mubr.bf16.mxu0 0
        %7052 = vmatmul.mubr.bf16.gmra.mrb[0].mxu0 %v6769
        %v7053 = vpop.f32.mrb[0].mxu0
        %v7054 = vadd.f32 0.0, %v7053
        %v7055 = vpop.f32.mrb[0].mxu0
        %v7056 = vpop.f32.mrb[0].mxu0
        %v7057 = vadd.f32 0.0, %v7056
        %v7058 = vpop.f32.mrb[0].mxu0
        %7059 = vdwg.mxu0
        %v7076 = vunpack.c.l.b16 %v6595
        %v7077 = vunpack.c.l.b16 %v6596
        %v7078 = vunpack.c.l.b16 %v6597
        %v7079 = vunpack.c.l.b16 %v6598
        %v7080 = vunpack.c.l.b16 %v6599
        %v7081 = vunpack.c.l.b16 %v6600
        %v7082 = vunpack.c.l.b16 %v6601
        %v7083 = vunpack.c.l.b16 %v6602
        %v7084 = vunpack.c.l.b16 %v6603
        %v7085 = vunpack.c.l.b16 %v6604
        %v7086 = vunpack.c.l.b16 %v6605
        %v7087 = vunpack.c.l.b16 %v6606
        %v7088 = vunpack.c.l.b16 %v6607
        %v7089 = vunpack.c.l.b16 %v6608
        %v7090 = vunpack.c.l.b16 %v6609
        %v7091 = vunpack.c.l.b16 %v6610
        %v7092 = vpack.c.b16 %v7077, %v7076
        %v7093 = vpack.c.b16 %v7079, %v7078
        %v7094 = vpack.c.b16 %v7081, %v7080
        %v7095 = vpack.c.b16 %v7083, %v7082
        %v7096 = vpack.c.b16 %v7085, %v7084
        %v7097 = vpack.c.b16 %v7087, %v7086
        %v7098 = vpack.c.b16 %v7089, %v7088
        %v7099 = vpack.c.b16 %v7091, %v7090
        %7108 = vmatprep.subr.bf16.mxu0 0
        %7109 = vmatpush1.bf16.msra.mxu0 %v7092
        %7110 = vmatprep.subr.bf16.mxu0 0
        %7111 = vmatpush1.bf16.msra.mxu0 %v7093
        %7112 = vmatprep.subr.bf16.mxu0 0
        %7113 = vmatpush1.bf16.msra.mxu0 %v7094
        %7114 = vmatprep.subr.bf16.mxu0 0
        %7115 = vmatpush1.bf16.msra.mxu0 %v7095
        %7116 = vmatprep.subr.bf16.mxu0 0
        %7117 = vmatpush1.bf16.msra.mxu0 %v7096
        %7118 = vmatprep.subr.bf16.mxu0 0
        %7119 = vmatpush1.bf16.msra.mxu0 %v7097
        %7120 = vmatprep.subr.bf16.mxu0 0
        %7121 = vmatpush1.bf16.msra.mxu0 %v7098
        %7122 = vmatprep.subr.bf16.mxu0 0
        %7123 = vmatpush1.bf16.msra.mxu0 %v7099
        %7124 = vmatprep.subr.bf16.mxu0 0
        %7125 = vmatpush1.bf16.msra.mxu0 0
        %7126 = vmatprep.subr.bf16.mxu0 0
        %7127 = vmatpush1.bf16.msra.mxu0 0
        %7128 = vmatprep.subr.bf16.mxu0 0
        %7129 = vmatpush1.bf16.msra.mxu0 0
        %7130 = vmatprep.subr.bf16.mxu0 0
        %7131 = vmatpush1.bf16.msra.mxu0 0
        %7132 = vmatprep.subr.bf16.mxu0 0
        %7133 = vmatpush1.bf16.msra.mxu0 0
        %7134 = vmatprep.subr.bf16.mxu0 0
        %7135 = vmatpush1.bf16.msra.mxu0 0
        %7136 = vmatprep.subr.bf16.mxu0 0
        %7137 = vmatpush1.bf16.msra.mxu0 0
        %7138 = vmatprep.subr.bf16.mxu0 0
        %7139 = vmatpush1.bf16.msra.mxu0 0
        %7140 = vmatprep.mubr.bf16.mxu0 0
        %7141 = vmatmul.mubr.bf16.gmra.mrb[0].mxu0 %v6762
        %v7142 = vpop.f32.mrb[0].mxu0
        %v7143 = vadd.f32 0.0, %v7142
        %v7144 = vpop.f32.mrb[0].mxu0
        %v7145 = vpop.f32.mrb[0].mxu0
        %v7146 = vadd.f32 0.0, %v7145
        %v7147 = vpop.f32.mrb[0].mxu0
        %7148 = vmatprep.mubr.bf16.mxu0 0
        %7149 = vmatmul.mubr.bf16.gmra.mrb[0].mxu0 %v6763
        %v7150 = vpop.f32.mrb[0].mxu0
        %v7151 = vadd.f32 0.0, %v7150
        %v7152 = vpop.f32.mrb[0].mxu0
        %v7153 = vpop.f32.mrb[0].mxu0
        %v7154 = vadd.f32 0.0, %v7153
        %v7155 = vpop.f32.mrb[0].mxu0
        %7156 = vmatprep.mubr.bf16.mxu0 0
        %7157 = vmatmul.mubr.bf16.gmra.mrb[0].mxu0 %v6764
        %v7158 = vpop.f32.mrb[0].mxu0
        %v7159 = vadd.f32 0.0, %v7158
        %v7160 = vpop.f32.mrb[0].mxu0
        %v7161 = vpop.f32.mrb[0].mxu0
        %v7162 = vadd.f32 0.0, %v7161
        %v7163 = vpop.f32.mrb[0].mxu0
        %7164 = vmatprep.mubr.bf16.mxu0 0
        %7165 = vmatmul.mubr.bf16.gmra.mrb[0].mxu0 %v6765
        %v7166 = vpop.f32.mrb[0].mxu0
        %v7167 = vadd.f32 0.0, %v7166
        %v7168 = vpop.f32.mrb[0].mxu0
        %v7169 = vpop.f32.mrb[0].mxu0
        %v7170 = vadd.f32 0.0, %v7169
        %v7171 = vpop.f32.mrb[0].mxu0
        %7172 = vmatprep.mubr.bf16.mxu0 0
        %7173 = vmatmul.mubr.bf16.gmra.mrb[0].mxu0 %v6766
        %v7174 = vpop.f32.mrb[0].mxu0
        %v7175 = vadd.f32 0.0, %v7174
        %v7176 = vpop.f32.mrb[0].mxu0
        %v7177 = vpop.f32.mrb[0].mxu0
        %v7178 = vadd.f32 0.0, %v7177
        %v7179 = vpop.f32.mrb[0].mxu0
        %7180 = vmatprep.mubr.bf16.mxu0 0
        %7181 = vmatmul.mubr.bf16.gmra.mrb[0].mxu0 %v6767
        %v7182 = vpop.f32.mrb[0].mxu0
        %v7183 = vadd.f32 0.0, %v7182
        %v7184 = vpop.f32.mrb[0].mxu0
        %v7185 = vpop.f32.mrb[0].mxu0
        %v7186 = vadd.f32 0.0, %v7185
        %v7187 = vpop.f32.mrb[0].mxu0
        %7188 = vmatprep.mubr.bf16.mxu0 0
        %7189 = vmatmul.mubr.bf16.gmra.mrb[0].mxu0 %v6768
        %v7190 = vpop.f32.mrb[0].mxu0
        %v7191 = vadd.f32 0.0, %v7190
        %v7192 = vpop.f32.mrb[0].mxu0
        %v7193 = vpop.f32.mrb[0].mxu0
        %v7194 = vadd.f32 0.0, %v7193
        %v7195 = vpop.f32.mrb[0].mxu0
        %7196 = vmatprep.mubr.bf16.mxu0 0
        %7197 = vmatmul.mubr.bf16.gmra.mrb[0].mxu0 %v6769
        %v7198 = vpop.f32.mrb[0].mxu0
        %v7199 = vadd.f32 0.0, %v7198
        %v7200 = vpop.f32.mrb[0].mxu0
        %v7201 = vpop.f32.mrb[0].mxu0
        %v7202 = vadd.f32 0.0, %v7201
        %v7203 = vpop.f32.mrb[0].mxu0
        %7204 = vdwg.mxu0
        %v7205 = vpack.c.bf16 %v6856, %v6853
        %v7206 = vpack.c.bf16 %v6864, %v6861
        %v7207 = vpack.c.bf16 %v6872, %v6869
        %v7208 = vpack.c.bf16 %v6880, %v6877
        %v7209 = vpack.c.bf16 %v6888, %v6885
        %v7210 = vpack.c.bf16 %v6896, %v6893
        %v7211 = vpack.c.bf16 %v6904, %v6901
        %v7212 = vpack.c.bf16 %v6912, %v6909
        %v7213 = vpack.c.bf16 %v7001, %v6998
        %v7214 = vpack.c.bf16 %v7009, %v7006
        %v7215 = vpack.c.bf16 %v7017, %v7014
        %v7216 = vpack.c.bf16 %v7025, %v7022
        %v7217 = vpack.c.bf16 %v7033, %v7030
        %v7218 = vpack.c.bf16 %v7041, %v7038
        %v7219 = vpack.c.bf16 %v7049, %v7046
        %v7220 = vpack.c.bf16 %v7057, %v7054
        %v7221 = vpack.c.bf16 %v7146, %v7143
        %v7222 = vpack.c.bf16 %v7154, %v7151
        %v7223 = vpack.c.bf16 %v7162, %v7159
        %v7224 = vpack.c.bf16 %v7170, %v7167
        %v7225 = vpack.c.bf16 %v7178, %v7175
        %v7226 = vpack.c.bf16 %v7186, %v7183
        %v7227 = vpack.c.bf16 %v7194, %v7191
        %v7228 = vpack.c.bf16 %v7202, %v7199
        %v7229 = vld [vmem:[#allocation27] sm:$0xf]
        %v7230 = vld [vmem:[#allocation27 + $0x4] sm:$0xf]
        %v7231 = vld [vmem:[#allocation27 + $0x8] sm:$0xf]
        %v7232 = vld [vmem:[#allocation27 + $0xc] sm:$0xf]
        %v7233 = vld [vmem:[#allocation27 + $0x10] sm:$0xf]
        %v7234 = vld [vmem:[#allocation27 + $0x14] sm:$0xf]
        %v7235 = vld [vmem:[#allocation27 + $0x18] sm:$0xf]
        %v7236 = vld [vmem:[#allocation27 + $0x1c] sm:$0xf]
        %v7237 = vld [vmem:[#allocation27 + $0x20] sm:$0xf]
        %v7238 = vld [vmem:[#allocation27 + $0x24] sm:$0xf]
        %v7239 = vld [vmem:[#allocation27 + $0x28] sm:$0xf]
        %v7240 = vld [vmem:[#allocation27 + $0x2c] sm:$0xf]
        %v7241 = vld [vmem:[#allocation27 + $0x30] sm:$0xf]
        %v7242 = vld [vmem:[#allocation27 + $0x34] sm:$0xf]
        %v7243 = vld [vmem:[#allocation27 + $0x38] sm:$0xf]
        %v7244 = vld [vmem:[#allocation27 + $0x3c] sm:$0xf]
        %v7245 = vunpack.c.l.bf16 %v7229
        %v7246 = vunpack.c.l.bf16 %v7230
        %v7247 = vunpack.c.l.bf16 %v7231
        %v7248 = vunpack.c.l.bf16 %v7232
        %v7249 = vunpack.c.l.bf16 %v7233
        %v7250 = vunpack.c.l.bf16 %v7234
        %v7251 = vunpack.c.l.bf16 %v7235
        %v7252 = vunpack.c.l.bf16 %v7236
        %v7253 = vunpack.c.l.bf16 %v7237
        %v7254 = vunpack.c.l.bf16 %v7238
        %v7255 = vunpack.c.l.bf16 %v7239
        %v7256 = vunpack.c.l.bf16 %v7240
        %v7257 = vunpack.c.l.bf16 %v7241
        %v7258 = vunpack.c.l.bf16 %v7242
        %v7259 = vunpack.c.l.bf16 %v7243
        %v7260 = vunpack.c.l.bf16 %v7244
        %vm7261 = vcmask 261120
        %v7263 = vsel %vm7261, %v7205, 0
        %v7266 = vsel %vm7261, %v7206, 0
        %v7269 = vsel %vm7261, %v7207, 0
        %v7272 = vsel %vm7261, %v7208, 0
        %v7275 = vsel %vm7261, %v7209, 0
        %v7278 = vsel %vm7261, %v7210, 0
        %v7281 = vsel %vm7261, %v7211, 0
        %v7284 = vsel %vm7261, %v7212, 0
        %v7287 = vsel %vm7261, %v7213, 0
        %v7290 = vsel %vm7261, %v7214, 0
        %v7293 = vsel %vm7261, %v7215, 0
        %v7296 = vsel %vm7261, %v7216, 0
        %v7299 = vsel %vm7261, %v7217, 0
        %v7302 = vsel %vm7261, %v7218, 0
        %v7305 = vsel %vm7261, %v7219, 0
        %v7308 = vsel %vm7261, %v7220, 0
        %7310 = vmatprep.subr.bf16.mxu0 0
        %7311 = vmatpush1.bf16.xpose.msra.mxu0 %v7287
        %7312 = vmatprep.subr.bf16.mxu0 0
        %7313 = vmatpush1.bf16.xpose.msra.mxu0 %v7290
        %7314 = vmatprep.subr.bf16.mxu0 0
        %7315 = vmatpush1.bf16.xpose.msra.mxu0 %v7293
        %7316 = vmatprep.subr.bf16.mxu0 0
        %7317 = vmatpush1.bf16.xpose.msra.mxu0 %v7296
        %7318 = vmatprep.subr.bf16.mxu0 0
        %7319 = vmatpush1.bf16.xpose.msra.mxu0 %v7299
        %7320 = vmatprep.subr.bf16.mxu0 0
        %7321 = vmatpush1.bf16.xpose.msra.mxu0 %v7302
        %7322 = vmatprep.subr.bf16.mxu0 0
        %7323 = vmatpush1.bf16.xpose.msra.mxu0 %v7305
        %7324 = vmatprep.subr.bf16.mxu0 0
        %7325 = vmatpush1.bf16.xpose.msra.mxu0 %v7308
        %7326 = vmatprep.subr.bf16.mxu0 0
        %7327 = vmatpush1.bf16.xpose.msra.mxu0 0
        %7328 = vmatprep.subr.bf16.mxu0 0
        %7329 = vmatpush1.bf16.xpose.msra.mxu0 0
        %7330 = vmatprep.subr.bf16.mxu0 0
        %7331 = vmatpush1.bf16.xpose.msra.mxu0 0
        %7332 = vmatprep.subr.bf16.mxu0 0
        %7333 = vmatpush1.bf16.xpose.msra.mxu0 0
        %7334 = vmatprep.subr.bf16.mxu0 0
        %7335 = vmatpush1.bf16.xpose.msra.mxu0 0
        %7336 = vmatprep.subr.bf16.mxu0 0
        %7337 = vmatpush1.bf16.xpose.msra.mxu0 0
        %7338 = vmatprep.subr.bf16.mxu0 0
        %7339 = vmatpush1.bf16.xpose.msra.mxu0 0
        %7340 = vmatprep.subr.bf16.mxu0 0
        %7341 = vmatpush1.bf16.xpose.msra.mxu0 0
        %7342 = vmatprep.mubr.bf16.mxu0 0
        %7343 = vmatmul.mubr.bf16.gmra.mrb[0].mxu0 %v7263
        %v7344 = vpop.f32.mrb[0].mxu0
        %v7345 = vadd.f32 %v7245, %v7344
        %v7346 = vpop.f32.mrb[0].mxu0
        %v7347 = vpop.f32.mrb[0].mxu0
        %v7348 = vadd.f32 %v7246, %v7347
        %v7349 = vpop.f32.mrb[0].mxu0
        %7350 = vmatprep.mubr.bf16.mxu0 0
        %7351 = vmatmul.mubr.bf16.gmra.mrb[0].mxu0 %v7266
        %v7352 = vpop.f32.mrb[0].mxu0
        %v7353 = vadd.f32 %v7247, %v7352
        %v7354 = vpop.f32.mrb[0].mxu0
        %v7355 = vpop.f32.mrb[0].mxu0
        %v7356 = vadd.f32 %v7248, %v7355
        %v7357 = vpop.f32.mrb[0].mxu0
        %7358 = vmatprep.mubr.bf16.mxu0 0
        %7359 = vmatmul.mubr.bf16.gmra.mrb[0].mxu0 %v7269
        %v7360 = vpop.f32.mrb[0].mxu0
        %v7361 = vadd.f32 %v7249, %v7360
        %v7362 = vpop.f32.mrb[0].mxu0
        %v7363 = vpop.f32.mrb[0].mxu0
        %v7364 = vadd.f32 %v7250, %v7363
        %v7365 = vpop.f32.mrb[0].mxu0
        %7366 = vmatprep.mubr.bf16.mxu0 0
        %7367 = vmatmul.mubr.bf16.gmra.mrb[0].mxu0 %v7272
        %v7368 = vpop.f32.mrb[0].mxu0
        %v7369 = vadd.f32 %v7251, %v7368
        %v7370 = vpop.f32.mrb[0].mxu0
        %v7371 = vpop.f32.mrb[0].mxu0
        %v7372 = vadd.f32 %v7252, %v7371
        %v7373 = vpop.f32.mrb[0].mxu0
        %7374 = vmatprep.mubr.bf16.mxu0 0
        %7375 = vmatmul.mubr.bf16.gmra.mrb[0].mxu0 %v7275
        %v7376 = vpop.f32.mrb[0].mxu0
        %v7377 = vadd.f32 %v7253, %v7376
        %v7378 = vpop.f32.mrb[0].mxu0
        %v7379 = vpop.f32.mrb[0].mxu0
        %v7380 = vadd.f32 %v7254, %v7379
        %v7381 = vpop.f32.mrb[0].mxu0
        %7382 = vmatprep.mubr.bf16.mxu0 0
        %7383 = vmatmul.mubr.bf16.gmra.mrb[0].mxu0 %v7278
        %v7384 = vpop.f32.mrb[0].mxu0
        %v7385 = vadd.f32 %v7255, %v7384
        %v7386 = vpop.f32.mrb[0].mxu0
        %v7387 = vpop.f32.mrb[0].mxu0
        %v7388 = vadd.f32 %v7256, %v7387
        %v7389 = vpop.f32.mrb[0].mxu0
        %7390 = vmatprep.mubr.bf16.mxu0 0
        %7391 = vmatmul.mubr.bf16.gmra.mrb[0].mxu0 %v7281
        %v7392 = vpop.f32.mrb[0].mxu0
        %v7393 = vadd.f32 %v7257, %v7392
        %v7394 = vpop.f32.mrb[0].mxu0
        %v7395 = vpop.f32.mrb[0].mxu0
        %v7396 = vadd.f32 %v7258, %v7395
        %v7397 = vpop.f32.mrb[0].mxu0
        %7398 = vmatprep.mubr.bf16.mxu0 0
        %7399 = vmatmul.mubr.bf16.gmra.mrb[0].mxu0 %v7284
        %v7400 = vpop.f32.mrb[0].mxu0
        %v7401 = vadd.f32 %v7259, %v7400
        %v7402 = vpop.f32.mrb[0].mxu0
        %v7403 = vpop.f32.mrb[0].mxu0
        %v7404 = vadd.f32 %v7260, %v7403
        %v7405 = vpop.f32.mrb[0].mxu0
        %7406 = vdwg.mxu0
        %7407 = vmax.xlane.f32.xlu0 %v7345
        %v7408 = vpop.xlane.xlu0 %7407
        %7409 = vmax.xlane.f32.xlu0 %v7348
        %v7410 = vpop.xlane.xlu0 %7409
        %7411 = vmax.xlane.f32.xlu0 %v7353
        %v7412 = vpop.xlane.xlu0 %7411
        %7413 = vmax.xlane.f32.xlu0 %v7356
        %v7414 = vpop.xlane.xlu0 %7413
        %7415 = vmax.xlane.f32.xlu0 %v7361
        %v7416 = vpop.xlane.xlu0 %7415
        %7417 = vmax.xlane.f32.xlu0 %v7364
        %v7418 = vpop.xlane.xlu0 %7417
        %7419 = vmax.xlane.f32.xlu0 %v7369
        %v7420 = vpop.xlane.xlu0 %7419
        %7421 = vmax.xlane.f32.xlu0 %v7372
        %v7422 = vpop.xlane.xlu0 %7421
        %7423 = vmax.xlane.f32.xlu0 %v7377
        %v7424 = vpop.xlane.xlu0 %7423
        %7425 = vmax.xlane.f32.xlu0 %v7380
        %v7426 = vpop.xlane.xlu0 %7425
        %7427 = vmax.xlane.f32.xlu0 %v7385
        %v7428 = vpop.xlane.xlu0 %7427
        %7429 = vmax.xlane.f32.xlu0 %v7388
        %v7430 = vpop.xlane.xlu0 %7429
        %7431 = vmax.xlane.f32.xlu0 %v7393
        %v7432 = vpop.xlane.xlu0 %7431
        %7433 = vmax.xlane.f32.xlu0 %v7396
        %v7434 = vpop.xlane.xlu0 %7433
        %7435 = vmax.xlane.f32.xlu0 %v7401
        %v7436 = vpop.xlane.xlu0 %7435
        %7437 = vmax.xlane.f32.xlu0 %v7404
        %v7438 = vpop.xlane.xlu0 %7437
        %v7439 = vsub.f32 %v7345, %v7408
        %v7440 = vsub.f32 %v7348, %v7410
        %v7441 = vsub.f32 %v7353, %v7412
        %v7442 = vsub.f32 %v7356, %v7414
        %v7443 = vsub.f32 %v7361, %v7416
        %v7444 = vsub.f32 %v7364, %v7418
        %v7445 = vsub.f32 %v7369, %v7420
        %v7446 = vsub.f32 %v7372, %v7422
        %v7447 = vsub.f32 %v7377, %v7424
        %v7448 = vsub.f32 %v7380, %v7426
        %v7449 = vsub.f32 %v7385, %v7428
        %v7450 = vsub.f32 %v7388, %v7430
        %v7451 = vsub.f32 %v7393, %v7432
        %v7452 = vsub.f32 %v7396, %v7434
        %v7453 = vsub.f32 %v7401, %v7436
        %v7454 = vsub.f32 %v7404, %v7438
        %v7455 = vmul.f32 %v7439, 1.442695
        %v7456 = vpow.pop %v7455
        %v7457 = vmul.f32 %v7440, 1.442695
        %v7458 = vpow.pop %v7457
        %v7459 = vmul.f32 %v7441, 1.442695
        %v7460 = vpow.pop %v7459
        %v7461 = vmul.f32 %v7442, 1.442695
        %v7462 = vpow.pop %v7461
        %v7463 = vmul.f32 %v7443, 1.442695
        %v7464 = vpow.pop %v7463
        %v7465 = vmul.f32 %v7444, 1.442695
        %v7466 = vpow.pop %v7465
        %v7467 = vmul.f32 %v7445, 1.442695
        %v7468 = vpow.pop %v7467
        %v7469 = vmul.f32 %v7446, 1.442695
        %v7470 = vpow.pop %v7469
        %v7471 = vmul.f32 %v7447, 1.442695
        %v7472 = vpow.pop %v7471
        %v7473 = vmul.f32 %v7448, 1.442695
        %v7474 = vpow.pop %v7473
        %v7475 = vmul.f32 %v7449, 1.442695
        %v7476 = vpow.pop %v7475
        %v7477 = vmul.f32 %v7450, 1.442695
        %v7478 = vpow.pop %v7477
        %v7479 = vmul.f32 %v7451, 1.442695
        %v7480 = vpow.pop %v7479
        %v7481 = vmul.f32 %v7452, 1.442695
        %v7482 = vpow.pop %v7481
        %v7483 = vmul.f32 %v7453, 1.442695
        %v7484 = vpow.pop %v7483
        %v7485 = vmul.f32 %v7454, 1.442695
        %v7486 = vpow.pop %v7485
        %7487 = vadd.xlane.f32.xlu0 %v7456
        %v7488 = vpop.xlane.xlu0 %7487
        %7489 = vadd.xlane.f32.xlu0 %v7458
        %v7490 = vpop.xlane.xlu0 %7489
        %7491 = vadd.xlane.f32.xlu0 %v7460
        %v7492 = vpop.xlane.xlu0 %7491
        %7493 = vadd.xlane.f32.xlu0 %v7462
        %v7494 = vpop.xlane.xlu0 %7493
        %7495 = vadd.xlane.f32.xlu0 %v7464
        %v7496 = vpop.xlane.xlu0 %7495
        %7497 = vadd.xlane.f32.xlu0 %v7466
        %v7498 = vpop.xlane.xlu0 %7497
        %7499 = vadd.xlane.f32.xlu0 %v7468
        %v7500 = vpop.xlane.xlu0 %7499
        %7501 = vadd.xlane.f32.xlu0 %v7470
        %v7502 = vpop.xlane.xlu0 %7501
        %7503 = vadd.xlane.f32.xlu0 %v7472
        %v7504 = vpop.xlane.xlu0 %7503
        %7505 = vadd.xlane.f32.xlu0 %v7474
        %v7506 = vpop.xlane.xlu0 %7505
        %7507 = vadd.xlane.f32.xlu0 %v7476
        %v7508 = vpop.xlane.xlu0 %7507
        %7509 = vadd.xlane.f32.xlu0 %v7478
        %v7510 = vpop.xlane.xlu0 %7509
        %7511 = vadd.xlane.f32.xlu0 %v7480
        %v7512 = vpop.xlane.xlu0 %7511
        %7513 = vadd.xlane.f32.xlu0 %v7482
        %v7514 = vpop.xlane.xlu0 %7513
        %7515 = vadd.xlane.f32.xlu0 %v7484
        %v7516 = vpop.xlane.xlu0 %7515
        %7517 = vadd.xlane.f32.xlu0 %v7486
        %v7518 = vpop.xlane.xlu0 %7517
        %v7519 = vrcp.pop %v7488
        %v7520 = vrcp.pop %v7490
        %v7521 = vrcp.pop %v7492
        %v7522 = vrcp.pop %v7494
        %v7523 = vrcp.pop %v7496
        %v7524 = vrcp.pop %v7498
        %v7525 = vrcp.pop %v7500
        %v7526 = vrcp.pop %v7502
        %v7527 = vrcp.pop %v7504
        %v7528 = vrcp.pop %v7506
        %v7529 = vrcp.pop %v7508
        %v7530 = vrcp.pop %v7510
        %v7531 = vrcp.pop %v7512
        %v7532 = vrcp.pop %v7514
        %v7533 = vrcp.pop %v7516
        %v7534 = vrcp.pop %v7518
        %v7535 = vmul.f32 %v7456, %v7519
        %v7536 = vmul.f32 %v7458, %v7520
        %v7537 = vmul.f32 %v7460, %v7521
        %v7538 = vmul.f32 %v7462, %v7522
        %v7539 = vmul.f32 %v7464, %v7523
        %v7540 = vmul.f32 %v7466, %v7524
        %v7541 = vmul.f32 %v7468, %v7525
        %v7542 = vmul.f32 %v7470, %v7526
        %v7543 = vmul.f32 %v7472, %v7527
        %v7544 = vmul.f32 %v7474, %v7528
        %v7545 = vmul.f32 %v7476, %v7529
        %v7546 = vmul.f32 %v7478, %v7530
        %v7547 = vmul.f32 %v7480, %v7531
        %v7548 = vmul.f32 %v7482, %v7532
        %v7549 = vmul.f32 %v7484, %v7533
        %v7550 = vmul.f32 %v7486, %v7534
        %v7551 = vpack.c.bf16 %v7536, %v7535
        %v7552 = vpack.c.bf16 %v7538, %v7537
        %v7553 = vpack.c.bf16 %v7540, %v7539
        %v7554 = vpack.c.bf16 %v7542, %v7541
        %v7555 = vpack.c.bf16 %v7544, %v7543
        %v7556 = vpack.c.bf16 %v7546, %v7545
        %v7557 = vpack.c.bf16 %v7548, %v7547
        %v7558 = vpack.c.bf16 %v7550, %v7549
        %7559 = vmatprep.subr.bf16.mxu0 0
        %7560 = vmatpush1.bf16.msra.mxu0 %v7221
        %7561 = vmatprep.subr.bf16.mxu0 0
        %7562 = vmatpush1.bf16.msra.mxu0 %v7222
        %7563 = vmatprep.subr.bf16.mxu0 0
        %7564 = vmatpush1.bf16.msra.mxu0 %v7223
        %7565 = vmatprep.subr.bf16.mxu0 0
        %7566 = vmatpush1.bf16.msra.mxu0 %v7224
        %7567 = vmatprep.subr.bf16.mxu0 0
        %7568 = vmatpush1.bf16.msra.mxu0 %v7225
        %7569 = vmatprep.subr.bf16.mxu0 0
        %7570 = vmatpush1.bf16.msra.mxu0 %v7226
        %7571 = vmatprep.subr.bf16.mxu0 0
        %7572 = vmatpush1.bf16.msra.mxu0 %v7227
        %7573 = vmatprep.subr.bf16.mxu0 0
        %7574 = vmatpush1.bf16.msra.mxu0 %v7228
        %7575 = vmatprep.subr.bf16.mxu0 0
        %7576 = vmatpush1.bf16.msra.mxu0 0
        %7577 = vmatprep.subr.bf16.mxu0 0
        %7578 = vmatpush1.bf16.msra.mxu0 0
        %7579 = vmatprep.subr.bf16.mxu0 0
        %7580 = vmatpush1.bf16.msra.mxu0 0
        %7581 = vmatprep.subr.bf16.mxu0 0
        %7582 = vmatpush1.bf16.msra.mxu0 0
        %7583 = vmatprep.subr.bf16.mxu0 0
        %7584 = vmatpush1.bf16.msra.mxu0 0
        %7585 = vmatprep.subr.bf16.mxu0 0
        %7586 = vmatpush1.bf16.msra.mxu0 0
        %7587 = vmatprep.subr.bf16.mxu0 0
        %7588 = vmatpush1.bf16.msra.mxu0 0
        %7589 = vmatprep.subr.bf16.mxu0 0
        %7590 = vmatpush1.bf16.msra.mxu0 0
        %7591 = vmatprep.mubr.bf16.mxu0 0
        %7592 = vmatmul.mubr.bf16.gmra.mrb[0].mxu0 %v7551
        %v7593 = vpop.f32.mrb[0].mxu0
        %v7594 = vadd.f32 0.0, %v7593
        %v7595 = vpop.f32.mrb[0].mxu0
        %v7596 = vpop.f32.mrb[0].mxu0
        %v7597 = vadd.f32 0.0, %v7596
        %v7598 = vpop.f32.mrb[0].mxu0
        %7599 = vmatprep.mubr.bf16.mxu0 0
        %7600 = vmatmul.mubr.bf16.gmra.mrb[0].mxu0 %v7552
        %v7601 = vpop.f32.mrb[0].mxu0
        %v7602 = vadd.f32 0.0, %v7601
        %v7603 = vpop.f32.mrb[0].mxu0
        %v7604 = vpop.f32.mrb[0].mxu0
        %v7605 = vadd.f32 0.0, %v7604
        %v7606 = vpop.f32.mrb[0].mxu0
        %7607 = vmatprep.mubr.bf16.mxu0 0
        %7608 = vmatmul.mubr.bf16.gmra.mrb[0].mxu0 %v7553
        %v7609 = vpop.f32.mrb[0].mxu0
        %v7610 = vadd.f32 0.0, %v7609
        %v7611 = vpop.f32.mrb[0].mxu0
        %v7612 = vpop.f32.mrb[0].mxu0
        %v7613 = vadd.f32 0.0, %v7612
        %v7614 = vpop.f32.mrb[0].mxu0
        %7615 = vmatprep.mubr.bf16.mxu0 0
        %7616 = vmatmul.mubr.bf16.gmra.mrb[0].mxu0 %v7554
        %v7617 = vpop.f32.mrb[0].mxu0
        %v7618 = vadd.f32 0.0, %v7617
        %v7619 = vpop.f32.mrb[0].mxu0
        %v7620 = vpop.f32.mrb[0].mxu0
        %v7621 = vadd.f32 0.0, %v7620
        %v7622 = vpop.f32.mrb[0].mxu0
        %7623 = vmatprep.mubr.bf16.mxu0 0
        %7624 = vmatmul.mubr.bf16.gmra.mrb[0].mxu0 %v7555
        %v7625 = vpop.f32.mrb[0].mxu0
        %v7626 = vadd.f32 0.0, %v7625
        %v7627 = vpop.f32.mrb[0].mxu0
        %v7628 = vpop.f32.mrb[0].mxu0
        %v7629 = vadd.f32 0.0, %v7628
        %v7630 = vpop.f32.mrb[0].mxu0
        %7631 = vmatprep.mubr.bf16.mxu0 0
        %7632 = vmatmul.mubr.bf16.gmra.mrb[0].mxu0 %v7556
        %v7633 = vpop.f32.mrb[0].mxu0
        %v7634 = vadd.f32 0.0, %v7633
        %v7635 = vpop.f32.mrb[0].mxu0
        %v7636 = vpop.f32.mrb[0].mxu0
        %v7637 = vadd.f32 0.0, %v7636
        %v7638 = vpop.f32.mrb[0].mxu0
        %7639 = vmatprep.mubr.bf16.mxu0 0
        %7640 = vmatmul.mubr.bf16.gmra.mrb[0].mxu0 %v7557
        %v7641 = vpop.f32.mrb[0].mxu0
        %v7642 = vadd.f32 0.0, %v7641
        %v7643 = vpop.f32.mrb[0].mxu0
        %v7644 = vpop.f32.mrb[0].mxu0
        %v7645 = vadd.f32 0.0, %v7644
        %v7646 = vpop.f32.mrb[0].mxu0
        %7647 = vmatprep.mubr.bf16.mxu0 0
        %7648 = vmatmul.mubr.bf16.gmra.mrb[0].mxu0 %v7558
        %v7649 = vpop.f32.mrb[0].mxu0
        %v7650 = vadd.f32 0.0, %v7649
        %v7651 = vpop.f32.mrb[0].mxu0
        %v7652 = vpop.f32.mrb[0].mxu0
        %v7653 = vadd.f32 0.0, %v7652
        %v7654 = vpop.f32.mrb[0].mxu0
        %7655 = vdwg.mxu0
        %v7656 = vpack.c.bf16 %v7597, %v7594
        %v7657 = vpack.c.bf16 %v7605, %v7602
        %v7658 = vpack.c.bf16 %v7613, %v7610
        %v7659 = vpack.c.bf16 %v7621, %v7618
        %v7660 = vpack.c.bf16 %v7629, %v7626
        %v7661 = vpack.c.bf16 %v7637, %v7634
        %v7662 = vpack.c.bf16 %v7645, %v7642
        %v7663 = vpack.c.bf16 %v7653, %v7650
        %7664 = vst.msk [vmem:[#allocation3] sm:$0xff] %vm7261, %v7656
        %7665 = vst.msk [vmem:[#allocation3 + $0x8] sm:$0xff] %vm7261, %v7657
        %7666 = vst.msk [vmem:[#allocation3 + $0x10] sm:$0xff] %vm7261, %v7658
        %7667 = vst.msk [vmem:[#allocation3 + $0x18] sm:$0xff] %vm7261, %v7659
        %7668 = vst.msk [vmem:[#allocation3 + $0x20] sm:$0xff] %vm7261, %v7660
        %7669 = vst.msk [vmem:[#allocation3 + $0x28] sm:$0xff] %vm7261, %v7661
        %7670 = vst.msk [vmem:[#allocation3 + $0x30] sm:$0xff] %vm7261, %v7662
        %7671 = vst.msk [vmem:[#allocation3 + $0x38] sm:$0xff] %vm7261, %v7663
        %s7672 = scalar_lea.vmem [#allocation27], 64
        %v7673 = vld [vmem:[%s7672] sm:$0xf]
        %v7674 = vld [vmem:[%s7672 + $0x4] sm:$0xf]
        %v7675 = vld [vmem:[%s7672 + $0x8] sm:$0xf]
        %v7676 = vld [vmem:[%s7672 + $0xc] sm:$0xf]
        %v7677 = vld [vmem:[%s7672 + $0x10] sm:$0xf]
        %v7678 = vld [vmem:[%s7672 + $0x14] sm:$0xf]
        %v7679 = vld [vmem:[%s7672 + $0x18] sm:$0xf]
        %v7680 = vld [vmem:[%s7672 + $0x1c] sm:$0xf]
        %v7681 = vld [vmem:[%s7672 + $0x20] sm:$0xf]
        %v7682 = vld [vmem:[%s7672 + $0x24] sm:$0xf]
        %v7683 = vld [vmem:[%s7672 + $0x28] sm:$0xf]
        %v7684 = vld [vmem:[%s7672 + $0x2c] sm:$0xf]
        %v7685 = vld [vmem:[%s7672 + $0x30] sm:$0xf]
        %v7686 = vld [vmem:[%s7672 + $0x34] sm:$0xf]
        %v7687 = vld [vmem:[%s7672 + $0x38] sm:$0xf]
        %v7688 = vld [vmem:[%s7672 + $0x3c] sm:$0xf]
        %v7689 = vunpack.c.l.bf16 %v7673
        %v7690 = vunpack.c.l.bf16 %v7674
        %v7691 = vunpack.c.l.bf16 %v7675
        %v7692 = vunpack.c.l.bf16 %v7676
        %v7693 = vunpack.c.l.bf16 %v7677
        %v7694 = vunpack.c.l.bf16 %v7678
        %v7695 = vunpack.c.l.bf16 %v7679
        %v7696 = vunpack.c.l.bf16 %v7680
        %v7697 = vunpack.c.l.bf16 %v7681
        %v7698 = vunpack.c.l.bf16 %v7682
        %v7699 = vunpack.c.l.bf16 %v7683
        %v7700 = vunpack.c.l.bf16 %v7684
        %v7701 = vunpack.c.l.bf16 %v7685
        %v7702 = vunpack.c.l.bf16 %v7686
        %v7703 = vunpack.c.l.bf16 %v7687
        %v7704 = vunpack.c.l.bf16 %v7688
        %7713 = vrot.lane.b32.xlu0 %v7205, 96
        %v7714 = vpop.permute.xlu0 %7713
        %7715 = vrot.lane.b32.xlu0 %v7206, 96
        %v7716 = vpop.permute.xlu0 %7715
        %7717 = vrot.lane.b32.xlu0 %v7207, 96
        %v7718 = vpop.permute.xlu0 %7717
        %7719 = vrot.lane.b32.xlu0 %v7208, 96
        %v7720 = vpop.permute.xlu0 %7719
        %7721 = vrot.lane.b32.xlu0 %v7209, 96
        %v7722 = vpop.permute.xlu0 %7721
        %7723 = vrot.lane.b32.xlu0 %v7210, 96
        %v7724 = vpop.permute.xlu0 %7723
        %7725 = vrot.lane.b32.xlu0 %v7211, 96
        %v7726 = vpop.permute.xlu0 %7725
        %7727 = vrot.lane.b32.xlu0 %v7212, 96
        %v7728 = vpop.permute.xlu0 %7727
        %7737 = vrot.lane.b32.xlu0 %v7213, 96
        %v7738 = vpop.permute.xlu0 %7737
        %7739 = vrot.lane.b32.xlu0 %v7214, 96
        %v7740 = vpop.permute.xlu0 %7739
        %7741 = vrot.lane.b32.xlu0 %v7215, 96
        %v7742 = vpop.permute.xlu0 %7741
        %7743 = vrot.lane.b32.xlu0 %v7216, 96
        %v7744 = vpop.permute.xlu0 %7743
        %7745 = vrot.lane.b32.xlu0 %v7217, 96
        %v7746 = vpop.permute.xlu0 %7745
        %7747 = vrot.lane.b32.xlu0 %v7218, 96
        %v7748 = vpop.permute.xlu0 %7747
        %7749 = vrot.lane.b32.xlu0 %v7219, 96
        %v7750 = vpop.permute.xlu0 %7749
        %7751 = vrot.lane.b32.xlu0 %v7220, 96
        %v7752 = vpop.permute.xlu0 %7751
        %v7754 = vsel %vm7261, %v7714, 0
        %v7757 = vsel %vm7261, %v7716, 0
        %v7760 = vsel %vm7261, %v7718, 0
        %v7763 = vsel %vm7261, %v7720, 0
        %v7766 = vsel %vm7261, %v7722, 0
        %v7769 = vsel %vm7261, %v7724, 0
        %v7772 = vsel %vm7261, %v7726, 0
        %v7775 = vsel %vm7261, %v7728, 0
        %v7778 = vsel %vm7261, %v7738, 0
        %v7781 = vsel %vm7261, %v7740, 0
        %v7784 = vsel %vm7261, %v7742, 0
        %v7787 = vsel %vm7261, %v7744, 0
        %v7790 = vsel %vm7261, %v7746, 0
        %v7793 = vsel %vm7261, %v7748, 0
        %v7796 = vsel %vm7261, %v7750, 0
        %v7799 = vsel %vm7261, %v7752, 0
        %7801 = vmatprep.subr.bf16.mxu0 0
        %7802 = vmatpush1.bf16.xpose.msra.mxu0 %v7778
        %7803 = vmatprep.subr.bf16.mxu0 0
        %7804 = vmatpush1.bf16.xpose.msra.mxu0 %v7781
        %7805 = vmatprep.subr.bf16.mxu0 0
        %7806 = vmatpush1.bf16.xpose.msra.mxu0 %v7784
        %7807 = vmatprep.subr.bf16.mxu0 0
        %7808 = vmatpush1.bf16.xpose.msra.mxu0 %v7787
        %7809 = vmatprep.subr.bf16.mxu0 0
        %7810 = vmatpush1.bf16.xpose.msra.mxu0 %v7790
        %7811 = vmatprep.subr.bf16.mxu0 0
        %7812 = vmatpush1.bf16.xpose.msra.mxu0 %v7793
        %7813 = vmatprep.subr.bf16.mxu0 0
        %7814 = vmatpush1.bf16.xpose.msra.mxu0 %v7796
        %7815 = vmatprep.subr.bf16.mxu0 0
        %7816 = vmatpush1.bf16.xpose.msra.mxu0 %v7799
        %7817 = vmatprep.subr.bf16.mxu0 0
        %7818 = vmatpush1.bf16.xpose.msra.mxu0 0
        %7819 = vmatprep.subr.bf16.mxu0 0
        %7820 = vmatpush1.bf16.xpose.msra.mxu0 0
        %7821 = vmatprep.subr.bf16.mxu0 0
        %7822 = vmatpush1.bf16.xpose.msra.mxu0 0
        %7823 = vmatprep.subr.bf16.mxu0 0
        %7824 = vmatpush1.bf16.xpose.msra.mxu0 0
        %7825 = vmatprep.subr.bf16.mxu0 0
        %7826 = vmatpush1.bf16.xpose.msra.mxu0 0
        %7827 = vmatprep.subr.bf16.mxu0 0
        %7828 = vmatpush1.bf16.xpose.msra.mxu0 0
        %7829 = vmatprep.subr.bf16.mxu0 0
        %7830 = vmatpush1.bf16.xpose.msra.mxu0 0
        %7831 = vmatprep.subr.bf16.mxu0 0
        %7832 = vmatpush1.bf16.xpose.msra.mxu0 0
        %7833 = vmatprep.mubr.bf16.mxu0 0
        %7834 = vmatmul.mubr.bf16.gmra.mrb[0].mxu0 %v7754
        %v7835 = vpop.f32.mrb[0].mxu0
        %v7836 = vadd.f32 %v7689, %v7835
        %v7837 = vpop.f32.mrb[0].mxu0
        %v7838 = vpop.f32.mrb[0].mxu0
        %v7839 = vadd.f32 %v7690, %v7838
        %v7840 = vpop.f32.mrb[0].mxu0
        %7841 = vmatprep.mubr.bf16.mxu0 0
        %7842 = vmatmul.mubr.bf16.gmra.mrb[0].mxu0 %v7757
        %v7843 = vpop.f32.mrb[0].mxu0
        %v7844 = vadd.f32 %v7691, %v7843
        %v7845 = vpop.f32.mrb[0].mxu0
        %v7846 = vpop.f32.mrb[0].mxu0
        %v7847 = vadd.f32 %v7692, %v7846
        %v7848 = vpop.f32.mrb[0].mxu0
        %7849 = vmatprep.mubr.bf16.mxu0 0
        %7850 = vmatmul.mubr.bf16.gmra.mrb[0].mxu0 %v7760
        %v7851 = vpop.f32.mrb[0].mxu0
        %v7852 = vadd.f32 %v7693, %v7851
        %v7853 = vpop.f32.mrb[0].mxu0
        %v7854 = vpop.f32.mrb[0].mxu0
        %v7855 = vadd.f32 %v7694, %v7854
        %v7856 = vpop.f32.mrb[0].mxu0
        %7857 = vmatprep.mubr.bf16.mxu0 0
        %7858 = vmatmul.mubr.bf16.gmra.mrb[0].mxu0 %v7763
        %v7859 = vpop.f32.mrb[0].mxu0
        %v7860 = vadd.f32 %v7695, %v7859
        %v7861 = vpop.f32.mrb[0].mxu0
        %v7862 = vpop.f32.mrb[0].mxu0
        %v7863 = vadd.f32 %v7696, %v7862
        %v7864 = vpop.f32.mrb[0].mxu0
        %7865 = vmatprep.mubr.bf16.mxu0 0
        %7866 = vmatmul.mubr.bf16.gmra.mrb[0].mxu0 %v7766
        %v7867 = vpop.f32.mrb[0].mxu0
        %v7868 = vadd.f32 %v7697, %v7867
        %v7869 = vpop.f32.mrb[0].mxu0
        %v7870 = vpop.f32.mrb[0].mxu0
        %v7871 = vadd.f32 %v7698, %v7870
        %v7872 = vpop.f32.mrb[0].mxu0
        %7873 = vmatprep.mubr.bf16.mxu0 0
        %7874 = vmatmul.mubr.bf16.gmra.mrb[0].mxu0 %v7769
        %v7875 = vpop.f32.mrb[0].mxu0
        %v7876 = vadd.f32 %v7699, %v7875
        %v7877 = vpop.f32.mrb[0].mxu0
        %v7878 = vpop.f32.mrb[0].mxu0
        %v7879 = vadd.f32 %v7700, %v7878
        %v7880 = vpop.f32.mrb[0].mxu0
        %7881 = vmatprep.mubr.bf16.mxu0 0
        %7882 = vmatmul.mubr.bf16.gmra.mrb[0].mxu0 %v7772
        %v7883 = vpop.f32.mrb[0].mxu0
        %v7884 = vadd.f32 %v7701, %v7883
        %v7885 = vpop.f32.mrb[0].mxu0
        %v7886 = vpop.f32.mrb[0].mxu0
        %v7887 = vadd.f32 %v7702, %v7886
        %v7888 = vpop.f32.mrb[0].mxu0
        %7889 = vmatprep.mubr.bf16.mxu0 0
        %7890 = vmatmul.mubr.bf16.gmra.mrb[0].mxu0 %v7775
        %v7891 = vpop.f32.mrb[0].mxu0
        %v7892 = vadd.f32 %v7703, %v7891
        %v7893 = vpop.f32.mrb[0].mxu0
        %v7894 = vpop.f32.mrb[0].mxu0
        %v7895 = vadd.f32 %v7704, %v7894
        %v7896 = vpop.f32.mrb[0].mxu0
        %7897 = vdwg.mxu0
        %7898 = vmax.xlane.f32.xlu0 %v7836
        %v7899 = vpop.xlane.xlu0 %7898
        %7900 = vmax.xlane.f32.xlu0 %v7839
        %v7901 = vpop.xlane.xlu0 %7900
        %7902 = vmax.xlane.f32.xlu0 %v7844
        %v7903 = vpop.xlane.xlu0 %7902
        %7904 = vmax.xlane.f32.xlu0 %v7847
        %v7905 = vpop.xlane.xlu0 %7904
        %7906 = vmax.xlane.f32.xlu0 %v7852
        %v7907 = vpop.xlane.xlu0 %7906
        %7908 = vmax.xlane.f32.xlu0 %v7855
        %v7909 = vpop.xlane.xlu0 %7908
        %7910 = vmax.xlane.f32.xlu0 %v7860
        %v7911 = vpop.xlane.xlu0 %7910
        %7912 = vmax.xlane.f32.xlu0 %v7863
        %v7913 = vpop.xlane.xlu0 %7912
        %7914 = vmax.xlane.f32.xlu0 %v7868
        %v7915 = vpop.xlane.xlu0 %7914
        %7916 = vmax.xlane.f32.xlu0 %v7871
        %v7917 = vpop.xlane.xlu0 %7916
        %7918 = vmax.xlane.f32.xlu0 %v7876
        %v7919 = vpop.xlane.xlu0 %7918
        %7920 = vmax.xlane.f32.xlu0 %v7879
        %v7921 = vpop.xlane.xlu0 %7920
        %7922 = vmax.xlane.f32.xlu0 %v7884
        %v7923 = vpop.xlane.xlu0 %7922
        %7924 = vmax.xlane.f32.xlu0 %v7887
        %v7925 = vpop.xlane.xlu0 %7924
        %7926 = vmax.xlane.f32.xlu0 %v7892
        %v7927 = vpop.xlane.xlu0 %7926
        %7928 = vmax.xlane.f32.xlu0 %v7895
        %v7929 = vpop.xlane.xlu0 %7928
        %v7930 = vsub.f32 %v7836, %v7899
        %v7931 = vsub.f32 %v7839, %v7901
        %v7932 = vsub.f32 %v7844, %v7903
        %v7933 = vsub.f32 %v7847, %v7905
        %v7934 = vsub.f32 %v7852, %v7907
        %v7935 = vsub.f32 %v7855, %v7909
        %v7936 = vsub.f32 %v7860, %v7911
        %v7937 = vsub.f32 %v7863, %v7913
        %v7938 = vsub.f32 %v7868, %v7915
        %v7939 = vsub.f32 %v7871, %v7917
        %v7940 = vsub.f32 %v7876, %v7919
        %v7941 = vsub.f32 %v7879, %v7921
        %v7942 = vsub.f32 %v7884, %v7923
        %v7943 = vsub.f32 %v7887, %v7925
        %v7944 = vsub.f32 %v7892, %v7927
        %v7945 = vsub.f32 %v7895, %v7929
        %v7946 = vmul.f32 %v7930, 1.442695
        %v7947 = vpow.pop %v7946
        %v7948 = vmul.f32 %v7931, 1.442695
        %v7949 = vpow.pop %v7948
        %v7950 = vmul.f32 %v7932, 1.442695
        %v7951 = vpow.pop %v7950
        %v7952 = vmul.f32 %v7933, 1.442695
        %v7953 = vpow.pop %v7952
        %v7954 = vmul.f32 %v7934, 1.442695
        %v7955 = vpow.pop %v7954
        %v7956 = vmul.f32 %v7935, 1.442695
        %v7957 = vpow.pop %v7956
        %v7958 = vmul.f32 %v7936, 1.442695
        %v7959 = vpow.pop %v7958
        %v7960 = vmul.f32 %v7937, 1.442695
        %v7961 = vpow.pop %v7960
        %v7962 = vmul.f32 %v7938, 1.442695
        %v7963 = vpow.pop %v7962
        %v7964 = vmul.f32 %v7939, 1.442695
        %v7965 = vpow.pop %v7964
        %v7966 = vmul.f32 %v7940, 1.442695
        %v7967 = vpow.pop %v7966
        %v7968 = vmul.f32 %v7941, 1.442695
        %v7969 = vpow.pop %v7968
        %v7970 = vmul.f32 %v7942, 1.442695
        %v7971 = vpow.pop %v7970
        %v7972 = vmul.f32 %v7943, 1.442695
        %v7973 = vpow.pop %v7972
        %v7974 = vmul.f32 %v7944, 1.442695
        %v7975 = vpow.pop %v7974
        %v7976 = vmul.f32 %v7945, 1.442695
        %v7977 = vpow.pop %v7976
        %7978 = vadd.xlane.f32.xlu0 %v7947
        %v7979 = vpop.xlane.xlu0 %7978
        %7980 = vadd.xlane.f32.xlu0 %v7949
        %v7981 = vpop.xlane.xlu0 %7980
        %7982 = vadd.xlane.f32.xlu0 %v7951
        %v7983 = vpop.xlane.xlu0 %7982
        %7984 = vadd.xlane.f32.xlu0 %v7953
        %v7985 = vpop.xlane.xlu0 %7984
        %7986 = vadd.xlane.f32.xlu0 %v7955
        %v7987 = vpop.xlane.xlu0 %7986
        %7988 = vadd.xlane.f32.xlu0 %v7957
        %v7989 = vpop.xlane.xlu0 %7988
        %7990 = vadd.xlane.f32.xlu0 %v7959
        %v7991 = vpop.xlane.xlu0 %7990
        %7992 = vadd.xlane.f32.xlu0 %v7961
        %v7993 = vpop.xlane.xlu0 %7992
        %7994 = vadd.xlane.f32.xlu0 %v7963
        %v7995 = vpop.xlane.xlu0 %7994
        %7996 = vadd.xlane.f32.xlu0 %v7965
        %v7997 = vpop.xlane.xlu0 %7996
        %7998 = vadd.xlane.f32.xlu0 %v7967
        %v7999 = vpop.xlane.xlu0 %7998
        %8000 = vadd.xlane.f32.xlu0 %v7969
        %v8001 = vpop.xlane.xlu0 %8000
        %8002 = vadd.xlane.f32.xlu0 %v7971
        %v8003 = vpop.xlane.xlu0 %8002
        %8004 = vadd.xlane.f32.xlu0 %v7973
        %v8005 = vpop.xlane.xlu0 %8004
        %8006 = vadd.xlane.f32.xlu0 %v7975
        %v8007 = vpop.xlane.xlu0 %8006
        %8008 = vadd.xlane.f32.xlu0 %v7977
        %v8009 = vpop.xlane.xlu0 %8008
        %v8010 = vrcp.pop %v7979
        %v8011 = vrcp.pop %v7981
        %v8012 = vrcp.pop %v7983
        %v8013 = vrcp.pop %v7985
        %v8014 = vrcp.pop %v7987
        %v8015 = vrcp.pop %v7989
        %v8016 = vrcp.pop %v7991
        %v8017 = vrcp.pop %v7993
        %v8018 = vrcp.pop %v7995
        %v8019 = vrcp.pop %v7997
        %v8020 = vrcp.pop %v7999
        %v8021 = vrcp.pop %v8001
        %v8022 = vrcp.pop %v8003
        %v8023 = vrcp.pop %v8005
        %v8024 = vrcp.pop %v8007
        %v8025 = vrcp.pop %v8009
        %v8026 = vmul.f32 %v7947, %v8010
        %v8027 = vmul.f32 %v7949, %v8011
        %v8028 = vmul.f32 %v7951, %v8012
        %v8029 = vmul.f32 %v7953, %v8013
        %v8030 = vmul.f32 %v7955, %v8014
        %v8031 = vmul.f32 %v7957, %v8015
        %v8032 = vmul.f32 %v7959, %v8016
        %v8033 = vmul.f32 %v7961, %v8017
        %v8034 = vmul.f32 %v7963, %v8018
        %v8035 = vmul.f32 %v7965, %v8019
        %v8036 = vmul.f32 %v7967, %v8020
        %v8037 = vmul.f32 %v7969, %v8021
        %v8038 = vmul.f32 %v7971, %v8022
        %v8039 = vmul.f32 %v7973, %v8023
        %v8040 = vmul.f32 %v7975, %v8024
        %v8041 = vmul.f32 %v7977, %v8025
        %v8042 = vpack.c.bf16 %v8027, %v8026
        %v8043 = vpack.c.bf16 %v8029, %v8028
        %v8044 = vpack.c.bf16 %v8031, %v8030
        %v8045 = vpack.c.bf16 %v8033, %v8032
        %v8046 = vpack.c.bf16 %v8035, %v8034
        %v8047 = vpack.c.bf16 %v8037, %v8036
        %v8048 = vpack.c.bf16 %v8039, %v8038
        %v8049 = vpack.c.bf16 %v8041, %v8040
        %8058 = vrot.lane.b32.xlu0 %v7221, 96
        %v8059 = vpop.permute.xlu0 %8058
        %8060 = vrot.lane.b32.xlu0 %v7222, 96
        %v8061 = vpop.permute.xlu0 %8060
        %8062 = vrot.lane.b32.xlu0 %v7223, 96
        %v8063 = vpop.permute.xlu0 %8062
        %8064 = vrot.lane.b32.xlu0 %v7224, 96
        %v8065 = vpop.permute.xlu0 %8064
        %8066 = vrot.lane.b32.xlu0 %v7225, 96
        %v8067 = vpop.permute.xlu0 %8066
        %8068 = vrot.lane.b32.xlu0 %v7226, 96
        %v8069 = vpop.permute.xlu0 %8068
        %8070 = vrot.lane.b32.xlu0 %v7227, 96
        %v8071 = vpop.permute.xlu0 %8070
        %8072 = vrot.lane.b32.xlu0 %v7228, 96
        %v8073 = vpop.permute.xlu0 %8072
        %8082 = vmatprep.subr.bf16.mxu0 0
        %8083 = vmatpush1.bf16.msra.mxu0 %v8059
        %8084 = vmatprep.subr.bf16.mxu0 0
        %8085 = vmatpush1.bf16.msra.mxu0 %v8061
        %8086 = vmatprep.subr.bf16.mxu0 0
        %8087 = vmatpush1.bf16.msra.mxu0 %v8063
        %8088 = vmatprep.subr.bf16.mxu0 0
        %8089 = vmatpush1.bf16.msra.mxu0 %v8065
        %8090 = vmatprep.subr.bf16.mxu0 0
        %8091 = vmatpush1.bf16.msra.mxu0 %v8067
        %8092 = vmatprep.subr.bf16.mxu0 0
        %8093 = vmatpush1.bf16.msra.mxu0 %v8069
        %8094 = vmatprep.subr.bf16.mxu0 0
        %8095 = vmatpush1.bf16.msra.mxu0 %v8071
        %8096 = vmatprep.subr.bf16.mxu0 0
        %8097 = vmatpush1.bf16.msra.mxu0 %v8073
        %8098 = vmatprep.subr.bf16.mxu0 0
        %8099 = vmatpush1.bf16.msra.mxu0 0
        %8100 = vmatprep.subr.bf16.mxu0 0
        %8101 = vmatpush1.bf16.msra.mxu0 0
        %8102 = vmatprep.subr.bf16.mxu0 0
        %8103 = vmatpush1.bf16.msra.mxu0 0
        %8104 = vmatprep.subr.bf16.mxu0 0
        %8105 = vmatpush1.bf16.msra.mxu0 0
        %8106 = vmatprep.subr.bf16.mxu0 0
        %8107 = vmatpush1.bf16.msra.mxu0 0
        %8108 = vmatprep.subr.bf16.mxu0 0
        %8109 = vmatpush1.bf16.msra.mxu0 0
        %8110 = vmatprep.subr.bf16.mxu0 0
        %8111 = vmatpush1.bf16.msra.mxu0 0
        %8112 = vmatprep.subr.bf16.mxu0 0
        %8113 = vmatpush1.bf16.msra.mxu0 0
        %8114 = vmatprep.mubr.bf16.mxu0 0
        %8115 = vmatmul.mubr.bf16.gmra.mrb[0].mxu0 %v8042
        %v8116 = vpop.f32.mrb[0].mxu0
        %v8117 = vadd.f32 0.0, %v8116
        %v8118 = vpop.f32.mrb[0].mxu0
        %v8119 = vpop.f32.mrb[0].mxu0
        %v8120 = vadd.f32 0.0, %v8119
        %v8121 = vpop.f32.mrb[0].mxu0
        %8122 = vmatprep.mubr.bf16.mxu0 0
        %8123 = vmatmul.mubr.bf16.gmra.mrb[0].mxu0 %v8043
        %v8124 = vpop.f32.mrb[0].mxu0
        %v8125 = vadd.f32 0.0, %v8124
        %v8126 = vpop.f32.mrb[0].mxu0
        %v8127 = vpop.f32.mrb[0].mxu0
        %v8128 = vadd.f32 0.0, %v8127
        %v8129 = vpop.f32.mrb[0].mxu0
        %8130 = vmatprep.mubr.bf16.mxu0 0
        %8131 = vmatmul.mubr.bf16.gmra.mrb[0].mxu0 %v8044
        %v8132 = vpop.f32.mrb[0].mxu0
        %v8133 = vadd.f32 0.0, %v8132
        %v8134 = vpop.f32.mrb[0].mxu0
        %v8135 = vpop.f32.mrb[0].mxu0
        %v8136 = vadd.f32 0.0, %v8135
        %v8137 = vpop.f32.mrb[0].mxu0
        %8138 = vmatprep.mubr.bf16.mxu0 0
        %8139 = vmatmul.mubr.bf16.gmra.mrb[0].mxu0 %v8045
        %v8140 = vpop.f32.mrb[0].mxu0
        %v8141 = vadd.f32 0.0, %v8140
        %v8142 = vpop.f32.mrb[0].mxu0
        %v8143 = vpop.f32.mrb[0].mxu0
        %v8144 = vadd.f32 0.0, %v8143
        %v8145 = vpop.f32.mrb[0].mxu0
        %8146 = vmatprep.mubr.bf16.mxu0 0
        %8147 = vmatmul.mubr.bf16.gmra.mrb[0].mxu0 %v8046
        %v8148 = vpop.f32.mrb[0].mxu0
        %v8149 = vadd.f32 0.0, %v8148
        %v8150 = vpop.f32.mrb[0].mxu0
        %v8151 = vpop.f32.mrb[0].mxu0
        %v8152 = vadd.f32 0.0, %v8151
        %v8153 = vpop.f32.mrb[0].mxu0
        %8154 = vmatprep.mubr.bf16.mxu0 0
        %8155 = vmatmul.mubr.bf16.gmra.mrb[0].mxu0 %v8047
        %v8156 = vpop.f32.mrb[0].mxu0
        %v8157 = vadd.f32 0.0, %v8156
        %v8158 = vpop.f32.mrb[0].mxu0
        %v8159 = vpop.f32.mrb[0].mxu0
        %v8160 = vadd.f32 0.0, %v8159
        %v8161 = vpop.f32.mrb[0].mxu0
        %8162 = vmatprep.mubr.bf16.mxu0 0
        %8163 = vmatmul.mubr.bf16.gmra.mrb[0].mxu0 %v8048
        %v8164 = vpop.f32.mrb[0].mxu0
        %v8165 = vadd.f32 0.0, %v8164
        %v8166 = vpop.f32.mrb[0].mxu0
        %v8167 = vpop.f32.mrb[0].mxu0
        %v8168 = vadd.f32 0.0, %v8167
        %v8169 = vpop.f32.mrb[0].mxu0
        %8170 = vmatprep.mubr.bf16.mxu0 0
        %8171 = vmatmul.mubr.bf16.gmra.mrb[0].mxu0 %v8049
        %v8172 = vpop.f32.mrb[0].mxu0
        %v8173 = vadd.f32 0.0, %v8172
        %v8174 = vpop.f32.mrb[0].mxu0
        %v8175 = vpop.f32.mrb[0].mxu0
        %v8176 = vadd.f32 0.0, %v8175
        %v8177 = vpop.f32.mrb[0].mxu0
        %8178 = vdwg.mxu0
        %v8179 = vpack.c.bf16 %v8120, %v8117
        %v8180 = vpack.c.bf16 %v8128, %v8125
        %v8181 = vpack.c.bf16 %v8136, %v8133
        %v8182 = vpack.c.bf16 %v8144, %v8141
        %v8183 = vpack.c.bf16 %v8152, %v8149
        %v8184 = vpack.c.bf16 %v8160, %v8157
        %v8185 = vpack.c.bf16 %v8168, %v8165
        %v8186 = vpack.c.bf16 %v8176, %v8173
        %8195 = vrot.lane.b32.xlu0 %v8179, 32
        %v8196 = vpop.permute.xlu0 %8195
        %8197 = vrot.lane.b32.xlu0 %v8180, 32
        %v8198 = vpop.permute.xlu0 %8197
        %8199 = vrot.lane.b32.xlu0 %v8181, 32
        %v8200 = vpop.permute.xlu0 %8199
        %8201 = vrot.lane.b32.xlu0 %v8182, 32
        %v8202 = vpop.permute.xlu0 %8201
        %8203 = vrot.lane.b32.xlu0 %v8183, 32
        %v8204 = vpop.permute.xlu0 %8203
        %8205 = vrot.lane.b32.xlu0 %v8184, 32
        %v8206 = vpop.permute.xlu0 %8205
        %8207 = vrot.lane.b32.xlu0 %v8185, 32
        %v8208 = vpop.permute.xlu0 %8207
        %8209 = vrot.lane.b32.xlu0 %v8186, 32
        %v8210 = vpop.permute.xlu0 %8209
        %vm8219 = vcmask 523520
        %8220 = vst.msk [vmem:[#allocation3] sm:$0xff] %vm8219, %v8196
        %8221 = vst.msk [vmem:[#allocation3 + $0x8] sm:$0xff] %vm8219, %v8198
        %8222 = vst.msk [vmem:[#allocation3 + $0x10] sm:$0xff] %vm8219, %v8200
        %8223 = vst.msk [vmem:[#allocation3 + $0x18] sm:$0xff] %vm8219, %v8202
        %8224 = vst.msk [vmem:[#allocation3 + $0x20] sm:$0xff] %vm8219, %v8204
        %8225 = vst.msk [vmem:[#allocation3 + $0x28] sm:$0xff] %vm8219, %v8206
        %8226 = vst.msk [vmem:[#allocation3 + $0x30] sm:$0xff] %vm8219, %v8208
        %8227 = vst.msk [vmem:[#allocation3 + $0x38] sm:$0xff] %vm8219, %v8210
        %s8228 = scalar_lea.vmem [#allocation27], 128
        %v8229 = vld [vmem:[%s8228] sm:$0xf]
        %v8230 = vld [vmem:[%s8228 + $0x4] sm:$0xf]
        %v8231 = vld [vmem:[%s8228 + $0x8] sm:$0xf]
        %v8232 = vld [vmem:[%s8228 + $0xc] sm:$0xf]
        %v8233 = vld [vmem:[%s8228 + $0x10] sm:$0xf]
        %v8234 = vld [vmem:[%s8228 + $0x14] sm:$0xf]
        %v8235 = vld [vmem:[%s8228 + $0x18] sm:$0xf]
        %v8236 = vld [vmem:[%s8228 + $0x1c] sm:$0xf]
        %v8237 = vld [vmem:[%s8228 + $0x20] sm:$0xf]
        %v8238 = vld [vmem:[%s8228 + $0x24] sm:$0xf]
        %v8239 = vld [vmem:[%s8228 + $0x28] sm:$0xf]
        %v8240 = vld [vmem:[%s8228 + $0x2c] sm:$0xf]
        %v8241 = vld [vmem:[%s8228 + $0x30] sm:$0xf]
        %v8242 = vld [vmem:[%s8228 + $0x34] sm:$0xf]
        %v8243 = vld [vmem:[%s8228 + $0x38] sm:$0xf]
        %v8244 = vld [vmem:[%s8228 + $0x3c] sm:$0xf]
        %v8245 = vunpack.c.l.bf16 %v8229
        %v8246 = vunpack.c.l.bf16 %v8230
        %v8247 = vunpack.c.l.bf16 %v8231
        %v8248 = vunpack.c.l.bf16 %v8232
        %v8249 = vunpack.c.l.bf16 %v8233
        %v8250 = vunpack.c.l.bf16 %v8234
        %v8251 = vunpack.c.l.bf16 %v8235
        %v8252 = vunpack.c.l.bf16 %v8236
        %v8253 = vunpack.c.l.bf16 %v8237
        %v8254 = vunpack.c.l.bf16 %v8238
        %v8255 = vunpack.c.l.bf16 %v8239
        %v8256 = vunpack.c.l.bf16 %v8240
        %v8257 = vunpack.c.l.bf16 %v8241
        %v8258 = vunpack.c.l.bf16 %v8242
        %v8259 = vunpack.c.l.bf16 %v8243
        %v8260 = vunpack.c.l.bf16 %v8244
        %8261 = vrot.lane.b32.xlu0 %v7205, 64
        %v8262 = vpop.permute.xlu0 %8261
        %8263 = vrot.lane.b32.xlu0 %v7206, 64
        %v8264 = vpop.permute.xlu0 %8263
        %8265 = vrot.lane.b32.xlu0 %v7207, 64
        %v8266 = vpop.permute.xlu0 %8265
        %8267 = vrot.lane.b32.xlu0 %v7208, 64
        %v8268 = vpop.permute.xlu0 %8267
        %8269 = vrot.lane.b32.xlu0 %v7209, 64
        %v8270 = vpop.permute.xlu0 %8269
        %8271 = vrot.lane.b32.xlu0 %v7210, 64
        %v8272 = vpop.permute.xlu0 %8271
        %8273 = vrot.lane.b32.xlu0 %v7211, 64
        %v8274 = vpop.permute.xlu0 %8273
        %8275 = vrot.lane.b32.xlu0 %v7212, 64
        %v8276 = vpop.permute.xlu0 %8275
        %8277 = vrot.lane.b32.xlu0 %v7213, 64
        %v8278 = vpop.permute.xlu0 %8277
        %8279 = vrot.lane.b32.xlu0 %v7214, 64
        %v8280 = vpop.permute.xlu0 %8279
        %8281 = vrot.lane.b32.xlu0 %v7215, 64
        %v8282 = vpop.permute.xlu0 %8281
        %8283 = vrot.lane.b32.xlu0 %v7216, 64
        %v8284 = vpop.permute.xlu0 %8283
        %8285 = vrot.lane.b32.xlu0 %v7217, 64
        %v8286 = vpop.permute.xlu0 %8285
        %8287 = vrot.lane.b32.xlu0 %v7218, 64
        %v8288 = vpop.permute.xlu0 %8287
        %8289 = vrot.lane.b32.xlu0 %v7219, 64
        %v8290 = vpop.permute.xlu0 %8289
        %8291 = vrot.lane.b32.xlu0 %v7220, 64
        %v8292 = vpop.permute.xlu0 %8291
        %v8294 = vsel %vm7261, %v8262, 0
        %v8297 = vsel %vm7261, %v8264, 0
        %v8300 = vsel %vm7261, %v8266, 0
        %v8303 = vsel %vm7261, %v8268, 0
        %v8306 = vsel %vm7261, %v8270, 0
        %v8309 = vsel %vm7261, %v8272, 0
        %v8312 = vsel %vm7261, %v8274, 0
        %v8315 = vsel %vm7261, %v8276, 0
        %v8318 = vsel %vm7261, %v8278, 0
        %v8321 = vsel %vm7261, %v8280, 0
        %v8324 = vsel %vm7261, %v8282, 0
        %v8327 = vsel %vm7261, %v8284, 0
        %v8330 = vsel %vm7261, %v8286, 0
        %v8333 = vsel %vm7261, %v8288, 0
        %v8336 = vsel %vm7261, %v8290, 0
        %v8339 = vsel %vm7261, %v8292, 0
        %8341 = vmatprep.subr.bf16.mxu0 0
        %8342 = vmatpush1.bf16.xpose.msra.mxu0 %v8318
        %8343 = vmatprep.subr.bf16.mxu0 0
        %8344 = vmatpush1.bf16.xpose.msra.mxu0 %v8321
        %8345 = vmatprep.subr.bf16.mxu0 0
        %8346 = vmatpush1.bf16.xpose.msra.mxu0 %v8324
        %8347 = vmatprep.subr.bf16.mxu0 0
        %8348 = vmatpush1.bf16.xpose.msra.mxu0 %v8327
        %8349 = vmatprep.subr.bf16.mxu0 0
        %8350 = vmatpush1.bf16.xpose.msra.mxu0 %v8330
        %8351 = vmatprep.subr.bf16.mxu0 0
        %8352 = vmatpush1.bf16.xpose.msra.mxu0 %v8333
        %8353 = vmatprep.subr.bf16.mxu0 0
        %8354 = vmatpush1.bf16.xpose.msra.mxu0 %v8336
        %8355 = vmatprep.subr.bf16.mxu0 0
        %8356 = vmatpush1.bf16.xpose.msra.mxu0 %v8339
        %8357 = vmatprep.subr.bf16.mxu0 0
        %8358 = vmatpush1.bf16.xpose.msra.mxu0 0
        %8359 = vmatprep.subr.bf16.mxu0 0
        %8360 = vmatpush1.bf16.xpose.msra.mxu0 0
        %8361 = vmatprep.subr.bf16.mxu0 0
        %8362 = vmatpush1.bf16.xpose.msra.mxu0 0
        %8363 = vmatprep.subr.bf16.mxu0 0
        %8364 = vmatpush1.bf16.xpose.msra.mxu0 0
        %8365 = vmatprep.subr.bf16.mxu0 0
        %8366 = vmatpush1.bf16.xpose.msra.mxu0 0
        %8367 = vmatprep.subr.bf16.mxu0 0
        %8368 = vmatpush1.bf16.xpose.msra.mxu0 0
        %8369 = vmatprep.subr.bf16.mxu0 0
        %8370 = vmatpush1.bf16.xpose.msra.mxu0 0
        %8371 = vmatprep.subr.bf16.mxu0 0
        %8372 = vmatpush1.bf16.xpose.msra.mxu0 0
        %8373 = vmatprep.mubr.bf16.mxu0 0
        %8374 = vmatmul.mubr.bf16.gmra.mrb[0].mxu0 %v8294
        %v8375 = vpop.f32.mrb[0].mxu0
        %v8376 = vadd.f32 %v8245, %v8375
        %v8377 = vpop.f32.mrb[0].mxu0
        %v8378 = vpop.f32.mrb[0].mxu0
        %v8379 = vadd.f32 %v8246, %v8378
        %v8380 = vpop.f32.mrb[0].mxu0
        %8381 = vmatprep.mubr.bf16.mxu0 0
        %8382 = vmatmul.mubr.bf16.gmra.mrb[0].mxu0 %v8297
        %v8383 = vpop.f32.mrb[0].mxu0
        %v8384 = vadd.f32 %v8247, %v8383
        %v8385 = vpop.f32.mrb[0].mxu0
        %v8386 = vpop.f32.mrb[0].mxu0
        %v8387 = vadd.f32 %v8248, %v8386
        %v8388 = vpop.f32.mrb[0].mxu0
        %8389 = vmatprep.mubr.bf16.mxu0 0
        %8390 = vmatmul.mubr.bf16.gmra.mrb[0].mxu0 %v8300
        %v8391 = vpop.f32.mrb[0].mxu0
        %v8392 = vadd.f32 %v8249, %v8391
        %v8393 = vpop.f32.mrb[0].mxu0
        %v8394 = vpop.f32.mrb[0].mxu0
        %v8395 = vadd.f32 %v8250, %v8394
        %v8396 = vpop.f32.mrb[0].mxu0
        %8397 = vmatprep.mubr.bf16.mxu0 0
        %8398 = vmatmul.mubr.bf16.gmra.mrb[0].mxu0 %v8303
        %v8399 = vpop.f32.mrb[0].mxu0
        %v8400 = vadd.f32 %v8251, %v8399
        %v8401 = vpop.f32.mrb[0].mxu0
        %v8402 = vpop.f32.mrb[0].mxu0
        %v8403 = vadd.f32 %v8252, %v8402
        %v8404 = vpop.f32.mrb[0].mxu0
        %8405 = vmatprep.mubr.bf16.mxu0 0
        %8406 = vmatmul.mubr.bf16.gmra.mrb[0].mxu0 %v8306
        %v8407 = vpop.f32.mrb[0].mxu0
        %v8408 = vadd.f32 %v8253, %v8407
        %v8409 = vpop.f32.mrb[0].mxu0
        %v8410 = vpop.f32.mrb[0].mxu0
        %v8411 = vadd.f32 %v8254, %v8410
        %v8412 = vpop.f32.mrb[0].mxu0
        %8413 = vmatprep.mubr.bf16.mxu0 0
        %8414 = vmatmul.mubr.bf16.gmra.mrb[0].mxu0 %v8309
        %v8415 = vpop.f32.mrb[0].mxu0
        %v8416 = vadd.f32 %v8255, %v8415
        %v8417 = vpop.f32.mrb[0].mxu0
        %v8418 = vpop.f32.mrb[0].mxu0
        %v8419 = vadd.f32 %v8256, %v8418
        %v8420 = vpop.f32.mrb[0].mxu0
        %8421 = vmatprep.mubr.bf16.mxu0 0
        %8422 = vmatmul.mubr.bf16.gmra.mrb[0].mxu0 %v8312
        %v8423 = vpop.f32.mrb[0].mxu0
        %v8424 = vadd.f32 %v8257, %v8423
        %v8425 = vpop.f32.mrb[0].mxu0
        %v8426 = vpop.f32.mrb[0].mxu0
        %v8427 = vadd.f32 %v8258, %v8426
        %v8428 = vpop.f32.mrb[0].mxu0
        %8429 = vmatprep.mubr.bf16.mxu0 0
        %8430 = vmatmul.mubr.bf16.gmra.mrb[0].mxu0 %v8315
        %v8431 = vpop.f32.mrb[0].mxu0
        %v8432 = vadd.f32 %v8259, %v8431
        %v8433 = vpop.f32.mrb[0].mxu0
        %v8434 = vpop.f32.mrb[0].mxu0
        %v8435 = vadd.f32 %v8260, %v8434
        %v8436 = vpop.f32.mrb[0].mxu0
        %8437 = vdwg.mxu0
        %8438 = vmax.xlane.f32.xlu0 %v8376
        %v8439 = vpop.xlane.xlu0 %8438
        %8440 = vmax.xlane.f32.xlu0 %v8379
        %v8441 = vpop.xlane.xlu0 %8440
        %8442 = vmax.xlane.f32.xlu0 %v8384
        %v8443 = vpop.xlane.xlu0 %8442
        %8444 = vmax.xlane.f32.xlu0 %v8387
        %v8445 = vpop.xlane.xlu0 %8444
        %8446 = vmax.xlane.f32.xlu0 %v8392
        %v8447 = vpop.xlane.xlu0 %8446
        %8448 = vmax.xlane.f32.xlu0 %v8395
        %v8449 = vpop.xlane.xlu0 %8448
        %8450 = vmax.xlane.f32.xlu0 %v8400
        %v8451 = vpop.xlane.xlu0 %8450
        %8452 = vmax.xlane.f32.xlu0 %v8403
        %v8453 = vpop.xlane.xlu0 %8452
        %8454 = vmax.xlane.f32.xlu0 %v8408
        %v8455 = vpop.xlane.xlu0 %8454
        %8456 = vmax.xlane.f32.xlu0 %v8411
        %v8457 = vpop.xlane.xlu0 %8456
        %8458 = vmax.xlane.f32.xlu0 %v8416
        %v8459 = vpop.xlane.xlu0 %8458
        %8460 = vmax.xlane.f32.xlu0 %v8419
        %v8461 = vpop.xlane.xlu0 %8460
        %8462 = vmax.xlane.f32.xlu0 %v8424
        %v8463 = vpop.xlane.xlu0 %8462
        %8464 = vmax.xlane.f32.xlu0 %v8427
        %v8465 = vpop.xlane.xlu0 %8464
        %8466 = vmax.xlane.f32.xlu0 %v8432
        %v8467 = vpop.xlane.xlu0 %8466
        %8468 = vmax.xlane.f32.xlu0 %v8435
        %v8469 = vpop.xlane.xlu0 %8468
        %v8470 = vsub.f32 %v8376, %v8439
        %v8471 = vsub.f32 %v8379, %v8441
        %v8472 = vsub.f32 %v8384, %v8443
        %v8473 = vsub.f32 %v8387, %v8445
        %v8474 = vsub.f32 %v8392, %v8447
        %v8475 = vsub.f32 %v8395, %v8449
        %v8476 = vsub.f32 %v8400, %v8451
        %v8477 = vsub.f32 %v8403, %v8453
        %v8478 = vsub.f32 %v8408, %v8455
        %v8479 = vsub.f32 %v8411, %v8457
        %v8480 = vsub.f32 %v8416, %v8459
        %v8481 = vsub.f32 %v8419, %v8461
        %v8482 = vsub.f32 %v8424, %v8463
        %v8483 = vsub.f32 %v8427, %v8465
        %v8484 = vsub.f32 %v8432, %v8467
        %v8485 = vsub.f32 %v8435, %v8469
        %v8486 = vmul.f32 %v8470, 1.442695
        %v8487 = vpow.pop %v8486
        %v8488 = vmul.f32 %v8471, 1.442695
        %v8489 = vpow.pop %v8488
        %v8490 = vmul.f32 %v8472, 1.442695
        %v8491 = vpow.pop %v8490
        %v8492 = vmul.f32 %v8473, 1.442695
        %v8493 = vpow.pop %v8492
        %v8494 = vmul.f32 %v8474, 1.442695
        %v8495 = vpow.pop %v8494
        %v8496 = vmul.f32 %v8475, 1.442695
        %v8497 = vpow.pop %v8496
        %v8498 = vmul.f32 %v8476, 1.442695
        %v8499 = vpow.pop %v8498
        %v8500 = vmul.f32 %v8477, 1.442695
        %v8501 = vpow.pop %v8500
        %v8502 = vmul.f32 %v8478, 1.442695
        %v8503 = vpow.pop %v8502
        %v8504 = vmul.f32 %v8479, 1.442695
        %v8505 = vpow.pop %v8504
        %v8506 = vmul.f32 %v8480, 1.442695
        %v8507 = vpow.pop %v8506
        %v8508 = vmul.f32 %v8481, 1.442695
        %v8509 = vpow.pop %v8508
        %v8510 = vmul.f32 %v8482, 1.442695
        %v8511 = vpow.pop %v8510
        %v8512 = vmul.f32 %v8483, 1.442695
        %v8513 = vpow.pop %v8512
        %v8514 = vmul.f32 %v8484, 1.442695
        %v8515 = vpow.pop %v8514
        %v8516 = vmul.f32 %v8485, 1.442695
        %v8517 = vpow.pop %v8516
        %8518 = vadd.xlane.f32.xlu0 %v8487
        %v8519 = vpop.xlane.xlu0 %8518
        %8520 = vadd.xlane.f32.xlu0 %v8489
        %v8521 = vpop.xlane.xlu0 %8520
        %8522 = vadd.xlane.f32.xlu0 %v8491
        %v8523 = vpop.xlane.xlu0 %8522
        %8524 = vadd.xlane.f32.xlu0 %v8493
        %v8525 = vpop.xlane.xlu0 %8524
        %8526 = vadd.xlane.f32.xlu0 %v8495
        %v8527 = vpop.xlane.xlu0 %8526
        %8528 = vadd.xlane.f32.xlu0 %v8497
        %v8529 = vpop.xlane.xlu0 %8528
        %8530 = vadd.xlane.f32.xlu0 %v8499
        %v8531 = vpop.xlane.xlu0 %8530
        %8532 = vadd.xlane.f32.xlu0 %v8501
        %v8533 = vpop.xlane.xlu0 %8532
        %8534 = vadd.xlane.f32.xlu0 %v8503
        %v8535 = vpop.xlane.xlu0 %8534
        %8536 = vadd.xlane.f32.xlu0 %v8505
        %v8537 = vpop.xlane.xlu0 %8536
        %8538 = vadd.xlane.f32.xlu0 %v8507
        %v8539 = vpop.xlane.xlu0 %8538
        %8540 = vadd.xlane.f32.xlu0 %v8509
        %v8541 = vpop.xlane.xlu0 %8540
        %8542 = vadd.xlane.f32.xlu0 %v8511
        %v8543 = vpop.xlane.xlu0 %8542
        %8544 = vadd.xlane.f32.xlu0 %v8513
        %v8545 = vpop.xlane.xlu0 %8544
        %8546 = vadd.xlane.f32.xlu0 %v8515
        %v8547 = vpop.xlane.xlu0 %8546
        %8548 = vadd.xlane.f32.xlu0 %v8517
        %v8549 = vpop.xlane.xlu0 %8548
        %v8550 = vrcp.pop %v8519
        %v8551 = vrcp.pop %v8521
        %v8552 = vrcp.pop %v8523
        %v8553 = vrcp.pop %v8525
        %v8554 = vrcp.pop %v8527
        %v8555 = vrcp.pop %v8529
        %v8556 = vrcp.pop %v8531
        %v8557 = vrcp.pop %v8533
        %v8558 = vrcp.pop %v8535
        %v8559 = vrcp.pop %v8537
        %v8560 = vrcp.pop %v8539
        %v8561 = vrcp.pop %v8541
        %v8562 = vrcp.pop %v8543
        %v8563 = vrcp.pop %v8545
        %v8564 = vrcp.pop %v8547
        %v8565 = vrcp.pop %v8549
        %v8566 = vmul.f32 %v8487, %v8550
        %v8567 = vmul.f32 %v8489, %v8551
        %v8568 = vmul.f32 %v8491, %v8552
        %v8569 = vmul.f32 %v8493, %v8553
        %v8570 = vmul.f32 %v8495, %v8554
        %v8571 = vmul.f32 %v8497, %v8555
        %v8572 = vmul.f32 %v8499, %v8556
        %v8573 = vmul.f32 %v8501, %v8557
        %v8574 = vmul.f32 %v8503, %v8558
        %v8575 = vmul.f32 %v8505, %v8559
        %v8576 = vmul.f32 %v8507, %v8560
        %v8577 = vmul.f32 %v8509, %v8561
        %v8578 = vmul.f32 %v8511, %v8562
        %v8579 = vmul.f32 %v8513, %v8563
        %v8580 = vmul.f32 %v8515, %v8564
        %v8581 = vmul.f32 %v8517, %v8565
        %v8582 = vpack.c.bf16 %v8567, %v8566
        %v8583 = vpack.c.bf16 %v8569, %v8568
        %v8584 = vpack.c.bf16 %v8571, %v8570
        %v8585 = vpack.c.bf16 %v8573, %v8572
        %v8586 = vpack.c.bf16 %v8575, %v8574
        %v8587 = vpack.c.bf16 %v8577, %v8576
        %v8588 = vpack.c.bf16 %v8579, %v8578
        %v8589 = vpack.c.bf16 %v8581, %v8580
        %8590 = vrot.lane.b32.xlu0 %v7221, 64
        %v8591 = vpop.permute.xlu0 %8590
        %8592 = vrot.lane.b32.xlu0 %v7222, 64
        %v8593 = vpop.permute.xlu0 %8592
        %8594 = vrot.lane.b32.xlu0 %v7223, 64
        %v8595 = vpop.permute.xlu0 %8594
        %8596 = vrot.lane.b32.xlu0 %v7224, 64
        %v8597 = vpop.permute.xlu0 %8596
        %8598 = vrot.lane.b32.xlu0 %v7225, 64
        %v8599 = vpop.permute.xlu0 %8598
        %8600 = vrot.lane.b32.xlu0 %v7226, 64
        %v8601 = vpop.permute.xlu0 %8600
        %8602 = vrot.lane.b32.xlu0 %v7227, 64
        %v8603 = vpop.permute.xlu0 %8602
        %8604 = vrot.lane.b32.xlu0 %v7228, 64
        %v8605 = vpop.permute.xlu0 %8604
        %8614 = vmatprep.subr.bf16.mxu0 0
        %8615 = vmatpush1.bf16.msra.mxu0 %v8591
        %8616 = vmatprep.subr.bf16.mxu0 0
        %8617 = vmatpush1.bf16.msra.mxu0 %v8593
        %8618 = vmatprep.subr.bf16.mxu0 0
        %8619 = vmatpush1.bf16.msra.mxu0 %v8595
        %8620 = vmatprep.subr.bf16.mxu0 0
        %8621 = vmatpush1.bf16.msra.mxu0 %v8597
        %8622 = vmatprep.subr.bf16.mxu0 0
        %8623 = vmatpush1.bf16.msra.mxu0 %v8599
        %8624 = vmatprep.subr.bf16.mxu0 0
        %8625 = vmatpush1.bf16.msra.mxu0 %v8601
        %8626 = vmatprep.subr.bf16.mxu0 0
        %8627 = vmatpush1.bf16.msra.mxu0 %v8603
        %8628 = vmatprep.subr.bf16.mxu0 0
        %8629 = vmatpush1.bf16.msra.mxu0 %v8605
        %8630 = vmatprep.subr.bf16.mxu0 0
        %8631 = vmatpush1.bf16.msra.mxu0 0
        %8632 = vmatprep.subr.bf16.mxu0 0
        %8633 = vmatpush1.bf16.msra.mxu0 0
        %8634 = vmatprep.subr.bf16.mxu0 0
        %8635 = vmatpush1.bf16.msra.mxu0 0
        %8636 = vmatprep.subr.bf16.mxu0 0
        %8637 = vmatpush1.bf16.msra.mxu0 0
        %8638 = vmatprep.subr.bf16.mxu0 0
        %8639 = vmatpush1.bf16.msra.mxu0 0
        %8640 = vmatprep.subr.bf16.mxu0 0
        %8641 = vmatpush1.bf16.msra.mxu0 0
        %8642 = vmatprep.subr.bf16.mxu0 0
        %8643 = vmatpush1.bf16.msra.mxu0 0
        %8644 = vmatprep.subr.bf16.mxu0 0
        %8645 = vmatpush1.bf16.msra.mxu0 0
        %8646 = vmatprep.mubr.bf16.mxu0 0
        %8647 = vmatmul.mubr.bf16.gmra.mrb[0].mxu0 %v8582
        %v8648 = vpop.f32.mrb[0].mxu0
        %v8649 = vadd.f32 0.0, %v8648
        %v8650 = vpop.f32.mrb[0].mxu0
        %v8651 = vpop.f32.mrb[0].mxu0
        %v8652 = vadd.f32 0.0, %v8651
        %v8653 = vpop.f32.mrb[0].mxu0
        %8654 = vmatprep.mubr.bf16.mxu0 0
        %8655 = vmatmul.mubr.bf16.gmra.mrb[0].mxu0 %v8583
        %v8656 = vpop.f32.mrb[0].mxu0
        %v8657 = vadd.f32 0.0, %v8656
        %v8658 = vpop.f32.mrb[0].mxu0
        %v8659 = vpop.f32.mrb[0].mxu0
        %v8660 = vadd.f32 0.0, %v8659
        %v8661 = vpop.f32.mrb[0].mxu0
        %8662 = vmatprep.mubr.bf16.mxu0 0
        %8663 = vmatmul.mubr.bf16.gmra.mrb[0].mxu0 %v8584
        %v8664 = vpop.f32.mrb[0].mxu0
        %v8665 = vadd.f32 0.0, %v8664
        %v8666 = vpop.f32.mrb[0].mxu0
        %v8667 = vpop.f32.mrb[0].mxu0
        %v8668 = vadd.f32 0.0, %v8667
        %v8669 = vpop.f32.mrb[0].mxu0
        %8670 = vmatprep.mubr.bf16.mxu0 0
        %8671 = vmatmul.mubr.bf16.gmra.mrb[0].mxu0 %v8585
        %v8672 = vpop.f32.mrb[0].mxu0
        %v8673 = vadd.f32 0.0, %v8672
        %v8674 = vpop.f32.mrb[0].mxu0
        %v8675 = vpop.f32.mrb[0].mxu0
        %v8676 = vadd.f32 0.0, %v8675
        %v8677 = vpop.f32.mrb[0].mxu0
        %8678 = vmatprep.mubr.bf16.mxu0 0
        %8679 = vmatmul.mubr.bf16.gmra.mrb[0].mxu0 %v8586
        %v8680 = vpop.f32.mrb[0].mxu0
        %v8681 = vadd.f32 0.0, %v8680
        %v8682 = vpop.f32.mrb[0].mxu0
        %v8683 = vpop.f32.mrb[0].mxu0
        %v8684 = vadd.f32 0.0, %v8683
        %v8685 = vpop.f32.mrb[0].mxu0
        %8686 = vmatprep.mubr.bf16.mxu0 0
        %8687 = vmatmul.mubr.bf16.gmra.mrb[0].mxu0 %v8587
        %v8688 = vpop.f32.mrb[0].mxu0
        %v8689 = vadd.f32 0.0, %v8688
        %v8690 = vpop.f32.mrb[0].mxu0
        %v8691 = vpop.f32.mrb[0].mxu0
        %v8692 = vadd.f32 0.0, %v8691
        %v8693 = vpop.f32.mrb[0].mxu0
        %8694 = vmatprep.mubr.bf16.mxu0 0
        %8695 = vmatmul.mubr.bf16.gmra.mrb[0].mxu0 %v8588
        %v8696 = vpop.f32.mrb[0].mxu0
        %v8697 = vadd.f32 0.0, %v8696
        %v8698 = vpop.f32.mrb[0].mxu0
        %v8699 = vpop.f32.mrb[0].mxu0
        %v8700 = vadd.f32 0.0, %v8699
        %v8701 = vpop.f32.mrb[0].mxu0
        %8702 = vmatprep.mubr.bf16.mxu0 0
        %8703 = vmatmul.mubr.bf16.gmra.mrb[0].mxu0 %v8589
        %v8704 = vpop.f32.mrb[0].mxu0
        %v8705 = vadd.f32 0.0, %v8704
        %v8706 = vpop.f32.mrb[0].mxu0
        %v8707 = vpop.f32.mrb[0].mxu0
        %v8708 = vadd.f32 0.0, %v8707
        %v8709 = vpop.f32.mrb[0].mxu0
        %8710 = vdwg.mxu0
        %v8711 = vpack.c.bf16 %v8652, %v8649
        %v8712 = vpack.c.bf16 %v8660, %v8657
        %v8713 = vpack.c.bf16 %v8668, %v8665
        %v8714 = vpack.c.bf16 %v8676, %v8673
        %v8715 = vpack.c.bf16 %v8684, %v8681
        %v8716 = vpack.c.bf16 %v8692, %v8689
        %v8717 = vpack.c.bf16 %v8700, %v8697
        %v8718 = vpack.c.bf16 %v8708, %v8705
        %8727 = vrot.lane.b32.xlu0 %v8711, 64
        %v8728 = vpop.permute.xlu0 %8727
        %8729 = vrot.lane.b32.xlu0 %v8712, 64
        %v8730 = vpop.permute.xlu0 %8729
        %8731 = vrot.lane.b32.xlu0 %v8713, 64
        %v8732 = vpop.permute.xlu0 %8731
        %8733 = vrot.lane.b32.xlu0 %v8714, 64
        %v8734 = vpop.permute.xlu0 %8733
        %8735 = vrot.lane.b32.xlu0 %v8715, 64
        %v8736 = vpop.permute.xlu0 %8735
        %8737 = vrot.lane.b32.xlu0 %v8716, 64
        %v8738 = vpop.permute.xlu0 %8737
        %8739 = vrot.lane.b32.xlu0 %v8717, 64
        %v8740 = vpop.permute.xlu0 %8739
        %8741 = vrot.lane.b32.xlu0 %v8718, 64
        %v8742 = vpop.permute.xlu0 %8741
        %vm8751 = vcmask 785920
        %8752 = vst.msk [vmem:[#allocation3] sm:$0xff] %vm8751, %v8728
        %8753 = vst.msk [vmem:[#allocation3 + $0x8] sm:$0xff] %vm8751, %v8730
        %8754 = vst.msk [vmem:[#allocation3 + $0x10] sm:$0xff] %vm8751, %v8732
        %8755 = vst.msk [vmem:[#allocation3 + $0x18] sm:$0xff] %vm8751, %v8734
        %8756 = vst.msk [vmem:[#allocation3 + $0x20] sm:$0xff] %vm8751, %v8736
        %8757 = vst.msk [vmem:[#allocation3 + $0x28] sm:$0xff] %vm8751, %v8738
        %8758 = vst.msk [vmem:[#allocation3 + $0x30] sm:$0xff] %vm8751, %v8740
        %8759 = vst.msk [vmem:[#allocation3 + $0x38] sm:$0xff] %vm8751, %v8742
        %s8760 = scalar_lea.vmem [#allocation27], 192
        %v8761 = vld [vmem:[%s8760] sm:$0xf]
        %v8762 = vld [vmem:[%s8760 + $0x4] sm:$0xf]
        %v8763 = vld [vmem:[%s8760 + $0x8] sm:$0xf]
        %v8764 = vld [vmem:[%s8760 + $0xc] sm:$0xf]
        %v8765 = vld [vmem:[%s8760 + $0x10] sm:$0xf]
        %v8766 = vld [vmem:[%s8760 + $0x14] sm:$0xf]
        %v8767 = vld [vmem:[%s8760 + $0x18] sm:$0xf]
        %v8768 = vld [vmem:[%s8760 + $0x1c] sm:$0xf]
        %v8769 = vld [vmem:[%s8760 + $0x20] sm:$0xf]
        %v8770 = vld [vmem:[%s8760 + $0x24] sm:$0xf]
        %v8771 = vld [vmem:[%s8760 + $0x28] sm:$0xf]
        %v8772 = vld [vmem:[%s8760 + $0x2c] sm:$0xf]
        %v8773 = vld [vmem:[%s8760 + $0x30] sm:$0xf]
        %v8774 = vld [vmem:[%s8760 + $0x34] sm:$0xf]
        %v8775 = vld [vmem:[%s8760 + $0x38] sm:$0xf]
        %v8776 = vld [vmem:[%s8760 + $0x3c] sm:$0xf]
        %v8777 = vunpack.c.l.bf16 %v8761
        %v8778 = vunpack.c.l.bf16 %v8762
        %v8779 = vunpack.c.l.bf16 %v8763
        %v8780 = vunpack.c.l.bf16 %v8764
        %v8781 = vunpack.c.l.bf16 %v8765
        %v8782 = vunpack.c.l.bf16 %v8766
        %v8783 = vunpack.c.l.bf16 %v8767
        %v8784 = vunpack.c.l.bf16 %v8768
        %v8785 = vunpack.c.l.bf16 %v8769
        %v8786 = vunpack.c.l.bf16 %v8770
        %v8787 = vunpack.c.l.bf16 %v8771
        %v8788 = vunpack.c.l.bf16 %v8772
        %v8789 = vunpack.c.l.bf16 %v8773
        %v8790 = vunpack.c.l.bf16 %v8774
        %v8791 = vunpack.c.l.bf16 %v8775
        %v8792 = vunpack.c.l.bf16 %v8776
        %8793 = vrot.lane.b32.xlu0 %v7205, 32
        %v8794 = vpop.permute.xlu0 %8793
        %8795 = vrot.lane.b32.xlu0 %v7206, 32
        %v8796 = vpop.permute.xlu0 %8795
        %8797 = vrot.lane.b32.xlu0 %v7207, 32
        %v8798 = vpop.permute.xlu0 %8797
        %8799 = vrot.lane.b32.xlu0 %v7208, 32
        %v8800 = vpop.permute.xlu0 %8799
        %8801 = vrot.lane.b32.xlu0 %v7209, 32
        %v8802 = vpop.permute.xlu0 %8801
        %8803 = vrot.lane.b32.xlu0 %v7210, 32
        %v8804 = vpop.permute.xlu0 %8803
        %8805 = vrot.lane.b32.xlu0 %v7211, 32
        %v8806 = vpop.permute.xlu0 %8805
        %8807 = vrot.lane.b32.xlu0 %v7212, 32
        %v8808 = vpop.permute.xlu0 %8807
        %8809 = vrot.lane.b32.xlu0 %v7213, 32
        %v8810 = vpop.permute.xlu0 %8809
        %8811 = vrot.lane.b32.xlu0 %v7214, 32
        %v8812 = vpop.permute.xlu0 %8811
        %8813 = vrot.lane.b32.xlu0 %v7215, 32
        %v8814 = vpop.permute.xlu0 %8813
        %8815 = vrot.lane.b32.xlu0 %v7216, 32
        %v8816 = vpop.permute.xlu0 %8815
        %8817 = vrot.lane.b32.xlu0 %v7217, 32
        %v8818 = vpop.permute.xlu0 %8817
        %8819 = vrot.lane.b32.xlu0 %v7218, 32
        %v8820 = vpop.permute.xlu0 %8819
        %8821 = vrot.lane.b32.xlu0 %v7219, 32
        %v8822 = vpop.permute.xlu0 %8821
        %8823 = vrot.lane.b32.xlu0 %v7220, 32
        %v8824 = vpop.permute.xlu0 %8823
        %v8826 = vsel %vm7261, %v8794, 0
        %v8829 = vsel %vm7261, %v8796, 0
        %v8832 = vsel %vm7261, %v8798, 0
        %v8835 = vsel %vm7261, %v8800, 0
        %v8838 = vsel %vm7261, %v8802, 0
        %v8841 = vsel %vm7261, %v8804, 0
        %v8844 = vsel %vm7261, %v8806, 0
        %v8847 = vsel %vm7261, %v8808, 0
        %v8850 = vsel %vm7261, %v8810, 0
        %v8853 = vsel %vm7261, %v8812, 0
        %v8856 = vsel %vm7261, %v8814, 0
        %v8859 = vsel %vm7261, %v8816, 0
        %v8862 = vsel %vm7261, %v8818, 0
        %v8865 = vsel %vm7261, %v8820, 0
        %v8868 = vsel %vm7261, %v8822, 0
        %v8871 = vsel %vm7261, %v8824, 0
        %8873 = vmatprep.subr.bf16.mxu0 0
        %8874 = vmatpush1.bf16.xpose.msra.mxu0 %v8850
        %8875 = vmatprep.subr.bf16.mxu0 0
        %8876 = vmatpush1.bf16.xpose.msra.mxu0 %v8853
        %8877 = vmatprep.subr.bf16.mxu0 0
        %8878 = vmatpush1.bf16.xpose.msra.mxu0 %v8856
        %8879 = vmatprep.subr.bf16.mxu0 0
        %8880 = vmatpush1.bf16.xpose.msra.mxu0 %v8859
        %8881 = vmatprep.subr.bf16.mxu0 0
        %8882 = vmatpush1.bf16.xpose.msra.mxu0 %v8862
        %8883 = vmatprep.subr.bf16.mxu0 0
        %8884 = vmatpush1.bf16.xpose.msra.mxu0 %v8865
        %8885 = vmatprep.subr.bf16.mxu0 0
        %8886 = vmatpush1.bf16.xpose.msra.mxu0 %v8868
        %8887 = vmatprep.subr.bf16.mxu0 0
        %8888 = vmatpush1.bf16.xpose.msra.mxu0 %v8871
        %8889 = vmatprep.subr.bf16.mxu0 0
        %8890 = vmatpush1.bf16.xpose.msra.mxu0 0
        %8891 = vmatprep.subr.bf16.mxu0 0
        %8892 = vmatpush1.bf16.xpose.msra.mxu0 0
        %8893 = vmatprep.subr.bf16.mxu0 0
        %8894 = vmatpush1.bf16.xpose.msra.mxu0 0
        %8895 = vmatprep.subr.bf16.mxu0 0
        %8896 = vmatpush1.bf16.xpose.msra.mxu0 0
        %8897 = vmatprep.subr.bf16.mxu0 0
        %8898 = vmatpush1.bf16.xpose.msra.mxu0 0
        %8899 = vmatprep.subr.bf16.mxu0 0
        %8900 = vmatpush1.bf16.xpose.msra.mxu0 0
        %8901 = vmatprep.subr.bf16.mxu0 0
        %8902 = vmatpush1.bf16.xpose.msra.mxu0 0
        %8903 = vmatprep.subr.bf16.mxu0 0
        %8904 = vmatpush1.bf16.xpose.msra.mxu0 0
        %8905 = vmatprep.mubr.bf16.mxu0 0
        %8906 = vmatmul.mubr.bf16.gmra.mrb[0].mxu0 %v8826
        %v8907 = vpop.f32.mrb[0].mxu0
        %v8908 = vadd.f32 %v8777, %v8907
        %v8909 = vpop.f32.mrb[0].mxu0
        %v8910 = vpop.f32.mrb[0].mxu0
        %v8911 = vadd.f32 %v8778, %v8910
        %v8912 = vpop.f32.mrb[0].mxu0
        %8913 = vmatprep.mubr.bf16.mxu0 0
        %8914 = vmatmul.mubr.bf16.gmra.mrb[0].mxu0 %v8829
        %v8915 = vpop.f32.mrb[0].mxu0
        %v8916 = vadd.f32 %v8779, %v8915
        %v8917 = vpop.f32.mrb[0].mxu0
        %v8918 = vpop.f32.mrb[0].mxu0
        %v8919 = vadd.f32 %v8780, %v8918
        %v8920 = vpop.f32.mrb[0].mxu0
        %8921 = vmatprep.mubr.bf16.mxu0 0
        %8922 = vmatmul.mubr.bf16.gmra.mrb[0].mxu0 %v8832
        %v8923 = vpop.f32.mrb[0].mxu0
        %v8924 = vadd.f32 %v8781, %v8923
        %v8925 = vpop.f32.mrb[0].mxu0
        %v8926 = vpop.f32.mrb[0].mxu0
        %v8927 = vadd.f32 %v8782, %v8926
        %v8928 = vpop.f32.mrb[0].mxu0
        %8929 = vmatprep.mubr.bf16.mxu0 0
        %8930 = vmatmul.mubr.bf16.gmra.mrb[0].mxu0 %v8835
        %v8931 = vpop.f32.mrb[0].mxu0
        %v8932 = vadd.f32 %v8783, %v8931
        %v8933 = vpop.f32.mrb[0].mxu0
        %v8934 = vpop.f32.mrb[0].mxu0
        %v8935 = vadd.f32 %v8784, %v8934
        %v8936 = vpop.f32.mrb[0].mxu0
        %8937 = vmatprep.mubr.bf16.mxu0 0
        %8938 = vmatmul.mubr.bf16.gmra.mrb[0].mxu0 %v8838
        %v8939 = vpop.f32.mrb[0].mxu0
        %v8940 = vadd.f32 %v8785, %v8939
        %v8941 = vpop.f32.mrb[0].mxu0
        %v8942 = vpop.f32.mrb[0].mxu0
        %v8943 = vadd.f32 %v8786, %v8942
        %v8944 = vpop.f32.mrb[0].mxu0
        %8945 = vmatprep.mubr.bf16.mxu0 0
        %8946 = vmatmul.mubr.bf16.gmra.mrb[0].mxu0 %v8841
        %v8947 = vpop.f32.mrb[0].mxu0
        %v8948 = vadd.f32 %v8787, %v8947
        %v8949 = vpop.f32.mrb[0].mxu0
        %v8950 = vpop.f32.mrb[0].mxu0
        %v8951 = vadd.f32 %v8788, %v8950
        %v8952 = vpop.f32.mrb[0].mxu0
        %8953 = vmatprep.mubr.bf16.mxu0 0
        %8954 = vmatmul.mubr.bf16.gmra.mrb[0].mxu0 %v8844
        %v8955 = vpop.f32.mrb[0].mxu0
        %v8956 = vadd.f32 %v8789, %v8955
        %v8957 = vpop.f32.mrb[0].mxu0
        %v8958 = vpop.f32.mrb[0].mxu0
        %v8959 = vadd.f32 %v8790, %v8958
        %v8960 = vpop.f32.mrb[0].mxu0
        %8961 = vmatprep.mubr.bf16.mxu0 0
        %8962 = vmatmul.mubr.bf16.gmra.mrb[0].mxu0 %v8847
        %v8963 = vpop.f32.mrb[0].mxu0
        %v8964 = vadd.f32 %v8791, %v8963
        %v8965 = vpop.f32.mrb[0].mxu0
        %v8966 = vpop.f32.mrb[0].mxu0
        %v8967 = vadd.f32 %v8792, %v8966
        %v8968 = vpop.f32.mrb[0].mxu0
        %8969 = vdwg.mxu0
        %8970 = vmax.xlane.f32.xlu0 %v8908
        %v8971 = vpop.xlane.xlu0 %8970
        %8972 = vmax.xlane.f32.xlu0 %v8911
        %v8973 = vpop.xlane.xlu0 %8972
        %8974 = vmax.xlane.f32.xlu0 %v8916
        %v8975 = vpop.xlane.xlu0 %8974
        %8976 = vmax.xlane.f32.xlu0 %v8919
        %v8977 = vpop.xlane.xlu0 %8976
        %8978 = vmax.xlane.f32.xlu0 %v8924
        %v8979 = vpop.xlane.xlu0 %8978
        %8980 = vmax.xlane.f32.xlu0 %v8927
        %v8981 = vpop.xlane.xlu0 %8980
        %8982 = vmax.xlane.f32.xlu0 %v8932
        %v8983 = vpop.xlane.xlu0 %8982
        %8984 = vmax.xlane.f32.xlu0 %v8935
        %v8985 = vpop.xlane.xlu0 %8984
        %8986 = vmax.xlane.f32.xlu0 %v8940
        %v8987 = vpop.xlane.xlu0 %8986
        %8988 = vmax.xlane.f32.xlu0 %v8943
        %v8989 = vpop.xlane.xlu0 %8988
        %8990 = vmax.xlane.f32.xlu0 %v8948
        %v8991 = vpop.xlane.xlu0 %8990
        %8992 = vmax.xlane.f32.xlu0 %v8951
        %v8993 = vpop.xlane.xlu0 %8992
        %8994 = vmax.xlane.f32.xlu0 %v8956
        %v8995 = vpop.xlane.xlu0 %8994
        %8996 = vmax.xlane.f32.xlu0 %v8959
        %v8997 = vpop.xlane.xlu0 %8996
        %8998 = vmax.xlane.f32.xlu0 %v8964
        %v8999 = vpop.xlane.xlu0 %8998
        %9000 = vmax.xlane.f32.xlu0 %v8967
        %v9001 = vpop.xlane.xlu0 %9000
        %v9002 = vsub.f32 %v8908, %v8971
        %v9003 = vsub.f32 %v8911, %v8973
        %v9004 = vsub.f32 %v8916, %v8975
        %v9005 = vsub.f32 %v8919, %v8977
        %v9006 = vsub.f32 %v8924, %v8979
        %v9007 = vsub.f32 %v8927, %v8981
        %v9008 = vsub.f32 %v8932, %v8983
        %v9009 = vsub.f32 %v8935, %v8985
        %v9010 = vsub.f32 %v8940, %v8987
        %v9011 = vsub.f32 %v8943, %v8989
        %v9012 = vsub.f32 %v8948, %v8991
        %v9013 = vsub.f32 %v8951, %v8993
        %v9014 = vsub.f32 %v8956, %v8995
        %v9015 = vsub.f32 %v8959, %v8997
        %v9016 = vsub.f32 %v8964, %v8999
        %v9017 = vsub.f32 %v8967, %v9001
        %v9018 = vmul.f32 %v9002, 1.442695
        %v9019 = vpow.pop %v9018
        %v9020 = vmul.f32 %v9003, 1.442695
        %v9021 = vpow.pop %v9020
        %v9022 = vmul.f32 %v9004, 1.442695
        %v9023 = vpow.pop %v9022
        %v9024 = vmul.f32 %v9005, 1.442695
        %v9025 = vpow.pop %v9024
        %v9026 = vmul.f32 %v9006, 1.442695
        %v9027 = vpow.pop %v9026
        %v9028 = vmul.f32 %v9007, 1.442695
        %v9029 = vpow.pop %v9028
        %v9030 = vmul.f32 %v9008, 1.442695
        %v9031 = vpow.pop %v9030
        %v9032 = vmul.f32 %v9009, 1.442695
        %v9033 = vpow.pop %v9032
        %v9034 = vmul.f32 %v9010, 1.442695
        %v9035 = vpow.pop %v9034
        %v9036 = vmul.f32 %v9011, 1.442695
        %v9037 = vpow.pop %v9036
        %v9038 = vmul.f32 %v9012, 1.442695
        %v9039 = vpow.pop %v9038
        %v9040 = vmul.f32 %v9013, 1.442695
        %v9041 = vpow.pop %v9040
        %v9042 = vmul.f32 %v9014, 1.442695
        %v9043 = vpow.pop %v9042
        %v9044 = vmul.f32 %v9015, 1.442695
        %v9045 = vpow.pop %v9044
        %v9046 = vmul.f32 %v9016, 1.442695
        %v9047 = vpow.pop %v9046
        %v9048 = vmul.f32 %v9017, 1.442695
        %v9049 = vpow.pop %v9048
        %9050 = vadd.xlane.f32.xlu0 %v9019
        %v9051 = vpop.xlane.xlu0 %9050
        %9052 = vadd.xlane.f32.xlu0 %v9021
        %v9053 = vpop.xlane.xlu0 %9052
        %9054 = vadd.xlane.f32.xlu0 %v9023
        %v9055 = vpop.xlane.xlu0 %9054
        %9056 = vadd.xlane.f32.xlu0 %v9025
        %v9057 = vpop.xlane.xlu0 %9056
        %9058 = vadd.xlane.f32.xlu0 %v9027
        %v9059 = vpop.xlane.xlu0 %9058
        %9060 = vadd.xlane.f32.xlu0 %v9029
        %v9061 = vpop.xlane.xlu0 %9060
        %9062 = vadd.xlane.f32.xlu0 %v9031
        %v9063 = vpop.xlane.xlu0 %9062
        %9064 = vadd.xlane.f32.xlu0 %v9033
        %v9065 = vpop.xlane.xlu0 %9064
        %9066 = vadd.xlane.f32.xlu0 %v9035
        %v9067 = vpop.xlane.xlu0 %9066
        %9068 = vadd.xlane.f32.xlu0 %v9037
        %v9069 = vpop.xlane.xlu0 %9068
        %9070 = vadd.xlane.f32.xlu0 %v9039
        %v9071 = vpop.xlane.xlu0 %9070
        %9072 = vadd.xlane.f32.xlu0 %v9041
        %v9073 = vpop.xlane.xlu0 %9072
        %9074 = vadd.xlane.f32.xlu0 %v9043
        %v9075 = vpop.xlane.xlu0 %9074
        %9076 = vadd.xlane.f32.xlu0 %v9045
        %v9077 = vpop.xlane.xlu0 %9076
        %9078 = vadd.xlane.f32.xlu0 %v9047
        %v9079 = vpop.xlane.xlu0 %9078
        %9080 = vadd.xlane.f32.xlu0 %v9049
        %v9081 = vpop.xlane.xlu0 %9080
        %v9082 = vrcp.pop %v9051
        %v9083 = vrcp.pop %v9053
        %v9084 = vrcp.pop %v9055
        %v9085 = vrcp.pop %v9057
        %v9086 = vrcp.pop %v9059
        %v9087 = vrcp.pop %v9061
        %v9088 = vrcp.pop %v9063
        %v9089 = vrcp.pop %v9065
        %v9090 = vrcp.pop %v9067
        %v9091 = vrcp.pop %v9069
        %v9092 = vrcp.pop %v9071
        %v9093 = vrcp.pop %v9073
        %v9094 = vrcp.pop %v9075
        %v9095 = vrcp.pop %v9077
        %v9096 = vrcp.pop %v9079
        %v9097 = vrcp.pop %v9081
        %v9098 = vmul.f32 %v9019, %v9082
        %v9099 = vmul.f32 %v9021, %v9083
        %v9100 = vmul.f32 %v9023, %v9084
        %v9101 = vmul.f32 %v9025, %v9085
        %v9102 = vmul.f32 %v9027, %v9086
        %v9103 = vmul.f32 %v9029, %v9087
        %v9104 = vmul.f32 %v9031, %v9088
        %v9105 = vmul.f32 %v9033, %v9089
        %v9106 = vmul.f32 %v9035, %v9090
        %v9107 = vmul.f32 %v9037, %v9091
        %v9108 = vmul.f32 %v9039, %v9092
        %v9109 = vmul.f32 %v9041, %v9093
        %v9110 = vmul.f32 %v9043, %v9094
        %v9111 = vmul.f32 %v9045, %v9095
        %v9112 = vmul.f32 %v9047, %v9096
        %v9113 = vmul.f32 %v9049, %v9097
        %v9114 = vpack.c.bf16 %v9099, %v9098
        %v9115 = vpack.c.bf16 %v9101, %v9100
        %v9116 = vpack.c.bf16 %v9103, %v9102
        %v9117 = vpack.c.bf16 %v9105, %v9104
        %v9118 = vpack.c.bf16 %v9107, %v9106
        %v9119 = vpack.c.bf16 %v9109, %v9108
        %v9120 = vpack.c.bf16 %v9111, %v9110
        %v9121 = vpack.c.bf16 %v9113, %v9112
        %9122 = vrot.lane.b32.xlu0 %v7221, 32
        %v9123 = vpop.permute.xlu0 %9122
        %9124 = vrot.lane.b32.xlu0 %v7222, 32
        %v9125 = vpop.permute.xlu0 %9124
        %9126 = vrot.lane.b32.xlu0 %v7223, 32
        %v9127 = vpop.permute.xlu0 %9126
        %9128 = vrot.lane.b32.xlu0 %v7224, 32
        %v9129 = vpop.permute.xlu0 %9128
        %9130 = vrot.lane.b32.xlu0 %v7225, 32
        %v9131 = vpop.permute.xlu0 %9130
        %9132 = vrot.lane.b32.xlu0 %v7226, 32
        %v9133 = vpop.permute.xlu0 %9132
        %9134 = vrot.lane.b32.xlu0 %v7227, 32
        %v9135 = vpop.permute.xlu0 %9134
        %9136 = vrot.lane.b32.xlu0 %v7228, 32
        %v9137 = vpop.permute.xlu0 %9136
        %9146 = vmatprep.subr.bf16.mxu0 0
        %9147 = vmatpush1.bf16.msra.mxu0 %v9123
        %9148 = vmatprep.subr.bf16.mxu0 0
        %9149 = vmatpush1.bf16.msra.mxu0 %v9125
        %9150 = vmatprep.subr.bf16.mxu0 0
        %9151 = vmatpush1.bf16.msra.mxu0 %v9127
        %9152 = vmatprep.subr.bf16.mxu0 0
        %9153 = vmatpush1.bf16.msra.mxu0 %v9129
        %9154 = vmatprep.subr.bf16.mxu0 0
        %9155 = vmatpush1.bf16.msra.mxu0 %v9131
        %9156 = vmatprep.subr.bf16.mxu0 0
        %9157 = vmatpush1.bf16.msra.mxu0 %v9133
        %9158 = vmatprep.subr.bf16.mxu0 0
        %9159 = vmatpush1.bf16.msra.mxu0 %v9135
        %9160 = vmatprep.subr.bf16.mxu0 0
        %9161 = vmatpush1.bf16.msra.mxu0 %v9137
        %9162 = vmatprep.subr.bf16.mxu0 0
        %9163 = vmatpush1.bf16.msra.mxu0 0
        %9164 = vmatprep.subr.bf16.mxu0 0
        %9165 = vmatpush1.bf16.msra.mxu0 0
        %9166 = vmatprep.subr.bf16.mxu0 0
        %9167 = vmatpush1.bf16.msra.mxu0 0
        %9168 = vmatprep.subr.bf16.mxu0 0
        %9169 = vmatpush1.bf16.msra.mxu0 0
        %9170 = vmatprep.subr.bf16.mxu0 0
        %9171 = vmatpush1.bf16.msra.mxu0 0
        %9172 = vmatprep.subr.bf16.mxu0 0
        %9173 = vmatpush1.bf16.msra.mxu0 0
        %9174 = vmatprep.subr.bf16.mxu0 0
        %9175 = vmatpush1.bf16.msra.mxu0 0
        %9176 = vmatprep.subr.bf16.mxu0 0
        %9177 = vmatpush1.bf16.msra.mxu0 0
        %9178 = vmatprep.mubr.bf16.mxu0 0
        %9179 = vmatmul.mubr.bf16.gmra.mrb[0].mxu0 %v9114
        %v9180 = vpop.f32.mrb[0].mxu0
        %v9181 = vadd.f32 0.0, %v9180
        %v9182 = vpop.f32.mrb[0].mxu0
        %v9183 = vpop.f32.mrb[0].mxu0
        %v9184 = vadd.f32 0.0, %v9183
        %v9185 = vpop.f32.mrb[0].mxu0
        %9186 = vmatprep.mubr.bf16.mxu0 0
        %9187 = vmatmul.mubr.bf16.gmra.mrb[0].mxu0 %v9115
        %v9188 = vpop.f32.mrb[0].mxu0
        %v9189 = vadd.f32 0.0, %v9188
        %v9190 = vpop.f32.mrb[0].mxu0
        %v9191 = vpop.f32.mrb[0].mxu0
        %v9192 = vadd.f32 0.0, %v9191
        %v9193 = vpop.f32.mrb[0].mxu0
        %9194 = vmatprep.mubr.bf16.mxu0 0
        %9195 = vmatmul.mubr.bf16.gmra.mrb[0].mxu0 %v9116
        %v9196 = vpop.f32.mrb[0].mxu0
        %v9197 = vadd.f32 0.0, %v9196
        %v9198 = vpop.f32.mrb[0].mxu0
        %v9199 = vpop.f32.mrb[0].mxu0
        %v9200 = vadd.f32 0.0, %v9199
        %v9201 = vpop.f32.mrb[0].mxu0
        %9202 = vmatprep.mubr.bf16.mxu0 0
        %9203 = vmatmul.mubr.bf16.gmra.mrb[0].mxu0 %v9117
        %v9204 = vpop.f32.mrb[0].mxu0
        %v9205 = vadd.f32 0.0, %v9204
        %v9206 = vpop.f32.mrb[0].mxu0
        %v9207 = vpop.f32.mrb[0].mxu0
        %v9208 = vadd.f32 0.0, %v9207
        %v9209 = vpop.f32.mrb[0].mxu0
        %9210 = vmatprep.mubr.bf16.mxu0 0
        %9211 = vmatmul.mubr.bf16.gmra.mrb[0].mxu0 %v9118
        %v9212 = vpop.f32.mrb[0].mxu0
        %v9213 = vadd.f32 0.0, %v9212
        %v9214 = vpop.f32.mrb[0].mxu0
        %v9215 = vpop.f32.mrb[0].mxu0
        %v9216 = vadd.f32 0.0, %v9215
        %v9217 = vpop.f32.mrb[0].mxu0
        %9218 = vmatprep.mubr.bf16.mxu0 0
        %9219 = vmatmul.mubr.bf16.gmra.mrb[0].mxu0 %v9119
        %v9220 = vpop.f32.mrb[0].mxu0
        %v9221 = vadd.f32 0.0, %v9220
        %v9222 = vpop.f32.mrb[0].mxu0
        %v9223 = vpop.f32.mrb[0].mxu0
        %v9224 = vadd.f32 0.0, %v9223
        %v9225 = vpop.f32.mrb[0].mxu0
        %9226 = vmatprep.mubr.bf16.mxu0 0
        %9227 = vmatmul.mubr.bf16.gmra.mrb[0].mxu0 %v9120
        %v9228 = vpop.f32.mrb[0].mxu0
        %v9229 = vadd.f32 0.0, %v9228
        %v9230 = vpop.f32.mrb[0].mxu0
        %v9231 = vpop.f32.mrb[0].mxu0
        %v9232 = vadd.f32 0.0, %v9231
        %v9233 = vpop.f32.mrb[0].mxu0
        %9234 = vmatprep.mubr.bf16.mxu0 0
        %9235 = vmatmul.mubr.bf16.gmra.mrb[0].mxu0 %v9121
        %v9236 = vpop.f32.mrb[0].mxu0
        %v9237 = vadd.f32 0.0, %v9236
        %v9238 = vpop.f32.mrb[0].mxu0
        %v9239 = vpop.f32.mrb[0].mxu0
        %v9240 = vadd.f32 0.0, %v9239
        %v9241 = vpop.f32.mrb[0].mxu0
        %9242 = vdwg.mxu0
        %v9243 = vpack.c.bf16 %v9184, %v9181
        %v9244 = vpack.c.bf16 %v9192, %v9189
        %v9245 = vpack.c.bf16 %v9200, %v9197
        %v9246 = vpack.c.bf16 %v9208, %v9205
        %v9247 = vpack.c.bf16 %v9216, %v9213
        %v9248 = vpack.c.bf16 %v9224, %v9221
        %v9249 = vpack.c.bf16 %v9232, %v9229
        %v9250 = vpack.c.bf16 %v9240, %v9237
        %9259 = vrot.lane.b32.xlu0 %v9243, 96
        %v9260 = vpop.permute.xlu0 %9259
        %9261 = vrot.lane.b32.xlu0 %v9244, 96
        %v9262 = vpop.permute.xlu0 %9261
        %9263 = vrot.lane.b32.xlu0 %v9245, 96
        %v9264 = vpop.permute.xlu0 %9263
        %9265 = vrot.lane.b32.xlu0 %v9246, 96
        %v9266 = vpop.permute.xlu0 %9265
        %9267 = vrot.lane.b32.xlu0 %v9247, 96
        %v9268 = vpop.permute.xlu0 %9267
        %9269 = vrot.lane.b32.xlu0 %v9248, 96
        %v9270 = vpop.permute.xlu0 %9269
        %9271 = vrot.lane.b32.xlu0 %v9249, 96
        %v9272 = vpop.permute.xlu0 %9271
        %9273 = vrot.lane.b32.xlu0 %v9250, 96
        %v9274 = vpop.permute.xlu0 %9273
        %vm9283 = vcmask 1048320
        %9284 = vst.msk [vmem:[#allocation3] sm:$0xff] %vm9283, %v9260
        %9285 = vst.msk [vmem:[#allocation3 + $0x8] sm:$0xff] %vm9283, %v9262
        %9286 = vst.msk [vmem:[#allocation3 + $0x10] sm:$0xff] %vm9283, %v9264
        %9287 = vst.msk [vmem:[#allocation3 + $0x18] sm:$0xff] %vm9283, %v9266
        %9288 = vst.msk [vmem:[#allocation3 + $0x20] sm:$0xff] %vm9283, %v9268
        %9289 = vst.msk [vmem:[#allocation3 + $0x28] sm:$0xff] %vm9283, %v9270
        %9290 = vst.msk [vmem:[#allocation3 + $0x30] sm:$0xff] %vm9283, %v9272
        %9291 = vst.msk [vmem:[#allocation3 + $0x38] sm:$0xff] %vm9283, %v9274
        %v9292 = vld [vmem:[#allocation3] sm:$0xff]
        %v9293 = vld [vmem:[#allocation3 + $0x8] sm:$0xff]
        %v9294 = vld [vmem:[#allocation3 + $0x10] sm:$0xff]
        %v9295 = vld [vmem:[#allocation3 + $0x18] sm:$0xff]
        %v9296 = vld [vmem:[#allocation3 + $0x20] sm:$0xff]
        %v9297 = vld [vmem:[#allocation3 + $0x28] sm:$0xff]
        %v9298 = vld [vmem:[#allocation3 + $0x30] sm:$0xff]
        %v9299 = vld [vmem:[#allocation3 + $0x38] sm:$0xff]
        %v9316 = vunpack.c.l.b16 %v6611
        %v9317 = vunpack.c.l.b16 %v6612
        %v9318 = vunpack.c.l.b16 %v6613
        %v9319 = vunpack.c.l.b16 %v6614
        %v9320 = vunpack.c.l.b16 %v6615
        %v9321 = vunpack.c.l.b16 %v6616
        %v9322 = vunpack.c.l.b16 %v6617
        %v9323 = vunpack.c.l.b16 %v6618
        %v9324 = vunpack.c.l.b16 %v6619
        %v9325 = vunpack.c.l.b16 %v6620
        %v9326 = vunpack.c.l.b16 %v6621
        %v9327 = vunpack.c.l.b16 %v6622
        %v9328 = vunpack.c.l.b16 %v6623
        %v9329 = vunpack.c.l.b16 %v6624
        %v9330 = vunpack.c.l.b16 %v6625
        %v9331 = vunpack.c.l.b16 %v6626
        %v9332 = vpack.c.b16 %v9317, %v9316
        %v9333 = vpack.c.b16 %v9319, %v9318
        %v9334 = vpack.c.b16 %v9321, %v9320
        %v9335 = vpack.c.b16 %v9323, %v9322
        %v9336 = vpack.c.b16 %v9325, %v9324
        %v9337 = vpack.c.b16 %v9327, %v9326
        %v9338 = vpack.c.b16 %v9329, %v9328
        %v9339 = vpack.c.b16 %v9331, %v9330
        %9348 = vmatprep.subr.bf16.mxu0 0
        %9349 = vmatpush1.bf16.msra.mxu0 %v9332
        %9350 = vmatprep.subr.bf16.mxu0 0
        %9351 = vmatpush1.bf16.msra.mxu0 %v9333
        %9352 = vmatprep.subr.bf16.mxu0 0
        %9353 = vmatpush1.bf16.msra.mxu0 %v9334
        %9354 = vmatprep.subr.bf16.mxu0 0
        %9355 = vmatpush1.bf16.msra.mxu0 %v9335
        %9356 = vmatprep.subr.bf16.mxu0 0
        %9357 = vmatpush1.bf16.msra.mxu0 %v9336
        %9358 = vmatprep.subr.bf16.mxu0 0
        %9359 = vmatpush1.bf16.msra.mxu0 %v9337
        %9360 = vmatprep.subr.bf16.mxu0 0
        %9361 = vmatpush1.bf16.msra.mxu0 %v9338
        %9362 = vmatprep.subr.bf16.mxu0 0
        %9363 = vmatpush1.bf16.msra.mxu0 %v9339
        %9364 = vmatprep.subr.bf16.mxu0 0
        %9365 = vmatpush1.bf16.msra.mxu0 0
        %9366 = vmatprep.subr.bf16.mxu0 0
        %9367 = vmatpush1.bf16.msra.mxu0 0
        %9368 = vmatprep.subr.bf16.mxu0 0
        %9369 = vmatpush1.bf16.msra.mxu0 0
        %9370 = vmatprep.subr.bf16.mxu0 0
        %9371 = vmatpush1.bf16.msra.mxu0 0
        %9372 = vmatprep.subr.bf16.mxu0 0
        %9373 = vmatpush1.bf16.msra.mxu0 0
        %9374 = vmatprep.subr.bf16.mxu0 0
        %9375 = vmatpush1.bf16.msra.mxu0 0
        %9376 = vmatprep.subr.bf16.mxu0 0
        %9377 = vmatpush1.bf16.msra.mxu0 0
        %9378 = vmatprep.subr.bf16.mxu0 0
        %9379 = vmatpush1.bf16.msra.mxu0 0
        %9380 = vmatprep.mubr.bf16.mxu0 0
        %9381 = vmatmul.mubr.bf16.gmra.mrb[0].mxu0 %v9292
        %v9382 = vpop.f32.mrb[0].mxu0
        %v9383 = vadd.f32 0.0, %v9382
        %v9384 = vpop.f32.mrb[0].mxu0
        %v9385 = vpop.f32.mrb[0].mxu0
        %v9386 = vadd.f32 0.0, %v9385
        %v9387 = vpop.f32.mrb[0].mxu0
        %9388 = vmatprep.mubr.bf16.mxu0 0
        %9389 = vmatmul.mubr.bf16.gmra.mrb[0].mxu0 %v9293
        %v9390 = vpop.f32.mrb[0].mxu0
        %v9391 = vadd.f32 0.0, %v9390
        %v9392 = vpop.f32.mrb[0].mxu0
        %v9393 = vpop.f32.mrb[0].mxu0
        %v9394 = vadd.f32 0.0, %v9393
        %v9395 = vpop.f32.mrb[0].mxu0
        %9396 = vmatprep.mubr.bf16.mxu0 0
        %9397 = vmatmul.mubr.bf16.gmra.mrb[0].mxu0 %v9294
        %v9398 = vpop.f32.mrb[0].mxu0
        %v9399 = vadd.f32 0.0, %v9398
        %v9400 = vpop.f32.mrb[0].mxu0
        %v9401 = vpop.f32.mrb[0].mxu0
        %v9402 = vadd.f32 0.0, %v9401
        %v9403 = vpop.f32.mrb[0].mxu0
        %9404 = vmatprep.mubr.bf16.mxu0 0
        %9405 = vmatmul.mubr.bf16.gmra.mrb[0].mxu0 %v9295
        %v9406 = vpop.f32.mrb[0].mxu0
        %v9407 = vadd.f32 0.0, %v9406
        %v9408 = vpop.f32.mrb[0].mxu0
        %v9409 = vpop.f32.mrb[0].mxu0
        %v9410 = vadd.f32 0.0, %v9409
        %v9411 = vpop.f32.mrb[0].mxu0
        %9412 = vmatprep.mubr.bf16.mxu0 0
        %9413 = vmatmul.mubr.bf16.gmra.mrb[0].mxu0 %v9296
        %v9414 = vpop.f32.mrb[0].mxu0
        %v9415 = vadd.f32 0.0, %v9414
        %v9416 = vpop.f32.mrb[0].mxu0
        %v9417 = vpop.f32.mrb[0].mxu0
        %v9418 = vadd.f32 0.0, %v9417
        %v9419 = vpop.f32.mrb[0].mxu0
        %9420 = vmatprep.mubr.bf16.mxu0 0
        %9421 = vmatmul.mubr.bf16.gmra.mrb[0].mxu0 %v9297
        %v9422 = vpop.f32.mrb[0].mxu0
        %v9423 = vadd.f32 0.0, %v9422
        %v9424 = vpop.f32.mrb[0].mxu0
        %v9425 = vpop.f32.mrb[0].mxu0
        %v9426 = vadd.f32 0.0, %v9425
        %v9427 = vpop.f32.mrb[0].mxu0
        %9428 = vmatprep.mubr.bf16.mxu0 0
        %9429 = vmatmul.mubr.bf16.gmra.mrb[0].mxu0 %v9298
        %v9430 = vpop.f32.mrb[0].mxu0
        %v9431 = vadd.f32 0.0, %v9430
        %v9432 = vpop.f32.mrb[0].mxu0
        %v9433 = vpop.f32.mrb[0].mxu0
        %v9434 = vadd.f32 0.0, %v9433
        %v9435 = vpop.f32.mrb[0].mxu0
        %9436 = vmatprep.mubr.bf16.mxu0 0
        %9437 = vmatmul.mubr.bf16.gmra.mrb[0].mxu0 %v9299
        %v9438 = vpop.f32.mrb[0].mxu0
        %v9439 = vadd.f32 0.0, %v9438
        %v9440 = vpop.f32.mrb[0].mxu0
        %v9441 = vpop.f32.mrb[0].mxu0
        %v9442 = vadd.f32 0.0, %v9441
        %v9443 = vpop.f32.mrb[0].mxu0
        %9444 = vdwg.mxu0
        %v9445 = vadd.f32 %v6500, %v9383
        %v9446 = vadd.f32 %v6503, %v9386
        %v9447 = vadd.f32 %v6508, %v9391
        %v9448 = vadd.f32 %v6511, %v9394
        %v9449 = vadd.f32 %v6516, %v9399
        %v9450 = vadd.f32 %v6519, %v9402
        %v9451 = vadd.f32 %v6524, %v9407
        %v9452 = vadd.f32 %v6527, %v9410
        %v9453 = vadd.f32 %v6532, %v9415
        %v9454 = vadd.f32 %v6535, %v9418
        %v9455 = vadd.f32 %v6540, %v9423
        %v9456 = vadd.f32 %v6543, %v9426
        %v9457 = vadd.f32 %v6548, %v9431
        %v9458 = vadd.f32 %v6551, %v9434
        %v9459 = vadd.f32 %v6556, %v9439
        %v9460 = vadd.f32 %v6559, %v9442
        %v9461 = vld [vmem:[%s18] sm:$0x1]
        %v9462 = vld [vmem:[#allocation28] sm:$0xff]
        %v9463 = vld [vmem:[#allocation28 + $0x8] sm:$0xff]
        %v9464 = vld [vmem:[#allocation28 + $0x10] sm:$0xff]
        %v9465 = vld [vmem:[#allocation28 + $0x18] sm:$0xff]
        %v9466 = vld [vmem:[#allocation28 + $0x20] sm:$0xff]
        %v9467 = vld [vmem:[#allocation28 + $0x28] sm:$0xff]
        %v9468 = vld [vmem:[#allocation28 + $0x30] sm:$0xff]
        %v9469 = vld [vmem:[#allocation28 + $0x38] sm:$0xff]
        %v9470 = vld [vmem:[#allocation28 + $0x40] sm:$0xff]
        %v9471 = vld [vmem:[#allocation28 + $0x48] sm:$0xff]
        %v9472 = vld [vmem:[#allocation28 + $0x50] sm:$0xff]
        %v9473 = vld [vmem:[#allocation28 + $0x58] sm:$0xff]
        %v9474 = vld [vmem:[#allocation28 + $0x60] sm:$0xff]
        %v9475 = vld [vmem:[#allocation28 + $0x68] sm:$0xff]
        %v9476 = vld [vmem:[#allocation28 + $0x70] sm:$0xff]
        %v9477 = vld [vmem:[#allocation28 + $0x78] sm:$0xff]
        %v9478 = vld [vmem:[#allocation30] sm:$0xf]
        %v9479 = vld [vmem:[#allocation30 + $0x4] sm:$0xf]
        %v9480 = vld [vmem:[#allocation30 + $0x8] sm:$0xf]
        %v9481 = vld [vmem:[#allocation30 + $0xc] sm:$0xf]
        %v9482 = vld [vmem:[#allocation30 + $0x10] sm:$0xf]
        %v9483 = vld [vmem:[#allocation30 + $0x14] sm:$0xf]
        %v9484 = vld [vmem:[#allocation30 + $0x18] sm:$0xf]
        %v9485 = vld [vmem:[#allocation30 + $0x1c] sm:$0xf]
        %v9486 = vld [vmem:[#allocation30 + $0x20] sm:$0xf]
        %v9487 = vld [vmem:[#allocation30 + $0x24] sm:$0xf]
        %v9488 = vld [vmem:[#allocation30 + $0x28] sm:$0xf]
        %v9489 = vld [vmem:[#allocation30 + $0x2c] sm:$0xf]
        %v9490 = vld [vmem:[#allocation30 + $0x30] sm:$0xf]
        %v9491 = vld [vmem:[#allocation30 + $0x34] sm:$0xf]
        %v9492 = vld [vmem:[#allocation30 + $0x38] sm:$0xf]
        %v9493 = vld [vmem:[#allocation30 + $0x3c] sm:$0xf]
        %v9494 = vld [vmem:[#allocation30 + $0x40] sm:$0xf]
        %v9495 = vld [vmem:[#allocation30 + $0x44] sm:$0xf]
        %v9496 = vld [vmem:[#allocation30 + $0x48] sm:$0xf]
        %v9497 = vld [vmem:[#allocation30 + $0x4c] sm:$0xf]
        %v9498 = vld [vmem:[#allocation30 + $0x50] sm:$0xf]
        %v9499 = vld [vmem:[#allocation30 + $0x54] sm:$0xf]
        %v9500 = vld [vmem:[#allocation30 + $0x58] sm:$0xf]
        %v9501 = vld [vmem:[#allocation30 + $0x5c] sm:$0xf]
        %v9502 = vld [vmem:[#allocation30 + $0x60] sm:$0xf]
        %v9503 = vld [vmem:[#allocation30 + $0x64] sm:$0xf]
        %v9504 = vld [vmem:[#allocation30 + $0x68] sm:$0xf]
        %v9505 = vld [vmem:[#allocation30 + $0x6c] sm:$0xf]
        %v9506 = vld [vmem:[#allocation30 + $0x70] sm:$0xf]
        %v9507 = vld [vmem:[#allocation30 + $0x74] sm:$0xf]
        %v9508 = vld [vmem:[#allocation30 + $0x78] sm:$0xf]
        %v9509 = vld [vmem:[#allocation30 + $0x7c] sm:$0xf]
        %v9510 = vmul.f32 %v9445, %v9445
        %v9511 = vmul.f32 %v9446, %v9446
        %v9512 = vmul.f32 %v9447, %v9447
        %v9513 = vmul.f32 %v9448, %v9448
        %v9514 = vmul.f32 %v9449, %v9449
        %v9515 = vmul.f32 %v9450, %v9450
        %v9516 = vmul.f32 %v9451, %v9451
        %v9517 = vmul.f32 %v9452, %v9452
        %v9518 = vmul.f32 %v9453, %v9453
        %v9519 = vmul.f32 %v9454, %v9454
        %v9520 = vmul.f32 %v9455, %v9455
        %v9521 = vmul.f32 %v9456, %v9456
        %v9522 = vmul.f32 %v9457, %v9457
        %v9523 = vmul.f32 %v9458, %v9458
        %v9524 = vmul.f32 %v9459, %v9459
        %v9525 = vmul.f32 %v9460, %v9460
        %9526 = vadd.xlane.f32.xlu0 %v9510
        %v9527 = vpop.xlane.xlu0 %9526
        %9528 = vadd.xlane.f32.xlu0 %v9511
        %v9529 = vpop.xlane.xlu0 %9528
        %9530 = vadd.xlane.f32.xlu0 %v9512
        %v9531 = vpop.xlane.xlu0 %9530
        %9532 = vadd.xlane.f32.xlu0 %v9513
        %v9533 = vpop.xlane.xlu0 %9532
        %9534 = vadd.xlane.f32.xlu0 %v9514
        %v9535 = vpop.xlane.xlu0 %9534
        %9536 = vadd.xlane.f32.xlu0 %v9515
        %v9537 = vpop.xlane.xlu0 %9536
        %9538 = vadd.xlane.f32.xlu0 %v9516
        %v9539 = vpop.xlane.xlu0 %9538
        %9540 = vadd.xlane.f32.xlu0 %v9517
        %v9541 = vpop.xlane.xlu0 %9540
        %9542 = vadd.xlane.f32.xlu0 %v9518
        %v9543 = vpop.xlane.xlu0 %9542
        %9544 = vadd.xlane.f32.xlu0 %v9519
        %v9545 = vpop.xlane.xlu0 %9544
        %9546 = vadd.xlane.f32.xlu0 %v9520
        %v9547 = vpop.xlane.xlu0 %9546
        %9548 = vadd.xlane.f32.xlu0 %v9521
        %v9549 = vpop.xlane.xlu0 %9548
        %9550 = vadd.xlane.f32.xlu0 %v9522
        %v9551 = vpop.xlane.xlu0 %9550
        %9552 = vadd.xlane.f32.xlu0 %v9523
        %v9553 = vpop.xlane.xlu0 %9552
        %9554 = vadd.xlane.f32.xlu0 %v9524
        %v9555 = vpop.xlane.xlu0 %9554
        %9556 = vadd.xlane.f32.xlu0 %v9525
        %v9557 = vpop.xlane.xlu0 %9556
        %v9558 = vmul.f32 %v9527, %v6675
        %v9559 = vmul.f32 %v9529, %v6675
        %v9560 = vmul.f32 %v9531, %v6675
        %v9561 = vmul.f32 %v9533, %v6675
        %v9562 = vmul.f32 %v9535, %v6675
        %v9563 = vmul.f32 %v9537, %v6675
        %v9564 = vmul.f32 %v9539, %v6675
        %v9565 = vmul.f32 %v9541, %v6675
        %v9566 = vmul.f32 %v9543, %v6675
        %v9567 = vmul.f32 %v9545, %v6675
        %v9568 = vmul.f32 %v9547, %v6675
        %v9569 = vmul.f32 %v9549, %v6675
        %v9570 = vmul.f32 %v9551, %v6675
        %v9571 = vmul.f32 %v9553, %v6675
        %v9572 = vmul.f32 %v9555, %v6675
        %v9573 = vmul.f32 %v9557, %v6675
        %v9574 = vadd.f32 %v9558, 1e-06
        %v9575 = vadd.f32 %v9559, 1e-06
        %v9576 = vadd.f32 %v9560, 1e-06
        %v9577 = vadd.f32 %v9561, 1e-06
        %v9578 = vadd.f32 %v9562, 1e-06
        %v9579 = vadd.f32 %v9563, 1e-06
        %v9580 = vadd.f32 %v9564, 1e-06
        %v9581 = vadd.f32 %v9565, 1e-06
        %v9582 = vadd.f32 %v9566, 1e-06
        %v9583 = vadd.f32 %v9567, 1e-06
        %v9584 = vadd.f32 %v9568, 1e-06
        %v9585 = vadd.f32 %v9569, 1e-06
        %v9586 = vadd.f32 %v9570, 1e-06
        %v9587 = vadd.f32 %v9571, 1e-06
        %v9588 = vadd.f32 %v9572, 1e-06
        %v9589 = vadd.f32 %v9573, 1e-06
        %v9590 = vrsqrt.pop %v9574
        %v9591 = vrsqrt.pop %v9575
        %v9592 = vrsqrt.pop %v9576
        %v9593 = vrsqrt.pop %v9577
        %v9594 = vrsqrt.pop %v9578
        %v9595 = vrsqrt.pop %v9579
        %v9596 = vrsqrt.pop %v9580
        %v9597 = vrsqrt.pop %v9581
        %v9598 = vrsqrt.pop %v9582
        %v9599 = vrsqrt.pop %v9583
        %v9600 = vrsqrt.pop %v9584
        %v9601 = vrsqrt.pop %v9585
        %v9602 = vrsqrt.pop %v9586
        %v9603 = vrsqrt.pop %v9587
        %v9604 = vrsqrt.pop %v9588
        %v9605 = vrsqrt.pop %v9589
        %v9606 = vmul.f32 %v9445, %v9590
        %v9607 = vmul.f32 %v9446, %v9591
        %v9608 = vmul.f32 %v9447, %v9592
        %v9609 = vmul.f32 %v9448, %v9593
        %v9610 = vmul.f32 %v9449, %v9594
        %v9611 = vmul.f32 %v9450, %v9595
        %v9612 = vmul.f32 %v9451, %v9596
        %v9613 = vmul.f32 %v9452, %v9597
        %v9614 = vmul.f32 %v9453, %v9598
        %v9615 = vmul.f32 %v9454, %v9599
        %v9616 = vmul.f32 %v9455, %v9600
        %v9617 = vmul.f32 %v9456, %v9601
        %v9618 = vmul.f32 %v9457, %v9602
        %v9619 = vmul.f32 %v9458, %v9603
        %v9620 = vmul.f32 %v9459, %v9604
        %v9621 = vmul.f32 %v9460, %v9605
        %v9623 = vlaneseq
        %v9624 = vshrl.u32 %v9623, 7
        %v9625 = vsub.s32 0, %v9624
        %v9626 = vrot.slane %v9461, %v9625
        %v9628 = vmul.f32 %v9606, %v9626
        %v9629 = vmul.f32 %v9607, %v9626
        %v9630 = vmul.f32 %v9608, %v9626
        %v9631 = vmul.f32 %v9609, %v9626
        %v9632 = vmul.f32 %v9610, %v9626
        %v9633 = vmul.f32 %v9611, %v9626
        %v9634 = vmul.f32 %v9612, %v9626
        %v9635 = vmul.f32 %v9613, %v9626
        %v9636 = vmul.f32 %v9614, %v9626
        %v9637 = vmul.f32 %v9615, %v9626
        %v9638 = vmul.f32 %v9616, %v9626
        %v9639 = vmul.f32 %v9617, %v9626
        %v9640 = vmul.f32 %v9618, %v9626
        %v9641 = vmul.f32 %v9619, %v9626
        %v9642 = vmul.f32 %v9620, %v9626
        %v9643 = vmul.f32 %v9621, %v9626
        %v9644 = vpack.c.bf16 %v9629, %v9628
        %v9645 = vpack.c.bf16 %v9631, %v9630
        %v9646 = vpack.c.bf16 %v9633, %v9632
        %v9647 = vpack.c.bf16 %v9635, %v9634
        %v9648 = vpack.c.bf16 %v9637, %v9636
        %v9649 = vpack.c.bf16 %v9639, %v9638
        %v9650 = vpack.c.bf16 %v9641, %v9640
        %v9651 = vpack.c.bf16 %v9643, %v9642
        %v9668 = vunpack.c.l.b16 %v9462
        %v9669 = vunpack.c.h.b16 %v9462
        %v9670 = vunpack.c.l.b16 %v9463
        %v9671 = vunpack.c.h.b16 %v9463
        %v9672 = vunpack.c.l.b16 %v9464
        %v9673 = vunpack.c.h.b16 %v9464
        %v9674 = vunpack.c.l.b16 %v9465
        %v9675 = vunpack.c.h.b16 %v9465
        %v9676 = vunpack.c.l.b16 %v9466
        %v9677 = vunpack.c.h.b16 %v9466
        %v9678 = vunpack.c.l.b16 %v9467
        %v9679 = vunpack.c.h.b16 %v9467
        %v9680 = vunpack.c.l.b16 %v9468
        %v9681 = vunpack.c.h.b16 %v9468
        %v9682 = vunpack.c.l.b16 %v9469
        %v9683 = vunpack.c.h.b16 %v9469
        %v9684 = vunpack.c.l.b16 %v9470
        %v9685 = vunpack.c.h.b16 %v9470
        %v9686 = vunpack.c.l.b16 %v9471
        %v9687 = vunpack.c.h.b16 %v9471
        %v9688 = vunpack.c.l.b16 %v9472
        %v9689 = vunpack.c.h.b16 %v9472
        %v9690 = vunpack.c.l.b16 %v9473
        %v9691 = vunpack.c.h.b16 %v9473
        %v9692 = vunpack.c.l.b16 %v9474
        %v9693 = vunpack.c.h.b16 %v9474
        %v9694 = vunpack.c.l.b16 %v9475
        %v9695 = vunpack.c.h.b16 %v9475
        %v9696 = vunpack.c.l.b16 %v9476
        %v9697 = vunpack.c.h.b16 %v9476
        %v9698 = vunpack.c.l.b16 %v9477
        %v9699 = vunpack.c.h.b16 %v9477
        %v9700 = vpack.c.b16 %v9670, %v9668
        %v9701 = vpack.c.b16 %v9671, %v9669
        %v9702 = vpack.c.b16 %v9674, %v9672
        %v9703 = vpack.c.b16 %v9675, %v9673
        %v9704 = vpack.c.b16 %v9678, %v9676
        %v9705 = vpack.c.b16 %v9679, %v9677
        %v9706 = vpack.c.b16 %v9682, %v9680
        %v9707 = vpack.c.b16 %v9683, %v9681
        %v9708 = vpack.c.b16 %v9686, %v9684
        %v9709 = vpack.c.b16 %v9687, %v9685
        %v9710 = vpack.c.b16 %v9690, %v9688
        %v9711 = vpack.c.b16 %v9691, %v9689
        %v9712 = vpack.c.b16 %v9694, %v9692
        %v9713 = vpack.c.b16 %v9695, %v9693
        %v9714 = vpack.c.b16 %v9698, %v9696
        %v9715 = vpack.c.b16 %v9699, %v9697
        %9732 = vmatprep.subr.bf16.mxu0 %v9701
        %9733 = vmatpush1.bf16.msra.mxu0 %v9700
        %9734 = vmatprep.subr.bf16.mxu0 %v9703
        %9735 = vmatpush1.bf16.msra.mxu0 %v9702
        %9736 = vmatprep.subr.bf16.mxu0 %v9705
        %9737 = vmatpush1.bf16.msra.mxu0 %v9704
        %9738 = vmatprep.subr.bf16.mxu0 %v9707
        %9739 = vmatpush1.bf16.msra.mxu0 %v9706
        %9740 = vmatprep.subr.bf16.mxu0 %v9709
        %9741 = vmatpush1.bf16.msra.mxu0 %v9708
        %9742 = vmatprep.subr.bf16.mxu0 %v9711
        %9743 = vmatpush1.bf16.msra.mxu0 %v9710
        %9744 = vmatprep.subr.bf16.mxu0 %v9713
        %9745 = vmatpush1.bf16.msra.mxu0 %v9712
        %9746 = vmatprep.subr.bf16.mxu0 %v9715
        %9747 = vmatpush1.bf16.msra.mxu0 %v9714
        %9748 = vmatprep.subr.bf16.mxu0 0
        %9749 = vmatpush1.bf16.msra.mxu0 0
        %9750 = vmatprep.subr.bf16.mxu0 0
        %9751 = vmatpush1.bf16.msra.mxu0 0
        %9752 = vmatprep.subr.bf16.mxu0 0
        %9753 = vmatpush1.bf16.msra.mxu0 0
        %9754 = vmatprep.subr.bf16.mxu0 0
        %9755 = vmatpush1.bf16.msra.mxu0 0
        %9756 = vmatprep.subr.bf16.mxu0 0
        %9757 = vmatpush1.bf16.msra.mxu0 0
        %9758 = vmatprep.subr.bf16.mxu0 0
        %9759 = vmatpush1.bf16.msra.mxu0 0
        %9760 = vmatprep.subr.bf16.mxu0 0
        %9761 = vmatpush1.bf16.msra.mxu0 0
        %9762 = vmatprep.subr.bf16.mxu0 0
        %9763 = vmatpush1.bf16.msra.mxu0 0
        %9764 = vmatprep.mubr.bf16.mxu0 0
        %9765 = vmatmul.mubr.bf16.gmra.mrb[0].mxu0 %v9644
        %v9766 = vpop.f32.mrb[0].mxu0
        %v9767 = vadd.f32 0.0, %v9766
        %v9768 = vpop.f32.mrb[0].mxu0
        %v9769 = vadd.f32 0.0, %v9768
        %v9770 = vpop.f32.mrb[0].mxu0
        %v9771 = vadd.f32 0.0, %v9770
        %v9772 = vpop.f32.mrb[0].mxu0
        %v9773 = vadd.f32 0.0, %v9772
        %9774 = vmatprep.mubr.bf16.mxu0 0
        %9775 = vmatmul.mubr.bf16.gmra.mrb[0].mxu0 %v9645
        %v9776 = vpop.f32.mrb[0].mxu0
        %v9777 = vadd.f32 0.0, %v9776
        %v9778 = vpop.f32.mrb[0].mxu0
        %v9779 = vadd.f32 0.0, %v9778
        %v9780 = vpop.f32.mrb[0].mxu0
        %v9781 = vadd.f32 0.0, %v9780
        %v9782 = vpop.f32.mrb[0].mxu0
        %v9783 = vadd.f32 0.0, %v9782
        %9784 = vmatprep.mubr.bf16.mxu0 0
        %9785 = vmatmul.mubr.bf16.gmra.mrb[0].mxu0 %v9646
        %v9786 = vpop.f32.mrb[0].mxu0
        %v9787 = vadd.f32 0.0, %v9786
        %v9788 = vpop.f32.mrb[0].mxu0
        %v9789 = vadd.f32 0.0, %v9788
        %v9790 = vpop.f32.mrb[0].mxu0
        %v9791 = vadd.f32 0.0, %v9790
        %v9792 = vpop.f32.mrb[0].mxu0
        %v9793 = vadd.f32 0.0, %v9792
        %9794 = vmatprep.mubr.bf16.mxu0 0
        %9795 = vmatmul.mubr.bf16.gmra.mrb[0].mxu0 %v9647
        %v9796 = vpop.f32.mrb[0].mxu0
        %v9797 = vadd.f32 0.0, %v9796
        %v9798 = vpop.f32.mrb[0].mxu0
        %v9799 = vadd.f32 0.0, %v9798
        %v9800 = vpop.f32.mrb[0].mxu0
        %v9801 = vadd.f32 0.0, %v9800
        %v9802 = vpop.f32.mrb[0].mxu0
        %v9803 = vadd.f32 0.0, %v9802
        %9804 = vmatprep.mubr.bf16.mxu0 0
        %9805 = vmatmul.mubr.bf16.gmra.mrb[0].mxu0 %v9648
        %v9806 = vpop.f32.mrb[0].mxu0
        %v9807 = vadd.f32 0.0, %v9806
        %v9808 = vpop.f32.mrb[0].mxu0
        %v9809 = vadd.f32 0.0, %v9808
        %v9810 = vpop.f32.mrb[0].mxu0
        %v9811 = vadd.f32 0.0, %v9810
        %v9812 = vpop.f32.mrb[0].mxu0
        %v9813 = vadd.f32 0.0, %v9812
        %9814 = vmatprep.mubr.bf16.mxu0 0
        %9815 = vmatmul.mubr.bf16.gmra.mrb[0].mxu0 %v9649
        %v9816 = vpop.f32.mrb[0].mxu0
        %v9817 = vadd.f32 0.0, %v9816
        %v9818 = vpop.f32.mrb[0].mxu0
        %v9819 = vadd.f32 0.0, %v9818
        %v9820 = vpop.f32.mrb[0].mxu0
        %v9821 = vadd.f32 0.0, %v9820
        %v9822 = vpop.f32.mrb[0].mxu0
        %v9823 = vadd.f32 0.0, %v9822
        %9824 = vmatprep.mubr.bf16.mxu0 0
        %9825 = vmatmul.mubr.bf16.gmra.mrb[0].mxu0 %v9650
        %v9826 = vpop.f32.mrb[0].mxu0
        %v9827 = vadd.f32 0.0, %v9826
        %v9828 = vpop.f32.mrb[0].mxu0
        %v9829 = vadd.f32 0.0, %v9828
        %v9830 = vpop.f32.mrb[0].mxu0
        %v9831 = vadd.f32 0.0, %v9830
        %v9832 = vpop.f32.mrb[0].mxu0
        %v9833 = vadd.f32 0.0, %v9832
        %9834 = vmatprep.mubr.bf16.mxu0 0
        %9835 = vmatmul.mubr.bf16.gmra.mrb[0].mxu0 %v9651
        %v9836 = vpop.f32.mrb[0].mxu0
        %v9837 = vadd.f32 0.0, %v9836
        %v9838 = vpop.f32.mrb[0].mxu0
        %v9839 = vadd.f32 0.0, %v9838
        %v9840 = vpop.f32.mrb[0].mxu0
        %v9841 = vadd.f32 0.0, %v9840
        %v9842 = vpop.f32.mrb[0].mxu0
        %v9843 = vadd.f32 0.0, %v9842
        %9844 = vdwg.mxu0
        %v9845 = vmax.f32 %v9767, 0.0
        %v9846 = vmax.f32 %v9769, 0.0
        %v9847 = vmax.f32 %v9771, 0.0
        %v9848 = vmax.f32 %v9773, 0.0
        %v9849 = vmax.f32 %v9777, 0.0
        %v9850 = vmax.f32 %v9779, 0.0
        %v9851 = vmax.f32 %v9781, 0.0
        %v9852 = vmax.f32 %v9783, 0.0
        %v9853 = vmax.f32 %v9787, 0.0
        %v9854 = vmax.f32 %v9789, 0.0
        %v9855 = vmax.f32 %v9791, 0.0
        %v9856 = vmax.f32 %v9793, 0.0
        %v9857 = vmax.f32 %v9797, 0.0
        %v9858 = vmax.f32 %v9799, 0.0
        %v9859 = vmax.f32 %v9801, 0.0
        %v9860 = vmax.f32 %v9803, 0.0
        %v9861 = vmax.f32 %v9807, 0.0
        %v9862 = vmax.f32 %v9809, 0.0
        %v9863 = vmax.f32 %v9811, 0.0
        %v9864 = vmax.f32 %v9813, 0.0
        %v9865 = vmax.f32 %v9817, 0.0
        %v9866 = vmax.f32 %v9819, 0.0
        %v9867 = vmax.f32 %v9821, 0.0
        %v9868 = vmax.f32 %v9823, 0.0
        %v9869 = vmax.f32 %v9827, 0.0
        %v9870 = vmax.f32 %v9829, 0.0
        %v9871 = vmax.f32 %v9831, 0.0
        %v9872 = vmax.f32 %v9833, 0.0
        %v9873 = vmax.f32 %v9837, 0.0
        %v9874 = vmax.f32 %v9839, 0.0
        %v9875 = vmax.f32 %v9841, 0.0
        %v9876 = vmax.f32 %v9843, 0.0
        %v9877 = vpack.c.bf16 %v9847, %v9845
        %v9878 = vpack.c.bf16 %v9848, %v9846
        %v9879 = vpack.c.bf16 %v9851, %v9849
        %v9880 = vpack.c.bf16 %v9852, %v9850
        %v9881 = vpack.c.bf16 %v9855, %v9853
        %v9882 = vpack.c.bf16 %v9856, %v9854
        %v9883 = vpack.c.bf16 %v9859, %v9857
        %v9884 = vpack.c.bf16 %v9860, %v9858
        %v9885 = vpack.c.bf16 %v9863, %v9861
        %v9886 = vpack.c.bf16 %v9864, %v9862
        %v9887 = vpack.c.bf16 %v9867, %v9865
        %v9888 = vpack.c.bf16 %v9868, %v9866
        %v9889 = vpack.c.bf16 %v9871, %v9869
        %v9890 = vpack.c.bf16 %v9872, %v9870
        %v9891 = vpack.c.bf16 %v9875, %v9873
        %v9892 = vpack.c.bf16 %v9876, %v9874
        %v9925 = vunpack.c.l.b16 %v9478
        %v9926 = vunpack.c.l.b16 %v9479
        %v9927 = vunpack.c.l.b16 %v9480
        %v9928 = vunpack.c.l.b16 %v9481
        %v9929 = vunpack.c.l.b16 %v9482
        %v9930 = vunpack.c.l.b16 %v9483
        %v9931 = vunpack.c.l.b16 %v9484
        %v9932 = vunpack.c.l.b16 %v9485
        %v9933 = vunpack.c.l.b16 %v9486
        %v9934 = vunpack.c.l.b16 %v9487
        %v9935 = vunpack.c.l.b16 %v9488
        %v9936 = vunpack.c.l.b16 %v9489
        %v9937 = vunpack.c.l.b16 %v9490
        %v9938 = vunpack.c.l.b16 %v9491
        %v9939 = vunpack.c.l.b16 %v9492
        %v9940 = vunpack.c.l.b16 %v9493
        %v9941 = vunpack.c.l.b16 %v9494
        %v9942 = vunpack.c.l.b16 %v9495
        %v9943 = vunpack.c.l.b16 %v9496
        %v9944 = vunpack.c.l.b16 %v9497
        %v9945 = vunpack.c.l.b16 %v9498
        %v9946 = vunpack.c.l.b16 %v9499
        %v9947 = vunpack.c.l.b16 %v9500
        %v9948 = vunpack.c.l.b16 %v9501
        %v9949 = vunpack.c.l.b16 %v9502
        %v9950 = vunpack.c.l.b16 %v9503
        %v9951 = vunpack.c.l.b16 %v9504
        %v9952 = vunpack.c.l.b16 %v9505
        %v9953 = vunpack.c.l.b16 %v9506
        %v9954 = vunpack.c.l.b16 %v9507
        %v9955 = vunpack.c.l.b16 %v9508
        %v9956 = vunpack.c.l.b16 %v9509
        %v9957 = vpack.c.b16 %v9926, %v9925
        %v9958 = vpack.c.b16 %v9928, %v9927
        %v9959 = vpack.c.b16 %v9930, %v9929
        %v9960 = vpack.c.b16 %v9932, %v9931
        %v9961 = vpack.c.b16 %v9934, %v9933
        %v9962 = vpack.c.b16 %v9936, %v9935
        %v9963 = vpack.c.b16 %v9938, %v9937
        %v9964 = vpack.c.b16 %v9940, %v9939
        %v9965 = vpack.c.b16 %v9942, %v9941
        %v9966 = vpack.c.b16 %v9944, %v9943
        %v9967 = vpack.c.b16 %v9946, %v9945
        %v9968 = vpack.c.b16 %v9948, %v9947
        %v9969 = vpack.c.b16 %v9950, %v9949
        %v9970 = vpack.c.b16 %v9952, %v9951
        %v9971 = vpack.c.b16 %v9954, %v9953
        %v9972 = vpack.c.b16 %v9956, %v9955
        %9989 = vmatprep.subr.bf16.mxu0 0
        %9990 = vmatpush1.bf16.msra.mxu0 %v9957
        %9991 = vmatprep.subr.bf16.mxu0 0
        %9992 = vmatpush1.bf16.msra.mxu0 %v9958
        %9993 = vmatprep.subr.bf16.mxu0 0
        %9994 = vmatpush1.bf16.msra.mxu0 %v9959
        %9995 = vmatprep.subr.bf16.mxu0 0
        %9996 = vmatpush1.bf16.msra.mxu0 %v9960
        %9997 = vmatprep.subr.bf16.mxu0 0
        %9998 = vmatpush1.bf16.msra.mxu0 %v9961
        %9999 = vmatprep.subr.bf16.mxu0 0
        %10000 = vmatpush1.bf16.msra.mxu0 %v9962
        %10001 = vmatprep.subr.bf16.mxu0 0
        %10002 = vmatpush1.bf16.msra.mxu0 %v9963
        %10003 = vmatprep.subr.bf16.mxu0 0
        %10004 = vmatpush1.bf16.msra.mxu0 %v9964
        %10005 = vmatprep.subr.bf16.mxu0 0
        %10006 = vmatpush1.bf16.msra.mxu0 %v9965
        %10007 = vmatprep.subr.bf16.mxu0 0
        %10008 = vmatpush1.bf16.msra.mxu0 %v9966
        %10009 = vmatprep.subr.bf16.mxu0 0
        %10010 = vmatpush1.bf16.msra.mxu0 %v9967
        %10011 = vmatprep.subr.bf16.mxu0 0
        %10012 = vmatpush1.bf16.msra.mxu0 %v9968
        %10013 = vmatprep.subr.bf16.mxu0 0
        %10014 = vmatpush1.bf16.msra.mxu0 %v9969
        %10015 = vmatprep.subr.bf16.mxu0 0
        %10016 = vmatpush1.bf16.msra.mxu0 %v9970
        %10017 = vmatprep.subr.bf16.mxu0 0
        %10018 = vmatpush1.bf16.msra.mxu0 %v9971
        %10019 = vmatprep.subr.bf16.mxu0 0
        %10020 = vmatpush1.bf16.msra.mxu0 %v9972
        %10021 = vmatprep.mubr.bf16.mxu0 %v9878
        %10022 = vmatmul.mubr.bf16.gmra.mrb[0].mxu0 %v9877
        %v10023 = vpop.f32.mrb[0].mxu0
        %v10024 = vadd.f32 0.0, %v10023
        %v10025 = vpop.f32.mrb[0].mxu0
        %v10026 = vpop.f32.mrb[0].mxu0
        %v10027 = vadd.f32 0.0, %v10026
        %v10028 = vpop.f32.mrb[0].mxu0
        %10029 = vmatprep.mubr.bf16.mxu0 %v9880
        %10030 = vmatmul.mubr.bf16.gmra.mrb[0].mxu0 %v9879
        %v10031 = vpop.f32.mrb[0].mxu0
        %v10032 = vadd.f32 0.0, %v10031
        %v10033 = vpop.f32.mrb[0].mxu0
        %v10034 = vpop.f32.mrb[0].mxu0
        %v10035 = vadd.f32 0.0, %v10034
        %v10036 = vpop.f32.mrb[0].mxu0
        %10037 = vmatprep.mubr.bf16.mxu0 %v9882
        %10038 = vmatmul.mubr.bf16.gmra.mrb[0].mxu0 %v9881
        %v10039 = vpop.f32.mrb[0].mxu0
        %v10040 = vadd.f32 0.0, %v10039
        %v10041 = vpop.f32.mrb[0].mxu0
        %v10042 = vpop.f32.mrb[0].mxu0
        %v10043 = vadd.f32 0.0, %v10042
        %v10044 = vpop.f32.mrb[0].mxu0
        %10045 = vmatprep.mubr.bf16.mxu0 %v9884
        %10046 = vmatmul.mubr.bf16.gmra.mrb[0].mxu0 %v9883
        %v10047 = vpop.f32.mrb[0].mxu0
        %v10048 = vadd.f32 0.0, %v10047
        %v10049 = vpop.f32.mrb[0].mxu0
        %v10050 = vpop.f32.mrb[0].mxu0
        %v10051 = vadd.f32 0.0, %v10050
        %v10052 = vpop.f32.mrb[0].mxu0
        %10053 = vmatprep.mubr.bf16.mxu0 %v9886
        %10054 = vmatmul.mubr.bf16.gmra.mrb[0].mxu0 %v9885
        %v10055 = vpop.f32.mrb[0].mxu0
        %v10056 = vadd.f32 0.0, %v10055
        %v10057 = vpop.f32.mrb[0].mxu0
        %v10058 = vpop.f32.mrb[0].mxu0
        %v10059 = vadd.f32 0.0, %v10058
        %v10060 = vpop.f32.mrb[0].mxu0
        %10061 = vmatprep.mubr.bf16.mxu0 %v9888
        %10062 = vmatmul.mubr.bf16.gmra.mrb[0].mxu0 %v9887
        %v10063 = vpop.f32.mrb[0].mxu0
        %v10064 = vadd.f32 0.0, %v10063
        %v10065 = vpop.f32.mrb[0].mxu0
        %v10066 = vpop.f32.mrb[0].mxu0
        %v10067 = vadd.f32 0.0, %v10066
        %v10068 = vpop.f32.mrb[0].mxu0
        %10069 = vmatprep.mubr.bf16.mxu0 %v9890
        %10070 = vmatmul.mubr.bf16.gmra.mrb[0].mxu0 %v9889
        %v10071 = vpop.f32.mrb[0].mxu0
        %v10072 = vadd.f32 0.0, %v10071
        %v10073 = vpop.f32.mrb[0].mxu0
        %v10074 = vpop.f32.mrb[0].mxu0
        %v10075 = vadd.f32 0.0, %v10074
        %v10076 = vpop.f32.mrb[0].mxu0
        %10077 = vmatprep.mubr.bf16.mxu0 %v9892
        %10078 = vmatmul.mubr.bf16.gmra.mrb[0].mxu0 %v9891
        %v10079 = vpop.f32.mrb[0].mxu0
        %v10080 = vadd.f32 0.0, %v10079
        %v10081 = vpop.f32.mrb[0].mxu0
        %v10082 = vpop.f32.mrb[0].mxu0
        %v10083 = vadd.f32 0.0, %v10082
        %v10084 = vpop.f32.mrb[0].mxu0
        %10085 = vdwg.mxu0
        %v10086 = vadd.f32 %v9445, %v10024
        %v10087 = vadd.f32 %v9446, %v10027
        %v10088 = vadd.f32 %v9447, %v10032
        %v10089 = vadd.f32 %v9448, %v10035
        %v10090 = vadd.f32 %v9449, %v10040
        %v10091 = vadd.f32 %v9450, %v10043
        %v10092 = vadd.f32 %v9451, %v10048
        %v10093 = vadd.f32 %v9452, %v10051
        %v10094 = vadd.f32 %v9453, %v10056
        %v10095 = vadd.f32 %v9454, %v10059
        %v10096 = vadd.f32 %v9455, %v10064
        %v10097 = vadd.f32 %v9456, %v10067
        %v10098 = vadd.f32 %v9457, %v10072
        %v10099 = vadd.f32 %v9458, %v10075
        %v10100 = vadd.f32 %v9459, %v10080
        %v10101 = vadd.f32 %v9460, %v10083
        %10102 = vst [vmem:[%s937] sm:$0xff] %v6048
        %10103 = vst [vmem:[%s937 + $0x8] sm:$0xff] %v6049
        %10104 = vst [vmem:[%s937 + $0x10] sm:$0xff] %v6050
        %10105 = vst [vmem:[%s937 + $0x18] sm:$0xff] %v6051
        %10106 = vst [vmem:[%s937 + $0x20] sm:$0xff] %v6052
        %10107 = vst [vmem:[%s937 + $0x28] sm:$0xff] %v6053
        %10108 = vst [vmem:[%s937 + $0x30] sm:$0xff] %v6054
        %10109 = vst [vmem:[%s937 + $0x38] sm:$0xff] %v6055
        %10110 = vst [vmem:[%s937 + $0x40] sm:$0xff] %v6056
        %10111 = vst [vmem:[%s937 + $0x48] sm:$0xff] %v6057
        %10112 = vst [vmem:[%s937 + $0x50] sm:$0xff] %v6058
        %10113 = vst [vmem:[%s937 + $0x58] sm:$0xff] %v6059
        %10114 = vst [vmem:[%s937 + $0x60] sm:$0xff] %v6060
        %10115 = vst [vmem:[%s937 + $0x68] sm:$0xff] %v6061
        %10116 = vst [vmem:[%s937 + $0x70] sm:$0xff] %v6062
        %10117 = vst [vmem:[%s937 + $0x78] sm:$0xff] %v6063
        %10118 = vst [vmem:[%s937 + $0x80] sm:$0xff] %v6064
        %10119 = vst [vmem:[%s937 + $0x88] sm:$0xff] %v6065
        %10120 = vst [vmem:[%s937 + $0x90] sm:$0xff] %v6066
        %10121 = vst [vmem:[%s937 + $0x98] sm:$0xff] %v6067
        %10122 = vst [vmem:[%s937 + $0xa0] sm:$0xff] %v6068
        %10123 = vst [vmem:[%s937 + $0xa8] sm:$0xff] %v6069
        %10124 = vst [vmem:[%s937 + $0xb0] sm:$0xff] %v6070
        %10125 = vst [vmem:[%s937 + $0xb8] sm:$0xff] %v6071
        %10126 = vst [vmem:[%s937 + $0xc0] sm:$0xff] %v6072
        %10127 = vst [vmem:[%s937 + $0xc8] sm:$0xff] %v6073
        %10128 = vst [vmem:[%s937 + $0xd0] sm:$0xff] %v6074
        %10129 = vst [vmem:[%s937 + $0xd8] sm:$0xff] %v6075
        %10130 = vst [vmem:[%s937 + $0xe0] sm:$0xff] %v6076
        %10131 = vst [vmem:[%s937 + $0xe8] sm:$0xff] %v6077
        %10132 = vst [vmem:[%s937 + $0xf0] sm:$0xff] %v6078
        %10133 = vst [vmem:[%s937 + $0xf8] sm:$0xff] %v6079
        %10134 = vst [vmem:[%s944] sm:$0xff] %v10086
        %10135 = vst [vmem:[%s944 + $0x8] sm:$0xff] %v10087
        %10136 = vst [vmem:[%s944 + $0x10] sm:$0xff] %v10088
        %10137 = vst [vmem:[%s944 + $0x18] sm:$0xff] %v10089
        %10138 = vst [vmem:[%s944 + $0x20] sm:$0xff] %v10090
        %10139 = vst [vmem:[%s944 + $0x28] sm:$0xff] %v10091
        %10140 = vst [vmem:[%s944 + $0x30] sm:$0xff] %v10092
        %10141 = vst [vmem:[%s944 + $0x38] sm:$0xff] %v10093
        %10142 = vst [vmem:[%s944 + $0x40] sm:$0xff] %v10094
        %10143 = vst [vmem:[%s944 + $0x48] sm:$0xff] %v10095
        %10144 = vst [vmem:[%s944 + $0x50] sm:$0xff] %v10096
        %10145 = vst [vmem:[%s944 + $0x58] sm:$0xff] %v10097
        %10146 = vst [vmem:[%s944 + $0x60] sm:$0xff] %v10098
        %10147 = vst [vmem:[%s944 + $0x68] sm:$0xff] %v10099
        %10148 = vst [vmem:[%s944 + $0x70] sm:$0xff] %v10100
        %10149 = vst [vmem:[%s944 + $0x78] sm:$0xff] %v10101
        %s10150 = sand.u32 %s505, 1
        %s10151 = scalar_lea.sflag [#allocation6], %s10150
        %s10152 = sand.u32 %s505, 1
        %s10153 = smul.addr %s10152, 256
        %s10154 = scalar_lea.vmem [#allocation31], %s10153
        %s10155 = sand.u32 %s531, 1
        %s10156 = scalar_lea.sflag [#allocation33], %s10155
        %s10157 = sand.u32 %s531, 1
        %s10158 = smul.addr %s10157, 128
        %s10159 = scalar_lea.vmem [#allocation32], %s10158
        // Predicated region
        $region173: #{tpu_custom_call.1} parent=103 // pred_check
          %p10160 = pneg %p515
        $region174: #{tpu_custom_call.1} parent=103 // pred_check_branch
          %10162 = sbr.rel (%p10160) target = $region176
        $region175: #{tpu_custom_call.1} parent=103 // pred_region
          %s10164 = ssub.s32 4096, 4096
          %10165 = vsyncadd %s10151, %s10164
          %s10166 = smul.addr %s51, 32
          %s10167 = smul.addr %s10166, 128
          %s10168 = scalar_lea.hbm %s21, %s10167
          %s10169 = sshll.u32 %s10154, 4
          %s10170 = int_to_ptr.vmem [resolvable:$true] %s10169
          %10175 = dma.vmem_to_hbm [thread:$0]  %s10170, 4096, %s10168, %s10151, 256, 256, 16
        $region176: #{tpu_custom_call.1} parent=103 // pred_fallthru
          _
        // Predicated region
        $region177: #{tpu_custom_call.1} parent=103 // pred_check
          %p10176 = pneg %p541
        $region178: #{tpu_custom_call.1} parent=103 // pred_check_branch
          %10178 = sbr.rel (%p10176) target = $region180
        $region179: #{tpu_custom_call.1} parent=103 // pred_region
          %s10180 = ssub.s32 2048, 2048
          %10181 = vsyncadd %s10156, %s10180
          %s10182 = smul.addr %s51, 16
          %s10183 = smul.addr %s10182, 128
          %s10184 = scalar_lea.hbm %s22, %s10183
          %s10185 = sshll.u32 %s10159, 4
          %s10186 = int_to_ptr.vmem [resolvable:$true] %s10185
          %10191 = dma.vmem_to_hbm [thread:$0]  %s10186, 2048, %s10184, %s10156, 128, 128, 8
        $region180: #{tpu_custom_call.1} parent=103 // pred_fallthru
          _
      $region104: #{tpu_custom_call.1} parent=5 // pred_fallthru
        _
      %p10192 = scmp.le.s32.totalorder 2, %s46
      // Predicated region
      $region181: #{tpu_custom_call.1} parent=5 // pred_check
        %p10193 = pneg %p10192
      $region182: #{tpu_custom_call.1} parent=5 // pred_check_branch
        %10195 = sbr.rel (%p10193) target = $region184
      $region183: #{tpu_custom_call.1} parent=5 // pred_region
        %s10196 = ssub.s32 %s46, 2
        // Predicated region
        $region185: #{tpu_custom_call.1} parent=183 // pred_check
          %p10197 = pneg %p521
        $region186: #{tpu_custom_call.1} parent=183 // pred_check_branch
          %10199 = sbr.rel (%p10197) target = $region188
        $region187: #{tpu_custom_call.1} parent=183 // pred_region
          %s10200 = sand.u32 %s506, 1
          %s10201 = scalar_lea.sflag [#allocation6], %s10200
          %s10202 = sand.u32 %s506, 1
          %s10203 = smul.addr %s10202, 256
          %s10204 = scalar_lea.vmem [#allocation31], %s10203
          %10205 = dma.done %s10201, 4096
        $region188: #{tpu_custom_call.1} parent=183 // pred_fallthru
          _
        // Predicated region
        $region189: #{tpu_custom_call.1} parent=183 // pred_check
          %p10206 = pneg %p547
        $region190: #{tpu_custom_call.1} parent=183 // pred_check_branch
          %10208 = sbr.rel (%p10206) target = $region192
        $region191: #{tpu_custom_call.1} parent=183 // pred_region
          %s10209 = sand.u32 %s532, 1
          %s10210 = scalar_lea.sflag [#allocation33], %s10209
          %s10211 = sand.u32 %s532, 1
          %s10212 = smul.addr %s10211, 128
          %s10213 = scalar_lea.vmem [#allocation32], %s10212
          %10214 = dma.done %s10210, 2048
        $region192: #{tpu_custom_call.1} parent=183 // pred_fallthru
          _
      $region184: #{tpu_custom_call.1} parent=5 // pred_fallthru
        _
    $region6: #{tpu_custom_call.1} parent=1 // loop_footer
      %s50 = sadd.s32 1, %s46
    $region7: #{tpu_custom_call.1} parent=1 // loop_footer_branch
      %45 = sbr.rel target = $region3
    $region8: #{tpu_custom_call.1} parent=1 // loop_exit
      _
    %10215 = vsyncpa [#allocation5], 1
    %s10216 = scalar_lea.sflag [#allocation5], 1
    %10217 = vsyncpa %s10216, 1
    %10218 = vsyncpa [#allocation8], 1
    %10219 = vsyncpa [#allocation11], 1
    %10220 = vsyncpa [#allocation14], 1
    %10221 = vsyncpa [#allocation17], 1
    %10222 = vsyncpa [#allocation20], 1
    %10223 = vsyncpa [#allocation23], 1
    %10224 = vsyncpa [#allocation26], 1
    %10225 = vsyncpa [#allocation29], 1
    %10226 = vsyncpa [#allocation6], 1
    %s10227 = scalar_lea.sflag [#allocation6], 1
    %10228 = vsyncpa %s10227, 1
    %10229 = vsyncpa [#allocation33], 1
    %s10230 = scalar_lea.sflag [#allocation33], 1
    %10231 = vsyncpa %s10230, 1

</llo_original>
